<compile_context>
chip_gen: v5e
topology: v5e:2x2
jax: 0.10.0
libtpu: 0.0.40
codegen_flags: <defaults>
</compile_context>

<pallas_src>
import functools

import jax
import jax.numpy as jnp
from jax.experimental import pallas as pl
from jax.experimental.pallas import tpu as pltpu

LANES = 128   # channel / class / K dims are zero-padded to this lane width
K5 = 5        # conv kernel size (fixed by the module)


# ----------------------------------------------------------------------------
# In-kernel helpers
# ----------------------------------------------------------------------------
def _sigmoid(y):
    # exp -> EUP, approximate reciprocal -> EUP; keeps the VPU slot free.
    return pl.reciprocal(1.0 + jnp.exp(-y), approx=True)


def _lenet_kernel(cols1_ref, w1_ref, b1_ref, w2_ref, b2_ref, w3_ref, b3_ref,
                  wfc_ref, bfc_ref, out_ref, p2_ref, p3_ref, *, s2):
    """One batch element per grid step; everything stays in VMEM."""
    f32, bf16 = jnp.float32, jnp.bfloat16

    # Zero the padded scratch buffers (halo regions must be 0 every grid step).
    p2_ref[...] = jnp.zeros(p2_ref.shape, p2_ref.dtype)
    p3_ref[...] = jnp.zeros(p3_ref.shape, p3_ref.dtype)

    # ---- conv1 (k=5, stride 2) as a single im2col matmul + sigmoid ----------
    a1 = _sigmoid(jnp.dot(cols1_ref[0], w1_ref[...],
                          preferred_element_type=f32) + b1_ref[...])
    # a1: (4*s2*s2, 128); rows ordered (ph, pw, i, j) -- phase-major (wrapper),
    # i.e. conv1 output position (h, w) = (2*i + ph, 2*j + pw).

    # Scatter a1 into four zero-padded phase grids for the stride-2 conv2.
    for phase in range(4):
        for i in range(s2):
            row0 = (phase * s2 + i) * s2
            p2_ref[phase, 1 + i, 1:1 + s2, :] = a1[row0:row0 + s2, :]

    # ---- conv2 (k=5, stride 2) as a phase-decomposed 25-tap sum -------------
    # out[ho,wo] = sum_{ph,pw,ah,aw} P[ph,pw][ho+ah, wo+aw] @ W[2ah+ph, 2aw+pw]
    acc2 = jnp.zeros((s2 * s2, LANES), f32)
    for ph in range(2):
        for pw in range(2):
            phase = ph * 2 + pw
            for ah in range(3 - ph):                   # kh = 2*ah + ph in 0..4
                for aw in range(3 - pw):               # kw = 2*aw + pw in 0..4
                    tap = (2 * ah + ph) * K5 + (2 * aw + pw)
                    patch = jnp.concatenate(
                        [p2_ref[phase, ho + ah, aw:aw + s2, :] for ho in range(s2)],
                        axis=0)                                    # (s2*s2, 128)
                    acc2 = acc2 + jnp.dot(patch.astype(bf16), w2_ref[tap],
                                          preferred_element_type=f32)
    a2 = _sigmoid(acc2 + b2_ref[...])                              # (s2*s2, 128)

    # Scatter a2 into a zero-padded buffer for the stride-1 conv3.
    for ho in range(s2):
        p3_ref[2 + ho, 2:2 + s2, :] = a2[ho * s2:(ho + 1) * s2, :]

    # ---- conv3 (k=5, stride 1) as a 25-tap sum -------------------------------
    acc3 = jnp.zeros((s2 * s2, LANES), f32)
    for kh in range(K5):
        for kw in range(K5):
            patch = jnp.concatenate(
                [p3_ref[kh + ho, kw:kw + s2, :] for ho in range(s2)], axis=0)
            acc3 = acc3 + jnp.dot(patch.astype(bf16), w3_ref[kh * K5 + kw],
                                  preferred_element_type=f32)
    a3 = _sigmoid(acc3 + b3_ref[...]).astype(bf16)                 # (s2*s2, 128)

    # ---- FC head (NCHW flatten order folded into the weight layout) ----------
    # logits = b + sum_p a3[p, :] @ Wfc_r[p]   with Wfc_r[p, c, o] = Wfc[o, c*P + p]
    acc_fc = jnp.zeros((1, LANES), f32)
    for p in range(s2 * s2):
        acc_fc = acc_fc + jnp.dot(a3[p:p + 1, :], wfc_ref[p],
                                  preferred_element_type=f32)
    out_ref[0] = acc_fc + bfc_ref[...]


# ----------------------------------------------------------------------------
# Plain-JAX glue: conv1 im2col (phase-major rows), weight packing, orchestration
# ----------------------------------------------------------------------------
def _pad_to(a, shape):
    return jnp.pad(a, [(0, t - s) for s, t in zip(a.shape, shape)])


def _im2col_conv1_phase_major(x):
    """im2col for conv1 (k=5, pad=2, stride=2), NCHW input.

    Returns (N, Ho*Wo, C*25) with K ordered (c, kh, kw) to match a flattened
    PyTorch Conv2d weight, and rows ordered phase-major: the row index encodes
    (ph, pw, i, j) where the conv output position is (h, w) = (2*i+ph, 2*j+pw).
    This ordering lets the kernel scatter conv1's output directly into the four
    stride-2 phase grids used by conv2 without any strided on-chip access."""
    n, c, h, w = x.shape
    pad, stride = K5 // 2, 2
    ho, wo = h // 2, w // 2
    xp = jnp.pad(x, ((0, 0), (0, 0), (pad, pad), (pad, pad)))
    taps = []
    for kh in range(K5):
        for kw in range(K5):
            taps.append(xp[:, :, kh:kh + ho * stride:stride,
                            kw:kw + wo * stride:stride])
    col = jnp.stack(taps, axis=2)                        # (N, C, 25, Ho, Wo)
    col = col.reshape(n, c * K5 * K5, ho, wo)            # K = c*25 + kh*5 + kw
    col = col.transpose(0, 2, 3, 1)                      # (N, Ho, Wo, K)
    col = col.reshape(n, ho // 2, 2, wo // 2, 2, c * K5 * K5)  # (N, i, ph, j, pw, K)
    col = col.transpose(0, 2, 4, 1, 3, 5)                # (N, ph, pw, i, j, K)
    return col.reshape(n, ho * wo, c * K5 * K5)


def _prepare_operands(params, k1p, s2, num_classes):
    f32, bf16 = jnp.float32, jnp.bfloat16

    def pad_bias(b):
        return _pad_to(b.astype(f32).reshape(1, -1), (1, LANES))

    cin1 = params["conv1_w"].shape[1]
    w1 = params["conv1_w"].reshape(12, cin1 * K5 * K5).T            # (K1, 12)
    w1 = _pad_to(w1, (k1p, LANES)).astype(bf16)

    def conv_taps(wc):                                   # (12,12,5,5) -> (25,128,128)
        wt = wc.transpose(2, 3, 1, 0).reshape(K5 * K5, 12, 12)      # [kh*5+kw, ci, co]
        return _pad_to(wt, (K5 * K5, LANES, LANES)).astype(bf16)

    p = s2 * s2
    wfc = params["fc_w"].reshape(num_classes, 12, p).transpose(2, 1, 0)  # [p, ci, cls]
    wfc = _pad_to(wfc, (p, LANES, LANES)).astype(bf16)

    return (w1, pad_bias(params["conv1_b"]),
            conv_taps(params["conv2_w"]), pad_bias(params["conv2_b"]),
            conv_taps(params["conv3_w"]), pad_bias(params["conv3_b"]),
            wfc, pad_bias(params["fc_b"]))


def lenet_forward(params, x):
    """x: [N, C, H, W] float32 (NCHW, same as the PyTorch module)."""
    n, c, h, w = x.shape
    assert h == w and h % 4 == 0, "spatial size must be a multiple of 4"
    s1, s2 = h // 2, h // 4
    num_classes = params["fc_b"].shape[0]
    assert params["fc_w"].shape == (num_classes, 12 * s2 * s2)
    assert num_classes <= LANES

    k1 = c * K5 * K5
    k1p = -(-k1 // LANES) * LANES

    cols1 = _im2col_conv1_phase_major(x)                            # (N, s1*s1, K1)
    cols1 = _pad_to(cols1, (n, s1 * s1, k1p)).astype(jnp.bfloat16)
    (w1, b1, w2, b2, w3, b3, wfc, bfc) = _prepare_operands(params, k1p, s2, num_classes)

    kernel = functools.partial(_lenet_kernel, s2=s2)
    out = pl.pallas_call(
        kernel,
        out_shape=jax.ShapeDtypeStruct((n, 1, LANES), jnp.float32),
        grid_spec=pltpu.PrefetchScalarGridSpec(
            num_scalar_prefetch=0,
            grid=(n,),
            in_specs=[
                pl.BlockSpec((1, s1 * s1, k1p), lambda b: (b, 0, 0)),       # cols1
                pl.BlockSpec((k1p, LANES), lambda b: (0, 0)),               # w1
                pl.BlockSpec((1, LANES), lambda b: (0, 0)),                 # b1
                pl.BlockSpec((K5 * K5, LANES, LANES), lambda b: (0, 0, 0)),  # w2 taps
                pl.BlockSpec((1, LANES), lambda b: (0, 0)),                 # b2
                pl.BlockSpec((K5 * K5, LANES, LANES), lambda b: (0, 0, 0)),  # w3 taps
                pl.BlockSpec((1, LANES), lambda b: (0, 0)),                 # b3
                pl.BlockSpec((s2 * s2, LANES, LANES), lambda b: (0, 0, 0)),  # fc taps
                pl.BlockSpec((1, LANES), lambda b: (0, 0)),                 # fc bias
            ],
            out_specs=pl.BlockSpec((1, 1, LANES), lambda b: (b, 0, 0)),
            scratch_shapes=[
                pltpu.VMEM((4, s2 + 2, s2 + 2, LANES), jnp.float32),  # conv2 phase grids
                pltpu.VMEM((s2 + 4, s2 + 4, LANES), jnp.float32),     # conv3 padded input
            ],
        ),
        compiler_params=pltpu.CompilerParams(
            dimension_semantics=("parallel",),
            vmem_limit_bytes=32 * 1024 * 1024,
        ),
    )(cols1, w1, b1, w2, b2, w3, b3, wfc, bfc)

    return out.reshape(n, LANES)[:, :num_classes]


def init_params(key, channel, hidden, num_classes):
    ks = jax.random.split(key, 8)

    def nrm(k, shape, scale=0.1):
        return scale * jax.random.normal(k, shape, dtype=jnp.float32)

    return {
        "conv1_w": nrm(ks[0], (12, channel, K5, K5)),
        "conv1_b": nrm(ks[1], (12,)),
        "conv2_w": nrm(ks[2], (12, 12, K5, K5)),
        "conv2_b": nrm(ks[3], (12,)),
        "conv3_w": nrm(ks[4], (12, 12, K5, K5)),
        "conv3_b": nrm(ks[5], (12,)),
        "fc_w": nrm(ks[6], (num_classes, hidden)),   # PyTorch Linear: [out, in]
        "fc_b": nrm(ks[7], (num_classes,)),
    }


if __name__ == "__main__":
    # 16x16 input, stride 2,2,1 convs -> 4x4 spatial, 12 channels -> hidden = 192.
    batch, channel, spatial, num_classes = 2, 3, 16, 10
    hidden = 12 * (spatial // 4) * (spatial // 4)   # 192

    key = jax.random.PRNGKey(0)
    k_params, k_x = jax.random.split(key)
    params = init_params(k_params, channel, hidden, num_classes)
    x = jax.random.normal(k_x, (batch, channel, spatial, spatial), dtype=jnp.float32)

    logits = jax.jit(lenet_forward)(params, x)
    logits = jax.block_until_ready(logits)
    assert logits.shape == (batch, num_classes), logits.shape
    print("KERNEL_OK")
</pallas_src>

<mosaic_0001>
module attributes {stable_mosaic.version = 11 : i64} {
  func.func @_lenet_kernel(%arg0: i32, %arg1: memref<1x64x128xbf16, #tpu.memory_space<vmem>>, %arg2: memref<128x128xbf16, #tpu.memory_space<vmem>>, %arg3: memref<1x128xf32, #tpu.memory_space<vmem>>, %arg4: memref<25x128x128xbf16, #tpu.memory_space<vmem>>, %arg5: memref<1x128xf32, #tpu.memory_space<vmem>>, %arg6: memref<25x128x128xbf16, #tpu.memory_space<vmem>>, %arg7: memref<1x128xf32, #tpu.memory_space<vmem>>, %arg8: memref<16x128x128xbf16, #tpu.memory_space<vmem>>, %arg9: memref<1x128xf32, #tpu.memory_space<vmem>>, %arg10: memref<1x1x128xf32, #tpu.memory_space<vmem>>, %arg11: memref<4x6x6x128xf32, #tpu.memory_space<vmem>>, %arg12: memref<8x8x128xf32, #tpu.memory_space<vmem>>) attributes {dimension_semantics = [#tpu.dimension_semantics<parallel>], iteration_bounds = array<i64: 2>, scalar_prefetch = 0 : i64, scratch_operands = 2 : i64, tpu.core_type = #tpu.core_type<tc>, window_params = [{transform_indices = @transform_0, window_bounds = array<i64: 1, 64, 128>}, {pipeline_mode = #tpu.pipeline_mode<synchronous>, transform_indices = @transform_1, window_bounds = array<i64: 128, 128>}, {pipeline_mode = #tpu.pipeline_mode<synchronous>, transform_indices = @transform_2, window_bounds = array<i64: 1, 128>}, {pipeline_mode = #tpu.pipeline_mode<synchronous>, transform_indices = @transform_3, window_bounds = array<i64: 25, 128, 128>}, {pipeline_mode = #tpu.pipeline_mode<synchronous>, transform_indices = @transform_4, window_bounds = array<i64: 1, 128>}, {pipeline_mode = #tpu.pipeline_mode<synchronous>, transform_indices = @transform_5, window_bounds = array<i64: 25, 128, 128>}, {pipeline_mode = #tpu.pipeline_mode<synchronous>, transform_indices = @transform_6, window_bounds = array<i64: 1, 128>}, {pipeline_mode = #tpu.pipeline_mode<synchronous>, transform_indices = @transform_7, window_bounds = array<i64: 16, 128, 128>}, {pipeline_mode = #tpu.pipeline_mode<synchronous>, transform_indices = @transform_8, window_bounds = array<i64: 1, 128>}, {transform_indices = @transform_9, window_bounds = array<i64: 1, 1, 128>}]} {
    %cst = arith.constant 0.000000e+00 : f32
    %0 = vector.broadcast %cst : f32 to vector<4x6x6x128xf32>
    %c0 = arith.constant 0 : index
    %c0_0 = arith.constant 0 : index
    %c0_1 = arith.constant 0 : index
    %c0_2 = arith.constant 0 : index
    %1 = vector.load %arg11[%c0, %c0_0, %c0_1, %c0_2] : memref<4x6x6x128xf32, #tpu.memory_space<vmem>>, vector<4x6x6x128xf32>
    tpu.vector_store %arg11[%c0, %c0_0, %c0_1, %c0_2], %0 {strides = array<i32>} : memref<4x6x6x128xf32, #tpu.memory_space<vmem>>, vector<4x6x6x128xf32>,
    %cst_3 = arith.constant 0.000000e+00 : f32
    %2 = vector.broadcast %cst_3 : f32 to vector<8x8x128xf32>
    %c0_4 = arith.constant 0 : index
    %c0_5 = arith.constant 0 : index
    %c0_6 = arith.constant 0 : index
    %3 = vector.load %arg12[%c0_4, %c0_5, %c0_6] : memref<8x8x128xf32, #tpu.memory_space<vmem>>, vector<8x8x128xf32>
    tpu.vector_store %arg12[%c0_4, %c0_5, %c0_6], %2 {strides = array<i32>} : memref<8x8x128xf32, #tpu.memory_space<vmem>>, vector<8x8x128xf32>,
    %c0_7 = arith.constant 0 : index
    %c0_8 = arith.constant 0 : index
    %c0_9 = arith.constant 0 : index
    %4 = vector.load %arg1[%c0_7, %c0_8, %c0_9] : memref<1x64x128xbf16, #tpu.memory_space<vmem>>, vector<1x64x128xbf16>
    %5 = vector.shape_cast %4 : vector<1x64x128xbf16> to vector<64x128xbf16>
    %c0_10 = arith.constant 0 : index
    %c0_11 = arith.constant 0 : index
    %6 = vector.load %arg2[%c0_10, %c0_11] : memref<128x128xbf16, #tpu.memory_space<vmem>>, vector<128x128xbf16>
    %cst_12 = arith.constant dense<0.000000e+00> : vector<64x128xf32>
    %7 = tpu.matmul %5, %6, %cst_12 {dimension_numbers = #tpu.dot_dimension_numbers<[1], [0], [0], [1], [0, 0, 1, 1], [], []>} : vector<64x128xbf16>, vector<128x128xbf16>, vector<64x128xf32> -> vector<64x128xf32>
    %c0_13 = arith.constant 0 : index
    %c0_14 = arith.constant 0 : index
    %8 = vector.load %arg3[%c0_13, %c0_14] : memref<1x128xf32, #tpu.memory_space<vmem>>, vector<1x128xf32>
    %9 = vector.broadcast %8 : vector<1x128xf32> to vector<64x128xf32>
    %10 = arith.addf %7, %9 : vector<64x128xf32>
    %cst_15 = arith.constant 0.000000e+00 : f32
    %11 = vector.broadcast %cst_15 : f32 to vector<64x128xf32>
    %12 = arith.subf %11, %10 : vector<64x128xf32>
    %13 = math.exp %12 : vector<64x128xf32>
    %cst_16 = arith.constant 1.000000e+00 : f32
    %14 = vector.broadcast %cst_16 : f32 to vector<64x128xf32>
    %15 = arith.addf %14, %13 : vector<64x128xf32>
    %16 = tpu.reciprocal %15 {approx = true} : vector<64x128xf32> -> vector<64x128xf32>
    %17 = vector.extract_strided_slice %16 {offsets = [0, 0], sizes = [4, 128], strides = [1, 1]} : vector<64x128xf32> to vector<4x128xf32>
    %c0_17 = arith.constant 0 : index
    %c1 = arith.constant 1 : index
    %c1_18 = arith.constant 1 : index
    %c0_19 = arith.constant 0 : index
    %18 = vector.load %arg11[%c0_17, %c1, %c1_18, %c0_19] : memref<4x6x6x128xf32, #tpu.memory_space<vmem>>, vector<1x1x4x128xf32>
    %19 = vector.shape_cast %18 : vector<1x1x4x128xf32> to vector<4x128xf32>
    %20 = vector.shape_cast %17 : vector<4x128xf32> to vector<1x1x4x128xf32>
    tpu.vector_store %arg11[%c0_17, %c1, %c1_18, %c0_19], %20 {strides = array<i32>} : memref<4x6x6x128xf32, #tpu.memory_space<vmem>>, vector<1x1x4x128xf32>,
    %21 = vector.extract_strided_slice %16 {offsets = [4, 0], sizes = [4, 128], strides = [1, 1]} : vector<64x128xf32> to vector<4x128xf32>
    %c0_20 = arith.constant 0 : index
    %c2 = arith.constant 2 : index
    %c1_21 = arith.constant 1 : index
    %c0_22 = arith.constant 0 : index
    %22 = vector.load %arg11[%c0_20, %c2, %c1_21, %c0_22] : memref<4x6x6x128xf32, #tpu.memory_space<vmem>>, vector<1x1x4x128xf32>
    %23 = vector.shape_cast %22 : vector<1x1x4x128xf32> to vector<4x128xf32>
    %24 = vector.shape_cast %21 : vector<4x128xf32> to vector<1x1x4x128xf32>
    tpu.vector_store %arg11[%c0_20, %c2, %c1_21, %c0_22], %24 {strides = array<i32>} : memref<4x6x6x128xf32, #tpu.memory_space<vmem>>, vector<1x1x4x128xf32>,
    %25 = vector.extract_strided_slice %16 {offsets = [8, 0], sizes = [4, 128], strides = [1, 1]} : vector<64x128xf32> to vector<4x128xf32>
    %c0_23 = arith.constant 0 : index
    %c3 = arith.constant 3 : index
    %c1_24 = arith.constant 1 : index
    %c0_25 = arith.constant 0 : index
    %26 = vector.load %arg11[%c0_23, %c3, %c1_24, %c0_25] : memref<4x6x6x128xf32, #tpu.memory_space<vmem>>, vector<1x1x4x128xf32>
    %27 = vector.shape_cast %26 : vector<1x1x4x128xf32> to vector<4x128xf32>
    %28 = vector.shape_cast %25 : vector<4x128xf32> to vector<1x1x4x128xf32>
    tpu.vector_store %arg11[%c0_23, %c3, %c1_24, %c0_25], %28 {strides = array<i32>} : memref<4x6x6x128xf32, #tpu.memory_space<vmem>>, vector<1x1x4x128xf32>,
    %29 = vector.extract_strided_slice %16 {offsets = [12, 0], sizes = [4, 128], strides = [1, 1]} : vector<64x128xf32> to vector<4x128xf32>
    %c0_26 = arith.constant 0 : index
    %c4 = arith.constant 4 : index
    %c1_27 = arith.constant 1 : index
    %c0_28 = arith.constant 0 : index
    %30 = vector.load %arg11[%c0_26, %c4, %c1_27, %c0_28] : memref<4x6x6x128xf32, #tpu.memory_space<vmem>>, vector<1x1x4x128xf32>
    %31 = vector.shape_cast %30 : vector<1x1x4x128xf32> to vector<4x128xf32>
    %32 = vector.shape_cast %29 : vector<4x128xf32> to vector<1x1x4x128xf32>
    tpu.vector_store %arg11[%c0_26, %c4, %c1_27, %c0_28], %32 {strides = array<i32>} : memref<4x6x6x128xf32, #tpu.memory_space<vmem>>, vector<1x1x4x128xf32>,
    %33 = vector.extract_strided_slice %16 {offsets = [16, 0], sizes = [4, 128], strides = [1, 1]} : vector<64x128xf32> to vector<4x128xf32>
    %c1_29 = arith.constant 1 : index
    %c1_30 = arith.constant 1 : index
    %c1_31 = arith.constant 1 : index
    %c0_32 = arith.constant 0 : index
    %34 = vector.load %arg11[%c1_29, %c1_30, %c1_31, %c0_32] : memref<4x6x6x128xf32, #tpu.memory_space<vmem>>, vector<1x1x4x128xf32>
    %35 = vector.shape_cast %34 : vector<1x1x4x128xf32> to vector<4x128xf32>
    %36 = vector.shape_cast %33 : vector<4x128xf32> to vector<1x1x4x128xf32>
    tpu.vector_store %arg11[%c1_29, %c1_30, %c1_31, %c0_32], %36 {strides = array<i32>} : memref<4x6x6x128xf32, #tpu.memory_space<vmem>>, vector<1x1x4x128xf32>,
    %37 = vector.extract_strided_slice %16 {offsets = [20, 0], sizes = [4, 128], strides = [1, 1]} : vector<64x128xf32> to vector<4x128xf32>
    %c1_33 = arith.constant 1 : index
    %c2_34 = arith.constant 2 : index
    %c1_35 = arith.constant 1 : index
    %c0_36 = arith.constant 0 : index
    %38 = vector.load %arg11[%c1_33, %c2_34, %c1_35, %c0_36] : memref<4x6x6x128xf32, #tpu.memory_space<vmem>>, vector<1x1x4x128xf32>
    %39 = vector.shape_cast %38 : vector<1x1x4x128xf32> to vector<4x128xf32>
    %40 = vector.shape_cast %37 : vector<4x128xf32> to vector<1x1x4x128xf32>
    tpu.vector_store %arg11[%c1_33, %c2_34, %c1_35, %c0_36], %40 {strides = array<i32>} : memref<4x6x6x128xf32, #tpu.memory_space<vmem>>, vector<1x1x4x128xf32>,
    %41 = vector.extract_strided_slice %16 {offsets = [24, 0], sizes = [4, 128], strides = [1, 1]} : vector<64x128xf32> to vector<4x128xf32>
    %c1_37 = arith.constant 1 : index
    %c3_38 = arith.constant 3 : index
    %c1_39 = arith.constant 1 : index
    %c0_40 = arith.constant 0 : index
    %42 = vector.load %arg11[%c1_37, %c3_38, %c1_39, %c0_40] : memref<4x6x6x128xf32, #tpu.memory_space<vmem>>, vector<1x1x4x128xf32>
    %43 = vector.shape_cast %42 : vector<1x1x4x128xf32> to vector<4x128xf32>
    %44 = vector.shape_cast %41 : vector<4x128xf32> to vector<1x1x4x128xf32>
    tpu.vector_store %arg11[%c1_37, %c3_38, %c1_39, %c0_40], %44 {strides = array<i32>} : memref<4x6x6x128xf32, #tpu.memory_space<vmem>>, vector<1x1x4x128xf32>,
    %45 = vector.extract_strided_slice %16 {offsets = [28, 0], sizes = [4, 128], strides = [1, 1]} : vector<64x128xf32> to vector<4x128xf32>
    %c1_41 = arith.constant 1 : index
    %c4_42 = arith.constant 4 : index
    %c1_43 = arith.constant 1 : index
    %c0_44 = arith.constant 0 : index
    %46 = vector.load %arg11[%c1_41, %c4_42, %c1_43, %c0_44] : memref<4x6x6x128xf32, #tpu.memory_space<vmem>>, vector<1x1x4x128xf32>
    %47 = vector.shape_cast %46 : vector<1x1x4x128xf32> to vector<4x128xf32>
    %48 = vector.shape_cast %45 : vector<4x128xf32> to vector<1x1x4x128xf32>
    tpu.vector_store %arg11[%c1_41, %c4_42, %c1_43, %c0_44], %48 {strides = array<i32>} : memref<4x6x6x128xf32, #tpu.memory_space<vmem>>, vector<1x1x4x128xf32>,
    %49 = vector.extract_strided_slice %16 {offsets = [32, 0], sizes = [4, 128], strides = [1, 1]} : vector<64x128xf32> to vector<4x128xf32>
    %c2_45 = arith.constant 2 : index
    %c1_46 = arith.constant 1 : index
    %c1_47 = arith.constant 1 : index
    %c0_48 = arith.constant 0 : index
    %50 = vector.load %arg11[%c2_45, %c1_46, %c1_47, %c0_48] : memref<4x6x6x128xf32, #tpu.memory_space<vmem>>, vector<1x1x4x128xf32>
    %51 = vector.shape_cast %50 : vector<1x1x4x128xf32> to vector<4x128xf32>
    %52 = vector.shape_cast %49 : vector<4x128xf32> to vector<1x1x4x128xf32>
    tpu.vector_store %arg11[%c2_45, %c1_46, %c1_47, %c0_48], %52 {strides = array<i32>} : memref<4x6x6x128xf32, #tpu.memory_space<vmem>>, vector<1x1x4x128xf32>,
    %53 = vector.extract_strided_slice %16 {offsets = [36, 0], sizes = [4, 128], strides = [1, 1]} : vector<64x128xf32> to vector<4x128xf32>
    %c2_49 = arith.constant 2 : index
    %c2_50 = arith.constant 2 : index
    %c1_51 = arith.constant 1 : index
    %c0_52 = arith.constant 0 : index
    %54 = vector.load %arg11[%c2_49, %c2_50, %c1_51, %c0_52] : memref<4x6x6x128xf32, #tpu.memory_space<vmem>>, vector<1x1x4x128xf32>
    %55 = vector.shape_cast %54 : vector<1x1x4x128xf32> to vector<4x128xf32>
    %56 = vector.shape_cast %53 : vector<4x128xf32> to vector<1x1x4x128xf32>
    tpu.vector_store %arg11[%c2_49, %c2_50, %c1_51, %c0_52], %56 {strides = array<i32>} : memref<4x6x6x128xf32, #tpu.memory_space<vmem>>, vector<1x1x4x128xf32>,
    %57 = vector.extract_strided_slice %16 {offsets = [40, 0], sizes = [4, 128], strides = [1, 1]} : vector<64x128xf32> to vector<4x128xf32>
    %c2_53 = arith.constant 2 : index
    %c3_54 = arith.constant 3 : index
    %c1_55 = arith.constant 1 : index
    %c0_56 = arith.constant 0 : index
    %58 = vector.load %arg11[%c2_53, %c3_54, %c1_55, %c0_56] : memref<4x6x6x128xf32, #tpu.memory_space<vmem>>, vector<1x1x4x128xf32>
    %59 = vector.shape_cast %58 : vector<1x1x4x128xf32> to vector<4x128xf32>
    %60 = vector.shape_cast %57 : vector<4x128xf32> to vector<1x1x4x128xf32>
    tpu.vector_store %arg11[%c2_53, %c3_54, %c1_55, %c0_56], %60 {strides = array<i32>} : memref<4x6x6x128xf32, #tpu.memory_space<vmem>>, vector<1x1x4x128xf32>,
    %61 = vector.extract_strided_slice %16 {offsets = [44, 0], sizes = [4, 128], strides = [1, 1]} : vector<64x128xf32> to vector<4x128xf32>
    %c2_57 = arith.constant 2 : index
    %c4_58 = arith.constant 4 : index
    %c1_59 = arith.constant 1 : index
    %c0_60 = arith.constant 0 : index
    %62 = vector.load %arg11[%c2_57, %c4_58, %c1_59, %c0_60] : memref<4x6x6x128xf32, #tpu.memory_space<vmem>>, vector<1x1x4x128xf32>
    %63 = vector.shape_cast %62 : vector<1x1x4x128xf32> to vector<4x128xf32>
    %64 = vector.shape_cast %61 : vector<4x128xf32> to vector<1x1x4x128xf32>
    tpu.vector_store %arg11[%c2_57, %c4_58, %c1_59, %c0_60], %64 {strides = array<i32>} : memref<4x6x6x128xf32, #tpu.memory_space<vmem>>, vector<1x1x4x128xf32>,
    %65 = vector.extract_strided_slice %16 {offsets = [48, 0], sizes = [4, 128], strides = [1, 1]} : vector<64x128xf32> to vector<4x128xf32>
    %c3_61 = arith.constant 3 : index
    %c1_62 = arith.constant 1 : index
    %c1_63 = arith.constant 1 : index
    %c0_64 = arith.constant 0 : index
    %66 = vector.load %arg11[%c3_61, %c1_62, %c1_63, %c0_64] : memref<4x6x6x128xf32, #tpu.memory_space<vmem>>, vector<1x1x4x128xf32>
    %67 = vector.shape_cast %66 : vector<1x1x4x128xf32> to vector<4x128xf32>
    %68 = vector.shape_cast %65 : vector<4x128xf32> to vector<1x1x4x128xf32>
    tpu.vector_store %arg11[%c3_61, %c1_62, %c1_63, %c0_64], %68 {strides = array<i32>} : memref<4x6x6x128xf32, #tpu.memory_space<vmem>>, vector<1x1x4x128xf32>,
    %69 = vector.extract_strided_slice %16 {offsets = [52, 0], sizes = [4, 128], strides = [1, 1]} : vector<64x128xf32> to vector<4x128xf32>
    %c3_65 = arith.constant 3 : index
    %c2_66 = arith.constant 2 : index
    %c1_67 = arith.constant 1 : index
    %c0_68 = arith.constant 0 : index
    %70 = vector.load %arg11[%c3_65, %c2_66, %c1_67, %c0_68] : memref<4x6x6x128xf32, #tpu.memory_space<vmem>>, vector<1x1x4x128xf32>
    %71 = vector.shape_cast %70 : vector<1x1x4x128xf32> to vector<4x128xf32>
    %72 = vector.shape_cast %69 : vector<4x128xf32> to vector<1x1x4x128xf32>
    tpu.vector_store %arg11[%c3_65, %c2_66, %c1_67, %c0_68], %72 {strides = array<i32>} : memref<4x6x6x128xf32, #tpu.memory_space<vmem>>, vector<1x1x4x128xf32>,
    %73 = vector.extract_strided_slice %16 {offsets = [56, 0], sizes = [4, 128], strides = [1, 1]} : vector<64x128xf32> to vector<4x128xf32>
    %c3_69 = arith.constant 3 : index
    %c3_70 = arith.constant 3 : index
    %c1_71 = arith.constant 1 : index
    %c0_72 = arith.constant 0 : index
    %74 = vector.load %arg11[%c3_69, %c3_70, %c1_71, %c0_72] : memref<4x6x6x128xf32, #tpu.memory_space<vmem>>, vector<1x1x4x128xf32>
    %75 = vector.shape_cast %74 : vector<1x1x4x128xf32> to vector<4x128xf32>
    %76 = vector.shape_cast %73 : vector<4x128xf32> to vector<1x1x4x128xf32>
    tpu.vector_store %arg11[%c3_69, %c3_70, %c1_71, %c0_72], %76 {strides = array<i32>} : memref<4x6x6x128xf32, #tpu.memory_space<vmem>>, vector<1x1x4x128xf32>,
    %77 = vector.extract_strided_slice %16 {offsets = [60, 0], sizes = [4, 128], strides = [1, 1]} : vector<64x128xf32> to vector<4x128xf32>
    %c3_73 = arith.constant 3 : index
    %c4_74 = arith.constant 4 : index
    %c1_75 = arith.constant 1 : index
    %c0_76 = arith.constant 0 : index
    %78 = vector.load %arg11[%c3_73, %c4_74, %c1_75, %c0_76] : memref<4x6x6x128xf32, #tpu.memory_space<vmem>>, vector<1x1x4x128xf32>
    %79 = vector.shape_cast %78 : vector<1x1x4x128xf32> to vector<4x128xf32>
    %80 = vector.shape_cast %77 : vector<4x128xf32> to vector<1x1x4x128xf32>
    tpu.vector_store %arg11[%c3_73, %c4_74, %c1_75, %c0_76], %80 {strides = array<i32>} : memref<4x6x6x128xf32, #tpu.memory_space<vmem>>, vector<1x1x4x128xf32>,
    %cst_77 = arith.constant 0.000000e+00 : f32
    %81 = vector.broadcast %cst_77 : f32 to vector<16x128xf32>
    %c0_78 = arith.constant 0 : index
    %c0_79 = arith.constant 0 : index
    %c0_80 = arith.constant 0 : index
    %c0_81 = arith.constant 0 : index
    %82 = vector.load %arg11[%c0_78, %c0_79, %c0_80, %c0_81] : memref<4x6x6x128xf32, #tpu.memory_space<vmem>>, vector<1x1x4x128xf32>
    %83 = vector.shape_cast %82 : vector<1x1x4x128xf32> to vector<4x128xf32>
    %c0_82 = arith.constant 0 : index
    %c1_83 = arith.constant 1 : index
    %c0_84 = arith.constant 0 : index
    %c0_85 = arith.constant 0 : index
    %84 = vector.load %arg11[%c0_82, %c1_83, %c0_84, %c0_85] : memref<4x6x6x128xf32, #tpu.memory_space<vmem>>, vector<1x1x4x128xf32>
    %85 = vector.shape_cast %84 : vector<1x1x4x128xf32> to vector<4x128xf32>
    %c0_86 = arith.constant 0 : index
    %c2_87 = arith.constant 2 : index
    %c0_88 = arith.constant 0 : index
    %c0_89 = arith.constant 0 : index
    %86 = vector.load %arg11[%c0_86, %c2_87, %c0_88, %c0_89] : memref<4x6x6x128xf32, #tpu.memory_space<vmem>>, vector<1x1x4x128xf32>
    %87 = vector.shape_cast %86 : vector<1x1x4x128xf32> to vector<4x128xf32>
    %c0_90 = arith.constant 0 : index
    %c3_91 = arith.constant 3 : index
    %c0_92 = arith.constant 0 : index
    %c0_93 = arith.constant 0 : index
    %88 = vector.load %arg11[%c0_90, %c3_91, %c0_92, %c0_93] : memref<4x6x6x128xf32, #tpu.memory_space<vmem>>, vector<1x1x4x128xf32>
    %89 = vector.shape_cast %88 : vector<1x1x4x128xf32> to vector<4x128xf32>
    %90 = tpu.concatenate %83, %85, %87, %89 in 0 : vector<4x128xf32>, vector<4x128xf32>, vector<4x128xf32>, vector<4x128xf32> -> vector<16x128xf32>
    %91 = arith.truncf %90 : vector<16x128xf32> to vector<16x128xbf16>
    %c0_94 = arith.constant 0 : index
    %c0_95 = arith.constant 0 : index
    %c0_96 = arith.constant 0 : index
    %92 = vector.load %arg4[%c0_94, %c0_95, %c0_96] : memref<25x128x128xbf16, #tpu.memory_space<vmem>>, vector<1x128x128xbf16>
    %93 = vector.shape_cast %92 : vector<1x128x128xbf16> to vector<128x128xbf16>
    %cst_97 = arith.constant dense<0.000000e+00> : vector<16x128xf32>
    %94 = tpu.matmul %91, %93, %cst_97 {dimension_numbers = #tpu.dot_dimension_numbers<[1], [0], [0], [1], [0, 0, 1, 1], [], []>} : vector<16x128xbf16>, vector<128x128xbf16>, vector<16x128xf32> -> vector<16x128xf32>
    %95 = arith.addf %81, %94 : vector<16x128xf32>
    %c0_98 = arith.constant 0 : index
    %c0_99 = arith.constant 0 : index
    %c1_100 = arith.constant 1 : index
    %c0_101 = arith.constant 0 : index
    %96 = vector.load %arg11[%c0_98, %c0_99, %c1_100, %c0_101] : memref<4x6x6x128xf32, #tpu.memory_space<vmem>>, vector<1x1x4x128xf32>
    %97 = vector.shape_cast %96 : vector<1x1x4x128xf32> to vector<4x128xf32>
    %c0_102 = arith.constant 0 : index
    %c1_103 = arith.constant 1 : index
    %c1_104 = arith.constant 1 : index
    %c0_105 = arith.constant 0 : index
    %98 = vector.load %arg11[%c0_102, %c1_103, %c1_104, %c0_105] : memref<4x6x6x128xf32, #tpu.memory_space<vmem>>, vector<1x1x4x128xf32>
    %99 = vector.shape_cast %98 : vector<1x1x4x128xf32> to vector<4x128xf32>
    %c0_106 = arith.constant 0 : index
    %c2_107 = arith.constant 2 : index
    %c1_108 = arith.constant 1 : index
    %c0_109 = arith.constant 0 : index
    %100 = vector.load %arg11[%c0_106, %c2_107, %c1_108, %c0_109] : memref<4x6x6x128xf32, #tpu.memory_space<vmem>>, vector<1x1x4x128xf32>
    %101 = vector.shape_cast %100 : vector<1x1x4x128xf32> to vector<4x128xf32>
    %c0_110 = arith.constant 0 : index
    %c3_111 = arith.constant 3 : index
    %c1_112 = arith.constant 1 : index
    %c0_113 = arith.constant 0 : index
    %102 = vector.load %arg11[%c0_110, %c3_111, %c1_112, %c0_113] : memref<4x6x6x128xf32, #tpu.memory_space<vmem>>, vector<1x1x4x128xf32>
    %103 = vector.shape_cast %102 : vector<1x1x4x128xf32> to vector<4x128xf32>
    %104 = tpu.concatenate %97, %99, %101, %103 in 0 : vector<4x128xf32>, vector<4x128xf32>, vector<4x128xf32>, vector<4x128xf32> -> vector<16x128xf32>
    %105 = arith.truncf %104 : vector<16x128xf32> to vector<16x128xbf16>
    %c2_114 = arith.constant 2 : index
    %c0_115 = arith.constant 0 : index
    %c0_116 = arith.constant 0 : index
    %106 = vector.load %arg4[%c2_114, %c0_115, %c0_116] : memref<25x128x128xbf16, #tpu.memory_space<vmem>>, vector<1x128x128xbf16>
    %107 = vector.shape_cast %106 : vector<1x128x128xbf16> to vector<128x128xbf16>
    %cst_117 = arith.constant dense<0.000000e+00> : vector<16x128xf32>
    %108 = tpu.matmul %105, %107, %cst_117 {dimension_numbers = #tpu.dot_dimension_numbers<[1], [0], [0], [1], [0, 0, 1, 1], [], []>} : vector<16x128xbf16>, vector<128x128xbf16>, vector<16x128xf32> -> vector<16x128xf32>
    %109 = arith.addf %95, %108 : vector<16x128xf32>
    %c0_118 = arith.constant 0 : index
    %c0_119 = arith.constant 0 : index
    %c2_120 = arith.constant 2 : index
    %c0_121 = arith.constant 0 : index
    %110 = vector.load %arg11[%c0_118, %c0_119, %c2_120, %c0_121] : memref<4x6x6x128xf32, #tpu.memory_space<vmem>>, vector<1x1x4x128xf32>
    %111 = vector.shape_cast %110 : vector<1x1x4x128xf32> to vector<4x128xf32>
    %c0_122 = arith.constant 0 : index
    %c1_123 = arith.constant 1 : index
    %c2_124 = arith.constant 2 : index
    %c0_125 = arith.constant 0 : index
    %112 = vector.load %arg11[%c0_122, %c1_123, %c2_124, %c0_125] : memref<4x6x6x128xf32, #tpu.memory_space<vmem>>, vector<1x1x4x128xf32>
    %113 = vector.shape_cast %112 : vector<1x1x4x128xf32> to vector<4x128xf32>
    %c0_126 = arith.constant 0 : index
    %c2_127 = arith.constant 2 : index
    %c2_128 = arith.constant 2 : index
    %c0_129 = arith.constant 0 : index
    %114 = vector.load %arg11[%c0_126, %c2_127, %c2_128, %c0_129] : memref<4x6x6x128xf32, #tpu.memory_space<vmem>>, vector<1x1x4x128xf32>
    %115 = vector.shape_cast %114 : vector<1x1x4x128xf32> to vector<4x128xf32>
    %c0_130 = arith.constant 0 : index
    %c3_131 = arith.constant 3 : index
    %c2_132 = arith.constant 2 : index
    %c0_133 = arith.constant 0 : index
    %116 = vector.load %arg11[%c0_130, %c3_131, %c2_132, %c0_133] : memref<4x6x6x128xf32, #tpu.memory_space<vmem>>, vector<1x1x4x128xf32>
    %117 = vector.shape_cast %116 : vector<1x1x4x128xf32> to vector<4x128xf32>
    %118 = tpu.concatenate %111, %113, %115, %117 in 0 : vector<4x128xf32>, vector<4x128xf32>, vector<4x128xf32>, vector<4x128xf32> -> vector<16x128xf32>
    %119 = arith.truncf %118 : vector<16x128xf32> to vector<16x128xbf16>
    %c4_134 = arith.constant 4 : index
    %c0_135 = arith.constant 0 : index
    %c0_136 = arith.constant 0 : index
    %120 = vector.load %arg4[%c4_134, %c0_135, %c0_136] : memref<25x128x128xbf16, #tpu.memory_space<vmem>>, vector<1x128x128xbf16>
    %121 = vector.shape_cast %120 : vector<1x128x128xbf16> to vector<128x128xbf16>
    %cst_137 = arith.constant dense<0.000000e+00> : vector<16x128xf32>
    %122 = tpu.matmul %119, %121, %cst_137 {dimension_numbers = #tpu.dot_dimension_numbers<[1], [0], [0], [1], [0, 0, 1, 1], [], []>} : vector<16x128xbf16>, vector<128x128xbf16>, vector<16x128xf32> -> vector<16x128xf32>
    %123 = arith.addf %109, %122 : vector<16x128xf32>
    %c0_138 = arith.constant 0 : index
    %c1_139 = arith.constant 1 : index
    %c0_140 = arith.constant 0 : index
    %c0_141 = arith.constant 0 : index
    %124 = vector.load %arg11[%c0_138, %c1_139, %c0_140, %c0_141] : memref<4x6x6x128xf32, #tpu.memory_space<vmem>>, vector<1x1x4x128xf32>
    %125 = vector.shape_cast %124 : vector<1x1x4x128xf32> to vector<4x128xf32>
    %c0_142 = arith.constant 0 : index
    %c2_143 = arith.constant 2 : index
    %c0_144 = arith.constant 0 : index
    %c0_145 = arith.constant 0 : index
    %126 = vector.load %arg11[%c0_142, %c2_143, %c0_144, %c0_145] : memref<4x6x6x128xf32, #tpu.memory_space<vmem>>, vector<1x1x4x128xf32>
    %127 = vector.shape_cast %126 : vector<1x1x4x128xf32> to vector<4x128xf32>
    %c0_146 = arith.constant 0 : index
    %c3_147 = arith.constant 3 : index
    %c0_148 = arith.constant 0 : index
    %c0_149 = arith.constant 0 : index
    %128 = vector.load %arg11[%c0_146, %c3_147, %c0_148, %c0_149] : memref<4x6x6x128xf32, #tpu.memory_space<vmem>>, vector<1x1x4x128xf32>
    %129 = vector.shape_cast %128 : vector<1x1x4x128xf32> to vector<4x128xf32>
    %c0_150 = arith.constant 0 : index
    %c4_151 = arith.constant 4 : index
    %c0_152 = arith.constant 0 : index
    %c0_153 = arith.constant 0 : index
    %130 = vector.load %arg11[%c0_150, %c4_151, %c0_152, %c0_153] : memref<4x6x6x128xf32, #tpu.memory_space<vmem>>, vector<1x1x4x128xf32>
    %131 = vector.shape_cast %130 : vector<1x1x4x128xf32> to vector<4x128xf32>
    %132 = tpu.concatenate %125, %127, %129, %131 in 0 : vector<4x128xf32>, vector<4x128xf32>, vector<4x128xf32>, vector<4x128xf32> -> vector<16x128xf32>
    %133 = arith.truncf %132 : vector<16x128xf32> to vector<16x128xbf16>
    %c10 = arith.constant 10 : index
    %c0_154 = arith.constant 0 : index
    %c0_155 = arith.constant 0 : index
    %134 = vector.load %arg4[%c10, %c0_154, %c0_155] : memref<25x128x128xbf16, #tpu.memory_space<vmem>>, vector<1x128x128xbf16>
    %135 = vector.shape_cast %134 : vector<1x128x128xbf16> to vector<128x128xbf16>
    %cst_156 = arith.constant dense<0.000000e+00> : vector<16x128xf32>
    %136 = tpu.matmul %133, %135, %cst_156 {dimension_numbers = #tpu.dot_dimension_numbers<[1], [0], [0], [1], [0, 0, 1, 1], [], []>} : vector<16x128xbf16>, vector<128x128xbf16>, vector<16x128xf32> -> vector<16x128xf32>
    %137 = arith.addf %123, %136 : vector<16x128xf32>
    %c0_157 = arith.constant 0 : index
    %c1_158 = arith.constant 1 : index
    %c1_159 = arith.constant 1 : index
    %c0_160 = arith.constant 0 : index
    %138 = vector.load %arg11[%c0_157, %c1_158, %c1_159, %c0_160] : memref<4x6x6x128xf32, #tpu.memory_space<vmem>>, vector<1x1x4x128xf32>
    %139 = vector.shape_cast %138 : vector<1x1x4x128xf32> to vector<4x128xf32>
    %c0_161 = arith.constant 0 : index
    %c2_162 = arith.constant 2 : index
    %c1_163 = arith.constant 1 : index
    %c0_164 = arith.constant 0 : index
    %140 = vector.load %arg11[%c0_161, %c2_162, %c1_163, %c0_164] : memref<4x6x6x128xf32, #tpu.memory_space<vmem>>, vector<1x1x4x128xf32>
    %141 = vector.shape_cast %140 : vector<1x1x4x128xf32> to vector<4x128xf32>
    %c0_165 = arith.constant 0 : index
    %c3_166 = arith.constant 3 : index
    %c1_167 = arith.constant 1 : index
    %c0_168 = arith.constant 0 : index
    %142 = vector.load %arg11[%c0_165, %c3_166, %c1_167, %c0_168] : memref<4x6x6x128xf32, #tpu.memory_space<vmem>>, vector<1x1x4x128xf32>
    %143 = vector.shape_cast %142 : vector<1x1x4x128xf32> to vector<4x128xf32>
    %c0_169 = arith.constant 0 : index
    %c4_170 = arith.constant 4 : index
    %c1_171 = arith.constant 1 : index
    %c0_172 = arith.constant 0 : index
    %144 = vector.load %arg11[%c0_169, %c4_170, %c1_171, %c0_172] : memref<4x6x6x128xf32, #tpu.memory_space<vmem>>, vector<1x1x4x128xf32>
    %145 = vector.shape_cast %144 : vector<1x1x4x128xf32> to vector<4x128xf32>
    %146 = tpu.concatenate %139, %141, %143, %145 in 0 : vector<4x128xf32>, vector<4x128xf32>, vector<4x128xf32>, vector<4x128xf32> -> vector<16x128xf32>
    %147 = arith.truncf %146 : vector<16x128xf32> to vector<16x128xbf16>
    %c12 = arith.constant 12 : index
    %c0_173 = arith.constant 0 : index
    %c0_174 = arith.constant 0 : index
    %148 = vector.load %arg4[%c12, %c0_173, %c0_174] : memref<25x128x128xbf16, #tpu.memory_space<vmem>>, vector<1x128x128xbf16>
    %149 = vector.shape_cast %148 : vector<1x128x128xbf16> to vector<128x128xbf16>
    %cst_175 = arith.constant dense<0.000000e+00> : vector<16x128xf32>
    %150 = tpu.matmul %147, %149, %cst_175 {dimension_numbers = #tpu.dot_dimension_numbers<[1], [0], [0], [1], [0, 0, 1, 1], [], []>} : vector<16x128xbf16>, vector<128x128xbf16>, vector<16x128xf32> -> vector<16x128xf32>
    %151 = arith.addf %137, %150 : vector<16x128xf32>
    %c0_176 = arith.constant 0 : index
    %c1_177 = arith.constant 1 : index
    %c2_178 = arith.constant 2 : index
    %c0_179 = arith.constant 0 : index
    %152 = vector.load %arg11[%c0_176, %c1_177, %c2_178, %c0_179] : memref<4x6x6x128xf32, #tpu.memory_space<vmem>>, vector<1x1x4x128xf32>
    %153 = vector.shape_cast %152 : vector<1x1x4x128xf32> to vector<4x128xf32>
    %c0_180 = arith.constant 0 : index
    %c2_181 = arith.constant 2 : index
    %c2_182 = arith.constant 2 : index
    %c0_183 = arith.constant 0 : index
    %154 = vector.load %arg11[%c0_180, %c2_181, %c2_182, %c0_183] : memref<4x6x6x128xf32, #tpu.memory_space<vmem>>, vector<1x1x4x128xf32>
    %155 = vector.shape_cast %154 : vector<1x1x4x128xf32> to vector<4x128xf32>
    %c0_184 = arith.constant 0 : index
    %c3_185 = arith.constant 3 : index
    %c2_186 = arith.constant 2 : index
    %c0_187 = arith.constant 0 : index
    %156 = vector.load %arg11[%c0_184, %c3_185, %c2_186, %c0_187] : memref<4x6x6x128xf32, #tpu.memory_space<vmem>>, vector<1x1x4x128xf32>
    %157 = vector.shape_cast %156 : vector<1x1x4x128xf32> to vector<4x128xf32>
    %c0_188 = arith.constant 0 : index
    %c4_189 = arith.constant 4 : index
    %c2_190 = arith.constant 2 : index
    %c0_191 = arith.constant 0 : index
    %158 = vector.load %arg11[%c0_188, %c4_189, %c2_190, %c0_191] : memref<4x6x6x128xf32, #tpu.memory_space<vmem>>, vector<1x1x4x128xf32>
    %159 = vector.shape_cast %158 : vector<1x1x4x128xf32> to vector<4x128xf32>
    %160 = tpu.concatenate %153, %155, %157, %159 in 0 : vector<4x128xf32>, vector<4x128xf32>, vector<4x128xf32>, vector<4x128xf32> -> vector<16x128xf32>
    %161 = arith.truncf %160 : vector<16x128xf32> to vector<16x128xbf16>
    %c14 = arith.constant 14 : index
    %c0_192 = arith.constant 0 : index
    %c0_193 = arith.constant 0 : index
    %162 = vector.load %arg4[%c14, %c0_192, %c0_193] : memref<25x128x128xbf16, #tpu.memory_space<vmem>>, vector<1x128x128xbf16>
    %163 = vector.shape_cast %162 : vector<1x128x128xbf16> to vector<128x128xbf16>
    %cst_194 = arith.constant dense<0.000000e+00> : vector<16x128xf32>
    %164 = tpu.matmul %161, %163, %cst_194 {dimension_numbers = #tpu.dot_dimension_numbers<[1], [0], [0], [1], [0, 0, 1, 1], [], []>} : vector<16x128xbf16>, vector<128x128xbf16>, vector<16x128xf32> -> vector<16x128xf32>
    %165 = arith.addf %151, %164 : vector<16x128xf32>
    %c0_195 = arith.constant 0 : index
    %c2_196 = arith.constant 2 : index
    %c0_197 = arith.constant 0 : index
    %c0_198 = arith.constant 0 : index
    %166 = vector.load %arg11[%c0_195, %c2_196, %c0_197, %c0_198] : memref<4x6x6x128xf32, #tpu.memory_space<vmem>>, vector<1x1x4x128xf32>
    %167 = vector.shape_cast %166 : vector<1x1x4x128xf32> to vector<4x128xf32>
    %c0_199 = arith.constant 0 : index
    %c3_200 = arith.constant 3 : index
    %c0_201 = arith.constant 0 : index
    %c0_202 = arith.constant 0 : index
    %168 = vector.load %arg11[%c0_199, %c3_200, %c0_201, %c0_202] : memref<4x6x6x128xf32, #tpu.memory_space<vmem>>, vector<1x1x4x128xf32>
    %169 = vector.shape_cast %168 : vector<1x1x4x128xf32> to vector<4x128xf32>
    %c0_203 = arith.constant 0 : index
    %c4_204 = arith.constant 4 : index
    %c0_205 = arith.constant 0 : index
    %c0_206 = arith.constant 0 : index
    %170 = vector.load %arg11[%c0_203, %c4_204, %c0_205, %c0_206] : memref<4x6x6x128xf32, #tpu.memory_space<vmem>>, vector<1x1x4x128xf32>
    %171 = vector.shape_cast %170 : vector<1x1x4x128xf32> to vector<4x128xf32>
    %c0_207 = arith.constant 0 : index
    %c5 = arith.constant 5 : index
    %c0_208 = arith.constant 0 : index
    %c0_209 = arith.constant 0 : index
    %172 = vector.load %arg11[%c0_207, %c5, %c0_208, %c0_209] : memref<4x6x6x128xf32, #tpu.memory_space<vmem>>, vector<1x1x4x128xf32>
    %173 = vector.shape_cast %172 : vector<1x1x4x128xf32> to vector<4x128xf32>
    %174 = tpu.concatenate %167, %169, %171, %173 in 0 : vector<4x128xf32>, vector<4x128xf32>, vector<4x128xf32>, vector<4x128xf32> -> vector<16x128xf32>
    %175 = arith.truncf %174 : vector<16x128xf32> to vector<16x128xbf16>
    %c20 = arith.constant 20 : index
    %c0_210 = arith.constant 0 : index
    %c0_211 = arith.constant 0 : index
    %176 = vector.load %arg4[%c20, %c0_210, %c0_211] : memref<25x128x128xbf16, #tpu.memory_space<vmem>>, vector<1x128x128xbf16>
    %177 = vector.shape_cast %176 : vector<1x128x128xbf16> to vector<128x128xbf16>
    %cst_212 = arith.constant dense<0.000000e+00> : vector<16x128xf32>
    %178 = tpu.matmul %175, %177, %cst_212 {dimension_numbers = #tpu.dot_dimension_numbers<[1], [0], [0], [1], [0, 0, 1, 1], [], []>} : vector<16x128xbf16>, vector<128x128xbf16>, vector<16x128xf32> -> vector<16x128xf32>
    %179 = arith.addf %165, %178 : vector<16x128xf32>
    %c0_213 = arith.constant 0 : index
    %c2_214 = arith.constant 2 : index
    %c1_215 = arith.constant 1 : index
    %c0_216 = arith.constant 0 : index
    %180 = vector.load %arg11[%c0_213, %c2_214, %c1_215, %c0_216] : memref<4x6x6x128xf32, #tpu.memory_space<vmem>>, vector<1x1x4x128xf32>
    %181 = vector.shape_cast %180 : vector<1x1x4x128xf32> to vector<4x128xf32>
    %c0_217 = arith.constant 0 : index
    %c3_218 = arith.constant 3 : index
    %c1_219 = arith.constant 1 : index
    %c0_220 = arith.constant 0 : index
    %182 = vector.load %arg11[%c0_217, %c3_218, %c1_219, %c0_220] : memref<4x6x6x128xf32, #tpu.memory_space<vmem>>, vector<1x1x4x128xf32>
    %183 = vector.shape_cast %182 : vector<1x1x4x128xf32> to vector<4x128xf32>
    %c0_221 = arith.constant 0 : index
    %c4_222 = arith.constant 4 : index
    %c1_223 = arith.constant 1 : index
    %c0_224 = arith.constant 0 : index
    %184 = vector.load %arg11[%c0_221, %c4_222, %c1_223, %c0_224] : memref<4x6x6x128xf32, #tpu.memory_space<vmem>>, vector<1x1x4x128xf32>
    %185 = vector.shape_cast %184 : vector<1x1x4x128xf32> to vector<4x128xf32>
    %c0_225 = arith.constant 0 : index
    %c5_226 = arith.constant 5 : index
    %c1_227 = arith.constant 1 : index
    %c0_228 = arith.constant 0 : index
    %186 = vector.load %arg11[%c0_225, %c5_226, %c1_227, %c0_228] : memref<4x6x6x128xf32, #tpu.memory_space<vmem>>, vector<1x1x4x128xf32>
    %187 = vector.shape_cast %186 : vector<1x1x4x128xf32> to vector<4x128xf32>
    %188 = tpu.concatenate %181, %183, %185, %187 in 0 : vector<4x128xf32>, vector<4x128xf32>, vector<4x128xf32>, vector<4x128xf32> -> vector<16x128xf32>
    %189 = arith.truncf %188 : vector<16x128xf32> to vector<16x128xbf16>
    %c22 = arith.constant 22 : index
    %c0_229 = arith.constant 0 : index
    %c0_230 = arith.constant 0 : index
    %190 = vector.load %arg4[%c22, %c0_229, %c0_230] : memref<25x128x128xbf16, #tpu.memory_space<vmem>>, vector<1x128x128xbf16>
    %191 = vector.shape_cast %190 : vector<1x128x128xbf16> to vector<128x128xbf16>
    %cst_231 = arith.constant dense<0.000000e+00> : vector<16x128xf32>
    %192 = tpu.matmul %189, %191, %cst_231 {dimension_numbers = #tpu.dot_dimension_numbers<[1], [0], [0], [1], [0, 0, 1, 1], [], []>} : vector<16x128xbf16>, vector<128x128xbf16>, vector<16x128xf32> -> vector<16x128xf32>
    %193 = arith.addf %179, %192 : vector<16x128xf32>
    %c0_232 = arith.constant 0 : index
    %c2_233 = arith.constant 2 : index
    %c2_234 = arith.constant 2 : index
    %c0_235 = arith.constant 0 : index
    %194 = vector.load %arg11[%c0_232, %c2_233, %c2_234, %c0_235] : memref<4x6x6x128xf32, #tpu.memory_space<vmem>>, vector<1x1x4x128xf32>
    %195 = vector.shape_cast %194 : vector<1x1x4x128xf32> to vector<4x128xf32>
    %c0_236 = arith.constant 0 : index
    %c3_237 = arith.constant 3 : index
    %c2_238 = arith.constant 2 : index
    %c0_239 = arith.constant 0 : index
    %196 = vector.load %arg11[%c0_236, %c3_237, %c2_238, %c0_239] : memref<4x6x6x128xf32, #tpu.memory_space<vmem>>, vector<1x1x4x128xf32>
    %197 = vector.shape_cast %196 : vector<1x1x4x128xf32> to vector<4x128xf32>
    %c0_240 = arith.constant 0 : index
    %c4_241 = arith.constant 4 : index
    %c2_242 = arith.constant 2 : index
    %c0_243 = arith.constant 0 : index
    %198 = vector.load %arg11[%c0_240, %c4_241, %c2_242, %c0_243] : memref<4x6x6x128xf32, #tpu.memory_space<vmem>>, vector<1x1x4x128xf32>
    %199 = vector.shape_cast %198 : vector<1x1x4x128xf32> to vector<4x128xf32>
    %c0_244 = arith.constant 0 : index
    %c5_245 = arith.constant 5 : index
    %c2_246 = arith.constant 2 : index
    %c0_247 = arith.constant 0 : index
    %200 = vector.load %arg11[%c0_244, %c5_245, %c2_246, %c0_247] : memref<4x6x6x128xf32, #tpu.memory_space<vmem>>, vector<1x1x4x128xf32>
    %201 = vector.shape_cast %200 : vector<1x1x4x128xf32> to vector<4x128xf32>
    %202 = tpu.concatenate %195, %197, %199, %201 in 0 : vector<4x128xf32>, vector<4x128xf32>, vector<4x128xf32>, vector<4x128xf32> -> vector<16x128xf32>
    %203 = arith.truncf %202 : vector<16x128xf32> to vector<16x128xbf16>
    %c24 = arith.constant 24 : index
    %c0_248 = arith.constant 0 : index
    %c0_249 = arith.constant 0 : index
    %204 = vector.load %arg4[%c24, %c0_248, %c0_249] : memref<25x128x128xbf16, #tpu.memory_space<vmem>>, vector<1x128x128xbf16>
    %205 = vector.shape_cast %204 : vector<1x128x128xbf16> to vector<128x128xbf16>
    %cst_250 = arith.constant dense<0.000000e+00> : vector<16x128xf32>
    %206 = tpu.matmul %203, %205, %cst_250 {dimension_numbers = #tpu.dot_dimension_numbers<[1], [0], [0], [1], [0, 0, 1, 1], [], []>} : vector<16x128xbf16>, vector<128x128xbf16>, vector<16x128xf32> -> vector<16x128xf32>
    %207 = arith.addf %193, %206 : vector<16x128xf32>
    %c1_251 = arith.constant 1 : index
    %c0_252 = arith.constant 0 : index
    %c0_253 = arith.constant 0 : index
    %c0_254 = arith.constant 0 : index
    %208 = vector.load %arg11[%c1_251, %c0_252, %c0_253, %c0_254] : memref<4x6x6x128xf32, #tpu.memory_space<vmem>>, vector<1x1x4x128xf32>
    %209 = vector.shape_cast %208 : vector<1x1x4x128xf32> to vector<4x128xf32>
    %c1_255 = arith.constant 1 : index
    %c1_256 = arith.constant 1 : index
    %c0_257 = arith.constant 0 : index
    %c0_258 = arith.constant 0 : index
    %210 = vector.load %arg11[%c1_255, %c1_256, %c0_257, %c0_258] : memref<4x6x6x128xf32, #tpu.memory_space<vmem>>, vector<1x1x4x128xf32>
    %211 = vector.shape_cast %210 : vector<1x1x4x128xf32> to vector<4x128xf32>
    %c1_259 = arith.constant 1 : index
    %c2_260 = arith.constant 2 : index
    %c0_261 = arith.constant 0 : index
    %c0_262 = arith.constant 0 : index
    %212 = vector.load %arg11[%c1_259, %c2_260, %c0_261, %c0_262] : memref<4x6x6x128xf32, #tpu.memory_space<vmem>>, vector<1x1x4x128xf32>
    %213 = vector.shape_cast %212 : vector<1x1x4x128xf32> to vector<4x128xf32>
    %c1_263 = arith.constant 1 : index
    %c3_264 = arith.constant 3 : index
    %c0_265 = arith.constant 0 : index
    %c0_266 = arith.constant 0 : index
    %214 = vector.load %arg11[%c1_263, %c3_264, %c0_265, %c0_266] : memref<4x6x6x128xf32, #tpu.memory_space<vmem>>, vector<1x1x4x128xf32>
    %215 = vector.shape_cast %214 : vector<1x1x4x128xf32> to vector<4x128xf32>
    %216 = tpu.concatenate %209, %211, %213, %215 in 0 : vector<4x128xf32>, vector<4x128xf32>, vector<4x128xf32>, vector<4x128xf32> -> vector<16x128xf32>
    %217 = arith.truncf %216 : vector<16x128xf32> to vector<16x128xbf16>
    %c1_267 = arith.constant 1 : index
    %c0_268 = arith.constant 0 : index
    %c0_269 = arith.constant 0 : index
    %218 = vector.load %arg4[%c1_267, %c0_268, %c0_269] : memref<25x128x128xbf16, #tpu.memory_space<vmem>>, vector<1x128x128xbf16>
    %219 = vector.shape_cast %218 : vector<1x128x128xbf16> to vector<128x128xbf16>
    %cst_270 = arith.constant dense<0.000000e+00> : vector<16x128xf32>
    %220 = tpu.matmul %217, %219, %cst_270 {dimension_numbers = #tpu.dot_dimension_numbers<[1], [0], [0], [1], [0, 0, 1, 1], [], []>} : vector<16x128xbf16>, vector<128x128xbf16>, vector<16x128xf32> -> vector<16x128xf32>
    %221 = arith.addf %207, %220 : vector<16x128xf32>
    %c1_271 = arith.constant 1 : index
    %c0_272 = arith.constant 0 : index
    %c1_273 = arith.constant 1 : index
    %c0_274 = arith.constant 0 : index
    %222 = vector.load %arg11[%c1_271, %c0_272, %c1_273, %c0_274] : memref<4x6x6x128xf32, #tpu.memory_space<vmem>>, vector<1x1x4x128xf32>
    %223 = vector.shape_cast %222 : vector<1x1x4x128xf32> to vector<4x128xf32>
    %c1_275 = arith.constant 1 : index
    %c1_276 = arith.constant 1 : index
    %c1_277 = arith.constant 1 : index
    %c0_278 = arith.constant 0 : index
    %224 = vector.load %arg11[%c1_275, %c1_276, %c1_277, %c0_278] : memref<4x6x6x128xf32, #tpu.memory_space<vmem>>, vector<1x1x4x128xf32>
    %225 = vector.shape_cast %224 : vector<1x1x4x128xf32> to vector<4x128xf32>
    %c1_279 = arith.constant 1 : index
    %c2_280 = arith.constant 2 : index
    %c1_281 = arith.constant 1 : index
    %c0_282 = arith.constant 0 : index
    %226 = vector.load %arg11[%c1_279, %c2_280, %c1_281, %c0_282] : memref<4x6x6x128xf32, #tpu.memory_space<vmem>>, vector<1x1x4x128xf32>
    %227 = vector.shape_cast %226 : vector<1x1x4x128xf32> to vector<4x128xf32>
    %c1_283 = arith.constant 1 : index
    %c3_284 = arith.constant 3 : index
    %c1_285 = arith.constant 1 : index
    %c0_286 = arith.constant 0 : index
    %228 = vector.load %arg11[%c1_283, %c3_284, %c1_285, %c0_286] : memref<4x6x6x128xf32, #tpu.memory_space<vmem>>, vector<1x1x4x128xf32>
    %229 = vector.shape_cast %228 : vector<1x1x4x128xf32> to vector<4x128xf32>
    %230 = tpu.concatenate %223, %225, %227, %229 in 0 : vector<4x128xf32>, vector<4x128xf32>, vector<4x128xf32>, vector<4x128xf32> -> vector<16x128xf32>
    %231 = arith.truncf %230 : vector<16x128xf32> to vector<16x128xbf16>
    %c3_287 = arith.constant 3 : index
    %c0_288 = arith.constant 0 : index
    %c0_289 = arith.constant 0 : index
    %232 = vector.load %arg4[%c3_287, %c0_288, %c0_289] : memref<25x128x128xbf16, #tpu.memory_space<vmem>>, vector<1x128x128xbf16>
    %233 = vector.shape_cast %232 : vector<1x128x128xbf16> to vector<128x128xbf16>
    %cst_290 = arith.constant dense<0.000000e+00> : vector<16x128xf32>
    %234 = tpu.matmul %231, %233, %cst_290 {dimension_numbers = #tpu.dot_dimension_numbers<[1], [0], [0], [1], [0, 0, 1, 1], [], []>} : vector<16x128xbf16>, vector<128x128xbf16>, vector<16x128xf32> -> vector<16x128xf32>
    %235 = arith.addf %221, %234 : vector<16x128xf32>
    %c1_291 = arith.constant 1 : index
    %c1_292 = arith.constant 1 : index
    %c0_293 = arith.constant 0 : index
    %c0_294 = arith.constant 0 : index
    %236 = vector.load %arg11[%c1_291, %c1_292, %c0_293, %c0_294] : memref<4x6x6x128xf32, #tpu.memory_space<vmem>>, vector<1x1x4x128xf32>
    %237 = vector.shape_cast %236 : vector<1x1x4x128xf32> to vector<4x128xf32>
    %c1_295 = arith.constant 1 : index
    %c2_296 = arith.constant 2 : index
    %c0_297 = arith.constant 0 : index
    %c0_298 = arith.constant 0 : index
    %238 = vector.load %arg11[%c1_295, %c2_296, %c0_297, %c0_298] : memref<4x6x6x128xf32, #tpu.memory_space<vmem>>, vector<1x1x4x128xf32>
    %239 = vector.shape_cast %238 : vector<1x1x4x128xf32> to vector<4x128xf32>
    %c1_299 = arith.constant 1 : index
    %c3_300 = arith.constant 3 : index
    %c0_301 = arith.constant 0 : index
    %c0_302 = arith.constant 0 : index
    %240 = vector.load %arg11[%c1_299, %c3_300, %c0_301, %c0_302] : memref<4x6x6x128xf32, #tpu.memory_space<vmem>>, vector<1x1x4x128xf32>
    %241 = vector.shape_cast %240 : vector<1x1x4x128xf32> to vector<4x128xf32>
    %c1_303 = arith.constant 1 : index
    %c4_304 = arith.constant 4 : index
    %c0_305 = arith.constant 0 : index
    %c0_306 = arith.constant 0 : index
    %242 = vector.load %arg11[%c1_303, %c4_304, %c0_305, %c0_306] : memref<4x6x6x128xf32, #tpu.memory_space<vmem>>, vector<1x1x4x128xf32>
    %243 = vector.shape_cast %242 : vector<1x1x4x128xf32> to vector<4x128xf32>
    %244 = tpu.concatenate %237, %239, %241, %243 in 0 : vector<4x128xf32>, vector<4x128xf32>, vector<4x128xf32>, vector<4x128xf32> -> vector<16x128xf32>
    %245 = arith.truncf %244 : vector<16x128xf32> to vector<16x128xbf16>
    %c11 = arith.constant 11 : index
    %c0_307 = arith.constant 0 : index
    %c0_308 = arith.constant 0 : index
    %246 = vector.load %arg4[%c11, %c0_307, %c0_308] : memref<25x128x128xbf16, #tpu.memory_space<vmem>>, vector<1x128x128xbf16>
    %247 = vector.shape_cast %246 : vector<1x128x128xbf16> to vector<128x128xbf16>
    %cst_309 = arith.constant dense<0.000000e+00> : vector<16x128xf32>
    %248 = tpu.matmul %245, %247, %cst_309 {dimension_numbers = #tpu.dot_dimension_numbers<[1], [0], [0], [1], [0, 0, 1, 1], [], []>} : vector<16x128xbf16>, vector<128x128xbf16>, vector<16x128xf32> -> vector<16x128xf32>
    %249 = arith.addf %235, %248 : vector<16x128xf32>
    %c1_310 = arith.constant 1 : index
    %c1_311 = arith.constant 1 : index
    %c1_312 = arith.constant 1 : index
    %c0_313 = arith.constant 0 : index
    %250 = vector.load %arg11[%c1_310, %c1_311, %c1_312, %c0_313] : memref<4x6x6x128xf32, #tpu.memory_space<vmem>>, vector<1x1x4x128xf32>
    %251 = vector.shape_cast %250 : vector<1x1x4x128xf32> to vector<4x128xf32>
    %c1_314 = arith.constant 1 : index
    %c2_315 = arith.constant 2 : index
    %c1_316 = arith.constant 1 : index
    %c0_317 = arith.constant 0 : index
    %252 = vector.load %arg11[%c1_314, %c2_315, %c1_316, %c0_317] : memref<4x6x6x128xf32, #tpu.memory_space<vmem>>, vector<1x1x4x128xf32>
    %253 = vector.shape_cast %252 : vector<1x1x4x128xf32> to vector<4x128xf32>
    %c1_318 = arith.constant 1 : index
    %c3_319 = arith.constant 3 : index
    %c1_320 = arith.constant 1 : index
    %c0_321 = arith.constant 0 : index
    %254 = vector.load %arg11[%c1_318, %c3_319, %c1_320, %c0_321] : memref<4x6x6x128xf32, #tpu.memory_space<vmem>>, vector<1x1x4x128xf32>
    %255 = vector.shape_cast %254 : vector<1x1x4x128xf32> to vector<4x128xf32>
    %c1_322 = arith.constant 1 : index
    %c4_323 = arith.constant 4 : index
    %c1_324 = arith.constant 1 : index
    %c0_325 = arith.constant 0 : index
    %256 = vector.load %arg11[%c1_322, %c4_323, %c1_324, %c0_325] : memref<4x6x6x128xf32, #tpu.memory_space<vmem>>, vector<1x1x4x128xf32>
    %257 = vector.shape_cast %256 : vector<1x1x4x128xf32> to vector<4x128xf32>
    %258 = tpu.concatenate %251, %253, %255, %257 in 0 : vector<4x128xf32>, vector<4x128xf32>, vector<4x128xf32>, vector<4x128xf32> -> vector<16x128xf32>
    %259 = arith.truncf %258 : vector<16x128xf32> to vector<16x128xbf16>
    %c13 = arith.constant 13 : index
    %c0_326 = arith.constant 0 : index
    %c0_327 = arith.constant 0 : index
    %260 = vector.load %arg4[%c13, %c0_326, %c0_327] : memref<25x128x128xbf16, #tpu.memory_space<vmem>>, vector<1x128x128xbf16>
    %261 = vector.shape_cast %260 : vector<1x128x128xbf16> to vector<128x128xbf16>
    %cst_328 = arith.constant dense<0.000000e+00> : vector<16x128xf32>
    %262 = tpu.matmul %259, %261, %cst_328 {dimension_numbers = #tpu.dot_dimension_numbers<[1], [0], [0], [1], [0, 0, 1, 1], [], []>} : vector<16x128xbf16>, vector<128x128xbf16>, vector<16x128xf32> -> vector<16x128xf32>
    %263 = arith.addf %249, %262 : vector<16x128xf32>
    %c1_329 = arith.constant 1 : index
    %c2_330 = arith.constant 2 : index
    %c0_331 = arith.constant 0 : index
    %c0_332 = arith.constant 0 : index
    %264 = vector.load %arg11[%c1_329, %c2_330, %c0_331, %c0_332] : memref<4x6x6x128xf32, #tpu.memory_space<vmem>>, vector<1x1x4x128xf32>
    %265 = vector.shape_cast %264 : vector<1x1x4x128xf32> to vector<4x128xf32>
    %c1_333 = arith.constant 1 : index
    %c3_334 = arith.constant 3 : index
    %c0_335 = arith.constant 0 : index
    %c0_336 = arith.constant 0 : index
    %266 = vector.load %arg11[%c1_333, %c3_334, %c0_335, %c0_336] : memref<4x6x6x128xf32, #tpu.memory_space<vmem>>, vector<1x1x4x128xf32>
    %267 = vector.shape_cast %266 : vector<1x1x4x128xf32> to vector<4x128xf32>
    %c1_337 = arith.constant 1 : index
    %c4_338 = arith.constant 4 : index
    %c0_339 = arith.constant 0 : index
    %c0_340 = arith.constant 0 : index
    %268 = vector.load %arg11[%c1_337, %c4_338, %c0_339, %c0_340] : memref<4x6x6x128xf32, #tpu.memory_space<vmem>>, vector<1x1x4x128xf32>
    %269 = vector.shape_cast %268 : vector<1x1x4x128xf32> to vector<4x128xf32>
    %c1_341 = arith.constant 1 : index
    %c5_342 = arith.constant 5 : index
    %c0_343 = arith.constant 0 : index
    %c0_344 = arith.constant 0 : index
    %270 = vector.load %arg11[%c1_341, %c5_342, %c0_343, %c0_344] : memref<4x6x6x128xf32, #tpu.memory_space<vmem>>, vector<1x1x4x128xf32>
    %271 = vector.shape_cast %270 : vector<1x1x4x128xf32> to vector<4x128xf32>
    %272 = tpu.concatenate %265, %267, %269, %271 in 0 : vector<4x128xf32>, vector<4x128xf32>, vector<4x128xf32>, vector<4x128xf32> -> vector<16x128xf32>
    %273 = arith.truncf %272 : vector<16x128xf32> to vector<16x128xbf16>
    %c21 = arith.constant 21 : index
    %c0_345 = arith.constant 0 : index
    %c0_346 = arith.constant 0 : index
    %274 = vector.load %arg4[%c21, %c0_345, %c0_346] : memref<25x128x128xbf16, #tpu.memory_space<vmem>>, vector<1x128x128xbf16>
    %275 = vector.shape_cast %274 : vector<1x128x128xbf16> to vector<128x128xbf16>
    %cst_347 = arith.constant dense<0.000000e+00> : vector<16x128xf32>
    %276 = tpu.matmul %273, %275, %cst_347 {dimension_numbers = #tpu.dot_dimension_numbers<[1], [0], [0], [1], [0, 0, 1, 1], [], []>} : vector<16x128xbf16>, vector<128x128xbf16>, vector<16x128xf32> -> vector<16x128xf32>
    %277 = arith.addf %263, %276 : vector<16x128xf32>
    %c1_348 = arith.constant 1 : index
    %c2_349 = arith.constant 2 : index
    %c1_350 = arith.constant 1 : index
    %c0_351 = arith.constant 0 : index
    %278 = vector.load %arg11[%c1_348, %c2_349, %c1_350, %c0_351] : memref<4x6x6x128xf32, #tpu.memory_space<vmem>>, vector<1x1x4x128xf32>
    %279 = vector.shape_cast %278 : vector<1x1x4x128xf32> to vector<4x128xf32>
    %c1_352 = arith.constant 1 : index
    %c3_353 = arith.constant 3 : index
    %c1_354 = arith.constant 1 : index
    %c0_355 = arith.constant 0 : index
    %280 = vector.load %arg11[%c1_352, %c3_353, %c1_354, %c0_355] : memref<4x6x6x128xf32, #tpu.memory_space<vmem>>, vector<1x1x4x128xf32>
    %281 = vector.shape_cast %280 : vector<1x1x4x128xf32> to vector<4x128xf32>
    %c1_356 = arith.constant 1 : index
    %c4_357 = arith.constant 4 : index
    %c1_358 = arith.constant 1 : index
    %c0_359 = arith.constant 0 : index
    %282 = vector.load %arg11[%c1_356, %c4_357, %c1_358, %c0_359] : memref<4x6x6x128xf32, #tpu.memory_space<vmem>>, vector<1x1x4x128xf32>
    %283 = vector.shape_cast %282 : vector<1x1x4x128xf32> to vector<4x128xf32>
    %c1_360 = arith.constant 1 : index
    %c5_361 = arith.constant 5 : index
    %c1_362 = arith.constant 1 : index
    %c0_363 = arith.constant 0 : index
    %284 = vector.load %arg11[%c1_360, %c5_361, %c1_362, %c0_363] : memref<4x6x6x128xf32, #tpu.memory_space<vmem>>, vector<1x1x4x128xf32>
    %285 = vector.shape_cast %284 : vector<1x1x4x128xf32> to vector<4x128xf32>
    %286 = tpu.concatenate %279, %281, %283, %285 in 0 : vector<4x128xf32>, vector<4x128xf32>, vector<4x128xf32>, vector<4x128xf32> -> vector<16x128xf32>
    %287 = arith.truncf %286 : vector<16x128xf32> to vector<16x128xbf16>
    %c23 = arith.constant 23 : index
    %c0_364 = arith.constant 0 : index
    %c0_365 = arith.constant 0 : index
    %288 = vector.load %arg4[%c23, %c0_364, %c0_365] : memref<25x128x128xbf16, #tpu.memory_space<vmem>>, vector<1x128x128xbf16>
    %289 = vector.shape_cast %288 : vector<1x128x128xbf16> to vector<128x128xbf16>
    %cst_366 = arith.constant dense<0.000000e+00> : vector<16x128xf32>
    %290 = tpu.matmul %287, %289, %cst_366 {dimension_numbers = #tpu.dot_dimension_numbers<[1], [0], [0], [1], [0, 0, 1, 1], [], []>} : vector<16x128xbf16>, vector<128x128xbf16>, vector<16x128xf32> -> vector<16x128xf32>
    %291 = arith.addf %277, %290 : vector<16x128xf32>
    %c2_367 = arith.constant 2 : index
    %c0_368 = arith.constant 0 : index
    %c0_369 = arith.constant 0 : index
    %c0_370 = arith.constant 0 : index
    %292 = vector.load %arg11[%c2_367, %c0_368, %c0_369, %c0_370] : memref<4x6x6x128xf32, #tpu.memory_space<vmem>>, vector<1x1x4x128xf32>
    %293 = vector.shape_cast %292 : vector<1x1x4x128xf32> to vector<4x128xf32>
    %c2_371 = arith.constant 2 : index
    %c1_372 = arith.constant 1 : index
    %c0_373 = arith.constant 0 : index
    %c0_374 = arith.constant 0 : index
    %294 = vector.load %arg11[%c2_371, %c1_372, %c0_373, %c0_374] : memref<4x6x6x128xf32, #tpu.memory_space<vmem>>, vector<1x1x4x128xf32>
    %295 = vector.shape_cast %294 : vector<1x1x4x128xf32> to vector<4x128xf32>
    %c2_375 = arith.constant 2 : index
    %c2_376 = arith.constant 2 : index
    %c0_377 = arith.constant 0 : index
    %c0_378 = arith.constant 0 : index
    %296 = vector.load %arg11[%c2_375, %c2_376, %c0_377, %c0_378] : memref<4x6x6x128xf32, #tpu.memory_space<vmem>>, vector<1x1x4x128xf32>
    %297 = vector.shape_cast %296 : vector<1x1x4x128xf32> to vector<4x128xf32>
    %c2_379 = arith.constant 2 : index
    %c3_380 = arith.constant 3 : index
    %c0_381 = arith.constant 0 : index
    %c0_382 = arith.constant 0 : index
    %298 = vector.load %arg11[%c2_379, %c3_380, %c0_381, %c0_382] : memref<4x6x6x128xf32, #tpu.memory_space<vmem>>, vector<1x1x4x128xf32>
    %299 = vector.shape_cast %298 : vector<1x1x4x128xf32> to vector<4x128xf32>
    %300 = tpu.concatenate %293, %295, %297, %299 in 0 : vector<4x128xf32>, vector<4x128xf32>, vector<4x128xf32>, vector<4x128xf32> -> vector<16x128xf32>
    %301 = arith.truncf %300 : vector<16x128xf32> to vector<16x128xbf16>
    %c5_383 = arith.constant 5 : index
    %c0_384 = arith.constant 0 : index
    %c0_385 = arith.constant 0 : index
    %302 = vector.load %arg4[%c5_383, %c0_384, %c0_385] : memref<25x128x128xbf16, #tpu.memory_space<vmem>>, vector<1x128x128xbf16>
    %303 = vector.shape_cast %302 : vector<1x128x128xbf16> to vector<128x128xbf16>
    %cst_386 = arith.constant dense<0.000000e+00> : vector<16x128xf32>
    %304 = tpu.matmul %301, %303, %cst_386 {dimension_numbers = #tpu.dot_dimension_numbers<[1], [0], [0], [1], [0, 0, 1, 1], [], []>} : vector<16x128xbf16>, vector<128x128xbf16>, vector<16x128xf32> -> vector<16x128xf32>
    %305 = arith.addf %291, %304 : vector<16x128xf32>
    %c2_387 = arith.constant 2 : index
    %c0_388 = arith.constant 0 : index
    %c1_389 = arith.constant 1 : index
    %c0_390 = arith.constant 0 : index
    %306 = vector.load %arg11[%c2_387, %c0_388, %c1_389, %c0_390] : memref<4x6x6x128xf32, #tpu.memory_space<vmem>>, vector<1x1x4x128xf32>
    %307 = vector.shape_cast %306 : vector<1x1x4x128xf32> to vector<4x128xf32>
    %c2_391 = arith.constant 2 : index
    %c1_392 = arith.constant 1 : index
    %c1_393 = arith.constant 1 : index
    %c0_394 = arith.constant 0 : index
    %308 = vector.load %arg11[%c2_391, %c1_392, %c1_393, %c0_394] : memref<4x6x6x128xf32, #tpu.memory_space<vmem>>, vector<1x1x4x128xf32>
    %309 = vector.shape_cast %308 : vector<1x1x4x128xf32> to vector<4x128xf32>
    %c2_395 = arith.constant 2 : index
    %c2_396 = arith.constant 2 : index
    %c1_397 = arith.constant 1 : index
    %c0_398 = arith.constant 0 : index
    %310 = vector.load %arg11[%c2_395, %c2_396, %c1_397, %c0_398] : memref<4x6x6x128xf32, #tpu.memory_space<vmem>>, vector<1x1x4x128xf32>
    %311 = vector.shape_cast %310 : vector<1x1x4x128xf32> to vector<4x128xf32>
    %c2_399 = arith.constant 2 : index
    %c3_400 = arith.constant 3 : index
    %c1_401 = arith.constant 1 : index
    %c0_402 = arith.constant 0 : index
    %312 = vector.load %arg11[%c2_399, %c3_400, %c1_401, %c0_402] : memref<4x6x6x128xf32, #tpu.memory_space<vmem>>, vector<1x1x4x128xf32>
    %313 = vector.shape_cast %312 : vector<1x1x4x128xf32> to vector<4x128xf32>
    %314 = tpu.concatenate %307, %309, %311, %313 in 0 : vector<4x128xf32>, vector<4x128xf32>, vector<4x128xf32>, vector<4x128xf32> -> vector<16x128xf32>
    %315 = arith.truncf %314 : vector<16x128xf32> to vector<16x128xbf16>
    %c7 = arith.constant 7 : index
    %c0_403 = arith.constant 0 : index
    %c0_404 = arith.constant 0 : index
    %316 = vector.load %arg4[%c7, %c0_403, %c0_404] : memref<25x128x128xbf16, #tpu.memory_space<vmem>>, vector<1x128x128xbf16>
    %317 = vector.shape_cast %316 : vector<1x128x128xbf16> to vector<128x128xbf16>
    %cst_405 = arith.constant dense<0.000000e+00> : vector<16x128xf32>
    %318 = tpu.matmul %315, %317, %cst_405 {dimension_numbers = #tpu.dot_dimension_numbers<[1], [0], [0], [1], [0, 0, 1, 1], [], []>} : vector<16x128xbf16>, vector<128x128xbf16>, vector<16x128xf32> -> vector<16x128xf32>
    %319 = arith.addf %305, %318 : vector<16x128xf32>
    %c2_406 = arith.constant 2 : index
    %c0_407 = arith.constant 0 : index
    %c2_408 = arith.constant 2 : index
    %c0_409 = arith.constant 0 : index
    %320 = vector.load %arg11[%c2_406, %c0_407, %c2_408, %c0_409] : memref<4x6x6x128xf32, #tpu.memory_space<vmem>>, vector<1x1x4x128xf32>
    %321 = vector.shape_cast %320 : vector<1x1x4x128xf32> to vector<4x128xf32>
    %c2_410 = arith.constant 2 : index
    %c1_411 = arith.constant 1 : index
    %c2_412 = arith.constant 2 : index
    %c0_413 = arith.constant 0 : index
    %322 = vector.load %arg11[%c2_410, %c1_411, %c2_412, %c0_413] : memref<4x6x6x128xf32, #tpu.memory_space<vmem>>, vector<1x1x4x128xf32>
    %323 = vector.shape_cast %322 : vector<1x1x4x128xf32> to vector<4x128xf32>
    %c2_414 = arith.constant 2 : index
    %c2_415 = arith.constant 2 : index
    %c2_416 = arith.constant 2 : index
    %c0_417 = arith.constant 0 : index
    %324 = vector.load %arg11[%c2_414, %c2_415, %c2_416, %c0_417] : memref<4x6x6x128xf32, #tpu.memory_space<vmem>>, vector<1x1x4x128xf32>
    %325 = vector.shape_cast %324 : vector<1x1x4x128xf32> to vector<4x128xf32>
    %c2_418 = arith.constant 2 : index
    %c3_419 = arith.constant 3 : index
    %c2_420 = arith.constant 2 : index
    %c0_421 = arith.constant 0 : index
    %326 = vector.load %arg11[%c2_418, %c3_419, %c2_420, %c0_421] : memref<4x6x6x128xf32, #tpu.memory_space<vmem>>, vector<1x1x4x128xf32>
    %327 = vector.shape_cast %326 : vector<1x1x4x128xf32> to vector<4x128xf32>
    %328 = tpu.concatenate %321, %323, %325, %327 in 0 : vector<4x128xf32>, vector<4x128xf32>, vector<4x128xf32>, vector<4x128xf32> -> vector<16x128xf32>
    %329 = arith.truncf %328 : vector<16x128xf32> to vector<16x128xbf16>
    %c9 = arith.constant 9 : index
    %c0_422 = arith.constant 0 : index
    %c0_423 = arith.constant 0 : index
    %330 = vector.load %arg4[%c9, %c0_422, %c0_423] : memref<25x128x128xbf16, #tpu.memory_space<vmem>>, vector<1x128x128xbf16>
    %331 = vector.shape_cast %330 : vector<1x128x128xbf16> to vector<128x128xbf16>
    %cst_424 = arith.constant dense<0.000000e+00> : vector<16x128xf32>
    %332 = tpu.matmul %329, %331, %cst_424 {dimension_numbers = #tpu.dot_dimension_numbers<[1], [0], [0], [1], [0, 0, 1, 1], [], []>} : vector<16x128xbf16>, vector<128x128xbf16>, vector<16x128xf32> -> vector<16x128xf32>
    %333 = arith.addf %319, %332 : vector<16x128xf32>
    %c2_425 = arith.constant 2 : index
    %c1_426 = arith.constant 1 : index
    %c0_427 = arith.constant 0 : index
    %c0_428 = arith.constant 0 : index
    %334 = vector.load %arg11[%c2_425, %c1_426, %c0_427, %c0_428] : memref<4x6x6x128xf32, #tpu.memory_space<vmem>>, vector<1x1x4x128xf32>
    %335 = vector.shape_cast %334 : vector<1x1x4x128xf32> to vector<4x128xf32>
    %c2_429 = arith.constant 2 : index
    %c2_430 = arith.constant 2 : index
    %c0_431 = arith.constant 0 : index
    %c0_432 = arith.constant 0 : index
    %336 = vector.load %arg11[%c2_429, %c2_430, %c0_431, %c0_432] : memref<4x6x6x128xf32, #tpu.memory_space<vmem>>, vector<1x1x4x128xf32>
    %337 = vector.shape_cast %336 : vector<1x1x4x128xf32> to vector<4x128xf32>
    %c2_433 = arith.constant 2 : index
    %c3_434 = arith.constant 3 : index
    %c0_435 = arith.constant 0 : index
    %c0_436 = arith.constant 0 : index
    %338 = vector.load %arg11[%c2_433, %c3_434, %c0_435, %c0_436] : memref<4x6x6x128xf32, #tpu.memory_space<vmem>>, vector<1x1x4x128xf32>
    %339 = vector.shape_cast %338 : vector<1x1x4x128xf32> to vector<4x128xf32>
    %c2_437 = arith.constant 2 : index
    %c4_438 = arith.constant 4 : index
    %c0_439 = arith.constant 0 : index
    %c0_440 = arith.constant 0 : index
    %340 = vector.load %arg11[%c2_437, %c4_438, %c0_439, %c0_440] : memref<4x6x6x128xf32, #tpu.memory_space<vmem>>, vector<1x1x4x128xf32>
    %341 = vector.shape_cast %340 : vector<1x1x4x128xf32> to vector<4x128xf32>
    %342 = tpu.concatenate %335, %337, %339, %341 in 0 : vector<4x128xf32>, vector<4x128xf32>, vector<4x128xf32>, vector<4x128xf32> -> vector<16x128xf32>
    %343 = arith.truncf %342 : vector<16x128xf32> to vector<16x128xbf16>
    %c15 = arith.constant 15 : index
    %c0_441 = arith.constant 0 : index
    %c0_442 = arith.constant 0 : index
    %344 = vector.load %arg4[%c15, %c0_441, %c0_442] : memref<25x128x128xbf16, #tpu.memory_space<vmem>>, vector<1x128x128xbf16>
    %345 = vector.shape_cast %344 : vector<1x128x128xbf16> to vector<128x128xbf16>
    %cst_443 = arith.constant dense<0.000000e+00> : vector<16x128xf32>
    %346 = tpu.matmul %343, %345, %cst_443 {dimension_numbers = #tpu.dot_dimension_numbers<[1], [0], [0], [1], [0, 0, 1, 1], [], []>} : vector<16x128xbf16>, vector<128x128xbf16>, vector<16x128xf32> -> vector<16x128xf32>
    %347 = arith.addf %333, %346 : vector<16x128xf32>
    %c2_444 = arith.constant 2 : index
    %c1_445 = arith.constant 1 : index
    %c1_446 = arith.constant 1 : index
    %c0_447 = arith.constant 0 : index
    %348 = vector.load %arg11[%c2_444, %c1_445, %c1_446, %c0_447] : memref<4x6x6x128xf32, #tpu.memory_space<vmem>>, vector<1x1x4x128xf32>
    %349 = vector.shape_cast %348 : vector<1x1x4x128xf32> to vector<4x128xf32>
    %c2_448 = arith.constant 2 : index
    %c2_449 = arith.constant 2 : index
    %c1_450 = arith.constant 1 : index
    %c0_451 = arith.constant 0 : index
    %350 = vector.load %arg11[%c2_448, %c2_449, %c1_450, %c0_451] : memref<4x6x6x128xf32, #tpu.memory_space<vmem>>, vector<1x1x4x128xf32>
    %351 = vector.shape_cast %350 : vector<1x1x4x128xf32> to vector<4x128xf32>
    %c2_452 = arith.constant 2 : index
    %c3_453 = arith.constant 3 : index
    %c1_454 = arith.constant 1 : index
    %c0_455 = arith.constant 0 : index
    %352 = vector.load %arg11[%c2_452, %c3_453, %c1_454, %c0_455] : memref<4x6x6x128xf32, #tpu.memory_space<vmem>>, vector<1x1x4x128xf32>
    %353 = vector.shape_cast %352 : vector<1x1x4x128xf32> to vector<4x128xf32>
    %c2_456 = arith.constant 2 : index
    %c4_457 = arith.constant 4 : index
    %c1_458 = arith.constant 1 : index
    %c0_459 = arith.constant 0 : index
    %354 = vector.load %arg11[%c2_456, %c4_457, %c1_458, %c0_459] : memref<4x6x6x128xf32, #tpu.memory_space<vmem>>, vector<1x1x4x128xf32>
    %355 = vector.shape_cast %354 : vector<1x1x4x128xf32> to vector<4x128xf32>
    %356 = tpu.concatenate %349, %351, %353, %355 in 0 : vector<4x128xf32>, vector<4x128xf32>, vector<4x128xf32>, vector<4x128xf32> -> vector<16x128xf32>
    %357 = arith.truncf %356 : vector<16x128xf32> to vector<16x128xbf16>
    %c17 = arith.constant 17 : index
    %c0_460 = arith.constant 0 : index
    %c0_461 = arith.constant 0 : index
    %358 = vector.load %arg4[%c17, %c0_460, %c0_461] : memref<25x128x128xbf16, #tpu.memory_space<vmem>>, vector<1x128x128xbf16>
    %359 = vector.shape_cast %358 : vector<1x128x128xbf16> to vector<128x128xbf16>
    %cst_462 = arith.constant dense<0.000000e+00> : vector<16x128xf32>
    %360 = tpu.matmul %357, %359, %cst_462 {dimension_numbers = #tpu.dot_dimension_numbers<[1], [0], [0], [1], [0, 0, 1, 1], [], []>} : vector<16x128xbf16>, vector<128x128xbf16>, vector<16x128xf32> -> vector<16x128xf32>
    %361 = arith.addf %347, %360 : vector<16x128xf32>
    %c2_463 = arith.constant 2 : index
    %c1_464 = arith.constant 1 : index
    %c2_465 = arith.constant 2 : index
    %c0_466 = arith.constant 0 : index
    %362 = vector.load %arg11[%c2_463, %c1_464, %c2_465, %c0_466] : memref<4x6x6x128xf32, #tpu.memory_space<vmem>>, vector<1x1x4x128xf32>
    %363 = vector.shape_cast %362 : vector<1x1x4x128xf32> to vector<4x128xf32>
    %c2_467 = arith.constant 2 : index
    %c2_468 = arith.constant 2 : index
    %c2_469 = arith.constant 2 : index
    %c0_470 = arith.constant 0 : index
    %364 = vector.load %arg11[%c2_467, %c2_468, %c2_469, %c0_470] : memref<4x6x6x128xf32, #tpu.memory_space<vmem>>, vector<1x1x4x128xf32>
    %365 = vector.shape_cast %364 : vector<1x1x4x128xf32> to vector<4x128xf32>
    %c2_471 = arith.constant 2 : index
    %c3_472 = arith.constant 3 : index
    %c2_473 = arith.constant 2 : index
    %c0_474 = arith.constant 0 : index
    %366 = vector.load %arg11[%c2_471, %c3_472, %c2_473, %c0_474] : memref<4x6x6x128xf32, #tpu.memory_space<vmem>>, vector<1x1x4x128xf32>
    %367 = vector.shape_cast %366 : vector<1x1x4x128xf32> to vector<4x128xf32>
    %c2_475 = arith.constant 2 : index
    %c4_476 = arith.constant 4 : index
    %c2_477 = arith.constant 2 : index
    %c0_478 = arith.constant 0 : index
    %368 = vector.load %arg11[%c2_475, %c4_476, %c2_477, %c0_478] : memref<4x6x6x128xf32, #tpu.memory_space<vmem>>, vector<1x1x4x128xf32>
    %369 = vector.shape_cast %368 : vector<1x1x4x128xf32> to vector<4x128xf32>
    %370 = tpu.concatenate %363, %365, %367, %369 in 0 : vector<4x128xf32>, vector<4x128xf32>, vector<4x128xf32>, vector<4x128xf32> -> vector<16x128xf32>
    %371 = arith.truncf %370 : vector<16x128xf32> to vector<16x128xbf16>
    %c19 = arith.constant 19 : index
    %c0_479 = arith.constant 0 : index
    %c0_480 = arith.constant 0 : index
    %372 = vector.load %arg4[%c19, %c0_479, %c0_480] : memref<25x128x128xbf16, #tpu.memory_space<vmem>>, vector<1x128x128xbf16>
    %373 = vector.shape_cast %372 : vector<1x128x128xbf16> to vector<128x128xbf16>
    %cst_481 = arith.constant dense<0.000000e+00> : vector<16x128xf32>
    %374 = tpu.matmul %371, %373, %cst_481 {dimension_numbers = #tpu.dot_dimension_numbers<[1], [0], [0], [1], [0, 0, 1, 1], [], []>} : vector<16x128xbf16>, vector<128x128xbf16>, vector<16x128xf32> -> vector<16x128xf32>
    %375 = arith.addf %361, %374 : vector<16x128xf32>
    %c3_482 = arith.constant 3 : index
    %c0_483 = arith.constant 0 : index
    %c0_484 = arith.constant 0 : index
    %c0_485 = arith.constant 0 : index
    %376 = vector.load %arg11[%c3_482, %c0_483, %c0_484, %c0_485] : memref<4x6x6x128xf32, #tpu.memory_space<vmem>>, vector<1x1x4x128xf32>
    %377 = vector.shape_cast %376 : vector<1x1x4x128xf32> to vector<4x128xf32>
    %c3_486 = arith.constant 3 : index
    %c1_487 = arith.constant 1 : index
    %c0_488 = arith.constant 0 : index
    %c0_489 = arith.constant 0 : index
    %378 = vector.load %arg11[%c3_486, %c1_487, %c0_488, %c0_489] : memref<4x6x6x128xf32, #tpu.memory_space<vmem>>, vector<1x1x4x128xf32>
    %379 = vector.shape_cast %378 : vector<1x1x4x128xf32> to vector<4x128xf32>
    %c3_490 = arith.constant 3 : index
    %c2_491 = arith.constant 2 : index
    %c0_492 = arith.constant 0 : index
    %c0_493 = arith.constant 0 : index
    %380 = vector.load %arg11[%c3_490, %c2_491, %c0_492, %c0_493] : memref<4x6x6x128xf32, #tpu.memory_space<vmem>>, vector<1x1x4x128xf32>
    %381 = vector.shape_cast %380 : vector<1x1x4x128xf32> to vector<4x128xf32>
    %c3_494 = arith.constant 3 : index
    %c3_495 = arith.constant 3 : index
    %c0_496 = arith.constant 0 : index
    %c0_497 = arith.constant 0 : index
    %382 = vector.load %arg11[%c3_494, %c3_495, %c0_496, %c0_497] : memref<4x6x6x128xf32, #tpu.memory_space<vmem>>, vector<1x1x4x128xf32>
    %383 = vector.shape_cast %382 : vector<1x1x4x128xf32> to vector<4x128xf32>
    %384 = tpu.concatenate %377, %379, %381, %383 in 0 : vector<4x128xf32>, vector<4x128xf32>, vector<4x128xf32>, vector<4x128xf32> -> vector<16x128xf32>
    %385 = arith.truncf %384 : vector<16x128xf32> to vector<16x128xbf16>
    %c6 = arith.constant 6 : index
    %c0_498 = arith.constant 0 : index
    %c0_499 = arith.constant 0 : index
    %386 = vector.load %arg4[%c6, %c0_498, %c0_499] : memref<25x128x128xbf16, #tpu.memory_space<vmem>>, vector<1x128x128xbf16>
    %387 = vector.shape_cast %386 : vector<1x128x128xbf16> to vector<128x128xbf16>
    %cst_500 = arith.constant dense<0.000000e+00> : vector<16x128xf32>
    %388 = tpu.matmul %385, %387, %cst_500 {dimension_numbers = #tpu.dot_dimension_numbers<[1], [0], [0], [1], [0, 0, 1, 1], [], []>} : vector<16x128xbf16>, vector<128x128xbf16>, vector<16x128xf32> -> vector<16x128xf32>
    %389 = arith.addf %375, %388 : vector<16x128xf32>
    %c3_501 = arith.constant 3 : index
    %c0_502 = arith.constant 0 : index
    %c1_503 = arith.constant 1 : index
    %c0_504 = arith.constant 0 : index
    %390 = vector.load %arg11[%c3_501, %c0_502, %c1_503, %c0_504] : memref<4x6x6x128xf32, #tpu.memory_space<vmem>>, vector<1x1x4x128xf32>
    %391 = vector.shape_cast %390 : vector<1x1x4x128xf32> to vector<4x128xf32>
    %c3_505 = arith.constant 3 : index
    %c1_506 = arith.constant 1 : index
    %c1_507 = arith.constant 1 : index
    %c0_508 = arith.constant 0 : index
    %392 = vector.load %arg11[%c3_505, %c1_506, %c1_507, %c0_508] : memref<4x6x6x128xf32, #tpu.memory_space<vmem>>, vector<1x1x4x128xf32>
    %393 = vector.shape_cast %392 : vector<1x1x4x128xf32> to vector<4x128xf32>
    %c3_509 = arith.constant 3 : index
    %c2_510 = arith.constant 2 : index
    %c1_511 = arith.constant 1 : index
    %c0_512 = arith.constant 0 : index
    %394 = vector.load %arg11[%c3_509, %c2_510, %c1_511, %c0_512] : memref<4x6x6x128xf32, #tpu.memory_space<vmem>>, vector<1x1x4x128xf32>
    %395 = vector.shape_cast %394 : vector<1x1x4x128xf32> to vector<4x128xf32>
    %c3_513 = arith.constant 3 : index
    %c3_514 = arith.constant 3 : index
    %c1_515 = arith.constant 1 : index
    %c0_516 = arith.constant 0 : index
    %396 = vector.load %arg11[%c3_513, %c3_514, %c1_515, %c0_516] : memref<4x6x6x128xf32, #tpu.memory_space<vmem>>, vector<1x1x4x128xf32>
    %397 = vector.shape_cast %396 : vector<1x1x4x128xf32> to vector<4x128xf32>
    %398 = tpu.concatenate %391, %393, %395, %397 in 0 : vector<4x128xf32>, vector<4x128xf32>, vector<4x128xf32>, vector<4x128xf32> -> vector<16x128xf32>
    %399 = arith.truncf %398 : vector<16x128xf32> to vector<16x128xbf16>
    %c8 = arith.constant 8 : index
    %c0_517 = arith.constant 0 : index
    %c0_518 = arith.constant 0 : index
    %400 = vector.load %arg4[%c8, %c0_517, %c0_518] : memref<25x128x128xbf16, #tpu.memory_space<vmem>>, vector<1x128x128xbf16>
    %401 = vector.shape_cast %400 : vector<1x128x128xbf16> to vector<128x128xbf16>
    %cst_519 = arith.constant dense<0.000000e+00> : vector<16x128xf32>
    %402 = tpu.matmul %399, %401, %cst_519 {dimension_numbers = #tpu.dot_dimension_numbers<[1], [0], [0], [1], [0, 0, 1, 1], [], []>} : vector<16x128xbf16>, vector<128x128xbf16>, vector<16x128xf32> -> vector<16x128xf32>
    %403 = arith.addf %389, %402 : vector<16x128xf32>
    %c3_520 = arith.constant 3 : index
    %c1_521 = arith.constant 1 : index
    %c0_522 = arith.constant 0 : index
    %c0_523 = arith.constant 0 : index
    %404 = vector.load %arg11[%c3_520, %c1_521, %c0_522, %c0_523] : memref<4x6x6x128xf32, #tpu.memory_space<vmem>>, vector<1x1x4x128xf32>
    %405 = vector.shape_cast %404 : vector<1x1x4x128xf32> to vector<4x128xf32>
    %c3_524 = arith.constant 3 : index
    %c2_525 = arith.constant 2 : index
    %c0_526 = arith.constant 0 : index
    %c0_527 = arith.constant 0 : index
    %406 = vector.load %arg11[%c3_524, %c2_525, %c0_526, %c0_527] : memref<4x6x6x128xf32, #tpu.memory_space<vmem>>, vector<1x1x4x128xf32>
    %407 = vector.shape_cast %406 : vector<1x1x4x128xf32> to vector<4x128xf32>
    %c3_528 = arith.constant 3 : index
    %c3_529 = arith.constant 3 : index
    %c0_530 = arith.constant 0 : index
    %c0_531 = arith.constant 0 : index
    %408 = vector.load %arg11[%c3_528, %c3_529, %c0_530, %c0_531] : memref<4x6x6x128xf32, #tpu.memory_space<vmem>>, vector<1x1x4x128xf32>
    %409 = vector.shape_cast %408 : vector<1x1x4x128xf32> to vector<4x128xf32>
    %c3_532 = arith.constant 3 : index
    %c4_533 = arith.constant 4 : index
    %c0_534 = arith.constant 0 : index
    %c0_535 = arith.constant 0 : index
    %410 = vector.load %arg11[%c3_532, %c4_533, %c0_534, %c0_535] : memref<4x6x6x128xf32, #tpu.memory_space<vmem>>, vector<1x1x4x128xf32>
    %411 = vector.shape_cast %410 : vector<1x1x4x128xf32> to vector<4x128xf32>
    %412 = tpu.concatenate %405, %407, %409, %411 in 0 : vector<4x128xf32>, vector<4x128xf32>, vector<4x128xf32>, vector<4x128xf32> -> vector<16x128xf32>
    %413 = arith.truncf %412 : vector<16x128xf32> to vector<16x128xbf16>
    %c16 = arith.constant 16 : index
    %c0_536 = arith.constant 0 : index
    %c0_537 = arith.constant 0 : index
    %414 = vector.load %arg4[%c16, %c0_536, %c0_537] : memref<25x128x128xbf16, #tpu.memory_space<vmem>>, vector<1x128x128xbf16>
    %415 = vector.shape_cast %414 : vector<1x128x128xbf16> to vector<128x128xbf16>
    %cst_538 = arith.constant dense<0.000000e+00> : vector<16x128xf32>
    %416 = tpu.matmul %413, %415, %cst_538 {dimension_numbers = #tpu.dot_dimension_numbers<[1], [0], [0], [1], [0, 0, 1, 1], [], []>} : vector<16x128xbf16>, vector<128x128xbf16>, vector<16x128xf32> -> vector<16x128xf32>
    %417 = arith.addf %403, %416 : vector<16x128xf32>
    %c3_539 = arith.constant 3 : index
    %c1_540 = arith.constant 1 : index
    %c1_541 = arith.constant 1 : index
    %c0_542 = arith.constant 0 : index
    %418 = vector.load %arg11[%c3_539, %c1_540, %c1_541, %c0_542] : memref<4x6x6x128xf32, #tpu.memory_space<vmem>>, vector<1x1x4x128xf32>
    %419 = vector.shape_cast %418 : vector<1x1x4x128xf32> to vector<4x128xf32>
    %c3_543 = arith.constant 3 : index
    %c2_544 = arith.constant 2 : index
    %c1_545 = arith.constant 1 : index
    %c0_546 = arith.constant 0 : index
    %420 = vector.load %arg11[%c3_543, %c2_544, %c1_545, %c0_546] : memref<4x6x6x128xf32, #tpu.memory_space<vmem>>, vector<1x1x4x128xf32>
    %421 = vector.shape_cast %420 : vector<1x1x4x128xf32> to vector<4x128xf32>
    %c3_547 = arith.constant 3 : index
    %c3_548 = arith.constant 3 : index
    %c1_549 = arith.constant 1 : index
    %c0_550 = arith.constant 0 : index
    %422 = vector.load %arg11[%c3_547, %c3_548, %c1_549, %c0_550] : memref<4x6x6x128xf32, #tpu.memory_space<vmem>>, vector<1x1x4x128xf32>
    %423 = vector.shape_cast %422 : vector<1x1x4x128xf32> to vector<4x128xf32>
    %c3_551 = arith.constant 3 : index
    %c4_552 = arith.constant 4 : index
    %c1_553 = arith.constant 1 : index
    %c0_554 = arith.constant 0 : index
    %424 = vector.load %arg11[%c3_551, %c4_552, %c1_553, %c0_554] : memref<4x6x6x128xf32, #tpu.memory_space<vmem>>, vector<1x1x4x128xf32>
    %425 = vector.shape_cast %424 : vector<1x1x4x128xf32> to vector<4x128xf32>
    %426 = tpu.concatenate %419, %421, %423, %425 in 0 : vector<4x128xf32>, vector<4x128xf32>, vector<4x128xf32>, vector<4x128xf32> -> vector<16x128xf32>
    %427 = arith.truncf %426 : vector<16x128xf32> to vector<16x128xbf16>
    %c18 = arith.constant 18 : index
    %c0_555 = arith.constant 0 : index
    %c0_556 = arith.constant 0 : index
    %428 = vector.load %arg4[%c18, %c0_555, %c0_556] : memref<25x128x128xbf16, #tpu.memory_space<vmem>>, vector<1x128x128xbf16>
    %429 = vector.shape_cast %428 : vector<1x128x128xbf16> to vector<128x128xbf16>
    %cst_557 = arith.constant dense<0.000000e+00> : vector<16x128xf32>
    %430 = tpu.matmul %427, %429, %cst_557 {dimension_numbers = #tpu.dot_dimension_numbers<[1], [0], [0], [1], [0, 0, 1, 1], [], []>} : vector<16x128xbf16>, vector<128x128xbf16>, vector<16x128xf32> -> vector<16x128xf32>
    %431 = arith.addf %417, %430 : vector<16x128xf32>
    %c0_558 = arith.constant 0 : index
    %c0_559 = arith.constant 0 : index
    %432 = vector.load %arg5[%c0_558, %c0_559] : memref<1x128xf32, #tpu.memory_space<vmem>>, vector<1x128xf32>
    %433 = vector.broadcast %432 : vector<1x128xf32> to vector<16x128xf32>
    %434 = arith.addf %431, %433 : vector<16x128xf32>
    %cst_560 = arith.constant 0.000000e+00 : f32
    %435 = vector.broadcast %cst_560 : f32 to vector<16x128xf32>
    %436 = arith.subf %435, %434 : vector<16x128xf32>
    %437 = math.exp %436 : vector<16x128xf32>
    %cst_561 = arith.constant 1.000000e+00 : f32
    %438 = vector.broadcast %cst_561 : f32 to vector<16x128xf32>
    %439 = arith.addf %438, %437 : vector<16x128xf32>
    %440 = tpu.reciprocal %439 {approx = true} : vector<16x128xf32> -> vector<16x128xf32>
    %441 = vector.extract_strided_slice %440 {offsets = [0, 0], sizes = [4, 128], strides = [1, 1]} : vector<16x128xf32> to vector<4x128xf32>
    %c2_562 = arith.constant 2 : index
    %c2_563 = arith.constant 2 : index
    %c0_564 = arith.constant 0 : index
    %442 = vector.load %arg12[%c2_562, %c2_563, %c0_564] : memref<8x8x128xf32, #tpu.memory_space<vmem>>, vector<1x4x128xf32>
    %443 = vector.shape_cast %442 : vector<1x4x128xf32> to vector<4x128xf32>
    %444 = vector.shape_cast %441 : vector<4x128xf32> to vector<1x4x128xf32>
    tpu.vector_store %arg12[%c2_562, %c2_563, %c0_564], %444 {strides = array<i32>} : memref<8x8x128xf32, #tpu.memory_space<vmem>>, vector<1x4x128xf32>,
    %445 = vector.extract_strided_slice %440 {offsets = [4, 0], sizes = [4, 128], strides = [1, 1]} : vector<16x128xf32> to vector<4x128xf32>
    %c3_565 = arith.constant 3 : index
    %c2_566 = arith.constant 2 : index
    %c0_567 = arith.constant 0 : index
    %446 = vector.load %arg12[%c3_565, %c2_566, %c0_567] : memref<8x8x128xf32, #tpu.memory_space<vmem>>, vector<1x4x128xf32>
    %447 = vector.shape_cast %446 : vector<1x4x128xf32> to vector<4x128xf32>
    %448 = vector.shape_cast %445 : vector<4x128xf32> to vector<1x4x128xf32>
    tpu.vector_store %arg12[%c3_565, %c2_566, %c0_567], %448 {strides = array<i32>} : memref<8x8x128xf32, #tpu.memory_space<vmem>>, vector<1x4x128xf32>,
    %449 = vector.extract_strided_slice %440 {offsets = [8, 0], sizes = [4, 128], strides = [1, 1]} : vector<16x128xf32> to vector<4x128xf32>
    %c4_568 = arith.constant 4 : index
    %c2_569 = arith.constant 2 : index
    %c0_570 = arith.constant 0 : index
    %450 = vector.load %arg12[%c4_568, %c2_569, %c0_570] : memref<8x8x128xf32, #tpu.memory_space<vmem>>, vector<1x4x128xf32>
    %451 = vector.shape_cast %450 : vector<1x4x128xf32> to vector<4x128xf32>
    %452 = vector.shape_cast %449 : vector<4x128xf32> to vector<1x4x128xf32>
    tpu.vector_store %arg12[%c4_568, %c2_569, %c0_570], %452 {strides = array<i32>} : memref<8x8x128xf32, #tpu.memory_space<vmem>>, vector<1x4x128xf32>,
    %453 = vector.extract_strided_slice %440 {offsets = [12, 0], sizes = [4, 128], strides = [1, 1]} : vector<16x128xf32> to vector<4x128xf32>
    %c5_571 = arith.constant 5 : index
    %c2_572 = arith.constant 2 : index
    %c0_573 = arith.constant 0 : index
    %454 = vector.load %arg12[%c5_571, %c2_572, %c0_573] : memref<8x8x128xf32, #tpu.memory_space<vmem>>, vector<1x4x128xf32>
    %455 = vector.shape_cast %454 : vector<1x4x128xf32> to vector<4x128xf32>
    %456 = vector.shape_cast %453 : vector<4x128xf32> to vector<1x4x128xf32>
    tpu.vector_store %arg12[%c5_571, %c2_572, %c0_573], %456 {strides = array<i32>} : memref<8x8x128xf32, #tpu.memory_space<vmem>>, vector<1x4x128xf32>,
    %cst_574 = arith.constant 0.000000e+00 : f32
    %457 = vector.broadcast %cst_574 : f32 to vector<16x128xf32>
    %c0_575 = arith.constant 0 : index
    %c0_576 = arith.constant 0 : index
    %c0_577 = arith.constant 0 : index
    %458 = vector.load %arg12[%c0_575, %c0_576, %c0_577] : memref<8x8x128xf32, #tpu.memory_space<vmem>>, vector<1x4x128xf32>
    %459 = vector.shape_cast %458 : vector<1x4x128xf32> to vector<4x128xf32>
    %c1_578 = arith.constant 1 : index
    %c0_579 = arith.constant 0 : index
    %c0_580 = arith.constant 0 : index
    %460 = vector.load %arg12[%c1_578, %c0_579, %c0_580] : memref<8x8x128xf32, #tpu.memory_space<vmem>>, vector<1x4x128xf32>
    %461 = vector.shape_cast %460 : vector<1x4x128xf32> to vector<4x128xf32>
    %c2_581 = arith.constant 2 : index
    %c0_582 = arith.constant 0 : index
    %c0_583 = arith.constant 0 : index
    %462 = vector.load %arg12[%c2_581, %c0_582, %c0_583] : memref<8x8x128xf32, #tpu.memory_space<vmem>>, vector<1x4x128xf32>
    %463 = vector.shape_cast %462 : vector<1x4x128xf32> to vector<4x128xf32>
    %c3_584 = arith.constant 3 : index
    %c0_585 = arith.constant 0 : index
    %c0_586 = arith.constant 0 : index
    %464 = vector.load %arg12[%c3_584, %c0_585, %c0_586] : memref<8x8x128xf32, #tpu.memory_space<vmem>>, vector<1x4x128xf32>
    %465 = vector.shape_cast %464 : vector<1x4x128xf32> to vector<4x128xf32>
    %466 = tpu.concatenate %459, %461, %463, %465 in 0 : vector<4x128xf32>, vector<4x128xf32>, vector<4x128xf32>, vector<4x128xf32> -> vector<16x128xf32>
    %467 = arith.truncf %466 : vector<16x128xf32> to vector<16x128xbf16>
    %c0_587 = arith.constant 0 : index
    %c0_588 = arith.constant 0 : index
    %c0_589 = arith.constant 0 : index
    %468 = vector.load %arg6[%c0_587, %c0_588, %c0_589] : memref<25x128x128xbf16, #tpu.memory_space<vmem>>, vector<1x128x128xbf16>
    %469 = vector.shape_cast %468 : vector<1x128x128xbf16> to vector<128x128xbf16>
    %cst_590 = arith.constant dense<0.000000e+00> : vector<16x128xf32>
    %470 = tpu.matmul %467, %469, %cst_590 {dimension_numbers = #tpu.dot_dimension_numbers<[1], [0], [0], [1], [0, 0, 1, 1], [], []>} : vector<16x128xbf16>, vector<128x128xbf16>, vector<16x128xf32> -> vector<16x128xf32>
    %471 = arith.addf %457, %470 : vector<16x128xf32>
    %c0_591 = arith.constant 0 : index
    %c1_592 = arith.constant 1 : index
    %c0_593 = arith.constant 0 : index
    %472 = vector.load %arg12[%c0_591, %c1_592, %c0_593] : memref<8x8x128xf32, #tpu.memory_space<vmem>>, vector<1x4x128xf32>
    %473 = vector.shape_cast %472 : vector<1x4x128xf32> to vector<4x128xf32>
    %c1_594 = arith.constant 1 : index
    %c1_595 = arith.constant 1 : index
    %c0_596 = arith.constant 0 : index
    %474 = vector.load %arg12[%c1_594, %c1_595, %c0_596] : memref<8x8x128xf32, #tpu.memory_space<vmem>>, vector<1x4x128xf32>
    %475 = vector.shape_cast %474 : vector<1x4x128xf32> to vector<4x128xf32>
    %c2_597 = arith.constant 2 : index
    %c1_598 = arith.constant 1 : index
    %c0_599 = arith.constant 0 : index
    %476 = vector.load %arg12[%c2_597, %c1_598, %c0_599] : memref<8x8x128xf32, #tpu.memory_space<vmem>>, vector<1x4x128xf32>
    %477 = vector.shape_cast %476 : vector<1x4x128xf32> to vector<4x128xf32>
    %c3_600 = arith.constant 3 : index
    %c1_601 = arith.constant 1 : index
    %c0_602 = arith.constant 0 : index
    %478 = vector.load %arg12[%c3_600, %c1_601, %c0_602] : memref<8x8x128xf32, #tpu.memory_space<vmem>>, vector<1x4x128xf32>
    %479 = vector.shape_cast %478 : vector<1x4x128xf32> to vector<4x128xf32>
    %480 = tpu.concatenate %473, %475, %477, %479 in 0 : vector<4x128xf32>, vector<4x128xf32>, vector<4x128xf32>, vector<4x128xf32> -> vector<16x128xf32>
    %481 = arith.truncf %480 : vector<16x128xf32> to vector<16x128xbf16>
    %c1_603 = arith.constant 1 : index
    %c0_604 = arith.constant 0 : index
    %c0_605 = arith.constant 0 : index
    %482 = vector.load %arg6[%c1_603, %c0_604, %c0_605] : memref<25x128x128xbf16, #tpu.memory_space<vmem>>, vector<1x128x128xbf16>
    %483 = vector.shape_cast %482 : vector<1x128x128xbf16> to vector<128x128xbf16>
    %cst_606 = arith.constant dense<0.000000e+00> : vector<16x128xf32>
    %484 = tpu.matmul %481, %483, %cst_606 {dimension_numbers = #tpu.dot_dimension_numbers<[1], [0], [0], [1], [0, 0, 1, 1], [], []>} : vector<16x128xbf16>, vector<128x128xbf16>, vector<16x128xf32> -> vector<16x128xf32>
    %485 = arith.addf %471, %484 : vector<16x128xf32>
    %c0_607 = arith.constant 0 : index
    %c2_608 = arith.constant 2 : index
    %c0_609 = arith.constant 0 : index
    %486 = vector.load %arg12[%c0_607, %c2_608, %c0_609] : memref<8x8x128xf32, #tpu.memory_space<vmem>>, vector<1x4x128xf32>
    %487 = vector.shape_cast %486 : vector<1x4x128xf32> to vector<4x128xf32>
    %c1_610 = arith.constant 1 : index
    %c2_611 = arith.constant 2 : index
    %c0_612 = arith.constant 0 : index
    %488 = vector.load %arg12[%c1_610, %c2_611, %c0_612] : memref<8x8x128xf32, #tpu.memory_space<vmem>>, vector<1x4x128xf32>
    %489 = vector.shape_cast %488 : vector<1x4x128xf32> to vector<4x128xf32>
    %c2_613 = arith.constant 2 : index
    %c2_614 = arith.constant 2 : index
    %c0_615 = arith.constant 0 : index
    %490 = vector.load %arg12[%c2_613, %c2_614, %c0_615] : memref<8x8x128xf32, #tpu.memory_space<vmem>>, vector<1x4x128xf32>
    %491 = vector.shape_cast %490 : vector<1x4x128xf32> to vector<4x128xf32>
    %c3_616 = arith.constant 3 : index
    %c2_617 = arith.constant 2 : index
    %c0_618 = arith.constant 0 : index
    %492 = vector.load %arg12[%c3_616, %c2_617, %c0_618] : memref<8x8x128xf32, #tpu.memory_space<vmem>>, vector<1x4x128xf32>
    %493 = vector.shape_cast %492 : vector<1x4x128xf32> to vector<4x128xf32>
    %494 = tpu.concatenate %487, %489, %491, %493 in 0 : vector<4x128xf32>, vector<4x128xf32>, vector<4x128xf32>, vector<4x128xf32> -> vector<16x128xf32>
    %495 = arith.truncf %494 : vector<16x128xf32> to vector<16x128xbf16>
    %c2_619 = arith.constant 2 : index
    %c0_620 = arith.constant 0 : index
    %c0_621 = arith.constant 0 : index
    %496 = vector.load %arg6[%c2_619, %c0_620, %c0_621] : memref<25x128x128xbf16, #tpu.memory_space<vmem>>, vector<1x128x128xbf16>
    %497 = vector.shape_cast %496 : vector<1x128x128xbf16> to vector<128x128xbf16>
    %cst_622 = arith.constant dense<0.000000e+00> : vector<16x128xf32>
    %498 = tpu.matmul %495, %497, %cst_622 {dimension_numbers = #tpu.dot_dimension_numbers<[1], [0], [0], [1], [0, 0, 1, 1], [], []>} : vector<16x128xbf16>, vector<128x128xbf16>, vector<16x128xf32> -> vector<16x128xf32>
    %499 = arith.addf %485, %498 : vector<16x128xf32>
    %c0_623 = arith.constant 0 : index
    %c3_624 = arith.constant 3 : index
    %c0_625 = arith.constant 0 : index
    %500 = vector.load %arg12[%c0_623, %c3_624, %c0_625] : memref<8x8x128xf32, #tpu.memory_space<vmem>>, vector<1x4x128xf32>
    %501 = vector.shape_cast %500 : vector<1x4x128xf32> to vector<4x128xf32>
    %c1_626 = arith.constant 1 : index
    %c3_627 = arith.constant 3 : index
    %c0_628 = arith.constant 0 : index
    %502 = vector.load %arg12[%c1_626, %c3_627, %c0_628] : memref<8x8x128xf32, #tpu.memory_space<vmem>>, vector<1x4x128xf32>
    %503 = vector.shape_cast %502 : vector<1x4x128xf32> to vector<4x128xf32>
    %c2_629 = arith.constant 2 : index
    %c3_630 = arith.constant 3 : index
    %c0_631 = arith.constant 0 : index
    %504 = vector.load %arg12[%c2_629, %c3_630, %c0_631] : memref<8x8x128xf32, #tpu.memory_space<vmem>>, vector<1x4x128xf32>
    %505 = vector.shape_cast %504 : vector<1x4x128xf32> to vector<4x128xf32>
    %c3_632 = arith.constant 3 : index
    %c3_633 = arith.constant 3 : index
    %c0_634 = arith.constant 0 : index
    %506 = vector.load %arg12[%c3_632, %c3_633, %c0_634] : memref<8x8x128xf32, #tpu.memory_space<vmem>>, vector<1x4x128xf32>
    %507 = vector.shape_cast %506 : vector<1x4x128xf32> to vector<4x128xf32>
    %508 = tpu.concatenate %501, %503, %505, %507 in 0 : vector<4x128xf32>, vector<4x128xf32>, vector<4x128xf32>, vector<4x128xf32> -> vector<16x128xf32>
    %509 = arith.truncf %508 : vector<16x128xf32> to vector<16x128xbf16>
    %c3_635 = arith.constant 3 : index
    %c0_636 = arith.constant 0 : index
    %c0_637 = arith.constant 0 : index
    %510 = vector.load %arg6[%c3_635, %c0_636, %c0_637] : memref<25x128x128xbf16, #tpu.memory_space<vmem>>, vector<1x128x128xbf16>
    %511 = vector.shape_cast %510 : vector<1x128x128xbf16> to vector<128x128xbf16>
    %cst_638 = arith.constant dense<0.000000e+00> : vector<16x128xf32>
    %512 = tpu.matmul %509, %511, %cst_638 {dimension_numbers = #tpu.dot_dimension_numbers<[1], [0], [0], [1], [0, 0, 1, 1], [], []>} : vector<16x128xbf16>, vector<128x128xbf16>, vector<16x128xf32> -> vector<16x128xf32>
    %513 = arith.addf %499, %512 : vector<16x128xf32>
    %c0_639 = arith.constant 0 : index
    %c4_640 = arith.constant 4 : index
    %c0_641 = arith.constant 0 : index
    %514 = vector.load %arg12[%c0_639, %c4_640, %c0_641] : memref<8x8x128xf32, #tpu.memory_space<vmem>>, vector<1x4x128xf32>
    %515 = vector.shape_cast %514 : vector<1x4x128xf32> to vector<4x128xf32>
    %c1_642 = arith.constant 1 : index
    %c4_643 = arith.constant 4 : index
    %c0_644 = arith.constant 0 : index
    %516 = vector.load %arg12[%c1_642, %c4_643, %c0_644] : memref<8x8x128xf32, #tpu.memory_space<vmem>>, vector<1x4x128xf32>
    %517 = vector.shape_cast %516 : vector<1x4x128xf32> to vector<4x128xf32>
    %c2_645 = arith.constant 2 : index
    %c4_646 = arith.constant 4 : index
    %c0_647 = arith.constant 0 : index
    %518 = vector.load %arg12[%c2_645, %c4_646, %c0_647] : memref<8x8x128xf32, #tpu.memory_space<vmem>>, vector<1x4x128xf32>
    %519 = vector.shape_cast %518 : vector<1x4x128xf32> to vector<4x128xf32>
    %c3_648 = arith.constant 3 : index
    %c4_649 = arith.constant 4 : index
    %c0_650 = arith.constant 0 : index
    %520 = vector.load %arg12[%c3_648, %c4_649, %c0_650] : memref<8x8x128xf32, #tpu.memory_space<vmem>>, vector<1x4x128xf32>
    %521 = vector.shape_cast %520 : vector<1x4x128xf32> to vector<4x128xf32>
    %522 = tpu.concatenate %515, %517, %519, %521 in 0 : vector<4x128xf32>, vector<4x128xf32>, vector<4x128xf32>, vector<4x128xf32> -> vector<16x128xf32>
    %523 = arith.truncf %522 : vector<16x128xf32> to vector<16x128xbf16>
    %c4_651 = arith.constant 4 : index
    %c0_652 = arith.constant 0 : index
    %c0_653 = arith.constant 0 : index
    %524 = vector.load %arg6[%c4_651, %c0_652, %c0_653] : memref<25x128x128xbf16, #tpu.memory_space<vmem>>, vector<1x128x128xbf16>
    %525 = vector.shape_cast %524 : vector<1x128x128xbf16> to vector<128x128xbf16>
    %cst_654 = arith.constant dense<0.000000e+00> : vector<16x128xf32>
    %526 = tpu.matmul %523, %525, %cst_654 {dimension_numbers = #tpu.dot_dimension_numbers<[1], [0], [0], [1], [0, 0, 1, 1], [], []>} : vector<16x128xbf16>, vector<128x128xbf16>, vector<16x128xf32> -> vector<16x128xf32>
    %527 = arith.addf %513, %526 : vector<16x128xf32>
    %c1_655 = arith.constant 1 : index
    %c0_656 = arith.constant 0 : index
    %c0_657 = arith.constant 0 : index
    %528 = vector.load %arg12[%c1_655, %c0_656, %c0_657] : memref<8x8x128xf32, #tpu.memory_space<vmem>>, vector<1x4x128xf32>
    %529 = vector.shape_cast %528 : vector<1x4x128xf32> to vector<4x128xf32>
    %c2_658 = arith.constant 2 : index
    %c0_659 = arith.constant 0 : index
    %c0_660 = arith.constant 0 : index
    %530 = vector.load %arg12[%c2_658, %c0_659, %c0_660] : memref<8x8x128xf32, #tpu.memory_space<vmem>>, vector<1x4x128xf32>
    %531 = vector.shape_cast %530 : vector<1x4x128xf32> to vector<4x128xf32>
    %c3_661 = arith.constant 3 : index
    %c0_662 = arith.constant 0 : index
    %c0_663 = arith.constant 0 : index
    %532 = vector.load %arg12[%c3_661, %c0_662, %c0_663] : memref<8x8x128xf32, #tpu.memory_space<vmem>>, vector<1x4x128xf32>
    %533 = vector.shape_cast %532 : vector<1x4x128xf32> to vector<4x128xf32>
    %c4_664 = arith.constant 4 : index
    %c0_665 = arith.constant 0 : index
    %c0_666 = arith.constant 0 : index
    %534 = vector.load %arg12[%c4_664, %c0_665, %c0_666] : memref<8x8x128xf32, #tpu.memory_space<vmem>>, vector<1x4x128xf32>
    %535 = vector.shape_cast %534 : vector<1x4x128xf32> to vector<4x128xf32>
    %536 = tpu.concatenate %529, %531, %533, %535 in 0 : vector<4x128xf32>, vector<4x128xf32>, vector<4x128xf32>, vector<4x128xf32> -> vector<16x128xf32>
    %537 = arith.truncf %536 : vector<16x128xf32> to vector<16x128xbf16>
    %c5_667 = arith.constant 5 : index
    %c0_668 = arith.constant 0 : index
    %c0_669 = arith.constant 0 : index
    %538 = vector.load %arg6[%c5_667, %c0_668, %c0_669] : memref<25x128x128xbf16, #tpu.memory_space<vmem>>, vector<1x128x128xbf16>
    %539 = vector.shape_cast %538 : vector<1x128x128xbf16> to vector<128x128xbf16>
    %cst_670 = arith.constant dense<0.000000e+00> : vector<16x128xf32>
    %540 = tpu.matmul %537, %539, %cst_670 {dimension_numbers = #tpu.dot_dimension_numbers<[1], [0], [0], [1], [0, 0, 1, 1], [], []>} : vector<16x128xbf16>, vector<128x128xbf16>, vector<16x128xf32> -> vector<16x128xf32>
    %541 = arith.addf %527, %540 : vector<16x128xf32>
    %c1_671 = arith.constant 1 : index
    %c1_672 = arith.constant 1 : index
    %c0_673 = arith.constant 0 : index
    %542 = vector.load %arg12[%c1_671, %c1_672, %c0_673] : memref<8x8x128xf32, #tpu.memory_space<vmem>>, vector<1x4x128xf32>
    %543 = vector.shape_cast %542 : vector<1x4x128xf32> to vector<4x128xf32>
    %c2_674 = arith.constant 2 : index
    %c1_675 = arith.constant 1 : index
    %c0_676 = arith.constant 0 : index
    %544 = vector.load %arg12[%c2_674, %c1_675, %c0_676] : memref<8x8x128xf32, #tpu.memory_space<vmem>>, vector<1x4x128xf32>
    %545 = vector.shape_cast %544 : vector<1x4x128xf32> to vector<4x128xf32>
    %c3_677 = arith.constant 3 : index
    %c1_678 = arith.constant 1 : index
    %c0_679 = arith.constant 0 : index
    %546 = vector.load %arg12[%c3_677, %c1_678, %c0_679] : memref<8x8x128xf32, #tpu.memory_space<vmem>>, vector<1x4x128xf32>
    %547 = vector.shape_cast %546 : vector<1x4x128xf32> to vector<4x128xf32>
    %c4_680 = arith.constant 4 : index
    %c1_681 = arith.constant 1 : index
    %c0_682 = arith.constant 0 : index
    %548 = vector.load %arg12[%c4_680, %c1_681, %c0_682] : memref<8x8x128xf32, #tpu.memory_space<vmem>>, vector<1x4x128xf32>
    %549 = vector.shape_cast %548 : vector<1x4x128xf32> to vector<4x128xf32>
    %550 = tpu.concatenate %543, %545, %547, %549 in 0 : vector<4x128xf32>, vector<4x128xf32>, vector<4x128xf32>, vector<4x128xf32> -> vector<16x128xf32>
    %551 = arith.truncf %550 : vector<16x128xf32> to vector<16x128xbf16>
    %c6_683 = arith.constant 6 : index
    %c0_684 = arith.constant 0 : index
    %c0_685 = arith.constant 0 : index
    %552 = vector.load %arg6[%c6_683, %c0_684, %c0_685] : memref<25x128x128xbf16, #tpu.memory_space<vmem>>, vector<1x128x128xbf16>
    %553 = vector.shape_cast %552 : vector<1x128x128xbf16> to vector<128x128xbf16>
    %cst_686 = arith.constant dense<0.000000e+00> : vector<16x128xf32>
    %554 = tpu.matmul %551, %553, %cst_686 {dimension_numbers = #tpu.dot_dimension_numbers<[1], [0], [0], [1], [0, 0, 1, 1], [], []>} : vector<16x128xbf16>, vector<128x128xbf16>, vector<16x128xf32> -> vector<16x128xf32>
    %555 = arith.addf %541, %554 : vector<16x128xf32>
    %c1_687 = arith.constant 1 : index
    %c2_688 = arith.constant 2 : index
    %c0_689 = arith.constant 0 : index
    %556 = vector.load %arg12[%c1_687, %c2_688, %c0_689] : memref<8x8x128xf32, #tpu.memory_space<vmem>>, vector<1x4x128xf32>
    %557 = vector.shape_cast %556 : vector<1x4x128xf32> to vector<4x128xf32>
    %c2_690 = arith.constant 2 : index
    %c2_691 = arith.constant 2 : index
    %c0_692 = arith.constant 0 : index
    %558 = vector.load %arg12[%c2_690, %c2_691, %c0_692] : memref<8x8x128xf32, #tpu.memory_space<vmem>>, vector<1x4x128xf32>
    %559 = vector.shape_cast %558 : vector<1x4x128xf32> to vector<4x128xf32>
    %c3_693 = arith.constant 3 : index
    %c2_694 = arith.constant 2 : index
    %c0_695 = arith.constant 0 : index
    %560 = vector.load %arg12[%c3_693, %c2_694, %c0_695] : memref<8x8x128xf32, #tpu.memory_space<vmem>>, vector<1x4x128xf32>
    %561 = vector.shape_cast %560 : vector<1x4x128xf32> to vector<4x128xf32>
    %c4_696 = arith.constant 4 : index
    %c2_697 = arith.constant 2 : index
    %c0_698 = arith.constant 0 : index
    %562 = vector.load %arg12[%c4_696, %c2_697, %c0_698] : memref<8x8x128xf32, #tpu.memory_space<vmem>>, vector<1x4x128xf32>
    %563 = vector.shape_cast %562 : vector<1x4x128xf32> to vector<4x128xf32>
    %564 = tpu.concatenate %557, %559, %561, %563 in 0 : vector<4x128xf32>, vector<4x128xf32>, vector<4x128xf32>, vector<4x128xf32> -> vector<16x128xf32>
    %565 = arith.truncf %564 : vector<16x128xf32> to vector<16x128xbf16>
    %c7_699 = arith.constant 7 : index
    %c0_700 = arith.constant 0 : index
    %c0_701 = arith.constant 0 : index
    %566 = vector.load %arg6[%c7_699, %c0_700, %c0_701] : memref<25x128x128xbf16, #tpu.memory_space<vmem>>, vector<1x128x128xbf16>
    %567 = vector.shape_cast %566 : vector<1x128x128xbf16> to vector<128x128xbf16>
    %cst_702 = arith.constant dense<0.000000e+00> : vector<16x128xf32>
    %568 = tpu.matmul %565, %567, %cst_702 {dimension_numbers = #tpu.dot_dimension_numbers<[1], [0], [0], [1], [0, 0, 1, 1], [], []>} : vector<16x128xbf16>, vector<128x128xbf16>, vector<16x128xf32> -> vector<16x128xf32>
    %569 = arith.addf %555, %568 : vector<16x128xf32>
    %c1_703 = arith.constant 1 : index
    %c3_704 = arith.constant 3 : index
    %c0_705 = arith.constant 0 : index
    %570 = vector.load %arg12[%c1_703, %c3_704, %c0_705] : memref<8x8x128xf32, #tpu.memory_space<vmem>>, vector<1x4x128xf32>
    %571 = vector.shape_cast %570 : vector<1x4x128xf32> to vector<4x128xf32>
    %c2_706 = arith.constant 2 : index
    %c3_707 = arith.constant 3 : index
    %c0_708 = arith.constant 0 : index
    %572 = vector.load %arg12[%c2_706, %c3_707, %c0_708] : memref<8x8x128xf32, #tpu.memory_space<vmem>>, vector<1x4x128xf32>
    %573 = vector.shape_cast %572 : vector<1x4x128xf32> to vector<4x128xf32>
    %c3_709 = arith.constant 3 : index
    %c3_710 = arith.constant 3 : index
    %c0_711 = arith.constant 0 : index
    %574 = vector.load %arg12[%c3_709, %c3_710, %c0_711] : memref<8x8x128xf32, #tpu.memory_space<vmem>>, vector<1x4x128xf32>
    %575 = vector.shape_cast %574 : vector<1x4x128xf32> to vector<4x128xf32>
    %c4_712 = arith.constant 4 : index
    %c3_713 = arith.constant 3 : index
    %c0_714 = arith.constant 0 : index
    %576 = vector.load %arg12[%c4_712, %c3_713, %c0_714] : memref<8x8x128xf32, #tpu.memory_space<vmem>>, vector<1x4x128xf32>
    %577 = vector.shape_cast %576 : vector<1x4x128xf32> to vector<4x128xf32>
    %578 = tpu.concatenate %571, %573, %575, %577 in 0 : vector<4x128xf32>, vector<4x128xf32>, vector<4x128xf32>, vector<4x128xf32> -> vector<16x128xf32>
    %579 = arith.truncf %578 : vector<16x128xf32> to vector<16x128xbf16>
    %c8_715 = arith.constant 8 : index
    %c0_716 = arith.constant 0 : index
    %c0_717 = arith.constant 0 : index
    %580 = vector.load %arg6[%c8_715, %c0_716, %c0_717] : memref<25x128x128xbf16, #tpu.memory_space<vmem>>, vector<1x128x128xbf16>
    %581 = vector.shape_cast %580 : vector<1x128x128xbf16> to vector<128x128xbf16>
    %cst_718 = arith.constant dense<0.000000e+00> : vector<16x128xf32>
    %582 = tpu.matmul %579, %581, %cst_718 {dimension_numbers = #tpu.dot_dimension_numbers<[1], [0], [0], [1], [0, 0, 1, 1], [], []>} : vector<16x128xbf16>, vector<128x128xbf16>, vector<16x128xf32> -> vector<16x128xf32>
    %583 = arith.addf %569, %582 : vector<16x128xf32>
    %c1_719 = arith.constant 1 : index
    %c4_720 = arith.constant 4 : index
    %c0_721 = arith.constant 0 : index
    %584 = vector.load %arg12[%c1_719, %c4_720, %c0_721] : memref<8x8x128xf32, #tpu.memory_space<vmem>>, vector<1x4x128xf32>
    %585 = vector.shape_cast %584 : vector<1x4x128xf32> to vector<4x128xf32>
    %c2_722 = arith.constant 2 : index
    %c4_723 = arith.constant 4 : index
    %c0_724 = arith.constant 0 : index
    %586 = vector.load %arg12[%c2_722, %c4_723, %c0_724] : memref<8x8x128xf32, #tpu.memory_space<vmem>>, vector<1x4x128xf32>
    %587 = vector.shape_cast %586 : vector<1x4x128xf32> to vector<4x128xf32>
    %c3_725 = arith.constant 3 : index
    %c4_726 = arith.constant 4 : index
    %c0_727 = arith.constant 0 : index
    %588 = vector.load %arg12[%c3_725, %c4_726, %c0_727] : memref<8x8x128xf32, #tpu.memory_space<vmem>>, vector<1x4x128xf32>
    %589 = vector.shape_cast %588 : vector<1x4x128xf32> to vector<4x128xf32>
    %c4_728 = arith.constant 4 : index
    %c4_729 = arith.constant 4 : index
    %c0_730 = arith.constant 0 : index
    %590 = vector.load %arg12[%c4_728, %c4_729, %c0_730] : memref<8x8x128xf32, #tpu.memory_space<vmem>>, vector<1x4x128xf32>
    %591 = vector.shape_cast %590 : vector<1x4x128xf32> to vector<4x128xf32>
    %592 = tpu.concatenate %585, %587, %589, %591 in 0 : vector<4x128xf32>, vector<4x128xf32>, vector<4x128xf32>, vector<4x128xf32> -> vector<16x128xf32>
    %593 = arith.truncf %592 : vector<16x128xf32> to vector<16x128xbf16>
    %c9_731 = arith.constant 9 : index
    %c0_732 = arith.constant 0 : index
    %c0_733 = arith.constant 0 : index
    %594 = vector.load %arg6[%c9_731, %c0_732, %c0_733] : memref<25x128x128xbf16, #tpu.memory_space<vmem>>, vector<1x128x128xbf16>
    %595 = vector.shape_cast %594 : vector<1x128x128xbf16> to vector<128x128xbf16>
    %cst_734 = arith.constant dense<0.000000e+00> : vector<16x128xf32>
    %596 = tpu.matmul %593, %595, %cst_734 {dimension_numbers = #tpu.dot_dimension_numbers<[1], [0], [0], [1], [0, 0, 1, 1], [], []>} : vector<16x128xbf16>, vector<128x128xbf16>, vector<16x128xf32> -> vector<16x128xf32>
    %597 = arith.addf %583, %596 : vector<16x128xf32>
    %c2_735 = arith.constant 2 : index
    %c0_736 = arith.constant 0 : index
    %c0_737 = arith.constant 0 : index
    %598 = vector.load %arg12[%c2_735, %c0_736, %c0_737] : memref<8x8x128xf32, #tpu.memory_space<vmem>>, vector<1x4x128xf32>
    %599 = vector.shape_cast %598 : vector<1x4x128xf32> to vector<4x128xf32>
    %c3_738 = arith.constant 3 : index
    %c0_739 = arith.constant 0 : index
    %c0_740 = arith.constant 0 : index
    %600 = vector.load %arg12[%c3_738, %c0_739, %c0_740] : memref<8x8x128xf32, #tpu.memory_space<vmem>>, vector<1x4x128xf32>
    %601 = vector.shape_cast %600 : vector<1x4x128xf32> to vector<4x128xf32>
    %c4_741 = arith.constant 4 : index
    %c0_742 = arith.constant 0 : index
    %c0_743 = arith.constant 0 : index
    %602 = vector.load %arg12[%c4_741, %c0_742, %c0_743] : memref<8x8x128xf32, #tpu.memory_space<vmem>>, vector<1x4x128xf32>
    %603 = vector.shape_cast %602 : vector<1x4x128xf32> to vector<4x128xf32>
    %c5_744 = arith.constant 5 : index
    %c0_745 = arith.constant 0 : index
    %c0_746 = arith.constant 0 : index
    %604 = vector.load %arg12[%c5_744, %c0_745, %c0_746] : memref<8x8x128xf32, #tpu.memory_space<vmem>>, vector<1x4x128xf32>
    %605 = vector.shape_cast %604 : vector<1x4x128xf32> to vector<4x128xf32>
    %606 = tpu.concatenate %599, %601, %603, %605 in 0 : vector<4x128xf32>, vector<4x128xf32>, vector<4x128xf32>, vector<4x128xf32> -> vector<16x128xf32>
    %607 = arith.truncf %606 : vector<16x128xf32> to vector<16x128xbf16>
    %c10_747 = arith.constant 10 : index
    %c0_748 = arith.constant 0 : index
    %c0_749 = arith.constant 0 : index
    %608 = vector.load %arg6[%c10_747, %c0_748, %c0_749] : memref<25x128x128xbf16, #tpu.memory_space<vmem>>, vector<1x128x128xbf16>
    %609 = vector.shape_cast %608 : vector<1x128x128xbf16> to vector<128x128xbf16>
    %cst_750 = arith.constant dense<0.000000e+00> : vector<16x128xf32>
    %610 = tpu.matmul %607, %609, %cst_750 {dimension_numbers = #tpu.dot_dimension_numbers<[1], [0], [0], [1], [0, 0, 1, 1], [], []>} : vector<16x128xbf16>, vector<128x128xbf16>, vector<16x128xf32> -> vector<16x128xf32>
    %611 = arith.addf %597, %610 : vector<16x128xf32>
    %c2_751 = arith.constant 2 : index
    %c1_752 = arith.constant 1 : index
    %c0_753 = arith.constant 0 : index
    %612 = vector.load %arg12[%c2_751, %c1_752, %c0_753] : memref<8x8x128xf32, #tpu.memory_space<vmem>>, vector<1x4x128xf32>
    %613 = vector.shape_cast %612 : vector<1x4x128xf32> to vector<4x128xf32>
    %c3_754 = arith.constant 3 : index
    %c1_755 = arith.constant 1 : index
    %c0_756 = arith.constant 0 : index
    %614 = vector.load %arg12[%c3_754, %c1_755, %c0_756] : memref<8x8x128xf32, #tpu.memory_space<vmem>>, vector<1x4x128xf32>
    %615 = vector.shape_cast %614 : vector<1x4x128xf32> to vector<4x128xf32>
    %c4_757 = arith.constant 4 : index
    %c1_758 = arith.constant 1 : index
    %c0_759 = arith.constant 0 : index
    %616 = vector.load %arg12[%c4_757, %c1_758, %c0_759] : memref<8x8x128xf32, #tpu.memory_space<vmem>>, vector<1x4x128xf32>
    %617 = vector.shape_cast %616 : vector<1x4x128xf32> to vector<4x128xf32>
    %c5_760 = arith.constant 5 : index
    %c1_761 = arith.constant 1 : index
    %c0_762 = arith.constant 0 : index
    %618 = vector.load %arg12[%c5_760, %c1_761, %c0_762] : memref<8x8x128xf32, #tpu.memory_space<vmem>>, vector<1x4x128xf32>
    %619 = vector.shape_cast %618 : vector<1x4x128xf32> to vector<4x128xf32>
    %620 = tpu.concatenate %613, %615, %617, %619 in 0 : vector<4x128xf32>, vector<4x128xf32>, vector<4x128xf32>, vector<4x128xf32> -> vector<16x128xf32>
    %621 = arith.truncf %620 : vector<16x128xf32> to vector<16x128xbf16>
    %c11_763 = arith.constant 11 : index
    %c0_764 = arith.constant 0 : index
    %c0_765 = arith.constant 0 : index
    %622 = vector.load %arg6[%c11_763, %c0_764, %c0_765] : memref<25x128x128xbf16, #tpu.memory_space<vmem>>, vector<1x128x128xbf16>
    %623 = vector.shape_cast %622 : vector<1x128x128xbf16> to vector<128x128xbf16>
    %cst_766 = arith.constant dense<0.000000e+00> : vector<16x128xf32>
    %624 = tpu.matmul %621, %623, %cst_766 {dimension_numbers = #tpu.dot_dimension_numbers<[1], [0], [0], [1], [0, 0, 1, 1], [], []>} : vector<16x128xbf16>, vector<128x128xbf16>, vector<16x128xf32> -> vector<16x128xf32>
    %625 = arith.addf %611, %624 : vector<16x128xf32>
    %c2_767 = arith.constant 2 : index
    %c2_768 = arith.constant 2 : index
    %c0_769 = arith.constant 0 : index
    %626 = vector.load %arg12[%c2_767, %c2_768, %c0_769] : memref<8x8x128xf32, #tpu.memory_space<vmem>>, vector<1x4x128xf32>
    %627 = vector.shape_cast %626 : vector<1x4x128xf32> to vector<4x128xf32>
    %c3_770 = arith.constant 3 : index
    %c2_771 = arith.constant 2 : index
    %c0_772 = arith.constant 0 : index
    %628 = vector.load %arg12[%c3_770, %c2_771, %c0_772] : memref<8x8x128xf32, #tpu.memory_space<vmem>>, vector<1x4x128xf32>
    %629 = vector.shape_cast %628 : vector<1x4x128xf32> to vector<4x128xf32>
    %c4_773 = arith.constant 4 : index
    %c2_774 = arith.constant 2 : index
    %c0_775 = arith.constant 0 : index
    %630 = vector.load %arg12[%c4_773, %c2_774, %c0_775] : memref<8x8x128xf32, #tpu.memory_space<vmem>>, vector<1x4x128xf32>
    %631 = vector.shape_cast %630 : vector<1x4x128xf32> to vector<4x128xf32>
    %c5_776 = arith.constant 5 : index
    %c2_777 = arith.constant 2 : index
    %c0_778 = arith.constant 0 : index
    %632 = vector.load %arg12[%c5_776, %c2_777, %c0_778] : memref<8x8x128xf32, #tpu.memory_space<vmem>>, vector<1x4x128xf32>
    %633 = vector.shape_cast %632 : vector<1x4x128xf32> to vector<4x128xf32>
    %634 = tpu.concatenate %627, %629, %631, %633 in 0 : vector<4x128xf32>, vector<4x128xf32>, vector<4x128xf32>, vector<4x128xf32> -> vector<16x128xf32>
    %635 = arith.truncf %634 : vector<16x128xf32> to vector<16x128xbf16>
    %c12_779 = arith.constant 12 : index
    %c0_780 = arith.constant 0 : index
    %c0_781 = arith.constant 0 : index
    %636 = vector.load %arg6[%c12_779, %c0_780, %c0_781] : memref<25x128x128xbf16, #tpu.memory_space<vmem>>, vector<1x128x128xbf16>
    %637 = vector.shape_cast %636 : vector<1x128x128xbf16> to vector<128x128xbf16>
    %cst_782 = arith.constant dense<0.000000e+00> : vector<16x128xf32>
    %638 = tpu.matmul %635, %637, %cst_782 {dimension_numbers = #tpu.dot_dimension_numbers<[1], [0], [0], [1], [0, 0, 1, 1], [], []>} : vector<16x128xbf16>, vector<128x128xbf16>, vector<16x128xf32> -> vector<16x128xf32>
    %639 = arith.addf %625, %638 : vector<16x128xf32>
    %c2_783 = arith.constant 2 : index
    %c3_784 = arith.constant 3 : index
    %c0_785 = arith.constant 0 : index
    %640 = vector.load %arg12[%c2_783, %c3_784, %c0_785] : memref<8x8x128xf32, #tpu.memory_space<vmem>>, vector<1x4x128xf32>
    %641 = vector.shape_cast %640 : vector<1x4x128xf32> to vector<4x128xf32>
    %c3_786 = arith.constant 3 : index
    %c3_787 = arith.constant 3 : index
    %c0_788 = arith.constant 0 : index
    %642 = vector.load %arg12[%c3_786, %c3_787, %c0_788] : memref<8x8x128xf32, #tpu.memory_space<vmem>>, vector<1x4x128xf32>
    %643 = vector.shape_cast %642 : vector<1x4x128xf32> to vector<4x128xf32>
    %c4_789 = arith.constant 4 : index
    %c3_790 = arith.constant 3 : index
    %c0_791 = arith.constant 0 : index
    %644 = vector.load %arg12[%c4_789, %c3_790, %c0_791] : memref<8x8x128xf32, #tpu.memory_space<vmem>>, vector<1x4x128xf32>
    %645 = vector.shape_cast %644 : vector<1x4x128xf32> to vector<4x128xf32>
    %c5_792 = arith.constant 5 : index
    %c3_793 = arith.constant 3 : index
    %c0_794 = arith.constant 0 : index
    %646 = vector.load %arg12[%c5_792, %c3_793, %c0_794] : memref<8x8x128xf32, #tpu.memory_space<vmem>>, vector<1x4x128xf32>
    %647 = vector.shape_cast %646 : vector<1x4x128xf32> to vector<4x128xf32>
    %648 = tpu.concatenate %641, %643, %645, %647 in 0 : vector<4x128xf32>, vector<4x128xf32>, vector<4x128xf32>, vector<4x128xf32> -> vector<16x128xf32>
    %649 = arith.truncf %648 : vector<16x128xf32> to vector<16x128xbf16>
    %c13_795 = arith.constant 13 : index
    %c0_796 = arith.constant 0 : index
    %c0_797 = arith.constant 0 : index
    %650 = vector.load %arg6[%c13_795, %c0_796, %c0_797] : memref<25x128x128xbf16, #tpu.memory_space<vmem>>, vector<1x128x128xbf16>
    %651 = vector.shape_cast %650 : vector<1x128x128xbf16> to vector<128x128xbf16>
    %cst_798 = arith.constant dense<0.000000e+00> : vector<16x128xf32>
    %652 = tpu.matmul %649, %651, %cst_798 {dimension_numbers = #tpu.dot_dimension_numbers<[1], [0], [0], [1], [0, 0, 1, 1], [], []>} : vector<16x128xbf16>, vector<128x128xbf16>, vector<16x128xf32> -> vector<16x128xf32>
    %653 = arith.addf %639, %652 : vector<16x128xf32>
    %c2_799 = arith.constant 2 : index
    %c4_800 = arith.constant 4 : index
    %c0_801 = arith.constant 0 : index
    %654 = vector.load %arg12[%c2_799, %c4_800, %c0_801] : memref<8x8x128xf32, #tpu.memory_space<vmem>>, vector<1x4x128xf32>
    %655 = vector.shape_cast %654 : vector<1x4x128xf32> to vector<4x128xf32>
    %c3_802 = arith.constant 3 : index
    %c4_803 = arith.constant 4 : index
    %c0_804 = arith.constant 0 : index
    %656 = vector.load %arg12[%c3_802, %c4_803, %c0_804] : memref<8x8x128xf32, #tpu.memory_space<vmem>>, vector<1x4x128xf32>
    %657 = vector.shape_cast %656 : vector<1x4x128xf32> to vector<4x128xf32>
    %c4_805 = arith.constant 4 : index
    %c4_806 = arith.constant 4 : index
    %c0_807 = arith.constant 0 : index
    %658 = vector.load %arg12[%c4_805, %c4_806, %c0_807] : memref<8x8x128xf32, #tpu.memory_space<vmem>>, vector<1x4x128xf32>
    %659 = vector.shape_cast %658 : vector<1x4x128xf32> to vector<4x128xf32>
    %c5_808 = arith.constant 5 : index
    %c4_809 = arith.constant 4 : index
    %c0_810 = arith.constant 0 : index
    %660 = vector.load %arg12[%c5_808, %c4_809, %c0_810] : memref<8x8x128xf32, #tpu.memory_space<vmem>>, vector<1x4x128xf32>
    %661 = vector.shape_cast %660 : vector<1x4x128xf32> to vector<4x128xf32>
    %662 = tpu.concatenate %655, %657, %659, %661 in 0 : vector<4x128xf32>, vector<4x128xf32>, vector<4x128xf32>, vector<4x128xf32> -> vector<16x128xf32>
    %663 = arith.truncf %662 : vector<16x128xf32> to vector<16x128xbf16>
    %c14_811 = arith.constant 14 : index
    %c0_812 = arith.constant 0 : index
    %c0_813 = arith.constant 0 : index
    %664 = vector.load %arg6[%c14_811, %c0_812, %c0_813] : memref<25x128x128xbf16, #tpu.memory_space<vmem>>, vector<1x128x128xbf16>
    %665 = vector.shape_cast %664 : vector<1x128x128xbf16> to vector<128x128xbf16>
    %cst_814 = arith.constant dense<0.000000e+00> : vector<16x128xf32>
    %666 = tpu.matmul %663, %665, %cst_814 {dimension_numbers = #tpu.dot_dimension_numbers<[1], [0], [0], [1], [0, 0, 1, 1], [], []>} : vector<16x128xbf16>, vector<128x128xbf16>, vector<16x128xf32> -> vector<16x128xf32>
    %667 = arith.addf %653, %666 : vector<16x128xf32>
    %c3_815 = arith.constant 3 : index
    %c0_816 = arith.constant 0 : index
    %c0_817 = arith.constant 0 : index
    %668 = vector.load %arg12[%c3_815, %c0_816, %c0_817] : memref<8x8x128xf32, #tpu.memory_space<vmem>>, vector<1x4x128xf32>
    %669 = vector.shape_cast %668 : vector<1x4x128xf32> to vector<4x128xf32>
    %c4_818 = arith.constant 4 : index
    %c0_819 = arith.constant 0 : index
    %c0_820 = arith.constant 0 : index
    %670 = vector.load %arg12[%c4_818, %c0_819, %c0_820] : memref<8x8x128xf32, #tpu.memory_space<vmem>>, vector<1x4x128xf32>
    %671 = vector.shape_cast %670 : vector<1x4x128xf32> to vector<4x128xf32>
    %c5_821 = arith.constant 5 : index
    %c0_822 = arith.constant 0 : index
    %c0_823 = arith.constant 0 : index
    %672 = vector.load %arg12[%c5_821, %c0_822, %c0_823] : memref<8x8x128xf32, #tpu.memory_space<vmem>>, vector<1x4x128xf32>
    %673 = vector.shape_cast %672 : vector<1x4x128xf32> to vector<4x128xf32>
    %c6_824 = arith.constant 6 : index
    %c0_825 = arith.constant 0 : index
    %c0_826 = arith.constant 0 : index
    %674 = vector.load %arg12[%c6_824, %c0_825, %c0_826] : memref<8x8x128xf32, #tpu.memory_space<vmem>>, vector<1x4x128xf32>
    %675 = vector.shape_cast %674 : vector<1x4x128xf32> to vector<4x128xf32>
    %676 = tpu.concatenate %669, %671, %673, %675 in 0 : vector<4x128xf32>, vector<4x128xf32>, vector<4x128xf32>, vector<4x128xf32> -> vector<16x128xf32>
    %677 = arith.truncf %676 : vector<16x128xf32> to vector<16x128xbf16>
    %c15_827 = arith.constant 15 : index
    %c0_828 = arith.constant 0 : index
    %c0_829 = arith.constant 0 : index
    %678 = vector.load %arg6[%c15_827, %c0_828, %c0_829] : memref<25x128x128xbf16, #tpu.memory_space<vmem>>, vector<1x128x128xbf16>
    %679 = vector.shape_cast %678 : vector<1x128x128xbf16> to vector<128x128xbf16>
    %cst_830 = arith.constant dense<0.000000e+00> : vector<16x128xf32>
    %680 = tpu.matmul %677, %679, %cst_830 {dimension_numbers = #tpu.dot_dimension_numbers<[1], [0], [0], [1], [0, 0, 1, 1], [], []>} : vector<16x128xbf16>, vector<128x128xbf16>, vector<16x128xf32> -> vector<16x128xf32>
    %681 = arith.addf %667, %680 : vector<16x128xf32>
    %c3_831 = arith.constant 3 : index
    %c1_832 = arith.constant 1 : index
    %c0_833 = arith.constant 0 : index
    %682 = vector.load %arg12[%c3_831, %c1_832, %c0_833] : memref<8x8x128xf32, #tpu.memory_space<vmem>>, vector<1x4x128xf32>
    %683 = vector.shape_cast %682 : vector<1x4x128xf32> to vector<4x128xf32>
    %c4_834 = arith.constant 4 : index
    %c1_835 = arith.constant 1 : index
    %c0_836 = arith.constant 0 : index
    %684 = vector.load %arg12[%c4_834, %c1_835, %c0_836] : memref<8x8x128xf32, #tpu.memory_space<vmem>>, vector<1x4x128xf32>
    %685 = vector.shape_cast %684 : vector<1x4x128xf32> to vector<4x128xf32>
    %c5_837 = arith.constant 5 : index
    %c1_838 = arith.constant 1 : index
    %c0_839 = arith.constant 0 : index
    %686 = vector.load %arg12[%c5_837, %c1_838, %c0_839] : memref<8x8x128xf32, #tpu.memory_space<vmem>>, vector<1x4x128xf32>
    %687 = vector.shape_cast %686 : vector<1x4x128xf32> to vector<4x128xf32>
    %c6_840 = arith.constant 6 : index
    %c1_841 = arith.constant 1 : index
    %c0_842 = arith.constant 0 : index
    %688 = vector.load %arg12[%c6_840, %c1_841, %c0_842] : memref<8x8x128xf32, #tpu.memory_space<vmem>>, vector<1x4x128xf32>
    %689 = vector.shape_cast %688 : vector<1x4x128xf32> to vector<4x128xf32>
    %690 = tpu.concatenate %683, %685, %687, %689 in 0 : vector<4x128xf32>, vector<4x128xf32>, vector<4x128xf32>, vector<4x128xf32> -> vector<16x128xf32>
    %691 = arith.truncf %690 : vector<16x128xf32> to vector<16x128xbf16>
    %c16_843 = arith.constant 16 : index
    %c0_844 = arith.constant 0 : index
    %c0_845 = arith.constant 0 : index
    %692 = vector.load %arg6[%c16_843, %c0_844, %c0_845] : memref<25x128x128xbf16, #tpu.memory_space<vmem>>, vector<1x128x128xbf16>
    %693 = vector.shape_cast %692 : vector<1x128x128xbf16> to vector<128x128xbf16>
    %cst_846 = arith.constant dense<0.000000e+00> : vector<16x128xf32>
    %694 = tpu.matmul %691, %693, %cst_846 {dimension_numbers = #tpu.dot_dimension_numbers<[1], [0], [0], [1], [0, 0, 1, 1], [], []>} : vector<16x128xbf16>, vector<128x128xbf16>, vector<16x128xf32> -> vector<16x128xf32>
    %695 = arith.addf %681, %694 : vector<16x128xf32>
    %c3_847 = arith.constant 3 : index
    %c2_848 = arith.constant 2 : index
    %c0_849 = arith.constant 0 : index
    %696 = vector.load %arg12[%c3_847, %c2_848, %c0_849] : memref<8x8x128xf32, #tpu.memory_space<vmem>>, vector<1x4x128xf32>
    %697 = vector.shape_cast %696 : vector<1x4x128xf32> to vector<4x128xf32>
    %c4_850 = arith.constant 4 : index
    %c2_851 = arith.constant 2 : index
    %c0_852 = arith.constant 0 : index
    %698 = vector.load %arg12[%c4_850, %c2_851, %c0_852] : memref<8x8x128xf32, #tpu.memory_space<vmem>>, vector<1x4x128xf32>
    %699 = vector.shape_cast %698 : vector<1x4x128xf32> to vector<4x128xf32>
    %c5_853 = arith.constant 5 : index
    %c2_854 = arith.constant 2 : index
    %c0_855 = arith.constant 0 : index
    %700 = vector.load %arg12[%c5_853, %c2_854, %c0_855] : memref<8x8x128xf32, #tpu.memory_space<vmem>>, vector<1x4x128xf32>
    %701 = vector.shape_cast %700 : vector<1x4x128xf32> to vector<4x128xf32>
    %c6_856 = arith.constant 6 : index
    %c2_857 = arith.constant 2 : index
    %c0_858 = arith.constant 0 : index
    %702 = vector.load %arg12[%c6_856, %c2_857, %c0_858] : memref<8x8x128xf32, #tpu.memory_space<vmem>>, vector<1x4x128xf32>
    %703 = vector.shape_cast %702 : vector<1x4x128xf32> to vector<4x128xf32>
    %704 = tpu.concatenate %697, %699, %701, %703 in 0 : vector<4x128xf32>, vector<4x128xf32>, vector<4x128xf32>, vector<4x128xf32> -> vector<16x128xf32>
    %705 = arith.truncf %704 : vector<16x128xf32> to vector<16x128xbf16>
    %c17_859 = arith.constant 17 : index
    %c0_860 = arith.constant 0 : index
    %c0_861 = arith.constant 0 : index
    %706 = vector.load %arg6[%c17_859, %c0_860, %c0_861] : memref<25x128x128xbf16, #tpu.memory_space<vmem>>, vector<1x128x128xbf16>
    %707 = vector.shape_cast %706 : vector<1x128x128xbf16> to vector<128x128xbf16>
    %cst_862 = arith.constant dense<0.000000e+00> : vector<16x128xf32>
    %708 = tpu.matmul %705, %707, %cst_862 {dimension_numbers = #tpu.dot_dimension_numbers<[1], [0], [0], [1], [0, 0, 1, 1], [], []>} : vector<16x128xbf16>, vector<128x128xbf16>, vector<16x128xf32> -> vector<16x128xf32>
    %709 = arith.addf %695, %708 : vector<16x128xf32>
    %c3_863 = arith.constant 3 : index
    %c3_864 = arith.constant 3 : index
    %c0_865 = arith.constant 0 : index
    %710 = vector.load %arg12[%c3_863, %c3_864, %c0_865] : memref<8x8x128xf32, #tpu.memory_space<vmem>>, vector<1x4x128xf32>
    %711 = vector.shape_cast %710 : vector<1x4x128xf32> to vector<4x128xf32>
    %c4_866 = arith.constant 4 : index
    %c3_867 = arith.constant 3 : index
    %c0_868 = arith.constant 0 : index
    %712 = vector.load %arg12[%c4_866, %c3_867, %c0_868] : memref<8x8x128xf32, #tpu.memory_space<vmem>>, vector<1x4x128xf32>
    %713 = vector.shape_cast %712 : vector<1x4x128xf32> to vector<4x128xf32>
    %c5_869 = arith.constant 5 : index
    %c3_870 = arith.constant 3 : index
    %c0_871 = arith.constant 0 : index
    %714 = vector.load %arg12[%c5_869, %c3_870, %c0_871] : memref<8x8x128xf32, #tpu.memory_space<vmem>>, vector<1x4x128xf32>
    %715 = vector.shape_cast %714 : vector<1x4x128xf32> to vector<4x128xf32>
    %c6_872 = arith.constant 6 : index
    %c3_873 = arith.constant 3 : index
    %c0_874 = arith.constant 0 : index
    %716 = vector.load %arg12[%c6_872, %c3_873, %c0_874] : memref<8x8x128xf32, #tpu.memory_space<vmem>>, vector<1x4x128xf32>
    %717 = vector.shape_cast %716 : vector<1x4x128xf32> to vector<4x128xf32>
    %718 = tpu.concatenate %711, %713, %715, %717 in 0 : vector<4x128xf32>, vector<4x128xf32>, vector<4x128xf32>, vector<4x128xf32> -> vector<16x128xf32>
    %719 = arith.truncf %718 : vector<16x128xf32> to vector<16x128xbf16>
    %c18_875 = arith.constant 18 : index
    %c0_876 = arith.constant 0 : index
    %c0_877 = arith.constant 0 : index
    %720 = vector.load %arg6[%c18_875, %c0_876, %c0_877] : memref<25x128x128xbf16, #tpu.memory_space<vmem>>, vector<1x128x128xbf16>
    %721 = vector.shape_cast %720 : vector<1x128x128xbf16> to vector<128x128xbf16>
    %cst_878 = arith.constant dense<0.000000e+00> : vector<16x128xf32>
    %722 = tpu.matmul %719, %721, %cst_878 {dimension_numbers = #tpu.dot_dimension_numbers<[1], [0], [0], [1], [0, 0, 1, 1], [], []>} : vector<16x128xbf16>, vector<128x128xbf16>, vector<16x128xf32> -> vector<16x128xf32>
    %723 = arith.addf %709, %722 : vector<16x128xf32>
    %c3_879 = arith.constant 3 : index
    %c4_880 = arith.constant 4 : index
    %c0_881 = arith.constant 0 : index
    %724 = vector.load %arg12[%c3_879, %c4_880, %c0_881] : memref<8x8x128xf32, #tpu.memory_space<vmem>>, vector<1x4x128xf32>
    %725 = vector.shape_cast %724 : vector<1x4x128xf32> to vector<4x128xf32>
    %c4_882 = arith.constant 4 : index
    %c4_883 = arith.constant 4 : index
    %c0_884 = arith.constant 0 : index
    %726 = vector.load %arg12[%c4_882, %c4_883, %c0_884] : memref<8x8x128xf32, #tpu.memory_space<vmem>>, vector<1x4x128xf32>
    %727 = vector.shape_cast %726 : vector<1x4x128xf32> to vector<4x128xf32>
    %c5_885 = arith.constant 5 : index
    %c4_886 = arith.constant 4 : index
    %c0_887 = arith.constant 0 : index
    %728 = vector.load %arg12[%c5_885, %c4_886, %c0_887] : memref<8x8x128xf32, #tpu.memory_space<vmem>>, vector<1x4x128xf32>
    %729 = vector.shape_cast %728 : vector<1x4x128xf32> to vector<4x128xf32>
    %c6_888 = arith.constant 6 : index
    %c4_889 = arith.constant 4 : index
    %c0_890 = arith.constant 0 : index
    %730 = vector.load %arg12[%c6_888, %c4_889, %c0_890] : memref<8x8x128xf32, #tpu.memory_space<vmem>>, vector<1x4x128xf32>
    %731 = vector.shape_cast %730 : vector<1x4x128xf32> to vector<4x128xf32>
    %732 = tpu.concatenate %725, %727, %729, %731 in 0 : vector<4x128xf32>, vector<4x128xf32>, vector<4x128xf32>, vector<4x128xf32> -> vector<16x128xf32>
    %733 = arith.truncf %732 : vector<16x128xf32> to vector<16x128xbf16>
    %c19_891 = arith.constant 19 : index
    %c0_892 = arith.constant 0 : index
    %c0_893 = arith.constant 0 : index
    %734 = vector.load %arg6[%c19_891, %c0_892, %c0_893] : memref<25x128x128xbf16, #tpu.memory_space<vmem>>, vector<1x128x128xbf16>
    %735 = vector.shape_cast %734 : vector<1x128x128xbf16> to vector<128x128xbf16>
    %cst_894 = arith.constant dense<0.000000e+00> : vector<16x128xf32>
    %736 = tpu.matmul %733, %735, %cst_894 {dimension_numbers = #tpu.dot_dimension_numbers<[1], [0], [0], [1], [0, 0, 1, 1], [], []>} : vector<16x128xbf16>, vector<128x128xbf16>, vector<16x128xf32> -> vector<16x128xf32>
    %737 = arith.addf %723, %736 : vector<16x128xf32>
    %c4_895 = arith.constant 4 : index
    %c0_896 = arith.constant 0 : index
    %c0_897 = arith.constant 0 : index
    %738 = vector.load %arg12[%c4_895, %c0_896, %c0_897] : memref<8x8x128xf32, #tpu.memory_space<vmem>>, vector<1x4x128xf32>
    %739 = vector.shape_cast %738 : vector<1x4x128xf32> to vector<4x128xf32>
    %c5_898 = arith.constant 5 : index
    %c0_899 = arith.constant 0 : index
    %c0_900 = arith.constant 0 : index
    %740 = vector.load %arg12[%c5_898, %c0_899, %c0_900] : memref<8x8x128xf32, #tpu.memory_space<vmem>>, vector<1x4x128xf32>
    %741 = vector.shape_cast %740 : vector<1x4x128xf32> to vector<4x128xf32>
    %c6_901 = arith.constant 6 : index
    %c0_902 = arith.constant 0 : index
    %c0_903 = arith.constant 0 : index
    %742 = vector.load %arg12[%c6_901, %c0_902, %c0_903] : memref<8x8x128xf32, #tpu.memory_space<vmem>>, vector<1x4x128xf32>
    %743 = vector.shape_cast %742 : vector<1x4x128xf32> to vector<4x128xf32>
    %c7_904 = arith.constant 7 : index
    %c0_905 = arith.constant 0 : index
    %c0_906 = arith.constant 0 : index
    %744 = vector.load %arg12[%c7_904, %c0_905, %c0_906] : memref<8x8x128xf32, #tpu.memory_space<vmem>>, vector<1x4x128xf32>
    %745 = vector.shape_cast %744 : vector<1x4x128xf32> to vector<4x128xf32>
    %746 = tpu.concatenate %739, %741, %743, %745 in 0 : vector<4x128xf32>, vector<4x128xf32>, vector<4x128xf32>, vector<4x128xf32> -> vector<16x128xf32>
    %747 = arith.truncf %746 : vector<16x128xf32> to vector<16x128xbf16>
    %c20_907 = arith.constant 20 : index
    %c0_908 = arith.constant 0 : index
    %c0_909 = arith.constant 0 : index
    %748 = vector.load %arg6[%c20_907, %c0_908, %c0_909] : memref<25x128x128xbf16, #tpu.memory_space<vmem>>, vector<1x128x128xbf16>
    %749 = vector.shape_cast %748 : vector<1x128x128xbf16> to vector<128x128xbf16>
    %cst_910 = arith.constant dense<0.000000e+00> : vector<16x128xf32>
    %750 = tpu.matmul %747, %749, %cst_910 {dimension_numbers = #tpu.dot_dimension_numbers<[1], [0], [0], [1], [0, 0, 1, 1], [], []>} : vector<16x128xbf16>, vector<128x128xbf16>, vector<16x128xf32> -> vector<16x128xf32>
    %751 = arith.addf %737, %750 : vector<16x128xf32>
    %c4_911 = arith.constant 4 : index
    %c1_912 = arith.constant 1 : index
    %c0_913 = arith.constant 0 : index
    %752 = vector.load %arg12[%c4_911, %c1_912, %c0_913] : memref<8x8x128xf32, #tpu.memory_space<vmem>>, vector<1x4x128xf32>
    %753 = vector.shape_cast %752 : vector<1x4x128xf32> to vector<4x128xf32>
    %c5_914 = arith.constant 5 : index
    %c1_915 = arith.constant 1 : index
    %c0_916 = arith.constant 0 : index
    %754 = vector.load %arg12[%c5_914, %c1_915, %c0_916] : memref<8x8x128xf32, #tpu.memory_space<vmem>>, vector<1x4x128xf32>
    %755 = vector.shape_cast %754 : vector<1x4x128xf32> to vector<4x128xf32>
    %c6_917 = arith.constant 6 : index
    %c1_918 = arith.constant 1 : index
    %c0_919 = arith.constant 0 : index
    %756 = vector.load %arg12[%c6_917, %c1_918, %c0_919] : memref<8x8x128xf32, #tpu.memory_space<vmem>>, vector<1x4x128xf32>
    %757 = vector.shape_cast %756 : vector<1x4x128xf32> to vector<4x128xf32>
    %c7_920 = arith.constant 7 : index
    %c1_921 = arith.constant 1 : index
    %c0_922 = arith.constant 0 : index
    %758 = vector.load %arg12[%c7_920, %c1_921, %c0_922] : memref<8x8x128xf32, #tpu.memory_space<vmem>>, vector<1x4x128xf32>
    %759 = vector.shape_cast %758 : vector<1x4x128xf32> to vector<4x128xf32>
    %760 = tpu.concatenate %753, %755, %757, %759 in 0 : vector<4x128xf32>, vector<4x128xf32>, vector<4x128xf32>, vector<4x128xf32> -> vector<16x128xf32>
    %761 = arith.truncf %760 : vector<16x128xf32> to vector<16x128xbf16>
    %c21_923 = arith.constant 21 : index
    %c0_924 = arith.constant 0 : index
    %c0_925 = arith.constant 0 : index
    %762 = vector.load %arg6[%c21_923, %c0_924, %c0_925] : memref<25x128x128xbf16, #tpu.memory_space<vmem>>, vector<1x128x128xbf16>
    %763 = vector.shape_cast %762 : vector<1x128x128xbf16> to vector<128x128xbf16>
    %cst_926 = arith.constant dense<0.000000e+00> : vector<16x128xf32>
    %764 = tpu.matmul %761, %763, %cst_926 {dimension_numbers = #tpu.dot_dimension_numbers<[1], [0], [0], [1], [0, 0, 1, 1], [], []>} : vector<16x128xbf16>, vector<128x128xbf16>, vector<16x128xf32> -> vector<16x128xf32>
    %765 = arith.addf %751, %764 : vector<16x128xf32>
    %c4_927 = arith.constant 4 : index
    %c2_928 = arith.constant 2 : index
    %c0_929 = arith.constant 0 : index
    %766 = vector.load %arg12[%c4_927, %c2_928, %c0_929] : memref<8x8x128xf32, #tpu.memory_space<vmem>>, vector<1x4x128xf32>
    %767 = vector.shape_cast %766 : vector<1x4x128xf32> to vector<4x128xf32>
    %c5_930 = arith.constant 5 : index
    %c2_931 = arith.constant 2 : index
    %c0_932 = arith.constant 0 : index
    %768 = vector.load %arg12[%c5_930, %c2_931, %c0_932] : memref<8x8x128xf32, #tpu.memory_space<vmem>>, vector<1x4x128xf32>
    %769 = vector.shape_cast %768 : vector<1x4x128xf32> to vector<4x128xf32>
    %c6_933 = arith.constant 6 : index
    %c2_934 = arith.constant 2 : index
    %c0_935 = arith.constant 0 : index
    %770 = vector.load %arg12[%c6_933, %c2_934, %c0_935] : memref<8x8x128xf32, #tpu.memory_space<vmem>>, vector<1x4x128xf32>
    %771 = vector.shape_cast %770 : vector<1x4x128xf32> to vector<4x128xf32>
    %c7_936 = arith.constant 7 : index
    %c2_937 = arith.constant 2 : index
    %c0_938 = arith.constant 0 : index
    %772 = vector.load %arg12[%c7_936, %c2_937, %c0_938] : memref<8x8x128xf32, #tpu.memory_space<vmem>>, vector<1x4x128xf32>
    %773 = vector.shape_cast %772 : vector<1x4x128xf32> to vector<4x128xf32>
    %774 = tpu.concatenate %767, %769, %771, %773 in 0 : vector<4x128xf32>, vector<4x128xf32>, vector<4x128xf32>, vector<4x128xf32> -> vector<16x128xf32>
    %775 = arith.truncf %774 : vector<16x128xf32> to vector<16x128xbf16>
    %c22_939 = arith.constant 22 : index
    %c0_940 = arith.constant 0 : index
    %c0_941 = arith.constant 0 : index
    %776 = vector.load %arg6[%c22_939, %c0_940, %c0_941] : memref<25x128x128xbf16, #tpu.memory_space<vmem>>, vector<1x128x128xbf16>
    %777 = vector.shape_cast %776 : vector<1x128x128xbf16> to vector<128x128xbf16>
    %cst_942 = arith.constant dense<0.000000e+00> : vector<16x128xf32>
    %778 = tpu.matmul %775, %777, %cst_942 {dimension_numbers = #tpu.dot_dimension_numbers<[1], [0], [0], [1], [0, 0, 1, 1], [], []>} : vector<16x128xbf16>, vector<128x128xbf16>, vector<16x128xf32> -> vector<16x128xf32>
    %779 = arith.addf %765, %778 : vector<16x128xf32>
    %c4_943 = arith.constant 4 : index
    %c3_944 = arith.constant 3 : index
    %c0_945 = arith.constant 0 : index
    %780 = vector.load %arg12[%c4_943, %c3_944, %c0_945] : memref<8x8x128xf32, #tpu.memory_space<vmem>>, vector<1x4x128xf32>
    %781 = vector.shape_cast %780 : vector<1x4x128xf32> to vector<4x128xf32>
    %c5_946 = arith.constant 5 : index
    %c3_947 = arith.constant 3 : index
    %c0_948 = arith.constant 0 : index
    %782 = vector.load %arg12[%c5_946, %c3_947, %c0_948] : memref<8x8x128xf32, #tpu.memory_space<vmem>>, vector<1x4x128xf32>
    %783 = vector.shape_cast %782 : vector<1x4x128xf32> to vector<4x128xf32>
    %c6_949 = arith.constant 6 : index
    %c3_950 = arith.constant 3 : index
    %c0_951 = arith.constant 0 : index
    %784 = vector.load %arg12[%c6_949, %c3_950, %c0_951] : memref<8x8x128xf32, #tpu.memory_space<vmem>>, vector<1x4x128xf32>
    %785 = vector.shape_cast %784 : vector<1x4x128xf32> to vector<4x128xf32>
    %c7_952 = arith.constant 7 : index
    %c3_953 = arith.constant 3 : index
    %c0_954 = arith.constant 0 : index
    %786 = vector.load %arg12[%c7_952, %c3_953, %c0_954] : memref<8x8x128xf32, #tpu.memory_space<vmem>>, vector<1x4x128xf32>
    %787 = vector.shape_cast %786 : vector<1x4x128xf32> to vector<4x128xf32>
    %788 = tpu.concatenate %781, %783, %785, %787 in 0 : vector<4x128xf32>, vector<4x128xf32>, vector<4x128xf32>, vector<4x128xf32> -> vector<16x128xf32>
    %789 = arith.truncf %788 : vector<16x128xf32> to vector<16x128xbf16>
    %c23_955 = arith.constant 23 : index
    %c0_956 = arith.constant 0 : index
    %c0_957 = arith.constant 0 : index
    %790 = vector.load %arg6[%c23_955, %c0_956, %c0_957] : memref<25x128x128xbf16, #tpu.memory_space<vmem>>, vector<1x128x128xbf16>
    %791 = vector.shape_cast %790 : vector<1x128x128xbf16> to vector<128x128xbf16>
    %cst_958 = arith.constant dense<0.000000e+00> : vector<16x128xf32>
    %792 = tpu.matmul %789, %791, %cst_958 {dimension_numbers = #tpu.dot_dimension_numbers<[1], [0], [0], [1], [0, 0, 1, 1], [], []>} : vector<16x128xbf16>, vector<128x128xbf16>, vector<16x128xf32> -> vector<16x128xf32>
    %793 = arith.addf %779, %792 : vector<16x128xf32>
    %c4_959 = arith.constant 4 : index
    %c4_960 = arith.constant 4 : index
    %c0_961 = arith.constant 0 : index
    %794 = vector.load %arg12[%c4_959, %c4_960, %c0_961] : memref<8x8x128xf32, #tpu.memory_space<vmem>>, vector<1x4x128xf32>
    %795 = vector.shape_cast %794 : vector<1x4x128xf32> to vector<4x128xf32>
    %c5_962 = arith.constant 5 : index
    %c4_963 = arith.constant 4 : index
    %c0_964 = arith.constant 0 : index
    %796 = vector.load %arg12[%c5_962, %c4_963, %c0_964] : memref<8x8x128xf32, #tpu.memory_space<vmem>>, vector<1x4x128xf32>
    %797 = vector.shape_cast %796 : vector<1x4x128xf32> to vector<4x128xf32>
    %c6_965 = arith.constant 6 : index
    %c4_966 = arith.constant 4 : index
    %c0_967 = arith.constant 0 : index
    %798 = vector.load %arg12[%c6_965, %c4_966, %c0_967] : memref<8x8x128xf32, #tpu.memory_space<vmem>>, vector<1x4x128xf32>
    %799 = vector.shape_cast %798 : vector<1x4x128xf32> to vector<4x128xf32>
    %c7_968 = arith.constant 7 : index
    %c4_969 = arith.constant 4 : index
    %c0_970 = arith.constant 0 : index
    %800 = vector.load %arg12[%c7_968, %c4_969, %c0_970] : memref<8x8x128xf32, #tpu.memory_space<vmem>>, vector<1x4x128xf32>
    %801 = vector.shape_cast %800 : vector<1x4x128xf32> to vector<4x128xf32>
    %802 = tpu.concatenate %795, %797, %799, %801 in 0 : vector<4x128xf32>, vector<4x128xf32>, vector<4x128xf32>, vector<4x128xf32> -> vector<16x128xf32>
    %803 = arith.truncf %802 : vector<16x128xf32> to vector<16x128xbf16>
    %c24_971 = arith.constant 24 : index
    %c0_972 = arith.constant 0 : index
    %c0_973 = arith.constant 0 : index
    %804 = vector.load %arg6[%c24_971, %c0_972, %c0_973] : memref<25x128x128xbf16, #tpu.memory_space<vmem>>, vector<1x128x128xbf16>
    %805 = vector.shape_cast %804 : vector<1x128x128xbf16> to vector<128x128xbf16>
    %cst_974 = arith.constant dense<0.000000e+00> : vector<16x128xf32>
    %806 = tpu.matmul %803, %805, %cst_974 {dimension_numbers = #tpu.dot_dimension_numbers<[1], [0], [0], [1], [0, 0, 1, 1], [], []>} : vector<16x128xbf16>, vector<128x128xbf16>, vector<16x128xf32> -> vector<16x128xf32>
    %807 = arith.addf %793, %806 : vector<16x128xf32>
    %c0_975 = arith.constant 0 : index
    %c0_976 = arith.constant 0 : index
    %808 = vector.load %arg7[%c0_975, %c0_976] : memref<1x128xf32, #tpu.memory_space<vmem>>, vector<1x128xf32>
    %809 = vector.broadcast %808 : vector<1x128xf32> to vector<16x128xf32>
    %810 = arith.addf %807, %809 : vector<16x128xf32>
    %cst_977 = arith.constant 0.000000e+00 : f32
    %811 = vector.broadcast %cst_977 : f32 to vector<16x128xf32>
    %812 = arith.subf %811, %810 : vector<16x128xf32>
    %813 = math.exp %812 : vector<16x128xf32>
    %cst_978 = arith.constant 1.000000e+00 : f32
    %814 = vector.broadcast %cst_978 : f32 to vector<16x128xf32>
    %815 = arith.addf %814, %813 : vector<16x128xf32>
    %816 = tpu.reciprocal %815 {approx = true} : vector<16x128xf32> -> vector<16x128xf32>
    %817 = arith.truncf %816 : vector<16x128xf32> to vector<16x128xbf16>
    %cst_979 = arith.constant 0.000000e+00 : f32
    %818 = vector.broadcast %cst_979 : f32 to vector<1x128xf32>
    %819 = vector.extract_strided_slice %817 {offsets = [0, 0], sizes = [1, 128], strides = [1, 1]} : vector<16x128xbf16> to vector<1x128xbf16>
    %c0_980 = arith.constant 0 : index
    %c0_981 = arith.constant 0 : index
    %c0_982 = arith.constant 0 : index
    %820 = vector.load %arg8[%c0_980, %c0_981, %c0_982] : memref<16x128x128xbf16, #tpu.memory_space<vmem>>, vector<1x128x128xbf16>
    %821 = vector.shape_cast %820 : vector<1x128x128xbf16> to vector<128x128xbf16>
    %cst_983 = arith.constant dense<0.000000e+00> : vector<1x128xf32>
    %822 = tpu.matmul %819, %821, %cst_983 {dimension_numbers = #tpu.dot_dimension_numbers<[1], [0], [0], [1], [0, 0, 1, 1], [], []>} : vector<1x128xbf16>, vector<128x128xbf16>, vector<1x128xf32> -> vector<1x128xf32>
    %823 = arith.addf %818, %822 : vector<1x128xf32>
    %824 = vector.extract_strided_slice %817 {offsets = [1, 0], sizes = [1, 128], strides = [1, 1]} : vector<16x128xbf16> to vector<1x128xbf16>
    %c1_984 = arith.constant 1 : index
    %c0_985 = arith.constant 0 : index
    %c0_986 = arith.constant 0 : index
    %825 = vector.load %arg8[%c1_984, %c0_985, %c0_986] : memref<16x128x128xbf16, #tpu.memory_space<vmem>>, vector<1x128x128xbf16>
    %826 = vector.shape_cast %825 : vector<1x128x128xbf16> to vector<128x128xbf16>
    %cst_987 = arith.constant dense<0.000000e+00> : vector<1x128xf32>
    %827 = tpu.matmul %824, %826, %cst_987 {dimension_numbers = #tpu.dot_dimension_numbers<[1], [0], [0], [1], [0, 0, 1, 1], [], []>} : vector<1x128xbf16>, vector<128x128xbf16>, vector<1x128xf32> -> vector<1x128xf32>
    %828 = arith.addf %823, %827 : vector<1x128xf32>
    %829 = vector.extract_strided_slice %817 {offsets = [2, 0], sizes = [1, 128], strides = [1, 1]} : vector<16x128xbf16> to vector<1x128xbf16>
    %c2_988 = arith.constant 2 : index
    %c0_989 = arith.constant 0 : index
    %c0_990 = arith.constant 0 : index
    %830 = vector.load %arg8[%c2_988, %c0_989, %c0_990] : memref<16x128x128xbf16, #tpu.memory_space<vmem>>, vector<1x128x128xbf16>
    %831 = vector.shape_cast %830 : vector<1x128x128xbf16> to vector<128x128xbf16>
    %cst_991 = arith.constant dense<0.000000e+00> : vector<1x128xf32>
    %832 = tpu.matmul %829, %831, %cst_991 {dimension_numbers = #tpu.dot_dimension_numbers<[1], [0], [0], [1], [0, 0, 1, 1], [], []>} : vector<1x128xbf16>, vector<128x128xbf16>, vector<1x128xf32> -> vector<1x128xf32>
    %833 = arith.addf %828, %832 : vector<1x128xf32>
    %834 = vector.extract_strided_slice %817 {offsets = [3, 0], sizes = [1, 128], strides = [1, 1]} : vector<16x128xbf16> to vector<1x128xbf16>
    %c3_992 = arith.constant 3 : index
    %c0_993 = arith.constant 0 : index
    %c0_994 = arith.constant 0 : index
    %835 = vector.load %arg8[%c3_992, %c0_993, %c0_994] : memref<16x128x128xbf16, #tpu.memory_space<vmem>>, vector<1x128x128xbf16>
    %836 = vector.shape_cast %835 : vector<1x128x128xbf16> to vector<128x128xbf16>
    %cst_995 = arith.constant dense<0.000000e+00> : vector<1x128xf32>
    %837 = tpu.matmul %834, %836, %cst_995 {dimension_numbers = #tpu.dot_dimension_numbers<[1], [0], [0], [1], [0, 0, 1, 1], [], []>} : vector<1x128xbf16>, vector<128x128xbf16>, vector<1x128xf32> -> vector<1x128xf32>
    %838 = arith.addf %833, %837 : vector<1x128xf32>
    %839 = vector.extract_strided_slice %817 {offsets = [4, 0], sizes = [1, 128], strides = [1, 1]} : vector<16x128xbf16> to vector<1x128xbf16>
    %c4_996 = arith.constant 4 : index
    %c0_997 = arith.constant 0 : index
    %c0_998 = arith.constant 0 : index
    %840 = vector.load %arg8[%c4_996, %c0_997, %c0_998] : memref<16x128x128xbf16, #tpu.memory_space<vmem>>, vector<1x128x128xbf16>
    %841 = vector.shape_cast %840 : vector<1x128x128xbf16> to vector<128x128xbf16>
    %cst_999 = arith.constant dense<0.000000e+00> : vector<1x128xf32>
    %842 = tpu.matmul %839, %841, %cst_999 {dimension_numbers = #tpu.dot_dimension_numbers<[1], [0], [0], [1], [0, 0, 1, 1], [], []>} : vector<1x128xbf16>, vector<128x128xbf16>, vector<1x128xf32> -> vector<1x128xf32>
    %843 = arith.addf %838, %842 : vector<1x128xf32>
    %844 = vector.extract_strided_slice %817 {offsets = [5, 0], sizes = [1, 128], strides = [1, 1]} : vector<16x128xbf16> to vector<1x128xbf16>
    %c5_1000 = arith.constant 5 : index
    %c0_1001 = arith.constant 0 : index
    %c0_1002 = arith.constant 0 : index
    %845 = vector.load %arg8[%c5_1000, %c0_1001, %c0_1002] : memref<16x128x128xbf16, #tpu.memory_space<vmem>>, vector<1x128x128xbf16>
    %846 = vector.shape_cast %845 : vector<1x128x128xbf16> to vector<128x128xbf16>
    %cst_1003 = arith.constant dense<0.000000e+00> : vector<1x128xf32>
    %847 = tpu.matmul %844, %846, %cst_1003 {dimension_numbers = #tpu.dot_dimension_numbers<[1], [0], [0], [1], [0, 0, 1, 1], [], []>} : vector<1x128xbf16>, vector<128x128xbf16>, vector<1x128xf32> -> vector<1x128xf32>
    %848 = arith.addf %843, %847 : vector<1x128xf32>
    %849 = vector.extract_strided_slice %817 {offsets = [6, 0], sizes = [1, 128], strides = [1, 1]} : vector<16x128xbf16> to vector<1x128xbf16>
    %c6_1004 = arith.constant 6 : index
    %c0_1005 = arith.constant 0 : index
    %c0_1006 = arith.constant 0 : index
    %850 = vector.load %arg8[%c6_1004, %c0_1005, %c0_1006] : memref<16x128x128xbf16, #tpu.memory_space<vmem>>, vector<1x128x128xbf16>
    %851 = vector.shape_cast %850 : vector<1x128x128xbf16> to vector<128x128xbf16>
    %cst_1007 = arith.constant dense<0.000000e+00> : vector<1x128xf32>
    %852 = tpu.matmul %849, %851, %cst_1007 {dimension_numbers = #tpu.dot_dimension_numbers<[1], [0], [0], [1], [0, 0, 1, 1], [], []>} : vector<1x128xbf16>, vector<128x128xbf16>, vector<1x128xf32> -> vector<1x128xf32>
    %853 = arith.addf %848, %852 : vector<1x128xf32>
    %854 = vector.extract_strided_slice %817 {offsets = [7, 0], sizes = [1, 128], strides = [1, 1]} : vector<16x128xbf16> to vector<1x128xbf16>
    %c7_1008 = arith.constant 7 : index
    %c0_1009 = arith.constant 0 : index
    %c0_1010 = arith.constant 0 : index
    %855 = vector.load %arg8[%c7_1008, %c0_1009, %c0_1010] : memref<16x128x128xbf16, #tpu.memory_space<vmem>>, vector<1x128x128xbf16>
    %856 = vector.shape_cast %855 : vector<1x128x128xbf16> to vector<128x128xbf16>
    %cst_1011 = arith.constant dense<0.000000e+00> : vector<1x128xf32>
    %857 = tpu.matmul %854, %856, %cst_1011 {dimension_numbers = #tpu.dot_dimension_numbers<[1], [0], [0], [1], [0, 0, 1, 1], [], []>} : vector<1x128xbf16>, vector<128x128xbf16>, vector<1x128xf32> -> vector<1x128xf32>
    %858 = arith.addf %853, %857 : vector<1x128xf32>
    %859 = vector.extract_strided_slice %817 {offsets = [8, 0], sizes = [1, 128], strides = [1, 1]} : vector<16x128xbf16> to vector<1x128xbf16>
    %c8_1012 = arith.constant 8 : index
    %c0_1013 = arith.constant 0 : index
    %c0_1014 = arith.constant 0 : index
    %860 = vector.load %arg8[%c8_1012, %c0_1013, %c0_1014] : memref<16x128x128xbf16, #tpu.memory_space<vmem>>, vector<1x128x128xbf16>
    %861 = vector.shape_cast %860 : vector<1x128x128xbf16> to vector<128x128xbf16>
    %cst_1015 = arith.constant dense<0.000000e+00> : vector<1x128xf32>
    %862 = tpu.matmul %859, %861, %cst_1015 {dimension_numbers = #tpu.dot_dimension_numbers<[1], [0], [0], [1], [0, 0, 1, 1], [], []>} : vector<1x128xbf16>, vector<128x128xbf16>, vector<1x128xf32> -> vector<1x128xf32>
    %863 = arith.addf %858, %862 : vector<1x128xf32>
    %864 = vector.extract_strided_slice %817 {offsets = [9, 0], sizes = [1, 128], strides = [1, 1]} : vector<16x128xbf16> to vector<1x128xbf16>
    %c9_1016 = arith.constant 9 : index
    %c0_1017 = arith.constant 0 : index
    %c0_1018 = arith.constant 0 : index
    %865 = vector.load %arg8[%c9_1016, %c0_1017, %c0_1018] : memref<16x128x128xbf16, #tpu.memory_space<vmem>>, vector<1x128x128xbf16>
    %866 = vector.shape_cast %865 : vector<1x128x128xbf16> to vector<128x128xbf16>
    %cst_1019 = arith.constant dense<0.000000e+00> : vector<1x128xf32>
    %867 = tpu.matmul %864, %866, %cst_1019 {dimension_numbers = #tpu.dot_dimension_numbers<[1], [0], [0], [1], [0, 0, 1, 1], [], []>} : vector<1x128xbf16>, vector<128x128xbf16>, vector<1x128xf32> -> vector<1x128xf32>
    %868 = arith.addf %863, %867 : vector<1x128xf32>
    %869 = vector.extract_strided_slice %817 {offsets = [10, 0], sizes = [1, 128], strides = [1, 1]} : vector<16x128xbf16> to vector<1x128xbf16>
    %c10_1020 = arith.constant 10 : index
    %c0_1021 = arith.constant 0 : index
    %c0_1022 = arith.constant 0 : index
    %870 = vector.load %arg8[%c10_1020, %c0_1021, %c0_1022] : memref<16x128x128xbf16, #tpu.memory_space<vmem>>, vector<1x128x128xbf16>
    %871 = vector.shape_cast %870 : vector<1x128x128xbf16> to vector<128x128xbf16>
    %cst_1023 = arith.constant dense<0.000000e+00> : vector<1x128xf32>
    %872 = tpu.matmul %869, %871, %cst_1023 {dimension_numbers = #tpu.dot_dimension_numbers<[1], [0], [0], [1], [0, 0, 1, 1], [], []>} : vector<1x128xbf16>, vector<128x128xbf16>, vector<1x128xf32> -> vector<1x128xf32>
    %873 = arith.addf %868, %872 : vector<1x128xf32>
    %874 = vector.extract_strided_slice %817 {offsets = [11, 0], sizes = [1, 128], strides = [1, 1]} : vector<16x128xbf16> to vector<1x128xbf16>
    %c11_1024 = arith.constant 11 : index
    %c0_1025 = arith.constant 0 : index
    %c0_1026 = arith.constant 0 : index
    %875 = vector.load %arg8[%c11_1024, %c0_1025, %c0_1026] : memref<16x128x128xbf16, #tpu.memory_space<vmem>>, vector<1x128x128xbf16>
    %876 = vector.shape_cast %875 : vector<1x128x128xbf16> to vector<128x128xbf16>
    %cst_1027 = arith.constant dense<0.000000e+00> : vector<1x128xf32>
    %877 = tpu.matmul %874, %876, %cst_1027 {dimension_numbers = #tpu.dot_dimension_numbers<[1], [0], [0], [1], [0, 0, 1, 1], [], []>} : vector<1x128xbf16>, vector<128x128xbf16>, vector<1x128xf32> -> vector<1x128xf32>
    %878 = arith.addf %873, %877 : vector<1x128xf32>
    %879 = vector.extract_strided_slice %817 {offsets = [12, 0], sizes = [1, 128], strides = [1, 1]} : vector<16x128xbf16> to vector<1x128xbf16>
    %c12_1028 = arith.constant 12 : index
    %c0_1029 = arith.constant 0 : index
    %c0_1030 = arith.constant 0 : index
    %880 = vector.load %arg8[%c12_1028, %c0_1029, %c0_1030] : memref<16x128x128xbf16, #tpu.memory_space<vmem>>, vector<1x128x128xbf16>
    %881 = vector.shape_cast %880 : vector<1x128x128xbf16> to vector<128x128xbf16>
    %cst_1031 = arith.constant dense<0.000000e+00> : vector<1x128xf32>
    %882 = tpu.matmul %879, %881, %cst_1031 {dimension_numbers = #tpu.dot_dimension_numbers<[1], [0], [0], [1], [0, 0, 1, 1], [], []>} : vector<1x128xbf16>, vector<128x128xbf16>, vector<1x128xf32> -> vector<1x128xf32>
    %883 = arith.addf %878, %882 : vector<1x128xf32>
    %884 = vector.extract_strided_slice %817 {offsets = [13, 0], sizes = [1, 128], strides = [1, 1]} : vector<16x128xbf16> to vector<1x128xbf16>
    %c13_1032 = arith.constant 13 : index
    %c0_1033 = arith.constant 0 : index
    %c0_1034 = arith.constant 0 : index
    %885 = vector.load %arg8[%c13_1032, %c0_1033, %c0_1034] : memref<16x128x128xbf16, #tpu.memory_space<vmem>>, vector<1x128x128xbf16>
    %886 = vector.shape_cast %885 : vector<1x128x128xbf16> to vector<128x128xbf16>
    %cst_1035 = arith.constant dense<0.000000e+00> : vector<1x128xf32>
    %887 = tpu.matmul %884, %886, %cst_1035 {dimension_numbers = #tpu.dot_dimension_numbers<[1], [0], [0], [1], [0, 0, 1, 1], [], []>} : vector<1x128xbf16>, vector<128x128xbf16>, vector<1x128xf32> -> vector<1x128xf32>
    %888 = arith.addf %883, %887 : vector<1x128xf32>
    %889 = vector.extract_strided_slice %817 {offsets = [14, 0], sizes = [1, 128], strides = [1, 1]} : vector<16x128xbf16> to vector<1x128xbf16>
    %c14_1036 = arith.constant 14 : index
    %c0_1037 = arith.constant 0 : index
    %c0_1038 = arith.constant 0 : index
    %890 = vector.load %arg8[%c14_1036, %c0_1037, %c0_1038] : memref<16x128x128xbf16, #tpu.memory_space<vmem>>, vector<1x128x128xbf16>
    %891 = vector.shape_cast %890 : vector<1x128x128xbf16> to vector<128x128xbf16>
    %cst_1039 = arith.constant dense<0.000000e+00> : vector<1x128xf32>
    %892 = tpu.matmul %889, %891, %cst_1039 {dimension_numbers = #tpu.dot_dimension_numbers<[1], [0], [0], [1], [0, 0, 1, 1], [], []>} : vector<1x128xbf16>, vector<128x128xbf16>, vector<1x128xf32> -> vector<1x128xf32>
    %893 = arith.addf %888, %892 : vector<1x128xf32>
    %894 = vector.extract_strided_slice %817 {offsets = [15, 0], sizes = [1, 128], strides = [1, 1]} : vector<16x128xbf16> to vector<1x128xbf16>
    %c15_1040 = arith.constant 15 : index
    %c0_1041 = arith.constant 0 : index
    %c0_1042 = arith.constant 0 : index
    %895 = vector.load %arg8[%c15_1040, %c0_1041, %c0_1042] : memref<16x128x128xbf16, #tpu.memory_space<vmem>>, vector<1x128x128xbf16>
    %896 = vector.shape_cast %895 : vector<1x128x128xbf16> to vector<128x128xbf16>
    %cst_1043 = arith.constant dense<0.000000e+00> : vector<1x128xf32>
    %897 = tpu.matmul %894, %896, %cst_1043 {dimension_numbers = #tpu.dot_dimension_numbers<[1], [0], [0], [1], [0, 0, 1, 1], [], []>} : vector<1x128xbf16>, vector<128x128xbf16>, vector<1x128xf32> -> vector<1x128xf32>
    %898 = arith.addf %893, %897 : vector<1x128xf32>
    %c0_1044 = arith.constant 0 : index
    %c0_1045 = arith.constant 0 : index
    %899 = vector.load %arg9[%c0_1044, %c0_1045] : memref<1x128xf32, #tpu.memory_space<vmem>>, vector<1x128xf32>
    %900 = arith.addf %898, %899 : vector<1x128xf32>
    %c0_1046 = arith.constant 0 : index
    %c0_1047 = arith.constant 0 : index
    %c0_1048 = arith.constant 0 : index
    %901 = vector.load %arg10[%c0_1046, %c0_1047, %c0_1048] : memref<1x1x128xf32, #tpu.memory_space<vmem>>, vector<1x1x128xf32>
    %902 = vector.shape_cast %901 : vector<1x1x128xf32> to vector<1x128xf32>
    %903 = vector.shape_cast %900 : vector<1x128xf32> to vector<1x1x128xf32>
    tpu.vector_store %arg10[%c0_1046, %c0_1047, %c0_1048], %903 {strides = array<i32>} : memref<1x1x128xf32, #tpu.memory_space<vmem>>, vector<1x1x128xf32>,
    return
  }
  func.func @transform_0(%arg0: i32) -> (i32, i32, i32) {
    %c0_i32 = arith.constant 0 : i32
    %c0_i32_0 = arith.constant 0 : i32
    %c0_i32_1 = arith.constant 0 : i32
    return %arg0, %c0_i32, %c0_i32_0 : i32, i32, i32
  }
  func.func @transform_1(%arg0: i32) -> (i32, i32) {
    %c0_i32 = arith.constant 0 : i32
    %c0_i32_0 = arith.constant 0 : i32
    %c0_i32_1 = arith.constant 0 : i32
    return %c0_i32, %c0_i32_0 : i32, i32
  }
  func.func @transform_2(%arg0: i32) -> (i32, i32) {
    %c0_i32 = arith.constant 0 : i32
    %c0_i32_0 = arith.constant 0 : i32
    %c0_i32_1 = arith.constant 0 : i32
    return %c0_i32, %c0_i32_0 : i32, i32
  }
  func.func @transform_3(%arg0: i32) -> (i32, i32, i32) {
    %c0_i32 = arith.constant 0 : i32
    %c0_i32_0 = arith.constant 0 : i32
    %c0_i32_1 = arith.constant 0 : i32
    %c0_i32_2 = arith.constant 0 : i32
    return %c0_i32, %c0_i32_0, %c0_i32_1 : i32, i32, i32
  }
  func.func @transform_4(%arg0: i32) -> (i32, i32) {
    %c0_i32 = arith.constant 0 : i32
    %c0_i32_0 = arith.constant 0 : i32
    %c0_i32_1 = arith.constant 0 : i32
    return %c0_i32, %c0_i32_0 : i32, i32
  }
  func.func @transform_5(%arg0: i32) -> (i32, i32, i32) {
    %c0_i32 = arith.constant 0 : i32
    %c0_i32_0 = arith.constant 0 : i32
    %c0_i32_1 = arith.constant 0 : i32
    %c0_i32_2 = arith.constant 0 : i32
    return %c0_i32, %c0_i32_0, %c0_i32_1 : i32, i32, i32
  }
  func.func @transform_6(%arg0: i32) -> (i32, i32) {
    %c0_i32 = arith.constant 0 : i32
    %c0_i32_0 = arith.constant 0 : i32
    %c0_i32_1 = arith.constant 0 : i32
    return %c0_i32, %c0_i32_0 : i32, i32
  }
  func.func @transform_7(%arg0: i32) -> (i32, i32, i32) {
    %c0_i32 = arith.constant 0 : i32
    %c0_i32_0 = arith.constant 0 : i32
    %c0_i32_1 = arith.constant 0 : i32
    %c0_i32_2 = arith.constant 0 : i32
    return %c0_i32, %c0_i32_0, %c0_i32_1 : i32, i32, i32
  }
  func.func @transform_8(%arg0: i32) -> (i32, i32) {
    %c0_i32 = arith.constant 0 : i32
    %c0_i32_0 = arith.constant 0 : i32
    %c0_i32_1 = arith.constant 0 : i32
    return %c0_i32, %c0_i32_0 : i32, i32
  }
  func.func @transform_9(%arg0: i32) -> (i32, i32, i32) {
    %c0_i32 = arith.constant 0 : i32
    %c0_i32_0 = arith.constant 0 : i32
    %c0_i32_1 = arith.constant 0 : i32
    return %arg0, %c0_i32, %c0_i32_0 : i32, i32, i32
  }
}

</mosaic_0001>

<llo_original>
// kernel: lenet_forward.1
$region0: #{lenet_forward.1}
  #allocation0 [shape = 'u32[]', space=smem, size = 0x4, offset = 0x4, fixed_abs, tag = 'smem constant byte address 0x4 - core index']
  #allocation1 [shape = 'u32[72,128]{1,0:T(1,128)}', space=vmem, size = 0x9000, scoped, tag = 'internal scratch']
  #allocation2 [shape = 'f32[4,6,6,128]{3,2,1,0:T(8,128)}', space=vmem, size = 0x18000, scoped, tag = 'scratch operand']
  #allocation3 [shape = 'f32[8,8,128]{2,1,0:T(8,128)}', space=vmem, size = 0x8000, scoped, tag = 'scratch operand']
  %s0 = inlined_call_operand.vmem [shape: bf16[2,64,128], index: 0, kind: input, shape index: {}]
  %s1 = inlined_call_operand.vmem [shape: bf16[128,128], index: 1, kind: input, shape index: {}]
  %s2 = inlined_call_operand.vmem [shape: f32[1,128], index: 2, kind: input, shape index: {}]
  %s3 = inlined_call_operand.vmem [shape: bf16[25,128,128], index: 3, kind: input, shape index: {}]
  %s4 = inlined_call_operand.vmem [shape: f32[1,128], index: 4, kind: input, shape index: {}]
  %s5 = inlined_call_operand.vmem [shape: bf16[25,128,128], index: 5, kind: input, shape index: {}]
  %s6 = inlined_call_operand.vmem [shape: f32[1,128], index: 6, kind: input, shape index: {}]
  %s7 = inlined_call_operand.vmem [shape: bf16[16,128,128], index: 7, kind: input, shape index: {}]
  %s8 = inlined_call_operand.vmem [shape: f32[1,128], index: 8, kind: input, shape index: {}]
  %s9 = inlined_call_operand.hbm [shape: f32[2,1,128], index: 9, kind: output, shape index: {}]
  %s10 = sld [smem:[#allocation0]]
  $region69: #{lenet_forward.1} parent=0
    _
  %s12 = ssub.s32 1, %s10
  %s13 = scalar_select 0, %s12, %s10
  $region1: #{lenet_forward.1} parent=0
    #allocation4 [shape = 'u8[1024]{0}', space=vmem, size = 0x400, scoped, tag = 'output window, operand 0']
    #allocation5 [shape = 's32[2]{0}', space=sflag, size = 0x8, scoped, tag = 'scoped memory for lenet_forward.1']
    %14 = vsyncpa [#allocation5], 0
    %s15 = scalar_lea.sflag [#allocation5], 1
    %16 = vsyncpa %s15, 0
    loop: start=0, step=1, limit=4
    $region2: #{lenet_forward.1} parent=1 // loop_pre_header
      _
    $region3: #{lenet_forward.1} parent=1 // loop_header
      %s18 = sphi 0, %s22
      %p19 = scmp.ge.s32.totalorder %s18, 4
      %s28 = sphi 0, %s30
      %s31 = sphi 0, %s28
      %s32 = sphi 0, %s31
      %s48 = sphi 0, %s32
      %s52 = sphi 0, %s52
      %s54 = sphi 0, %s52
      %s55 = sphi 0, %s54
      %s69 = sphi 0, %s55
      %s73 = sphi 0, %s73
      %s75 = sphi 0, %s73
      %s76 = sphi 0, %s75
      %s90 = sphi 0, %s76
      %s94 = sphi 0, %s94
      %s96 = sphi 0, %s94
      %s97 = sphi 0, %s96
      %s111 = sphi 0, %s97
      %s115 = sphi 0, %s115
      %s117 = sphi 0, %s115
      %s118 = sphi 0, %s117
      %s132 = sphi 0, %s118
      %s136 = sphi 0, %s136
      %s138 = sphi 0, %s136
      %s139 = sphi 0, %s138
      %s153 = sphi 0, %s139
      %s157 = sphi 0, %s157
      %s159 = sphi 0, %s157
      %s160 = sphi 0, %s159
      %s174 = sphi 0, %s160
      %s178 = sphi 0, %s178
      %s180 = sphi 0, %s178
      %s181 = sphi 0, %s180
      %s195 = sphi 0, %s181
      %s199 = sphi 0, %s199
      %s201 = sphi 0, %s199
      %s202 = sphi 0, %s201
      %s216 = sphi 0, %s202
      %s222 = sphi 0, %s224
      %s225 = sphi 0, %s222
      %s226 = sphi 0, %s225
      %s242 = sphi 0, %s226
    $region4: #{lenet_forward.1} parent=1 // loop_header_branch
      %21 = sbr.rel (%p19) target = $region8
    $region5: #{lenet_forward.1} parent=1 // loop_body
      %s23 = ssub.s32 %s18, 1
      %s24 = ssub.s32 %s18, 2
      %s25 = sadd.s32 %s18, 1
      %s26 = ssub.s32 %s18, %s25
      %p27 = scmp.eq.s32.totalorder %s26, 0
      %s29 = sadd.s32 %s28, 1
      %s30 = scalar_select %p27, %s28, %s29
      %p33 = pneg %p27
      %p34 = scmp.eq.s32.totalorder %s18, 1
      %p35 = por %p33, %p34
      %p36 = scmp.ne.s32.totalorder %s28, %s31
      %p37 = scmp.eq.s32.totalorder %s18, 0
      %p38 = por %p36, %p37
      %p39 = scmp.ne.s32.totalorder %s28, %s31
      %p40 = scmp.eq.s32.totalorder %s23, 1
      %p41 = por %p39, %p40
      %p42 = scmp.ne.s32.totalorder %s31, %s32
      %p43 = scmp.eq.s32.totalorder %s23, 0
      %p44 = por %p42, %p43
      %p45 = scmp.ne.s32.totalorder %s31, %s32
      %p46 = scmp.eq.s32.totalorder %s24, 1
      %p47 = por %p45, %p46
      %p49 = scmp.ne.s32.totalorder %s32, %s48
      %p50 = scmp.eq.s32.totalorder %s24, 0
      %p51 = por %p49, %p50
      %s53 = sadd.s32 %s52, 1
      %p56 = scmp.eq.s32.totalorder %s18, 1
      %p57 = scmp.ne.s32.totalorder %s52, %s54
      %p58 = scmp.eq.s32.totalorder %s18, 0
      %p59 = por %p57, %p58
      %p60 = scmp.ne.s32.totalorder %s52, %s54
      %p61 = scmp.eq.s32.totalorder %s23, 1
      %p62 = por %p60, %p61
      %p63 = scmp.ne.s32.totalorder %s54, %s55
      %p64 = scmp.eq.s32.totalorder %s23, 0
      %p65 = por %p63, %p64
      %p66 = scmp.ne.s32.totalorder %s54, %s55
      %p67 = scmp.eq.s32.totalorder %s24, 1
      %p68 = por %p66, %p67
      %p70 = scmp.ne.s32.totalorder %s55, %s69
      %p71 = scmp.eq.s32.totalorder %s24, 0
      %p72 = por %p70, %p71
      %s74 = sadd.s32 %s73, 1
      %p77 = scmp.eq.s32.totalorder %s18, 1
      %p78 = scmp.ne.s32.totalorder %s73, %s75
      %p79 = scmp.eq.s32.totalorder %s18, 0
      %p80 = por %p78, %p79
      %p81 = scmp.ne.s32.totalorder %s73, %s75
      %p82 = scmp.eq.s32.totalorder %s23, 1
      %p83 = por %p81, %p82
      %p84 = scmp.ne.s32.totalorder %s75, %s76
      %p85 = scmp.eq.s32.totalorder %s23, 0
      %p86 = por %p84, %p85
      %p87 = scmp.ne.s32.totalorder %s75, %s76
      %p88 = scmp.eq.s32.totalorder %s24, 1
      %p89 = por %p87, %p88
      %p91 = scmp.ne.s32.totalorder %s76, %s90
      %p92 = scmp.eq.s32.totalorder %s24, 0
      %p93 = por %p91, %p92
      %s95 = sadd.s32 %s94, 1
      %p98 = scmp.eq.s32.totalorder %s18, 1
      %p99 = scmp.ne.s32.totalorder %s94, %s96
      %p100 = scmp.eq.s32.totalorder %s18, 0
      %p101 = por %p99, %p100
      %p102 = scmp.ne.s32.totalorder %s94, %s96
      %p103 = scmp.eq.s32.totalorder %s23, 1
      %p104 = por %p102, %p103
      %p105 = scmp.ne.s32.totalorder %s96, %s97
      %p106 = scmp.eq.s32.totalorder %s23, 0
      %p107 = por %p105, %p106
      %p108 = scmp.ne.s32.totalorder %s96, %s97
      %p109 = scmp.eq.s32.totalorder %s24, 1
      %p110 = por %p108, %p109
      %p112 = scmp.ne.s32.totalorder %s97, %s111
      %p113 = scmp.eq.s32.totalorder %s24, 0
      %p114 = por %p112, %p113
      %s116 = sadd.s32 %s115, 1
      %p119 = scmp.eq.s32.totalorder %s18, 1
      %p120 = scmp.ne.s32.totalorder %s115, %s117
      %p121 = scmp.eq.s32.totalorder %s18, 0
      %p122 = por %p120, %p121
      %p123 = scmp.ne.s32.totalorder %s115, %s117
      %p124 = scmp.eq.s32.totalorder %s23, 1
      %p125 = por %p123, %p124
      %p126 = scmp.ne.s32.totalorder %s117, %s118
      %p127 = scmp.eq.s32.totalorder %s23, 0
      %p128 = por %p126, %p127
      %p129 = scmp.ne.s32.totalorder %s117, %s118
      %p130 = scmp.eq.s32.totalorder %s24, 1
      %p131 = por %p129, %p130
      %p133 = scmp.ne.s32.totalorder %s118, %s132
      %p134 = scmp.eq.s32.totalorder %s24, 0
      %p135 = por %p133, %p134
      %s137 = sadd.s32 %s136, 1
      %p140 = scmp.eq.s32.totalorder %s18, 1
      %p141 = scmp.ne.s32.totalorder %s136, %s138
      %p142 = scmp.eq.s32.totalorder %s18, 0
      %p143 = por %p141, %p142
      %p144 = scmp.ne.s32.totalorder %s136, %s138
      %p145 = scmp.eq.s32.totalorder %s23, 1
      %p146 = por %p144, %p145
      %p147 = scmp.ne.s32.totalorder %s138, %s139
      %p148 = scmp.eq.s32.totalorder %s23, 0
      %p149 = por %p147, %p148
      %p150 = scmp.ne.s32.totalorder %s138, %s139
      %p151 = scmp.eq.s32.totalorder %s24, 1
      %p152 = por %p150, %p151
      %p154 = scmp.ne.s32.totalorder %s139, %s153
      %p155 = scmp.eq.s32.totalorder %s24, 0
      %p156 = por %p154, %p155
      %s158 = sadd.s32 %s157, 1
      %p161 = scmp.eq.s32.totalorder %s18, 1
      %p162 = scmp.ne.s32.totalorder %s157, %s159
      %p163 = scmp.eq.s32.totalorder %s18, 0
      %p164 = por %p162, %p163
      %p165 = scmp.ne.s32.totalorder %s157, %s159
      %p166 = scmp.eq.s32.totalorder %s23, 1
      %p167 = por %p165, %p166
      %p168 = scmp.ne.s32.totalorder %s159, %s160
      %p169 = scmp.eq.s32.totalorder %s23, 0
      %p170 = por %p168, %p169
      %p171 = scmp.ne.s32.totalorder %s159, %s160
      %p172 = scmp.eq.s32.totalorder %s24, 1
      %p173 = por %p171, %p172
      %p175 = scmp.ne.s32.totalorder %s160, %s174
      %p176 = scmp.eq.s32.totalorder %s24, 0
      %p177 = por %p175, %p176
      %s179 = sadd.s32 %s178, 1
      %p182 = scmp.eq.s32.totalorder %s18, 1
      %p183 = scmp.ne.s32.totalorder %s178, %s180
      %p184 = scmp.eq.s32.totalorder %s18, 0
      %p185 = por %p183, %p184
      %p186 = scmp.ne.s32.totalorder %s178, %s180
      %p187 = scmp.eq.s32.totalorder %s23, 1
      %p188 = por %p186, %p187
      %p189 = scmp.ne.s32.totalorder %s180, %s181
      %p190 = scmp.eq.s32.totalorder %s23, 0
      %p191 = por %p189, %p190
      %p192 = scmp.ne.s32.totalorder %s180, %s181
      %p193 = scmp.eq.s32.totalorder %s24, 1
      %p194 = por %p192, %p193
      %p196 = scmp.ne.s32.totalorder %s181, %s195
      %p197 = scmp.eq.s32.totalorder %s24, 0
      %p198 = por %p196, %p197
      %s200 = sadd.s32 %s199, 1
      %p203 = scmp.eq.s32.totalorder %s18, 1
      %p204 = scmp.ne.s32.totalorder %s199, %s201
      %p205 = scmp.eq.s32.totalorder %s18, 0
      %p206 = por %p204, %p205
      %p207 = scmp.ne.s32.totalorder %s199, %s201
      %p208 = scmp.eq.s32.totalorder %s23, 1
      %p209 = por %p207, %p208
      %p210 = scmp.ne.s32.totalorder %s201, %s202
      %p211 = scmp.eq.s32.totalorder %s23, 0
      %p212 = por %p210, %p211
      %p213 = scmp.ne.s32.totalorder %s201, %s202
      %p214 = scmp.eq.s32.totalorder %s24, 1
      %p215 = por %p213, %p214
      %p217 = scmp.ne.s32.totalorder %s202, %s216
      %p218 = scmp.eq.s32.totalorder %s24, 0
      %p219 = por %p217, %p218
      %s220 = ssub.s32 %s18, %s25
      %p221 = scmp.eq.s32.totalorder %s220, 0
      %s223 = sadd.s32 %s222, 1
      %s224 = scalar_select %p221, %s222, %s223
      %p227 = pneg %p221
      %p228 = scmp.eq.s32.totalorder %s18, 1
      %p229 = por %p227, %p228
      %p230 = scmp.ne.s32.totalorder %s222, %s225
      %p231 = scmp.eq.s32.totalorder %s18, 0
      %p232 = por %p230, %p231
      %p233 = scmp.ne.s32.totalorder %s222, %s225
      %p234 = scmp.eq.s32.totalorder %s23, 1
      %p235 = por %p233, %p234
      %p236 = scmp.ne.s32.totalorder %s225, %s226
      %p237 = scmp.eq.s32.totalorder %s23, 0
      %p238 = por %p236, %p237
      %p239 = scmp.ne.s32.totalorder %s225, %s226
      %p240 = scmp.eq.s32.totalorder %s24, 1
      %p241 = por %p239, %p240
      %p243 = scmp.ne.s32.totalorder %s226, %s242
      %p244 = scmp.eq.s32.totalorder %s24, 0
      %p245 = por %p243, %p244
      %p246 = scmp.le.s32.totalorder 1, %s18
      %p247 = scmp.lt.s32.totalorder %s18, 3
      %p248 = pnand %p246, %p247
      %p249 = pneg %p248
      // Predicated region
      $region9: #{lenet_forward.1} parent=5 // pred_check
        _
      $region10: #{lenet_forward.1} parent=5 // pred_check_branch
        %251 = sbr.rel (%p248) target = $region12
      $region11: #{lenet_forward.1} parent=5 // pred_region
        %s252 = ssub.s32 %s18, 1
        // Predicated region
        $region13: #{lenet_forward.1} parent=11 // pred_check
          %p253 = pneg %p65
        $region14: #{lenet_forward.1} parent=11 // pred_check_branch
          %255 = sbr.rel (%p253) target = $region16
        $region15: #{lenet_forward.1} parent=11 // pred_region
          _
        $region16: #{lenet_forward.1} parent=11 // pred_fallthru
          _
        // Predicated region
        $region17: #{lenet_forward.1} parent=11 // pred_check
          %p256 = pneg %p86
        $region18: #{lenet_forward.1} parent=11 // pred_check_branch
          %258 = sbr.rel (%p256) target = $region20
        $region19: #{lenet_forward.1} parent=11 // pred_region
          _
        $region20: #{lenet_forward.1} parent=11 // pred_fallthru
          _
        // Predicated region
        $region21: #{lenet_forward.1} parent=11 // pred_check
          %p259 = pneg %p107
        $region22: #{lenet_forward.1} parent=11 // pred_check_branch
          %261 = sbr.rel (%p259) target = $region24
        $region23: #{lenet_forward.1} parent=11 // pred_region
          _
        $region24: #{lenet_forward.1} parent=11 // pred_fallthru
          _
        // Predicated region
        $region25: #{lenet_forward.1} parent=11 // pred_check
          %p262 = pneg %p128
        $region26: #{lenet_forward.1} parent=11 // pred_check_branch
          %264 = sbr.rel (%p262) target = $region28
        $region27: #{lenet_forward.1} parent=11 // pred_region
          _
        $region28: #{lenet_forward.1} parent=11 // pred_fallthru
          _
        // Predicated region
        $region29: #{lenet_forward.1} parent=11 // pred_check
          %p265 = pneg %p149
        $region30: #{lenet_forward.1} parent=11 // pred_check_branch
          %267 = sbr.rel (%p265) target = $region32
        $region31: #{lenet_forward.1} parent=11 // pred_region
          _
        $region32: #{lenet_forward.1} parent=11 // pred_fallthru
          _
        // Predicated region
        $region33: #{lenet_forward.1} parent=11 // pred_check
          %p268 = pneg %p170
        $region34: #{lenet_forward.1} parent=11 // pred_check_branch
          %270 = sbr.rel (%p268) target = $region36
        $region35: #{lenet_forward.1} parent=11 // pred_region
          _
        $region36: #{lenet_forward.1} parent=11 // pred_fallthru
          _
        // Predicated region
        $region37: #{lenet_forward.1} parent=11 // pred_check
          %p271 = pneg %p191
        $region38: #{lenet_forward.1} parent=11 // pred_check_branch
          %273 = sbr.rel (%p271) target = $region40
        $region39: #{lenet_forward.1} parent=11 // pred_region
          _
        $region40: #{lenet_forward.1} parent=11 // pred_fallthru
          _
        // Predicated region
        $region41: #{lenet_forward.1} parent=11 // pred_check
          %p274 = pneg %p212
        $region42: #{lenet_forward.1} parent=11 // pred_check_branch
          %276 = sbr.rel (%p274) target = $region44
        $region43: #{lenet_forward.1} parent=11 // pred_region
          _
        $region44: #{lenet_forward.1} parent=11 // pred_fallthru
          _
      $region12: #{lenet_forward.1} parent=5 // pred_fallthru
        _
      %p277 = scmp.lt.s32.totalorder %s18, 2
      // Predicated region
      $region45: #{lenet_forward.1} parent=5 // pred_check
        %p278 = pneg %p277
      $region46: #{lenet_forward.1} parent=5 // pred_check_branch
        %280 = sbr.rel (%p278) target = $region48
      $region47: #{lenet_forward.1} parent=5 // pred_region
        // Predicated region
        $region49: #{lenet_forward.1} parent=47 // pred_check
          %p281 = pneg %p38
        $region50: #{lenet_forward.1} parent=47 // pred_check_branch
          %283 = sbr.rel (%p281) target = $region52
        $region51: #{lenet_forward.1} parent=47 // pred_region
          %p284 = scmp.lt.s32.totalorder %s18, 1
          %s285 = scalar_select %p284, %s18, 1
          %s286 = smul.addr %s285, 8
          %s287 = smul.addr %s286, 4
          %s288 = scalar_lea.vmem %s0, %s287
        $region52: #{lenet_forward.1} parent=47 // pred_fallthru
          _
      $region48: #{lenet_forward.1} parent=5 // pred_fallthru
        _
      %p289 = scmp.le.s32.totalorder 1, %s18
      %p290 = scmp.lt.s32.totalorder %s18, 3
      %p291 = pnand %p289, %p290
      %p292 = pneg %p291
      // Predicated region
      $region53: #{lenet_forward.1} parent=5 // pred_check
        _
      $region54: #{lenet_forward.1} parent=5 // pred_check_branch
        %294 = sbr.rel (%p291) target = $region56
      $region55: #{lenet_forward.1} parent=5 // pred_region
        %s295 = ssub.s32 %s18, 1
        %p296 = scmp.lt.s32.totalorder %s23, 1
        %s297 = scalar_select %p296, %s23, 1
        %s298 = smul.addr %s297, 8
        %s299 = smul.addr %s298, 4
        %s300 = scalar_lea.vmem %s0, %s299
        %p301 = pneg %p44
        %p302 = pneg %p41
        %p303 = pneg %p65
        %p304 = pneg %p62
        %p305 = pneg %p86
        %p306 = pneg %p83
        %p307 = pneg %p107
        %p308 = pneg %p104
        %p309 = pneg %p128
        %p310 = pneg %p125
        %p311 = pneg %p149
        %p312 = pneg %p146
        %p313 = pneg %p170
        %p314 = pneg %p167
        %p315 = pneg %p191
        %p316 = pneg %p188
        %p317 = pneg %p212
        %p318 = pneg %p209
        %p319 = pneg %p238
        %p320 = pneg %p235
        %s321 = sand.u32 %s225, 1
        %s322 = scalar_lea.sflag [#allocation5], %s321
        %s323 = sand.u32 %s225, 1
        %s324 = scalar_lea.vmem [#allocation4], %s323
        %p325 = scmp.lt.s32.totalorder %s23, 1
        %s326 = scalar_select %p325, %s23, 1
        %s327 = smul.addr %s326, 8
        %s328 = smul.addr %s327, 4
        %s329 = scalar_lea.vmem %s0, %s328
        %330 = vst [vmem:[#allocation2] sm:$0x3f] 0.0
        %331 = vst [vmem:[#allocation2 + $0x8] sm:$0x3f] 0.0
        %332 = vst [vmem:[#allocation2 + $0x10] sm:$0x3f] 0.0
        %333 = vst [vmem:[#allocation2 + $0x18] sm:$0x3f] 0.0
        %334 = vst [vmem:[#allocation2 + $0x20] sm:$0x3f] 0.0
        %335 = vst [vmem:[#allocation2 + $0x28] sm:$0x3f] 0.0
        %336 = vst [vmem:[#allocation2 + $0x30] sm:$0x3f] 0.0
        %337 = vst [vmem:[#allocation2 + $0x38] sm:$0x3f] 0.0
        %338 = vst [vmem:[#allocation2 + $0x40] sm:$0x3f] 0.0
        %339 = vst [vmem:[#allocation2 + $0x48] sm:$0x3f] 0.0
        %340 = vst [vmem:[#allocation2 + $0x50] sm:$0x3f] 0.0
        %341 = vst [vmem:[#allocation2 + $0x58] sm:$0x3f] 0.0
        %342 = vst [vmem:[#allocation2 + $0x60] sm:$0x3f] 0.0
        %343 = vst [vmem:[#allocation2 + $0x68] sm:$0x3f] 0.0
        %344 = vst [vmem:[#allocation2 + $0x70] sm:$0x3f] 0.0
        %345 = vst [vmem:[#allocation2 + $0x78] sm:$0x3f] 0.0
        %346 = vst [vmem:[#allocation2 + $0x80] sm:$0x3f] 0.0
        %347 = vst [vmem:[#allocation2 + $0x88] sm:$0x3f] 0.0
        %348 = vst [vmem:[#allocation2 + $0x90] sm:$0x3f] 0.0
        %349 = vst [vmem:[#allocation2 + $0x98] sm:$0x3f] 0.0
        %350 = vst [vmem:[#allocation2 + $0xa0] sm:$0x3f] 0.0
        %351 = vst [vmem:[#allocation2 + $0xa8] sm:$0x3f] 0.0
        %352 = vst [vmem:[#allocation2 + $0xb0] sm:$0x3f] 0.0
        %353 = vst [vmem:[#allocation2 + $0xb8] sm:$0x3f] 0.0
        %354 = vst [vmem:[#allocation3] sm:$0xff] 0.0
        %355 = vst [vmem:[#allocation3 + $0x8] sm:$0xff] 0.0
        %356 = vst [vmem:[#allocation3 + $0x10] sm:$0xff] 0.0
        %357 = vst [vmem:[#allocation3 + $0x18] sm:$0xff] 0.0
        %358 = vst [vmem:[#allocation3 + $0x20] sm:$0xff] 0.0
        %359 = vst [vmem:[#allocation3 + $0x28] sm:$0xff] 0.0
        %360 = vst [vmem:[#allocation3 + $0x30] sm:$0xff] 0.0
        %361 = vst [vmem:[#allocation3 + $0x38] sm:$0xff] 0.0
        %v362 = vld [vmem:[%s329] sm:$0xf]
        %v363 = vld [vmem:[%s329 + $0x4] sm:$0xf]
        %v364 = vld [vmem:[%s329 + $0x8] sm:$0xf]
        %v365 = vld [vmem:[%s329 + $0xc] sm:$0xf]
        %v366 = vld [vmem:[%s329 + $0x10] sm:$0xf]
        %v367 = vld [vmem:[%s329 + $0x14] sm:$0xf]
        %v368 = vld [vmem:[%s329 + $0x18] sm:$0xf]
        %v369 = vld [vmem:[%s329 + $0x1c] sm:$0xf]
        %v370 = vld [vmem:[%s1] sm:$0xf]
        %v371 = vld [vmem:[%s1 + $0x4] sm:$0xf]
        %v372 = vld [vmem:[%s1 + $0x8] sm:$0xf]
        %v373 = vld [vmem:[%s1 + $0xc] sm:$0xf]
        %v374 = vld [vmem:[%s1 + $0x10] sm:$0xf]
        %v375 = vld [vmem:[%s1 + $0x14] sm:$0xf]
        %v376 = vld [vmem:[%s1 + $0x18] sm:$0xf]
        %v377 = vld [vmem:[%s1 + $0x1c] sm:$0xf]
        %v378 = vld [vmem:[%s1 + $0x20] sm:$0xf]
        %v379 = vld [vmem:[%s1 + $0x24] sm:$0xf]
        %v380 = vld [vmem:[%s1 + $0x28] sm:$0xf]
        %v381 = vld [vmem:[%s1 + $0x2c] sm:$0xf]
        %v382 = vld [vmem:[%s1 + $0x30] sm:$0xf]
        %v383 = vld [vmem:[%s1 + $0x34] sm:$0xf]
        %v384 = vld [vmem:[%s1 + $0x38] sm:$0xf]
        %v385 = vld [vmem:[%s1 + $0x3c] sm:$0xf]
        %v386 = vld [vmem:[%s2] sm:$0x1]
        %v388 = vperm.slane %v386, 0
        %v398 = vunpack.c.l.b16 %v362
        %v399 = vunpack.c.l.b16 %v363
        %v400 = vunpack.c.l.b16 %v364
        %v401 = vunpack.c.l.b16 %v365
        %v402 = vunpack.c.l.b16 %v366
        %v403 = vunpack.c.l.b16 %v367
        %v404 = vunpack.c.l.b16 %v368
        %v405 = vunpack.c.l.b16 %v369
        %v406 = vpack.c.b16 %v399, %v398
        %v407 = vpack.c.b16 %v401, %v400
        %v408 = vpack.c.b16 %v403, %v402
        %v409 = vpack.c.b16 %v405, %v404
        %v430 = vunpack.c.l.b16 %v370
        %v431 = vunpack.c.l.b16 %v371
        %v432 = vunpack.c.l.b16 %v372
        %v433 = vunpack.c.l.b16 %v373
        %v434 = vunpack.c.l.b16 %v374
        %v435 = vunpack.c.l.b16 %v375
        %v436 = vunpack.c.l.b16 %v376
        %v437 = vunpack.c.l.b16 %v377
        %v438 = vunpack.c.l.b16 %v378
        %v439 = vunpack.c.l.b16 %v379
        %v440 = vunpack.c.l.b16 %v380
        %v441 = vunpack.c.l.b16 %v381
        %v442 = vunpack.c.l.b16 %v382
        %v443 = vunpack.c.l.b16 %v383
        %v444 = vunpack.c.l.b16 %v384
        %v445 = vunpack.c.l.b16 %v385
        %v446 = vpack.c.b16 %v431, %v430
        %v447 = vpack.c.b16 %v433, %v432
        %v448 = vpack.c.b16 %v435, %v434
        %v449 = vpack.c.b16 %v437, %v436
        %v450 = vpack.c.b16 %v439, %v438
        %v451 = vpack.c.b16 %v441, %v440
        %v452 = vpack.c.b16 %v443, %v442
        %v453 = vpack.c.b16 %v445, %v444
        %462 = vmatpush.bf16.msra.mxu0 %v453
        %463 = vmatpush.bf16.msra.mxu0 %v452
        %464 = vmatpush.bf16.msra.mxu0 %v451
        %465 = vmatpush.bf16.msra.mxu0 %v450
        %466 = vmatpush.bf16.msra.mxu0 %v449
        %467 = vmatpush.bf16.msra.mxu0 %v448
        %468 = vmatpush.bf16.msra.mxu0 %v447
        %469 = vmatpush.bf16.msra.mxu0 %v446
        %470 = vmatmul.bf16.gmra.mxu0 %v406
        %v471 = vpop.f32.mrf.mxu0
        %v472 = vadd.f32 %v388, %v471
        %v473 = vpop.f32.mrf.mxu0
        %v474 = vadd.f32 %v388, %v473
        %475 = vmatmul.bf16.gmra.mxu0 %v407
        %v476 = vpop.f32.mrf.mxu0
        %v477 = vadd.f32 %v388, %v476
        %v478 = vpop.f32.mrf.mxu0
        %v479 = vadd.f32 %v388, %v478
        %480 = vmatmul.bf16.gmra.mxu0 %v408
        %v481 = vpop.f32.mrf.mxu0
        %v482 = vadd.f32 %v388, %v481
        %v483 = vpop.f32.mrf.mxu0
        %v484 = vadd.f32 %v388, %v483
        %485 = vmatmul.bf16.gmra.mxu0 %v409
        %v486 = vpop.f32.mrf.mxu0
        %v487 = vadd.f32 %v388, %v486
        %v488 = vpop.f32.mrf.mxu0
        %v489 = vadd.f32 %v388, %v488
        %490 = vdwg.mxu0
        %v491 = vsub.f32 0.0, %v472
        %v492 = vsub.f32 0.0, %v474
        %v493 = vsub.f32 0.0, %v477
        %v494 = vsub.f32 0.0, %v479
        %v495 = vsub.f32 0.0, %v482
        %v496 = vsub.f32 0.0, %v484
        %v497 = vsub.f32 0.0, %v487
        %v498 = vsub.f32 0.0, %v489
        %v499 = vmul.f32 %v491, 1.442695
        %v500 = vpow.pop %v499
        %v501 = vmul.f32 %v492, 1.442695
        %v502 = vpow.pop %v501
        %v503 = vmul.f32 %v493, 1.442695
        %v504 = vpow.pop %v503
        %v505 = vmul.f32 %v494, 1.442695
        %v506 = vpow.pop %v505
        %v507 = vmul.f32 %v495, 1.442695
        %v508 = vpow.pop %v507
        %v509 = vmul.f32 %v496, 1.442695
        %v510 = vpow.pop %v509
        %v511 = vmul.f32 %v497, 1.442695
        %v512 = vpow.pop %v511
        %v513 = vmul.f32 %v498, 1.442695
        %v514 = vpow.pop %v513
        %v515 = vadd.f32 %v500, 1.0
        %v516 = vadd.f32 %v502, 1.0
        %v517 = vadd.f32 %v504, 1.0
        %v518 = vadd.f32 %v506, 1.0
        %v519 = vadd.f32 %v508, 1.0
        %v520 = vadd.f32 %v510, 1.0
        %v521 = vadd.f32 %v512, 1.0
        %v522 = vadd.f32 %v514, 1.0
        %v523 = vrcp.pop %v515
        %v524 = vrcp.pop %v516
        %v525 = vrcp.pop %v517
        %v526 = vrcp.pop %v518
        %v527 = vrcp.pop %v519
        %v528 = vrcp.pop %v520
        %v529 = vrcp.pop %v521
        %v530 = vrcp.pop %v522
        %s531 = scalar_lea.vmem [#allocation2], 8
        %532 = vst [vmem:[%s531 + $0x1] sm:$0xf] %v523
        %s533 = scalar_lea.vmem [#allocation2], 16
        %534 = vst [vmem:[%s533 - $0x3] sm:$0xf0] %v523
        %s535 = scalar_lea.vmem [#allocation2], 24
        %536 = vst [vmem:[%s535 + $0x1] sm:$0xf] %v524
        %s537 = scalar_lea.vmem [#allocation2], 32
        %538 = vst [vmem:[%s537 - $0x3] sm:$0xf0] %v524
        %s539 = scalar_lea.vmem [#allocation2], 56
        %540 = vst [vmem:[%s539 + $0x1] sm:$0xf] %v525
        %s541 = scalar_lea.vmem [#allocation2], 64
        %542 = vst [vmem:[%s541 - $0x3] sm:$0xf0] %v525
        %s543 = scalar_lea.vmem [#allocation2], 72
        %544 = vst [vmem:[%s543 + $0x1] sm:$0xf] %v526
        %s545 = scalar_lea.vmem [#allocation2], 80
        %546 = vst [vmem:[%s545 - $0x3] sm:$0xf0] %v526
        %s547 = scalar_lea.vmem [#allocation2], 104
        %548 = vst [vmem:[%s547 + $0x1] sm:$0xf] %v527
        %s549 = scalar_lea.vmem [#allocation2], 112
        %550 = vst [vmem:[%s549 - $0x3] sm:$0xf0] %v527
        %s551 = scalar_lea.vmem [#allocation2], 120
        %552 = vst [vmem:[%s551 + $0x1] sm:$0xf] %v528
        %s553 = scalar_lea.vmem [#allocation2], 128
        %554 = vst [vmem:[%s553 - $0x3] sm:$0xf0] %v528
        %s555 = scalar_lea.vmem [#allocation2], 152
        %556 = vst [vmem:[%s555 + $0x1] sm:$0xf] %v529
        %s557 = scalar_lea.vmem [#allocation2], 160
        %558 = vst [vmem:[%s557 - $0x3] sm:$0xf0] %v529
        %s559 = scalar_lea.vmem [#allocation2], 168
        %560 = vst [vmem:[%s559 + $0x1] sm:$0xf] %v530
        %s561 = scalar_lea.vmem [#allocation2], 176
        %562 = vst [vmem:[%s561 - $0x3] sm:$0xf0] %v530
        %v563 = vld [vmem:[#allocation2] sm:$0xf]
        %v564 = vld [vmem:[%s531] sm:$0xf]
        %v565 = vld [vmem:[%s533] sm:$0xf]
        %v566 = vld [vmem:[%s535] sm:$0xf]
        %v568 = vrot.slane %v564, 4
        %v571 = vrot.slane %v566, 4
        %vm573 = vcmask 1043456
        %v574 = vsel %vm573, %v563, %v568
        %v575 = vsel %vm573, %v565, %v571
        %v576 = vpack.c.bf16 %v575, %v574
        %v577 = vld [vmem:[%s3] sm:$0xf]
        %v578 = vld [vmem:[%s3 + $0x4] sm:$0xf]
        %v579 = vld [vmem:[%s3 + $0x8] sm:$0xf]
        %v580 = vld [vmem:[%s3 + $0xc] sm:$0xf]
        %v581 = vld [vmem:[%s3 + $0x10] sm:$0xf]
        %v582 = vld [vmem:[%s3 + $0x14] sm:$0xf]
        %v583 = vld [vmem:[%s3 + $0x18] sm:$0xf]
        %v584 = vld [vmem:[%s3 + $0x1c] sm:$0xf]
        %v585 = vld [vmem:[%s3 + $0x20] sm:$0xf]
        %v586 = vld [vmem:[%s3 + $0x24] sm:$0xf]
        %v587 = vld [vmem:[%s3 + $0x28] sm:$0xf]
        %v588 = vld [vmem:[%s3 + $0x2c] sm:$0xf]
        %v589 = vld [vmem:[%s3 + $0x30] sm:$0xf]
        %v590 = vld [vmem:[%s3 + $0x34] sm:$0xf]
        %v591 = vld [vmem:[%s3 + $0x38] sm:$0xf]
        %v592 = vld [vmem:[%s3 + $0x3c] sm:$0xf]
        %v593 = vld [vmem:[#allocation2 + $0x1] sm:$0xf]
        %v594 = vld [vmem:[%s531 + $0x1] sm:$0xf]
        %v595 = vld [vmem:[%s533 + $0x1] sm:$0xf]
        %v596 = vld [vmem:[%s535 + $0x1] sm:$0xf]
        %v598 = vrot.slane %v594, 4
        %v601 = vrot.slane %v596, 4
        %v603 = vsel %vm573, %v593, %v598
        %v604 = vsel %vm573, %v595, %v601
        %v605 = vpack.c.bf16 %v604, %v603
        %s606 = scalar_lea.vmem %s3, 128
        %v607 = vld [vmem:[%s606] sm:$0xf]
        %v608 = vld [vmem:[%s606 + $0x4] sm:$0xf]
        %v609 = vld [vmem:[%s606 + $0x8] sm:$0xf]
        %v610 = vld [vmem:[%s606 + $0xc] sm:$0xf]
        %v611 = vld [vmem:[%s606 + $0x10] sm:$0xf]
        %v612 = vld [vmem:[%s606 + $0x14] sm:$0xf]
        %v613 = vld [vmem:[%s606 + $0x18] sm:$0xf]
        %v614 = vld [vmem:[%s606 + $0x1c] sm:$0xf]
        %v615 = vld [vmem:[%s606 + $0x20] sm:$0xf]
        %v616 = vld [vmem:[%s606 + $0x24] sm:$0xf]
        %v617 = vld [vmem:[%s606 + $0x28] sm:$0xf]
        %v618 = vld [vmem:[%s606 + $0x2c] sm:$0xf]
        %v619 = vld [vmem:[%s606 + $0x30] sm:$0xf]
        %v620 = vld [vmem:[%s606 + $0x34] sm:$0xf]
        %v621 = vld [vmem:[%s606 + $0x38] sm:$0xf]
        %v622 = vld [vmem:[%s606 + $0x3c] sm:$0xf]
        %v639 = vunpack.c.l.b16 %v607
        %v640 = vunpack.c.l.b16 %v608
        %v641 = vunpack.c.l.b16 %v609
        %v642 = vunpack.c.l.b16 %v610
        %v643 = vunpack.c.l.b16 %v611
        %v644 = vunpack.c.l.b16 %v612
        %v645 = vunpack.c.l.b16 %v613
        %v646 = vunpack.c.l.b16 %v614
        %v647 = vunpack.c.l.b16 %v615
        %v648 = vunpack.c.l.b16 %v616
        %v649 = vunpack.c.l.b16 %v617
        %v650 = vunpack.c.l.b16 %v618
        %v651 = vunpack.c.l.b16 %v619
        %v652 = vunpack.c.l.b16 %v620
        %v653 = vunpack.c.l.b16 %v621
        %v654 = vunpack.c.l.b16 %v622
        %v655 = vpack.c.b16 %v640, %v639
        %v656 = vpack.c.b16 %v642, %v641
        %v657 = vpack.c.b16 %v644, %v643
        %v658 = vpack.c.b16 %v646, %v645
        %v659 = vpack.c.b16 %v648, %v647
        %v660 = vpack.c.b16 %v650, %v649
        %v661 = vpack.c.b16 %v652, %v651
        %v662 = vpack.c.b16 %v654, %v653
        %671 = vmatpush.bf16.msra.mxu0 %v662
        %672 = vmatpush.bf16.msra.mxu0 %v661
        %673 = vmatpush.bf16.msra.mxu0 %v660
        %674 = vmatpush.bf16.msra.mxu0 %v659
        %675 = vmatpush.bf16.msra.mxu0 %v658
        %676 = vmatpush.bf16.msra.mxu0 %v657
        %677 = vmatpush.bf16.msra.mxu0 %v656
        %678 = vmatpush.bf16.msra.mxu0 %v655
        %679 = vmatmul.bf16.gmra.mxu0 %v605
        %v680 = vpop.f32.mrf.mxu0
        %v681 = vadd.f32 0.0, %v680
        %v682 = vpop.f32.mrf.mxu0
        %v683 = vadd.f32 0.0, %v682
        %684 = vdwg.mxu0
        %v701 = vunpack.c.l.b16 %v577
        %v702 = vunpack.c.l.b16 %v578
        %v703 = vunpack.c.l.b16 %v579
        %v704 = vunpack.c.l.b16 %v580
        %v705 = vunpack.c.l.b16 %v581
        %v706 = vunpack.c.l.b16 %v582
        %v707 = vunpack.c.l.b16 %v583
        %v708 = vunpack.c.l.b16 %v584
        %v709 = vunpack.c.l.b16 %v585
        %v710 = vunpack.c.l.b16 %v586
        %v711 = vunpack.c.l.b16 %v587
        %v712 = vunpack.c.l.b16 %v588
        %v713 = vunpack.c.l.b16 %v589
        %v714 = vunpack.c.l.b16 %v590
        %v715 = vunpack.c.l.b16 %v591
        %v716 = vunpack.c.l.b16 %v592
        %v717 = vpack.c.b16 %v702, %v701
        %v718 = vpack.c.b16 %v704, %v703
        %v719 = vpack.c.b16 %v706, %v705
        %v720 = vpack.c.b16 %v708, %v707
        %v721 = vpack.c.b16 %v710, %v709
        %v722 = vpack.c.b16 %v712, %v711
        %v723 = vpack.c.b16 %v714, %v713
        %v724 = vpack.c.b16 %v716, %v715
        %733 = vmatpush.bf16.msra.mxu0 %v724
        %734 = vmatpush.bf16.msra.mxu0 %v723
        %735 = vmatpush.bf16.msra.mxu0 %v722
        %736 = vmatpush.bf16.msra.mxu0 %v721
        %737 = vmatpush.bf16.msra.mxu0 %v720
        %738 = vmatpush.bf16.msra.mxu0 %v719
        %739 = vmatpush.bf16.msra.mxu0 %v718
        %740 = vmatpush.bf16.msra.mxu0 %v717
        %741 = vmatmul.bf16.gmra.mxu0 %v576
        %v742 = vpop.f32.mrf.mxu0
        %v743 = vadd.f32 %v681, %v742
        %v744 = vpop.f32.mrf.mxu0
        %v745 = vadd.f32 %v683, %v744
        %746 = vdwg.mxu0
        %v747 = vld [vmem:[#allocation2 + $0x2] sm:$0xf]
        %v748 = vld [vmem:[%s531 + $0x2] sm:$0xf]
        %v749 = vld [vmem:[%s533 + $0x2] sm:$0xf]
        %v750 = vld [vmem:[%s535 + $0x2] sm:$0xf]
        %v752 = vrot.slane %v748, 4
        %v755 = vrot.slane %v750, 4
        %v757 = vsel %vm573, %v747, %v752
        %v758 = vsel %vm573, %v749, %v755
        %v759 = vpack.c.bf16 %v758, %v757
        %s760 = scalar_lea.vmem %s3, 256
        %v761 = vld [vmem:[%s760] sm:$0xf]
        %v762 = vld [vmem:[%s760 + $0x4] sm:$0xf]
        %v763 = vld [vmem:[%s760 + $0x8] sm:$0xf]
        %v764 = vld [vmem:[%s760 + $0xc] sm:$0xf]
        %v765 = vld [vmem:[%s760 + $0x10] sm:$0xf]
        %v766 = vld [vmem:[%s760 + $0x14] sm:$0xf]
        %v767 = vld [vmem:[%s760 + $0x18] sm:$0xf]
        %v768 = vld [vmem:[%s760 + $0x1c] sm:$0xf]
        %v769 = vld [vmem:[%s760 + $0x20] sm:$0xf]
        %v770 = vld [vmem:[%s760 + $0x24] sm:$0xf]
        %v771 = vld [vmem:[%s760 + $0x28] sm:$0xf]
        %v772 = vld [vmem:[%s760 + $0x2c] sm:$0xf]
        %v773 = vld [vmem:[%s760 + $0x30] sm:$0xf]
        %v774 = vld [vmem:[%s760 + $0x34] sm:$0xf]
        %v775 = vld [vmem:[%s760 + $0x38] sm:$0xf]
        %v776 = vld [vmem:[%s760 + $0x3c] sm:$0xf]
        %v793 = vunpack.c.l.b16 %v761
        %v794 = vunpack.c.l.b16 %v762
        %v795 = vunpack.c.l.b16 %v763
        %v796 = vunpack.c.l.b16 %v764
        %v797 = vunpack.c.l.b16 %v765
        %v798 = vunpack.c.l.b16 %v766
        %v799 = vunpack.c.l.b16 %v767
        %v800 = vunpack.c.l.b16 %v768
        %v801 = vunpack.c.l.b16 %v769
        %v802 = vunpack.c.l.b16 %v770
        %v803 = vunpack.c.l.b16 %v771
        %v804 = vunpack.c.l.b16 %v772
        %v805 = vunpack.c.l.b16 %v773
        %v806 = vunpack.c.l.b16 %v774
        %v807 = vunpack.c.l.b16 %v775
        %v808 = vunpack.c.l.b16 %v776
        %v809 = vpack.c.b16 %v794, %v793
        %v810 = vpack.c.b16 %v796, %v795
        %v811 = vpack.c.b16 %v798, %v797
        %v812 = vpack.c.b16 %v800, %v799
        %v813 = vpack.c.b16 %v802, %v801
        %v814 = vpack.c.b16 %v804, %v803
        %v815 = vpack.c.b16 %v806, %v805
        %v816 = vpack.c.b16 %v808, %v807
        %825 = vmatpush.bf16.msra.mxu0 %v816
        %826 = vmatpush.bf16.msra.mxu0 %v815
        %827 = vmatpush.bf16.msra.mxu0 %v814
        %828 = vmatpush.bf16.msra.mxu0 %v813
        %829 = vmatpush.bf16.msra.mxu0 %v812
        %830 = vmatpush.bf16.msra.mxu0 %v811
        %831 = vmatpush.bf16.msra.mxu0 %v810
        %832 = vmatpush.bf16.msra.mxu0 %v809
        %833 = vmatmul.bf16.gmra.mxu0 %v759
        %v834 = vpop.f32.mrf.mxu0
        %v835 = vadd.f32 0.0, %v834
        %v836 = vpop.f32.mrf.mxu0
        %v837 = vadd.f32 0.0, %v836
        %838 = vdwg.mxu0
        %v839 = vadd.f32 %v743, %v835
        %v840 = vadd.f32 %v745, %v837
        %v841 = vld [vmem:[%s537] sm:$0xf]
        %v843 = vrot.slane %v565, 4
        %v846 = vrot.slane %v841, 4
        %v848 = vsel %vm573, %v564, %v843
        %v849 = vsel %vm573, %v566, %v846
        %v850 = vpack.c.bf16 %v849, %v848
        %s851 = scalar_lea.vmem %s3, 640
        %v852 = vld [vmem:[%s851] sm:$0xf]
        %v853 = vld [vmem:[%s851 + $0x4] sm:$0xf]
        %v854 = vld [vmem:[%s851 + $0x8] sm:$0xf]
        %v855 = vld [vmem:[%s851 + $0xc] sm:$0xf]
        %v856 = vld [vmem:[%s851 + $0x10] sm:$0xf]
        %v857 = vld [vmem:[%s851 + $0x14] sm:$0xf]
        %v858 = vld [vmem:[%s851 + $0x18] sm:$0xf]
        %v859 = vld [vmem:[%s851 + $0x1c] sm:$0xf]
        %v860 = vld [vmem:[%s851 + $0x20] sm:$0xf]
        %v861 = vld [vmem:[%s851 + $0x24] sm:$0xf]
        %v862 = vld [vmem:[%s851 + $0x28] sm:$0xf]
        %v863 = vld [vmem:[%s851 + $0x2c] sm:$0xf]
        %v864 = vld [vmem:[%s851 + $0x30] sm:$0xf]
        %v865 = vld [vmem:[%s851 + $0x34] sm:$0xf]
        %v866 = vld [vmem:[%s851 + $0x38] sm:$0xf]
        %v867 = vld [vmem:[%s851 + $0x3c] sm:$0xf]
        %v884 = vunpack.c.l.b16 %v852
        %v885 = vunpack.c.l.b16 %v853
        %v886 = vunpack.c.l.b16 %v854
        %v887 = vunpack.c.l.b16 %v855
        %v888 = vunpack.c.l.b16 %v856
        %v889 = vunpack.c.l.b16 %v857
        %v890 = vunpack.c.l.b16 %v858
        %v891 = vunpack.c.l.b16 %v859
        %v892 = vunpack.c.l.b16 %v860
        %v893 = vunpack.c.l.b16 %v861
        %v894 = vunpack.c.l.b16 %v862
        %v895 = vunpack.c.l.b16 %v863
        %v896 = vunpack.c.l.b16 %v864
        %v897 = vunpack.c.l.b16 %v865
        %v898 = vunpack.c.l.b16 %v866
        %v899 = vunpack.c.l.b16 %v867
        %v900 = vpack.c.b16 %v885, %v884
        %v901 = vpack.c.b16 %v887, %v886
        %v902 = vpack.c.b16 %v889, %v888
        %v903 = vpack.c.b16 %v891, %v890
        %v904 = vpack.c.b16 %v893, %v892
        %v905 = vpack.c.b16 %v895, %v894
        %v906 = vpack.c.b16 %v897, %v896
        %v907 = vpack.c.b16 %v899, %v898
        %916 = vmatpush.bf16.msra.mxu0 %v907
        %917 = vmatpush.bf16.msra.mxu0 %v906
        %918 = vmatpush.bf16.msra.mxu0 %v905
        %919 = vmatpush.bf16.msra.mxu0 %v904
        %920 = vmatpush.bf16.msra.mxu0 %v903
        %921 = vmatpush.bf16.msra.mxu0 %v902
        %922 = vmatpush.bf16.msra.mxu0 %v901
        %923 = vmatpush.bf16.msra.mxu0 %v900
        %924 = vmatmul.bf16.gmra.mxu0 %v850
        %v925 = vpop.f32.mrf.mxu0
        %v926 = vadd.f32 0.0, %v925
        %v927 = vpop.f32.mrf.mxu0
        %v928 = vadd.f32 0.0, %v927
        %929 = vdwg.mxu0
        %v930 = vadd.f32 %v839, %v926
        %v931 = vadd.f32 %v840, %v928
        %v932 = vld [vmem:[%s537 + $0x1] sm:$0xf]
        %v934 = vrot.slane %v595, 4
        %v937 = vrot.slane %v932, 4
        %v939 = vsel %vm573, %v594, %v934
        %v940 = vsel %vm573, %v596, %v937
        %v941 = vpack.c.bf16 %v940, %v939
        %s942 = scalar_lea.vmem %s3, 768
        %v943 = vld [vmem:[%s942] sm:$0xf]
        %v944 = vld [vmem:[%s942 + $0x4] sm:$0xf]
        %v945 = vld [vmem:[%s942 + $0x8] sm:$0xf]
        %v946 = vld [vmem:[%s942 + $0xc] sm:$0xf]
        %v947 = vld [vmem:[%s942 + $0x10] sm:$0xf]
        %v948 = vld [vmem:[%s942 + $0x14] sm:$0xf]
        %v949 = vld [vmem:[%s942 + $0x18] sm:$0xf]
        %v950 = vld [vmem:[%s942 + $0x1c] sm:$0xf]
        %v951 = vld [vmem:[%s942 + $0x20] sm:$0xf]
        %v952 = vld [vmem:[%s942 + $0x24] sm:$0xf]
        %v953 = vld [vmem:[%s942 + $0x28] sm:$0xf]
        %v954 = vld [vmem:[%s942 + $0x2c] sm:$0xf]
        %v955 = vld [vmem:[%s942 + $0x30] sm:$0xf]
        %v956 = vld [vmem:[%s942 + $0x34] sm:$0xf]
        %v957 = vld [vmem:[%s942 + $0x38] sm:$0xf]
        %v958 = vld [vmem:[%s942 + $0x3c] sm:$0xf]
        %v975 = vunpack.c.l.b16 %v943
        %v976 = vunpack.c.l.b16 %v944
        %v977 = vunpack.c.l.b16 %v945
        %v978 = vunpack.c.l.b16 %v946
        %v979 = vunpack.c.l.b16 %v947
        %v980 = vunpack.c.l.b16 %v948
        %v981 = vunpack.c.l.b16 %v949
        %v982 = vunpack.c.l.b16 %v950
        %v983 = vunpack.c.l.b16 %v951
        %v984 = vunpack.c.l.b16 %v952
        %v985 = vunpack.c.l.b16 %v953
        %v986 = vunpack.c.l.b16 %v954
        %v987 = vunpack.c.l.b16 %v955
        %v988 = vunpack.c.l.b16 %v956
        %v989 = vunpack.c.l.b16 %v957
        %v990 = vunpack.c.l.b16 %v958
        %v991 = vpack.c.b16 %v976, %v975
        %v992 = vpack.c.b16 %v978, %v977
        %v993 = vpack.c.b16 %v980, %v979
        %v994 = vpack.c.b16 %v982, %v981
        %v995 = vpack.c.b16 %v984, %v983
        %v996 = vpack.c.b16 %v986, %v985
        %v997 = vpack.c.b16 %v988, %v987
        %v998 = vpack.c.b16 %v990, %v989
        %1007 = vmatpush.bf16.msra.mxu0 %v998
        %1008 = vmatpush.bf16.msra.mxu0 %v997
        %1009 = vmatpush.bf16.msra.mxu0 %v996
        %1010 = vmatpush.bf16.msra.mxu0 %v995
        %1011 = vmatpush.bf16.msra.mxu0 %v994
        %1012 = vmatpush.bf16.msra.mxu0 %v993
        %1013 = vmatpush.bf16.msra.mxu0 %v992
        %1014 = vmatpush.bf16.msra.mxu0 %v991
        %1015 = vmatmul.bf16.gmra.mxu0 %v941
        %v1016 = vpop.f32.mrf.mxu0
        %v1017 = vadd.f32 0.0, %v1016
        %v1018 = vpop.f32.mrf.mxu0
        %v1019 = vadd.f32 0.0, %v1018
        %1020 = vdwg.mxu0
        %v1021 = vadd.f32 %v930, %v1017
        %v1022 = vadd.f32 %v931, %v1019
        %v1023 = vld [vmem:[%s537 + $0x2] sm:$0xf]
        %v1025 = vrot.slane %v749, 4
        %v1028 = vrot.slane %v1023, 4
        %v1030 = vsel %vm573, %v748, %v1025
        %v1031 = vsel %vm573, %v750, %v1028
        %v1032 = vpack.c.bf16 %v1031, %v1030
        %s1033 = scalar_lea.vmem %s3, 896
        %v1034 = vld [vmem:[%s1033] sm:$0xf]
        %v1035 = vld [vmem:[%s1033 + $0x4] sm:$0xf]
        %v1036 = vld [vmem:[%s1033 + $0x8] sm:$0xf]
        %v1037 = vld [vmem:[%s1033 + $0xc] sm:$0xf]
        %v1038 = vld [vmem:[%s1033 + $0x10] sm:$0xf]
        %v1039 = vld [vmem:[%s1033 + $0x14] sm:$0xf]
        %v1040 = vld [vmem:[%s1033 + $0x18] sm:$0xf]
        %v1041 = vld [vmem:[%s1033 + $0x1c] sm:$0xf]
        %v1042 = vld [vmem:[%s1033 + $0x20] sm:$0xf]
        %v1043 = vld [vmem:[%s1033 + $0x24] sm:$0xf]
        %v1044 = vld [vmem:[%s1033 + $0x28] sm:$0xf]
        %v1045 = vld [vmem:[%s1033 + $0x2c] sm:$0xf]
        %v1046 = vld [vmem:[%s1033 + $0x30] sm:$0xf]
        %v1047 = vld [vmem:[%s1033 + $0x34] sm:$0xf]
        %v1048 = vld [vmem:[%s1033 + $0x38] sm:$0xf]
        %v1049 = vld [vmem:[%s1033 + $0x3c] sm:$0xf]
        %v1066 = vunpack.c.l.b16 %v1034
        %v1067 = vunpack.c.l.b16 %v1035
        %v1068 = vunpack.c.l.b16 %v1036
        %v1069 = vunpack.c.l.b16 %v1037
        %v1070 = vunpack.c.l.b16 %v1038
        %v1071 = vunpack.c.l.b16 %v1039
        %v1072 = vunpack.c.l.b16 %v1040
        %v1073 = vunpack.c.l.b16 %v1041
        %v1074 = vunpack.c.l.b16 %v1042
        %v1075 = vunpack.c.l.b16 %v1043
        %v1076 = vunpack.c.l.b16 %v1044
        %v1077 = vunpack.c.l.b16 %v1045
        %v1078 = vunpack.c.l.b16 %v1046
        %v1079 = vunpack.c.l.b16 %v1047
        %v1080 = vunpack.c.l.b16 %v1048
        %v1081 = vunpack.c.l.b16 %v1049
        %v1082 = vpack.c.b16 %v1067, %v1066
        %v1083 = vpack.c.b16 %v1069, %v1068
        %v1084 = vpack.c.b16 %v1071, %v1070
        %v1085 = vpack.c.b16 %v1073, %v1072
        %v1086 = vpack.c.b16 %v1075, %v1074
        %v1087 = vpack.c.b16 %v1077, %v1076
        %v1088 = vpack.c.b16 %v1079, %v1078
        %v1089 = vpack.c.b16 %v1081, %v1080
        %1098 = vmatpush.bf16.msra.mxu0 %v1089
        %1099 = vmatpush.bf16.msra.mxu0 %v1088
        %1100 = vmatpush.bf16.msra.mxu0 %v1087
        %1101 = vmatpush.bf16.msra.mxu0 %v1086
        %1102 = vmatpush.bf16.msra.mxu0 %v1085
        %1103 = vmatpush.bf16.msra.mxu0 %v1084
        %1104 = vmatpush.bf16.msra.mxu0 %v1083
        %1105 = vmatpush.bf16.msra.mxu0 %v1082
        %1106 = vmatmul.bf16.gmra.mxu0 %v1032
        %v1107 = vpop.f32.mrf.mxu0
        %v1108 = vadd.f32 0.0, %v1107
        %v1109 = vpop.f32.mrf.mxu0
        %v1110 = vadd.f32 0.0, %v1109
        %1111 = vdwg.mxu0
        %v1112 = vadd.f32 %v1021, %v1108
        %v1113 = vadd.f32 %v1022, %v1110
        %s1114 = scalar_lea.vmem [#allocation2], 40
        %v1115 = vld [vmem:[%s1114] sm:$0xf]
        %v1117 = vrot.slane %v1115, 4
        %v1119 = vsel %vm573, %v841, %v1117
        %v1120 = vpack.c.bf16 %v1119, %v575
        %s1121 = scalar_lea.vmem %s3, 1280
        %v1122 = vld [vmem:[%s1121] sm:$0xf]
        %v1123 = vld [vmem:[%s1121 + $0x4] sm:$0xf]
        %v1124 = vld [vmem:[%s1121 + $0x8] sm:$0xf]
        %v1125 = vld [vmem:[%s1121 + $0xc] sm:$0xf]
        %v1126 = vld [vmem:[%s1121 + $0x10] sm:$0xf]
        %v1127 = vld [vmem:[%s1121 + $0x14] sm:$0xf]
        %v1128 = vld [vmem:[%s1121 + $0x18] sm:$0xf]
        %v1129 = vld [vmem:[%s1121 + $0x1c] sm:$0xf]
        %v1130 = vld [vmem:[%s1121 + $0x20] sm:$0xf]
        %v1131 = vld [vmem:[%s1121 + $0x24] sm:$0xf]
        %v1132 = vld [vmem:[%s1121 + $0x28] sm:$0xf]
        %v1133 = vld [vmem:[%s1121 + $0x2c] sm:$0xf]
        %v1134 = vld [vmem:[%s1121 + $0x30] sm:$0xf]
        %v1135 = vld [vmem:[%s1121 + $0x34] sm:$0xf]
        %v1136 = vld [vmem:[%s1121 + $0x38] sm:$0xf]
        %v1137 = vld [vmem:[%s1121 + $0x3c] sm:$0xf]
        %v1154 = vunpack.c.l.b16 %v1122
        %v1155 = vunpack.c.l.b16 %v1123
        %v1156 = vunpack.c.l.b16 %v1124
        %v1157 = vunpack.c.l.b16 %v1125
        %v1158 = vunpack.c.l.b16 %v1126
        %v1159 = vunpack.c.l.b16 %v1127
        %v1160 = vunpack.c.l.b16 %v1128
        %v1161 = vunpack.c.l.b16 %v1129
        %v1162 = vunpack.c.l.b16 %v1130
        %v1163 = vunpack.c.l.b16 %v1131
        %v1164 = vunpack.c.l.b16 %v1132
        %v1165 = vunpack.c.l.b16 %v1133
        %v1166 = vunpack.c.l.b16 %v1134
        %v1167 = vunpack.c.l.b16 %v1135
        %v1168 = vunpack.c.l.b16 %v1136
        %v1169 = vunpack.c.l.b16 %v1137
        %v1170 = vpack.c.b16 %v1155, %v1154
        %v1171 = vpack.c.b16 %v1157, %v1156
        %v1172 = vpack.c.b16 %v1159, %v1158
        %v1173 = vpack.c.b16 %v1161, %v1160
        %v1174 = vpack.c.b16 %v1163, %v1162
        %v1175 = vpack.c.b16 %v1165, %v1164
        %v1176 = vpack.c.b16 %v1167, %v1166
        %v1177 = vpack.c.b16 %v1169, %v1168
        %1186 = vmatpush.bf16.msra.mxu0 %v1177
        %1187 = vmatpush.bf16.msra.mxu0 %v1176
        %1188 = vmatpush.bf16.msra.mxu0 %v1175
        %1189 = vmatpush.bf16.msra.mxu0 %v1174
        %1190 = vmatpush.bf16.msra.mxu0 %v1173
        %1191 = vmatpush.bf16.msra.mxu0 %v1172
        %1192 = vmatpush.bf16.msra.mxu0 %v1171
        %1193 = vmatpush.bf16.msra.mxu0 %v1170
        %1194 = vmatmul.bf16.gmra.mxu0 %v1120
        %v1195 = vpop.f32.mrf.mxu0
        %v1196 = vadd.f32 0.0, %v1195
        %v1197 = vpop.f32.mrf.mxu0
        %v1198 = vadd.f32 0.0, %v1197
        %1199 = vdwg.mxu0
        %v1200 = vadd.f32 %v1112, %v1196
        %v1201 = vadd.f32 %v1113, %v1198
        %v1202 = vld [vmem:[%s1114 + $0x1] sm:$0xf]
        %v1204 = vrot.slane %v1202, 4
        %v1206 = vsel %vm573, %v932, %v1204
        %v1207 = vpack.c.bf16 %v1206, %v604
        %s1208 = scalar_lea.vmem %s3, 1408
        %v1209 = vld [vmem:[%s1208] sm:$0xf]
        %v1210 = vld [vmem:[%s1208 + $0x4] sm:$0xf]
        %v1211 = vld [vmem:[%s1208 + $0x8] sm:$0xf]
        %v1212 = vld [vmem:[%s1208 + $0xc] sm:$0xf]
        %v1213 = vld [vmem:[%s1208 + $0x10] sm:$0xf]
        %v1214 = vld [vmem:[%s1208 + $0x14] sm:$0xf]
        %v1215 = vld [vmem:[%s1208 + $0x18] sm:$0xf]
        %v1216 = vld [vmem:[%s1208 + $0x1c] sm:$0xf]
        %v1217 = vld [vmem:[%s1208 + $0x20] sm:$0xf]
        %v1218 = vld [vmem:[%s1208 + $0x24] sm:$0xf]
        %v1219 = vld [vmem:[%s1208 + $0x28] sm:$0xf]
        %v1220 = vld [vmem:[%s1208 + $0x2c] sm:$0xf]
        %v1221 = vld [vmem:[%s1208 + $0x30] sm:$0xf]
        %v1222 = vld [vmem:[%s1208 + $0x34] sm:$0xf]
        %v1223 = vld [vmem:[%s1208 + $0x38] sm:$0xf]
        %v1224 = vld [vmem:[%s1208 + $0x3c] sm:$0xf]
        %v1241 = vunpack.c.l.b16 %v1209
        %v1242 = vunpack.c.l.b16 %v1210
        %v1243 = vunpack.c.l.b16 %v1211
        %v1244 = vunpack.c.l.b16 %v1212
        %v1245 = vunpack.c.l.b16 %v1213
        %v1246 = vunpack.c.l.b16 %v1214
        %v1247 = vunpack.c.l.b16 %v1215
        %v1248 = vunpack.c.l.b16 %v1216
        %v1249 = vunpack.c.l.b16 %v1217
        %v1250 = vunpack.c.l.b16 %v1218
        %v1251 = vunpack.c.l.b16 %v1219
        %v1252 = vunpack.c.l.b16 %v1220
        %v1253 = vunpack.c.l.b16 %v1221
        %v1254 = vunpack.c.l.b16 %v1222
        %v1255 = vunpack.c.l.b16 %v1223
        %v1256 = vunpack.c.l.b16 %v1224
        %v1257 = vpack.c.b16 %v1242, %v1241
        %v1258 = vpack.c.b16 %v1244, %v1243
        %v1259 = vpack.c.b16 %v1246, %v1245
        %v1260 = vpack.c.b16 %v1248, %v1247
        %v1261 = vpack.c.b16 %v1250, %v1249
        %v1262 = vpack.c.b16 %v1252, %v1251
        %v1263 = vpack.c.b16 %v1254, %v1253
        %v1264 = vpack.c.b16 %v1256, %v1255
        %1273 = vmatpush.bf16.msra.mxu0 %v1264
        %1274 = vmatpush.bf16.msra.mxu0 %v1263
        %1275 = vmatpush.bf16.msra.mxu0 %v1262
        %1276 = vmatpush.bf16.msra.mxu0 %v1261
        %1277 = vmatpush.bf16.msra.mxu0 %v1260
        %1278 = vmatpush.bf16.msra.mxu0 %v1259
        %1279 = vmatpush.bf16.msra.mxu0 %v1258
        %1280 = vmatpush.bf16.msra.mxu0 %v1257
        %1281 = vmatmul.bf16.gmra.mxu0 %v1207
        %v1282 = vpop.f32.mrf.mxu0
        %v1283 = vadd.f32 0.0, %v1282
        %v1284 = vpop.f32.mrf.mxu0
        %v1285 = vadd.f32 0.0, %v1284
        %1286 = vdwg.mxu0
        %v1287 = vadd.f32 %v1200, %v1283
        %v1288 = vadd.f32 %v1201, %v1285
        %v1289 = vld [vmem:[%s1114 + $0x2] sm:$0xf]
        %v1291 = vrot.slane %v1289, 4
        %v1293 = vsel %vm573, %v1023, %v1291
        %v1294 = vpack.c.bf16 %v1293, %v758
        %s1295 = scalar_lea.vmem %s3, 1536
        %v1296 = vld [vmem:[%s1295] sm:$0xf]
        %v1297 = vld [vmem:[%s1295 + $0x4] sm:$0xf]
        %v1298 = vld [vmem:[%s1295 + $0x8] sm:$0xf]
        %v1299 = vld [vmem:[%s1295 + $0xc] sm:$0xf]
        %v1300 = vld [vmem:[%s1295 + $0x10] sm:$0xf]
        %v1301 = vld [vmem:[%s1295 + $0x14] sm:$0xf]
        %v1302 = vld [vmem:[%s1295 + $0x18] sm:$0xf]
        %v1303 = vld [vmem:[%s1295 + $0x1c] sm:$0xf]
        %v1304 = vld [vmem:[%s1295 + $0x20] sm:$0xf]
        %v1305 = vld [vmem:[%s1295 + $0x24] sm:$0xf]
        %v1306 = vld [vmem:[%s1295 + $0x28] sm:$0xf]
        %v1307 = vld [vmem:[%s1295 + $0x2c] sm:$0xf]
        %v1308 = vld [vmem:[%s1295 + $0x30] sm:$0xf]
        %v1309 = vld [vmem:[%s1295 + $0x34] sm:$0xf]
        %v1310 = vld [vmem:[%s1295 + $0x38] sm:$0xf]
        %v1311 = vld [vmem:[%s1295 + $0x3c] sm:$0xf]
        %v1328 = vunpack.c.l.b16 %v1296
        %v1329 = vunpack.c.l.b16 %v1297
        %v1330 = vunpack.c.l.b16 %v1298
        %v1331 = vunpack.c.l.b16 %v1299
        %v1332 = vunpack.c.l.b16 %v1300
        %v1333 = vunpack.c.l.b16 %v1301
        %v1334 = vunpack.c.l.b16 %v1302
        %v1335 = vunpack.c.l.b16 %v1303
        %v1336 = vunpack.c.l.b16 %v1304
        %v1337 = vunpack.c.l.b16 %v1305
        %v1338 = vunpack.c.l.b16 %v1306
        %v1339 = vunpack.c.l.b16 %v1307
        %v1340 = vunpack.c.l.b16 %v1308
        %v1341 = vunpack.c.l.b16 %v1309
        %v1342 = vunpack.c.l.b16 %v1310
        %v1343 = vunpack.c.l.b16 %v1311
        %v1344 = vpack.c.b16 %v1329, %v1328
        %v1345 = vpack.c.b16 %v1331, %v1330
        %v1346 = vpack.c.b16 %v1333, %v1332
        %v1347 = vpack.c.b16 %v1335, %v1334
        %v1348 = vpack.c.b16 %v1337, %v1336
        %v1349 = vpack.c.b16 %v1339, %v1338
        %v1350 = vpack.c.b16 %v1341, %v1340
        %v1351 = vpack.c.b16 %v1343, %v1342
        %1360 = vmatpush.bf16.msra.mxu0 %v1351
        %1361 = vmatpush.bf16.msra.mxu0 %v1350
        %1362 = vmatpush.bf16.msra.mxu0 %v1349
        %1363 = vmatpush.bf16.msra.mxu0 %v1348
        %1364 = vmatpush.bf16.msra.mxu0 %v1347
        %1365 = vmatpush.bf16.msra.mxu0 %v1346
        %1366 = vmatpush.bf16.msra.mxu0 %v1345
        %1367 = vmatpush.bf16.msra.mxu0 %v1344
        %1368 = vmatmul.bf16.gmra.mxu0 %v1294
        %v1369 = vpop.f32.mrf.mxu0
        %v1370 = vadd.f32 0.0, %v1369
        %v1371 = vpop.f32.mrf.mxu0
        %v1372 = vadd.f32 0.0, %v1371
        %1373 = vdwg.mxu0
        %v1374 = vadd.f32 %v1287, %v1370
        %v1375 = vadd.f32 %v1288, %v1372
        %s1376 = scalar_lea.vmem [#allocation2], 48
        %v1377 = vld [vmem:[%s1376] sm:$0xf]
        %v1378 = vld [vmem:[%s539] sm:$0xf]
        %v1379 = vld [vmem:[%s541] sm:$0xf]
        %v1380 = vld [vmem:[%s543] sm:$0xf]
        %v1382 = vrot.slane %v1378, 4
        %v1385 = vrot.slane %v1380, 4
        %v1387 = vsel %vm573, %v1377, %v1382
        %v1388 = vsel %vm573, %v1379, %v1385
        %v1389 = vpack.c.bf16 %v1388, %v1387
        %s1390 = scalar_lea.vmem %s3, 64
        %v1391 = vld [vmem:[%s1390] sm:$0xf]
        %v1392 = vld [vmem:[%s1390 + $0x4] sm:$0xf]
        %v1393 = vld [vmem:[%s1390 + $0x8] sm:$0xf]
        %v1394 = vld [vmem:[%s1390 + $0xc] sm:$0xf]
        %v1395 = vld [vmem:[%s1390 + $0x10] sm:$0xf]
        %v1396 = vld [vmem:[%s1390 + $0x14] sm:$0xf]
        %v1397 = vld [vmem:[%s1390 + $0x18] sm:$0xf]
        %v1398 = vld [vmem:[%s1390 + $0x1c] sm:$0xf]
        %v1399 = vld [vmem:[%s1390 + $0x20] sm:$0xf]
        %v1400 = vld [vmem:[%s1390 + $0x24] sm:$0xf]
        %v1401 = vld [vmem:[%s1390 + $0x28] sm:$0xf]
        %v1402 = vld [vmem:[%s1390 + $0x2c] sm:$0xf]
        %v1403 = vld [vmem:[%s1390 + $0x30] sm:$0xf]
        %v1404 = vld [vmem:[%s1390 + $0x34] sm:$0xf]
        %v1405 = vld [vmem:[%s1390 + $0x38] sm:$0xf]
        %v1406 = vld [vmem:[%s1390 + $0x3c] sm:$0xf]
        %v1423 = vunpack.c.l.b16 %v1391
        %v1424 = vunpack.c.l.b16 %v1392
        %v1425 = vunpack.c.l.b16 %v1393
        %v1426 = vunpack.c.l.b16 %v1394
        %v1427 = vunpack.c.l.b16 %v1395
        %v1428 = vunpack.c.l.b16 %v1396
        %v1429 = vunpack.c.l.b16 %v1397
        %v1430 = vunpack.c.l.b16 %v1398
        %v1431 = vunpack.c.l.b16 %v1399
        %v1432 = vunpack.c.l.b16 %v1400
        %v1433 = vunpack.c.l.b16 %v1401
        %v1434 = vunpack.c.l.b16 %v1402
        %v1435 = vunpack.c.l.b16 %v1403
        %v1436 = vunpack.c.l.b16 %v1404
        %v1437 = vunpack.c.l.b16 %v1405
        %v1438 = vunpack.c.l.b16 %v1406
        %v1439 = vpack.c.b16 %v1424, %v1423
        %v1440 = vpack.c.b16 %v1426, %v1425
        %v1441 = vpack.c.b16 %v1428, %v1427
        %v1442 = vpack.c.b16 %v1430, %v1429
        %v1443 = vpack.c.b16 %v1432, %v1431
        %v1444 = vpack.c.b16 %v1434, %v1433
        %v1445 = vpack.c.b16 %v1436, %v1435
        %v1446 = vpack.c.b16 %v1438, %v1437
        %1455 = vmatpush.bf16.msra.mxu0 %v1446
        %1456 = vmatpush.bf16.msra.mxu0 %v1445
        %1457 = vmatpush.bf16.msra.mxu0 %v1444
        %1458 = vmatpush.bf16.msra.mxu0 %v1443
        %1459 = vmatpush.bf16.msra.mxu0 %v1442
        %1460 = vmatpush.bf16.msra.mxu0 %v1441
        %1461 = vmatpush.bf16.msra.mxu0 %v1440
        %1462 = vmatpush.bf16.msra.mxu0 %v1439
        %1463 = vmatmul.bf16.gmra.mxu0 %v1389
        %v1464 = vpop.f32.mrf.mxu0
        %v1465 = vadd.f32 0.0, %v1464
        %v1466 = vpop.f32.mrf.mxu0
        %v1467 = vadd.f32 0.0, %v1466
        %1468 = vdwg.mxu0
        %v1469 = vadd.f32 %v1374, %v1465
        %v1470 = vadd.f32 %v1375, %v1467
        %v1471 = vld [vmem:[%s1376 + $0x1] sm:$0xf]
        %v1472 = vld [vmem:[%s539 + $0x1] sm:$0xf]
        %v1473 = vld [vmem:[%s541 + $0x1] sm:$0xf]
        %v1474 = vld [vmem:[%s543 + $0x1] sm:$0xf]
        %v1476 = vrot.slane %v1472, 4
        %v1479 = vrot.slane %v1474, 4
        %v1481 = vsel %vm573, %v1471, %v1476
        %v1482 = vsel %vm573, %v1473, %v1479
        %v1483 = vpack.c.bf16 %v1482, %v1481
        %s1484 = scalar_lea.vmem %s3, 192
        %v1485 = vld [vmem:[%s1484] sm:$0xf]
        %v1486 = vld [vmem:[%s1484 + $0x4] sm:$0xf]
        %v1487 = vld [vmem:[%s1484 + $0x8] sm:$0xf]
        %v1488 = vld [vmem:[%s1484 + $0xc] sm:$0xf]
        %v1489 = vld [vmem:[%s1484 + $0x10] sm:$0xf]
        %v1490 = vld [vmem:[%s1484 + $0x14] sm:$0xf]
        %v1491 = vld [vmem:[%s1484 + $0x18] sm:$0xf]
        %v1492 = vld [vmem:[%s1484 + $0x1c] sm:$0xf]
        %v1493 = vld [vmem:[%s1484 + $0x20] sm:$0xf]
        %v1494 = vld [vmem:[%s1484 + $0x24] sm:$0xf]
        %v1495 = vld [vmem:[%s1484 + $0x28] sm:$0xf]
        %v1496 = vld [vmem:[%s1484 + $0x2c] sm:$0xf]
        %v1497 = vld [vmem:[%s1484 + $0x30] sm:$0xf]
        %v1498 = vld [vmem:[%s1484 + $0x34] sm:$0xf]
        %v1499 = vld [vmem:[%s1484 + $0x38] sm:$0xf]
        %v1500 = vld [vmem:[%s1484 + $0x3c] sm:$0xf]
        %v1517 = vunpack.c.l.b16 %v1485
        %v1518 = vunpack.c.l.b16 %v1486
        %v1519 = vunpack.c.l.b16 %v1487
        %v1520 = vunpack.c.l.b16 %v1488
        %v1521 = vunpack.c.l.b16 %v1489
        %v1522 = vunpack.c.l.b16 %v1490
        %v1523 = vunpack.c.l.b16 %v1491
        %v1524 = vunpack.c.l.b16 %v1492
        %v1525 = vunpack.c.l.b16 %v1493
        %v1526 = vunpack.c.l.b16 %v1494
        %v1527 = vunpack.c.l.b16 %v1495
        %v1528 = vunpack.c.l.b16 %v1496
        %v1529 = vunpack.c.l.b16 %v1497
        %v1530 = vunpack.c.l.b16 %v1498
        %v1531 = vunpack.c.l.b16 %v1499
        %v1532 = vunpack.c.l.b16 %v1500
        %v1533 = vpack.c.b16 %v1518, %v1517
        %v1534 = vpack.c.b16 %v1520, %v1519
        %v1535 = vpack.c.b16 %v1522, %v1521
        %v1536 = vpack.c.b16 %v1524, %v1523
        %v1537 = vpack.c.b16 %v1526, %v1525
        %v1538 = vpack.c.b16 %v1528, %v1527
        %v1539 = vpack.c.b16 %v1530, %v1529
        %v1540 = vpack.c.b16 %v1532, %v1531
        %1549 = vmatpush.bf16.msra.mxu0 %v1540
        %1550 = vmatpush.bf16.msra.mxu0 %v1539
        %1551 = vmatpush.bf16.msra.mxu0 %v1538
        %1552 = vmatpush.bf16.msra.mxu0 %v1537
        %1553 = vmatpush.bf16.msra.mxu0 %v1536
        %1554 = vmatpush.bf16.msra.mxu0 %v1535
        %1555 = vmatpush.bf16.msra.mxu0 %v1534
        %1556 = vmatpush.bf16.msra.mxu0 %v1533
        %1557 = vmatmul.bf16.gmra.mxu0 %v1483
        %v1558 = vpop.f32.mrf.mxu0
        %v1559 = vadd.f32 0.0, %v1558
        %v1560 = vpop.f32.mrf.mxu0
        %v1561 = vadd.f32 0.0, %v1560
        %1562 = vdwg.mxu0
        %v1563 = vadd.f32 %v1469, %v1559
        %v1564 = vadd.f32 %v1470, %v1561
        %v1565 = vld [vmem:[%s545] sm:$0xf]
        %v1567 = vrot.slane %v1379, 4
        %v1570 = vrot.slane %v1565, 4
        %v1572 = vsel %vm573, %v1378, %v1567
        %v1573 = vsel %vm573, %v1380, %v1570
        %v1574 = vpack.c.bf16 %v1573, %v1572
        %s1575 = scalar_lea.vmem %s3, 704
        %v1576 = vld [vmem:[%s1575] sm:$0xf]
        %v1577 = vld [vmem:[%s1575 + $0x4] sm:$0xf]
        %v1578 = vld [vmem:[%s1575 + $0x8] sm:$0xf]
        %v1579 = vld [vmem:[%s1575 + $0xc] sm:$0xf]
        %v1580 = vld [vmem:[%s1575 + $0x10] sm:$0xf]
        %v1581 = vld [vmem:[%s1575 + $0x14] sm:$0xf]
        %v1582 = vld [vmem:[%s1575 + $0x18] sm:$0xf]
        %v1583 = vld [vmem:[%s1575 + $0x1c] sm:$0xf]
        %v1584 = vld [vmem:[%s1575 + $0x20] sm:$0xf]
        %v1585 = vld [vmem:[%s1575 + $0x24] sm:$0xf]
        %v1586 = vld [vmem:[%s1575 + $0x28] sm:$0xf]
        %v1587 = vld [vmem:[%s1575 + $0x2c] sm:$0xf]
        %v1588 = vld [vmem:[%s1575 + $0x30] sm:$0xf]
        %v1589 = vld [vmem:[%s1575 + $0x34] sm:$0xf]
        %v1590 = vld [vmem:[%s1575 + $0x38] sm:$0xf]
        %v1591 = vld [vmem:[%s1575 + $0x3c] sm:$0xf]
        %v1608 = vunpack.c.l.b16 %v1576
        %v1609 = vunpack.c.l.b16 %v1577
        %v1610 = vunpack.c.l.b16 %v1578
        %v1611 = vunpack.c.l.b16 %v1579
        %v1612 = vunpack.c.l.b16 %v1580
        %v1613 = vunpack.c.l.b16 %v1581
        %v1614 = vunpack.c.l.b16 %v1582
        %v1615 = vunpack.c.l.b16 %v1583
        %v1616 = vunpack.c.l.b16 %v1584
        %v1617 = vunpack.c.l.b16 %v1585
        %v1618 = vunpack.c.l.b16 %v1586
        %v1619 = vunpack.c.l.b16 %v1587
        %v1620 = vunpack.c.l.b16 %v1588
        %v1621 = vunpack.c.l.b16 %v1589
        %v1622 = vunpack.c.l.b16 %v1590
        %v1623 = vunpack.c.l.b16 %v1591
        %v1624 = vpack.c.b16 %v1609, %v1608
        %v1625 = vpack.c.b16 %v1611, %v1610
        %v1626 = vpack.c.b16 %v1613, %v1612
        %v1627 = vpack.c.b16 %v1615, %v1614
        %v1628 = vpack.c.b16 %v1617, %v1616
        %v1629 = vpack.c.b16 %v1619, %v1618
        %v1630 = vpack.c.b16 %v1621, %v1620
        %v1631 = vpack.c.b16 %v1623, %v1622
        %1640 = vmatpush.bf16.msra.mxu0 %v1631
        %1641 = vmatpush.bf16.msra.mxu0 %v1630
        %1642 = vmatpush.bf16.msra.mxu0 %v1629
        %1643 = vmatpush.bf16.msra.mxu0 %v1628
        %1644 = vmatpush.bf16.msra.mxu0 %v1627
        %1645 = vmatpush.bf16.msra.mxu0 %v1626
        %1646 = vmatpush.bf16.msra.mxu0 %v1625
        %1647 = vmatpush.bf16.msra.mxu0 %v1624
        %1648 = vmatmul.bf16.gmra.mxu0 %v1574
        %v1649 = vpop.f32.mrf.mxu0
        %v1650 = vadd.f32 0.0, %v1649
        %v1651 = vpop.f32.mrf.mxu0
        %v1652 = vadd.f32 0.0, %v1651
        %1653 = vdwg.mxu0
        %v1654 = vadd.f32 %v1563, %v1650
        %v1655 = vadd.f32 %v1564, %v1652
        %v1656 = vld [vmem:[%s545 + $0x1] sm:$0xf]
        %v1658 = vrot.slane %v1473, 4
        %v1661 = vrot.slane %v1656, 4
        %v1663 = vsel %vm573, %v1472, %v1658
        %v1664 = vsel %vm573, %v1474, %v1661
        %v1665 = vpack.c.bf16 %v1664, %v1663
        %s1666 = scalar_lea.vmem %s3, 832
        %v1667 = vld [vmem:[%s1666] sm:$0xf]
        %v1668 = vld [vmem:[%s1666 + $0x4] sm:$0xf]
        %v1669 = vld [vmem:[%s1666 + $0x8] sm:$0xf]
        %v1670 = vld [vmem:[%s1666 + $0xc] sm:$0xf]
        %v1671 = vld [vmem:[%s1666 + $0x10] sm:$0xf]
        %v1672 = vld [vmem:[%s1666 + $0x14] sm:$0xf]
        %v1673 = vld [vmem:[%s1666 + $0x18] sm:$0xf]
        %v1674 = vld [vmem:[%s1666 + $0x1c] sm:$0xf]
        %v1675 = vld [vmem:[%s1666 + $0x20] sm:$0xf]
        %v1676 = vld [vmem:[%s1666 + $0x24] sm:$0xf]
        %v1677 = vld [vmem:[%s1666 + $0x28] sm:$0xf]
        %v1678 = vld [vmem:[%s1666 + $0x2c] sm:$0xf]
        %v1679 = vld [vmem:[%s1666 + $0x30] sm:$0xf]
        %v1680 = vld [vmem:[%s1666 + $0x34] sm:$0xf]
        %v1681 = vld [vmem:[%s1666 + $0x38] sm:$0xf]
        %v1682 = vld [vmem:[%s1666 + $0x3c] sm:$0xf]
        %v1699 = vunpack.c.l.b16 %v1667
        %v1700 = vunpack.c.l.b16 %v1668
        %v1701 = vunpack.c.l.b16 %v1669
        %v1702 = vunpack.c.l.b16 %v1670
        %v1703 = vunpack.c.l.b16 %v1671
        %v1704 = vunpack.c.l.b16 %v1672
        %v1705 = vunpack.c.l.b16 %v1673
        %v1706 = vunpack.c.l.b16 %v1674
        %v1707 = vunpack.c.l.b16 %v1675
        %v1708 = vunpack.c.l.b16 %v1676
        %v1709 = vunpack.c.l.b16 %v1677
        %v1710 = vunpack.c.l.b16 %v1678
        %v1711 = vunpack.c.l.b16 %v1679
        %v1712 = vunpack.c.l.b16 %v1680
        %v1713 = vunpack.c.l.b16 %v1681
        %v1714 = vunpack.c.l.b16 %v1682
        %v1715 = vpack.c.b16 %v1700, %v1699
        %v1716 = vpack.c.b16 %v1702, %v1701
        %v1717 = vpack.c.b16 %v1704, %v1703
        %v1718 = vpack.c.b16 %v1706, %v1705
        %v1719 = vpack.c.b16 %v1708, %v1707
        %v1720 = vpack.c.b16 %v1710, %v1709
        %v1721 = vpack.c.b16 %v1712, %v1711
        %v1722 = vpack.c.b16 %v1714, %v1713
        %1731 = vmatpush.bf16.msra.mxu0 %v1722
        %1732 = vmatpush.bf16.msra.mxu0 %v1721
        %1733 = vmatpush.bf16.msra.mxu0 %v1720
        %1734 = vmatpush.bf16.msra.mxu0 %v1719
        %1735 = vmatpush.bf16.msra.mxu0 %v1718
        %1736 = vmatpush.bf16.msra.mxu0 %v1717
        %1737 = vmatpush.bf16.msra.mxu0 %v1716
        %1738 = vmatpush.bf16.msra.mxu0 %v1715
        %1739 = vmatmul.bf16.gmra.mxu0 %v1665
        %v1740 = vpop.f32.mrf.mxu0
        %v1741 = vadd.f32 0.0, %v1740
        %v1742 = vpop.f32.mrf.mxu0
        %v1743 = vadd.f32 0.0, %v1742
        %1744 = vdwg.mxu0
        %v1745 = vadd.f32 %v1654, %v1741
        %v1746 = vadd.f32 %v1655, %v1743
        %s1747 = scalar_lea.vmem [#allocation2], 88
        %v1748 = vld [vmem:[%s1747] sm:$0xf]
        %v1750 = vrot.slane %v1748, 4
        %v1752 = vsel %vm573, %v1565, %v1750
        %v1753 = vpack.c.bf16 %v1752, %v1388
        %s1754 = scalar_lea.vmem %s3, 1344
        %v1755 = vld [vmem:[%s1754] sm:$0xf]
        %v1756 = vld [vmem:[%s1754 + $0x4] sm:$0xf]
        %v1757 = vld [vmem:[%s1754 + $0x8] sm:$0xf]
        %v1758 = vld [vmem:[%s1754 + $0xc] sm:$0xf]
        %v1759 = vld [vmem:[%s1754 + $0x10] sm:$0xf]
        %v1760 = vld [vmem:[%s1754 + $0x14] sm:$0xf]
        %v1761 = vld [vmem:[%s1754 + $0x18] sm:$0xf]
        %v1762 = vld [vmem:[%s1754 + $0x1c] sm:$0xf]
        %v1763 = vld [vmem:[%s1754 + $0x20] sm:$0xf]
        %v1764 = vld [vmem:[%s1754 + $0x24] sm:$0xf]
        %v1765 = vld [vmem:[%s1754 + $0x28] sm:$0xf]
        %v1766 = vld [vmem:[%s1754 + $0x2c] sm:$0xf]
        %v1767 = vld [vmem:[%s1754 + $0x30] sm:$0xf]
        %v1768 = vld [vmem:[%s1754 + $0x34] sm:$0xf]
        %v1769 = vld [vmem:[%s1754 + $0x38] sm:$0xf]
        %v1770 = vld [vmem:[%s1754 + $0x3c] sm:$0xf]
        %v1787 = vunpack.c.l.b16 %v1755
        %v1788 = vunpack.c.l.b16 %v1756
        %v1789 = vunpack.c.l.b16 %v1757
        %v1790 = vunpack.c.l.b16 %v1758
        %v1791 = vunpack.c.l.b16 %v1759
        %v1792 = vunpack.c.l.b16 %v1760
        %v1793 = vunpack.c.l.b16 %v1761
        %v1794 = vunpack.c.l.b16 %v1762
        %v1795 = vunpack.c.l.b16 %v1763
        %v1796 = vunpack.c.l.b16 %v1764
        %v1797 = vunpack.c.l.b16 %v1765
        %v1798 = vunpack.c.l.b16 %v1766
        %v1799 = vunpack.c.l.b16 %v1767
        %v1800 = vunpack.c.l.b16 %v1768
        %v1801 = vunpack.c.l.b16 %v1769
        %v1802 = vunpack.c.l.b16 %v1770
        %v1803 = vpack.c.b16 %v1788, %v1787
        %v1804 = vpack.c.b16 %v1790, %v1789
        %v1805 = vpack.c.b16 %v1792, %v1791
        %v1806 = vpack.c.b16 %v1794, %v1793
        %v1807 = vpack.c.b16 %v1796, %v1795
        %v1808 = vpack.c.b16 %v1798, %v1797
        %v1809 = vpack.c.b16 %v1800, %v1799
        %v1810 = vpack.c.b16 %v1802, %v1801
        %1819 = vmatpush.bf16.msra.mxu0 %v1810
        %1820 = vmatpush.bf16.msra.mxu0 %v1809
        %1821 = vmatpush.bf16.msra.mxu0 %v1808
        %1822 = vmatpush.bf16.msra.mxu0 %v1807
        %1823 = vmatpush.bf16.msra.mxu0 %v1806
        %1824 = vmatpush.bf16.msra.mxu0 %v1805
        %1825 = vmatpush.bf16.msra.mxu0 %v1804
        %1826 = vmatpush.bf16.msra.mxu0 %v1803
        %1827 = vmatmul.bf16.gmra.mxu0 %v1753
        %v1828 = vpop.f32.mrf.mxu0
        %v1829 = vadd.f32 0.0, %v1828
        %v1830 = vpop.f32.mrf.mxu0
        %v1831 = vadd.f32 0.0, %v1830
        %1832 = vdwg.mxu0
        %v1833 = vadd.f32 %v1745, %v1829
        %v1834 = vadd.f32 %v1746, %v1831
        %v1835 = vld [vmem:[%s1747 + $0x1] sm:$0xf]
        %v1837 = vrot.slane %v1835, 4
        %v1839 = vsel %vm573, %v1656, %v1837
        %v1840 = vpack.c.bf16 %v1839, %v1482
        %s1841 = scalar_lea.vmem %s3, 1472
        %v1842 = vld [vmem:[%s1841] sm:$0xf]
        %v1843 = vld [vmem:[%s1841 + $0x4] sm:$0xf]
        %v1844 = vld [vmem:[%s1841 + $0x8] sm:$0xf]
        %v1845 = vld [vmem:[%s1841 + $0xc] sm:$0xf]
        %v1846 = vld [vmem:[%s1841 + $0x10] sm:$0xf]
        %v1847 = vld [vmem:[%s1841 + $0x14] sm:$0xf]
        %v1848 = vld [vmem:[%s1841 + $0x18] sm:$0xf]
        %v1849 = vld [vmem:[%s1841 + $0x1c] sm:$0xf]
        %v1850 = vld [vmem:[%s1841 + $0x20] sm:$0xf]
        %v1851 = vld [vmem:[%s1841 + $0x24] sm:$0xf]
        %v1852 = vld [vmem:[%s1841 + $0x28] sm:$0xf]
        %v1853 = vld [vmem:[%s1841 + $0x2c] sm:$0xf]
        %v1854 = vld [vmem:[%s1841 + $0x30] sm:$0xf]
        %v1855 = vld [vmem:[%s1841 + $0x34] sm:$0xf]
        %v1856 = vld [vmem:[%s1841 + $0x38] sm:$0xf]
        %v1857 = vld [vmem:[%s1841 + $0x3c] sm:$0xf]
        %v1874 = vunpack.c.l.b16 %v1842
        %v1875 = vunpack.c.l.b16 %v1843
        %v1876 = vunpack.c.l.b16 %v1844
        %v1877 = vunpack.c.l.b16 %v1845
        %v1878 = vunpack.c.l.b16 %v1846
        %v1879 = vunpack.c.l.b16 %v1847
        %v1880 = vunpack.c.l.b16 %v1848
        %v1881 = vunpack.c.l.b16 %v1849
        %v1882 = vunpack.c.l.b16 %v1850
        %v1883 = vunpack.c.l.b16 %v1851
        %v1884 = vunpack.c.l.b16 %v1852
        %v1885 = vunpack.c.l.b16 %v1853
        %v1886 = vunpack.c.l.b16 %v1854
        %v1887 = vunpack.c.l.b16 %v1855
        %v1888 = vunpack.c.l.b16 %v1856
        %v1889 = vunpack.c.l.b16 %v1857
        %v1890 = vpack.c.b16 %v1875, %v1874
        %v1891 = vpack.c.b16 %v1877, %v1876
        %v1892 = vpack.c.b16 %v1879, %v1878
        %v1893 = vpack.c.b16 %v1881, %v1880
        %v1894 = vpack.c.b16 %v1883, %v1882
        %v1895 = vpack.c.b16 %v1885, %v1884
        %v1896 = vpack.c.b16 %v1887, %v1886
        %v1897 = vpack.c.b16 %v1889, %v1888
        %1906 = vmatpush.bf16.msra.mxu0 %v1897
        %1907 = vmatpush.bf16.msra.mxu0 %v1896
        %1908 = vmatpush.bf16.msra.mxu0 %v1895
        %1909 = vmatpush.bf16.msra.mxu0 %v1894
        %1910 = vmatpush.bf16.msra.mxu0 %v1893
        %1911 = vmatpush.bf16.msra.mxu0 %v1892
        %1912 = vmatpush.bf16.msra.mxu0 %v1891
        %1913 = vmatpush.bf16.msra.mxu0 %v1890
        %1914 = vmatmul.bf16.gmra.mxu0 %v1840
        %v1915 = vpop.f32.mrf.mxu0
        %v1916 = vadd.f32 0.0, %v1915
        %v1917 = vpop.f32.mrf.mxu0
        %v1918 = vadd.f32 0.0, %v1917
        %1919 = vdwg.mxu0
        %v1920 = vadd.f32 %v1833, %v1916
        %v1921 = vadd.f32 %v1834, %v1918
        %s1922 = scalar_lea.vmem [#allocation2], 96
        %v1923 = vld [vmem:[%s1922] sm:$0xf]
        %v1924 = vld [vmem:[%s547] sm:$0xf]
        %v1925 = vld [vmem:[%s549] sm:$0xf]
        %v1926 = vld [vmem:[%s551] sm:$0xf]
        %v1928 = vrot.slane %v1924, 4
        %v1931 = vrot.slane %v1926, 4
        %v1933 = vsel %vm573, %v1923, %v1928
        %v1934 = vsel %vm573, %v1925, %v1931
        %v1935 = vpack.c.bf16 %v1934, %v1933
        %s1936 = scalar_lea.vmem %s3, 320
        %v1937 = vld [vmem:[%s1936] sm:$0xf]
        %v1938 = vld [vmem:[%s1936 + $0x4] sm:$0xf]
        %v1939 = vld [vmem:[%s1936 + $0x8] sm:$0xf]
        %v1940 = vld [vmem:[%s1936 + $0xc] sm:$0xf]
        %v1941 = vld [vmem:[%s1936 + $0x10] sm:$0xf]
        %v1942 = vld [vmem:[%s1936 + $0x14] sm:$0xf]
        %v1943 = vld [vmem:[%s1936 + $0x18] sm:$0xf]
        %v1944 = vld [vmem:[%s1936 + $0x1c] sm:$0xf]
        %v1945 = vld [vmem:[%s1936 + $0x20] sm:$0xf]
        %v1946 = vld [vmem:[%s1936 + $0x24] sm:$0xf]
        %v1947 = vld [vmem:[%s1936 + $0x28] sm:$0xf]
        %v1948 = vld [vmem:[%s1936 + $0x2c] sm:$0xf]
        %v1949 = vld [vmem:[%s1936 + $0x30] sm:$0xf]
        %v1950 = vld [vmem:[%s1936 + $0x34] sm:$0xf]
        %v1951 = vld [vmem:[%s1936 + $0x38] sm:$0xf]
        %v1952 = vld [vmem:[%s1936 + $0x3c] sm:$0xf]
        %v1969 = vunpack.c.l.b16 %v1937
        %v1970 = vunpack.c.l.b16 %v1938
        %v1971 = vunpack.c.l.b16 %v1939
        %v1972 = vunpack.c.l.b16 %v1940
        %v1973 = vunpack.c.l.b16 %v1941
        %v1974 = vunpack.c.l.b16 %v1942
        %v1975 = vunpack.c.l.b16 %v1943
        %v1976 = vunpack.c.l.b16 %v1944
        %v1977 = vunpack.c.l.b16 %v1945
        %v1978 = vunpack.c.l.b16 %v1946
        %v1979 = vunpack.c.l.b16 %v1947
        %v1980 = vunpack.c.l.b16 %v1948
        %v1981 = vunpack.c.l.b16 %v1949
        %v1982 = vunpack.c.l.b16 %v1950
        %v1983 = vunpack.c.l.b16 %v1951
        %v1984 = vunpack.c.l.b16 %v1952
        %v1985 = vpack.c.b16 %v1970, %v1969
        %v1986 = vpack.c.b16 %v1972, %v1971
        %v1987 = vpack.c.b16 %v1974, %v1973
        %v1988 = vpack.c.b16 %v1976, %v1975
        %v1989 = vpack.c.b16 %v1978, %v1977
        %v1990 = vpack.c.b16 %v1980, %v1979
        %v1991 = vpack.c.b16 %v1982, %v1981
        %v1992 = vpack.c.b16 %v1984, %v1983
        %2001 = vmatpush.bf16.msra.mxu0 %v1992
        %2002 = vmatpush.bf16.msra.mxu0 %v1991
        %2003 = vmatpush.bf16.msra.mxu0 %v1990
        %2004 = vmatpush.bf16.msra.mxu0 %v1989
        %2005 = vmatpush.bf16.msra.mxu0 %v1988
        %2006 = vmatpush.bf16.msra.mxu0 %v1987
        %2007 = vmatpush.bf16.msra.mxu0 %v1986
        %2008 = vmatpush.bf16.msra.mxu0 %v1985
        %2009 = vmatmul.bf16.gmra.mxu0 %v1935
        %v2010 = vpop.f32.mrf.mxu0
        %v2011 = vadd.f32 0.0, %v2010
        %v2012 = vpop.f32.mrf.mxu0
        %v2013 = vadd.f32 0.0, %v2012
        %2014 = vdwg.mxu0
        %v2015 = vadd.f32 %v1920, %v2011
        %v2016 = vadd.f32 %v1921, %v2013
        %v2017 = vld [vmem:[%s1922 + $0x1] sm:$0xf]
        %v2018 = vld [vmem:[%s547 + $0x1] sm:$0xf]
        %v2019 = vld [vmem:[%s549 + $0x1] sm:$0xf]
        %v2020 = vld [vmem:[%s551 + $0x1] sm:$0xf]
        %v2022 = vrot.slane %v2018, 4
        %v2025 = vrot.slane %v2020, 4
        %v2027 = vsel %vm573, %v2017, %v2022
        %v2028 = vsel %vm573, %v2019, %v2025
        %v2029 = vpack.c.bf16 %v2028, %v2027
        %s2030 = scalar_lea.vmem %s3, 448
        %v2031 = vld [vmem:[%s2030] sm:$0xf]
        %v2032 = vld [vmem:[%s2030 + $0x4] sm:$0xf]
        %v2033 = vld [vmem:[%s2030 + $0x8] sm:$0xf]
        %v2034 = vld [vmem:[%s2030 + $0xc] sm:$0xf]
        %v2035 = vld [vmem:[%s2030 + $0x10] sm:$0xf]
        %v2036 = vld [vmem:[%s2030 + $0x14] sm:$0xf]
        %v2037 = vld [vmem:[%s2030 + $0x18] sm:$0xf]
        %v2038 = vld [vmem:[%s2030 + $0x1c] sm:$0xf]
        %v2039 = vld [vmem:[%s2030 + $0x20] sm:$0xf]
        %v2040 = vld [vmem:[%s2030 + $0x24] sm:$0xf]
        %v2041 = vld [vmem:[%s2030 + $0x28] sm:$0xf]
        %v2042 = vld [vmem:[%s2030 + $0x2c] sm:$0xf]
        %v2043 = vld [vmem:[%s2030 + $0x30] sm:$0xf]
        %v2044 = vld [vmem:[%s2030 + $0x34] sm:$0xf]
        %v2045 = vld [vmem:[%s2030 + $0x38] sm:$0xf]
        %v2046 = vld [vmem:[%s2030 + $0x3c] sm:$0xf]
        %v2063 = vunpack.c.l.b16 %v2031
        %v2064 = vunpack.c.l.b16 %v2032
        %v2065 = vunpack.c.l.b16 %v2033
        %v2066 = vunpack.c.l.b16 %v2034
        %v2067 = vunpack.c.l.b16 %v2035
        %v2068 = vunpack.c.l.b16 %v2036
        %v2069 = vunpack.c.l.b16 %v2037
        %v2070 = vunpack.c.l.b16 %v2038
        %v2071 = vunpack.c.l.b16 %v2039
        %v2072 = vunpack.c.l.b16 %v2040
        %v2073 = vunpack.c.l.b16 %v2041
        %v2074 = vunpack.c.l.b16 %v2042
        %v2075 = vunpack.c.l.b16 %v2043
        %v2076 = vunpack.c.l.b16 %v2044
        %v2077 = vunpack.c.l.b16 %v2045
        %v2078 = vunpack.c.l.b16 %v2046
        %v2079 = vpack.c.b16 %v2064, %v2063
        %v2080 = vpack.c.b16 %v2066, %v2065
        %v2081 = vpack.c.b16 %v2068, %v2067
        %v2082 = vpack.c.b16 %v2070, %v2069
        %v2083 = vpack.c.b16 %v2072, %v2071
        %v2084 = vpack.c.b16 %v2074, %v2073
        %v2085 = vpack.c.b16 %v2076, %v2075
        %v2086 = vpack.c.b16 %v2078, %v2077
        %2095 = vmatpush.bf16.msra.mxu0 %v2086
        %2096 = vmatpush.bf16.msra.mxu0 %v2085
        %2097 = vmatpush.bf16.msra.mxu0 %v2084
        %2098 = vmatpush.bf16.msra.mxu0 %v2083
        %2099 = vmatpush.bf16.msra.mxu0 %v2082
        %2100 = vmatpush.bf16.msra.mxu0 %v2081
        %2101 = vmatpush.bf16.msra.mxu0 %v2080
        %2102 = vmatpush.bf16.msra.mxu0 %v2079
        %2103 = vmatmul.bf16.gmra.mxu0 %v2029
        %v2104 = vpop.f32.mrf.mxu0
        %v2105 = vadd.f32 0.0, %v2104
        %v2106 = vpop.f32.mrf.mxu0
        %v2107 = vadd.f32 0.0, %v2106
        %2108 = vdwg.mxu0
        %v2109 = vadd.f32 %v2015, %v2105
        %v2110 = vadd.f32 %v2016, %v2107
        %v2111 = vld [vmem:[%s1922 + $0x2] sm:$0xf]
        %v2112 = vld [vmem:[%s547 + $0x2] sm:$0xf]
        %v2113 = vld [vmem:[%s549 + $0x2] sm:$0xf]
        %v2114 = vld [vmem:[%s551 + $0x2] sm:$0xf]
        %v2116 = vrot.slane %v2112, 4
        %v2119 = vrot.slane %v2114, 4
        %v2121 = vsel %vm573, %v2111, %v2116
        %v2122 = vsel %vm573, %v2113, %v2119
        %v2123 = vpack.c.bf16 %v2122, %v2121
        %s2124 = scalar_lea.vmem %s3, 576
        %v2125 = vld [vmem:[%s2124] sm:$0xf]
        %v2126 = vld [vmem:[%s2124 + $0x4] sm:$0xf]
        %v2127 = vld [vmem:[%s2124 + $0x8] sm:$0xf]
        %v2128 = vld [vmem:[%s2124 + $0xc] sm:$0xf]
        %v2129 = vld [vmem:[%s2124 + $0x10] sm:$0xf]
        %v2130 = vld [vmem:[%s2124 + $0x14] sm:$0xf]
        %v2131 = vld [vmem:[%s2124 + $0x18] sm:$0xf]
        %v2132 = vld [vmem:[%s2124 + $0x1c] sm:$0xf]
        %v2133 = vld [vmem:[%s2124 + $0x20] sm:$0xf]
        %v2134 = vld [vmem:[%s2124 + $0x24] sm:$0xf]
        %v2135 = vld [vmem:[%s2124 + $0x28] sm:$0xf]
        %v2136 = vld [vmem:[%s2124 + $0x2c] sm:$0xf]
        %v2137 = vld [vmem:[%s2124 + $0x30] sm:$0xf]
        %v2138 = vld [vmem:[%s2124 + $0x34] sm:$0xf]
        %v2139 = vld [vmem:[%s2124 + $0x38] sm:$0xf]
        %v2140 = vld [vmem:[%s2124 + $0x3c] sm:$0xf]
        %v2157 = vunpack.c.l.b16 %v2125
        %v2158 = vunpack.c.l.b16 %v2126
        %v2159 = vunpack.c.l.b16 %v2127
        %v2160 = vunpack.c.l.b16 %v2128
        %v2161 = vunpack.c.l.b16 %v2129
        %v2162 = vunpack.c.l.b16 %v2130
        %v2163 = vunpack.c.l.b16 %v2131
        %v2164 = vunpack.c.l.b16 %v2132
        %v2165 = vunpack.c.l.b16 %v2133
        %v2166 = vunpack.c.l.b16 %v2134
        %v2167 = vunpack.c.l.b16 %v2135
        %v2168 = vunpack.c.l.b16 %v2136
        %v2169 = vunpack.c.l.b16 %v2137
        %v2170 = vunpack.c.l.b16 %v2138
        %v2171 = vunpack.c.l.b16 %v2139
        %v2172 = vunpack.c.l.b16 %v2140
        %v2173 = vpack.c.b16 %v2158, %v2157
        %v2174 = vpack.c.b16 %v2160, %v2159
        %v2175 = vpack.c.b16 %v2162, %v2161
        %v2176 = vpack.c.b16 %v2164, %v2163
        %v2177 = vpack.c.b16 %v2166, %v2165
        %v2178 = vpack.c.b16 %v2168, %v2167
        %v2179 = vpack.c.b16 %v2170, %v2169
        %v2180 = vpack.c.b16 %v2172, %v2171
        %2189 = vmatpush.bf16.msra.mxu0 %v2180
        %2190 = vmatpush.bf16.msra.mxu0 %v2179
        %2191 = vmatpush.bf16.msra.mxu0 %v2178
        %2192 = vmatpush.bf16.msra.mxu0 %v2177
        %2193 = vmatpush.bf16.msra.mxu0 %v2176
        %2194 = vmatpush.bf16.msra.mxu0 %v2175
        %2195 = vmatpush.bf16.msra.mxu0 %v2174
        %2196 = vmatpush.bf16.msra.mxu0 %v2173
        %2197 = vmatmul.bf16.gmra.mxu0 %v2123
        %v2198 = vpop.f32.mrf.mxu0
        %v2199 = vadd.f32 0.0, %v2198
        %v2200 = vpop.f32.mrf.mxu0
        %v2201 = vadd.f32 0.0, %v2200
        %2202 = vdwg.mxu0
        %v2203 = vadd.f32 %v2109, %v2199
        %v2204 = vadd.f32 %v2110, %v2201
        %v2205 = vld [vmem:[%s553] sm:$0xf]
        %v2207 = vrot.slane %v1925, 4
        %v2210 = vrot.slane %v2205, 4
        %v2212 = vsel %vm573, %v1924, %v2207
        %v2213 = vsel %vm573, %v1926, %v2210
        %v2214 = vpack.c.bf16 %v2213, %v2212
        %s2215 = scalar_lea.vmem %s3, 960
        %v2216 = vld [vmem:[%s2215] sm:$0xf]
        %v2217 = vld [vmem:[%s2215 + $0x4] sm:$0xf]
        %v2218 = vld [vmem:[%s2215 + $0x8] sm:$0xf]
        %v2219 = vld [vmem:[%s2215 + $0xc] sm:$0xf]
        %v2220 = vld [vmem:[%s2215 + $0x10] sm:$0xf]
        %v2221 = vld [vmem:[%s2215 + $0x14] sm:$0xf]
        %v2222 = vld [vmem:[%s2215 + $0x18] sm:$0xf]
        %v2223 = vld [vmem:[%s2215 + $0x1c] sm:$0xf]
        %v2224 = vld [vmem:[%s2215 + $0x20] sm:$0xf]
        %v2225 = vld [vmem:[%s2215 + $0x24] sm:$0xf]
        %v2226 = vld [vmem:[%s2215 + $0x28] sm:$0xf]
        %v2227 = vld [vmem:[%s2215 + $0x2c] sm:$0xf]
        %v2228 = vld [vmem:[%s2215 + $0x30] sm:$0xf]
        %v2229 = vld [vmem:[%s2215 + $0x34] sm:$0xf]
        %v2230 = vld [vmem:[%s2215 + $0x38] sm:$0xf]
        %v2231 = vld [vmem:[%s2215 + $0x3c] sm:$0xf]
        %v2248 = vunpack.c.l.b16 %v2216
        %v2249 = vunpack.c.l.b16 %v2217
        %v2250 = vunpack.c.l.b16 %v2218
        %v2251 = vunpack.c.l.b16 %v2219
        %v2252 = vunpack.c.l.b16 %v2220
        %v2253 = vunpack.c.l.b16 %v2221
        %v2254 = vunpack.c.l.b16 %v2222
        %v2255 = vunpack.c.l.b16 %v2223
        %v2256 = vunpack.c.l.b16 %v2224
        %v2257 = vunpack.c.l.b16 %v2225
        %v2258 = vunpack.c.l.b16 %v2226
        %v2259 = vunpack.c.l.b16 %v2227
        %v2260 = vunpack.c.l.b16 %v2228
        %v2261 = vunpack.c.l.b16 %v2229
        %v2262 = vunpack.c.l.b16 %v2230
        %v2263 = vunpack.c.l.b16 %v2231
        %v2264 = vpack.c.b16 %v2249, %v2248
        %v2265 = vpack.c.b16 %v2251, %v2250
        %v2266 = vpack.c.b16 %v2253, %v2252
        %v2267 = vpack.c.b16 %v2255, %v2254
        %v2268 = vpack.c.b16 %v2257, %v2256
        %v2269 = vpack.c.b16 %v2259, %v2258
        %v2270 = vpack.c.b16 %v2261, %v2260
        %v2271 = vpack.c.b16 %v2263, %v2262
        %2280 = vmatpush.bf16.msra.mxu0 %v2271
        %2281 = vmatpush.bf16.msra.mxu0 %v2270
        %2282 = vmatpush.bf16.msra.mxu0 %v2269
        %2283 = vmatpush.bf16.msra.mxu0 %v2268
        %2284 = vmatpush.bf16.msra.mxu0 %v2267
        %2285 = vmatpush.bf16.msra.mxu0 %v2266
        %2286 = vmatpush.bf16.msra.mxu0 %v2265
        %2287 = vmatpush.bf16.msra.mxu0 %v2264
        %2288 = vmatmul.bf16.gmra.mxu0 %v2214
        %v2289 = vpop.f32.mrf.mxu0
        %v2290 = vadd.f32 0.0, %v2289
        %v2291 = vpop.f32.mrf.mxu0
        %v2292 = vadd.f32 0.0, %v2291
        %2293 = vdwg.mxu0
        %v2294 = vadd.f32 %v2203, %v2290
        %v2295 = vadd.f32 %v2204, %v2292
        %v2296 = vld [vmem:[%s553 + $0x1] sm:$0xf]
        %v2298 = vrot.slane %v2019, 4
        %v2301 = vrot.slane %v2296, 4
        %v2303 = vsel %vm573, %v2018, %v2298
        %v2304 = vsel %vm573, %v2020, %v2301
        %v2305 = vpack.c.bf16 %v2304, %v2303
        %s2306 = scalar_lea.vmem %s3, 1088
        %v2307 = vld [vmem:[%s2306] sm:$0xf]
        %v2308 = vld [vmem:[%s2306 + $0x4] sm:$0xf]
        %v2309 = vld [vmem:[%s2306 + $0x8] sm:$0xf]
        %v2310 = vld [vmem:[%s2306 + $0xc] sm:$0xf]
        %v2311 = vld [vmem:[%s2306 + $0x10] sm:$0xf]
        %v2312 = vld [vmem:[%s2306 + $0x14] sm:$0xf]
        %v2313 = vld [vmem:[%s2306 + $0x18] sm:$0xf]
        %v2314 = vld [vmem:[%s2306 + $0x1c] sm:$0xf]
        %v2315 = vld [vmem:[%s2306 + $0x20] sm:$0xf]
        %v2316 = vld [vmem:[%s2306 + $0x24] sm:$0xf]
        %v2317 = vld [vmem:[%s2306 + $0x28] sm:$0xf]
        %v2318 = vld [vmem:[%s2306 + $0x2c] sm:$0xf]
        %v2319 = vld [vmem:[%s2306 + $0x30] sm:$0xf]
        %v2320 = vld [vmem:[%s2306 + $0x34] sm:$0xf]
        %v2321 = vld [vmem:[%s2306 + $0x38] sm:$0xf]
        %v2322 = vld [vmem:[%s2306 + $0x3c] sm:$0xf]
        %v2339 = vunpack.c.l.b16 %v2307
        %v2340 = vunpack.c.l.b16 %v2308
        %v2341 = vunpack.c.l.b16 %v2309
        %v2342 = vunpack.c.l.b16 %v2310
        %v2343 = vunpack.c.l.b16 %v2311
        %v2344 = vunpack.c.l.b16 %v2312
        %v2345 = vunpack.c.l.b16 %v2313
        %v2346 = vunpack.c.l.b16 %v2314
        %v2347 = vunpack.c.l.b16 %v2315
        %v2348 = vunpack.c.l.b16 %v2316
        %v2349 = vunpack.c.l.b16 %v2317
        %v2350 = vunpack.c.l.b16 %v2318
        %v2351 = vunpack.c.l.b16 %v2319
        %v2352 = vunpack.c.l.b16 %v2320
        %v2353 = vunpack.c.l.b16 %v2321
        %v2354 = vunpack.c.l.b16 %v2322
        %v2355 = vpack.c.b16 %v2340, %v2339
        %v2356 = vpack.c.b16 %v2342, %v2341
        %v2357 = vpack.c.b16 %v2344, %v2343
        %v2358 = vpack.c.b16 %v2346, %v2345
        %v2359 = vpack.c.b16 %v2348, %v2347
        %v2360 = vpack.c.b16 %v2350, %v2349
        %v2361 = vpack.c.b16 %v2352, %v2351
        %v2362 = vpack.c.b16 %v2354, %v2353
        %2371 = vmatpush.bf16.msra.mxu0 %v2362
        %2372 = vmatpush.bf16.msra.mxu0 %v2361
        %2373 = vmatpush.bf16.msra.mxu0 %v2360
        %2374 = vmatpush.bf16.msra.mxu0 %v2359
        %2375 = vmatpush.bf16.msra.mxu0 %v2358
        %2376 = vmatpush.bf16.msra.mxu0 %v2357
        %2377 = vmatpush.bf16.msra.mxu0 %v2356
        %2378 = vmatpush.bf16.msra.mxu0 %v2355
        %2379 = vmatmul.bf16.gmra.mxu0 %v2305
        %v2380 = vpop.f32.mrf.mxu0
        %v2381 = vadd.f32 0.0, %v2380
        %v2382 = vpop.f32.mrf.mxu0
        %v2383 = vadd.f32 0.0, %v2382
        %2384 = vdwg.mxu0
        %v2385 = vadd.f32 %v2294, %v2381
        %v2386 = vadd.f32 %v2295, %v2383
        %v2387 = vld [vmem:[%s553 + $0x2] sm:$0xf]
        %v2389 = vrot.slane %v2113, 4
        %v2392 = vrot.slane %v2387, 4
        %v2394 = vsel %vm573, %v2112, %v2389
        %v2395 = vsel %vm573, %v2114, %v2392
        %v2396 = vpack.c.bf16 %v2395, %v2394
        %s2397 = scalar_lea.vmem %s3, 1216
        %v2398 = vld [vmem:[%s2397] sm:$0xf]
        %v2399 = vld [vmem:[%s2397 + $0x4] sm:$0xf]
        %v2400 = vld [vmem:[%s2397 + $0x8] sm:$0xf]
        %v2401 = vld [vmem:[%s2397 + $0xc] sm:$0xf]
        %v2402 = vld [vmem:[%s2397 + $0x10] sm:$0xf]
        %v2403 = vld [vmem:[%s2397 + $0x14] sm:$0xf]
        %v2404 = vld [vmem:[%s2397 + $0x18] sm:$0xf]
        %v2405 = vld [vmem:[%s2397 + $0x1c] sm:$0xf]
        %v2406 = vld [vmem:[%s2397 + $0x20] sm:$0xf]
        %v2407 = vld [vmem:[%s2397 + $0x24] sm:$0xf]
        %v2408 = vld [vmem:[%s2397 + $0x28] sm:$0xf]
        %v2409 = vld [vmem:[%s2397 + $0x2c] sm:$0xf]
        %v2410 = vld [vmem:[%s2397 + $0x30] sm:$0xf]
        %v2411 = vld [vmem:[%s2397 + $0x34] sm:$0xf]
        %v2412 = vld [vmem:[%s2397 + $0x38] sm:$0xf]
        %v2413 = vld [vmem:[%s2397 + $0x3c] sm:$0xf]
        %v2430 = vunpack.c.l.b16 %v2398
        %v2431 = vunpack.c.l.b16 %v2399
        %v2432 = vunpack.c.l.b16 %v2400
        %v2433 = vunpack.c.l.b16 %v2401
        %v2434 = vunpack.c.l.b16 %v2402
        %v2435 = vunpack.c.l.b16 %v2403
        %v2436 = vunpack.c.l.b16 %v2404
        %v2437 = vunpack.c.l.b16 %v2405
        %v2438 = vunpack.c.l.b16 %v2406
        %v2439 = vunpack.c.l.b16 %v2407
        %v2440 = vunpack.c.l.b16 %v2408
        %v2441 = vunpack.c.l.b16 %v2409
        %v2442 = vunpack.c.l.b16 %v2410
        %v2443 = vunpack.c.l.b16 %v2411
        %v2444 = vunpack.c.l.b16 %v2412
        %v2445 = vunpack.c.l.b16 %v2413
        %v2446 = vpack.c.b16 %v2431, %v2430
        %v2447 = vpack.c.b16 %v2433, %v2432
        %v2448 = vpack.c.b16 %v2435, %v2434
        %v2449 = vpack.c.b16 %v2437, %v2436
        %v2450 = vpack.c.b16 %v2439, %v2438
        %v2451 = vpack.c.b16 %v2441, %v2440
        %v2452 = vpack.c.b16 %v2443, %v2442
        %v2453 = vpack.c.b16 %v2445, %v2444
        %2462 = vmatpush.bf16.msra.mxu0 %v2453
        %2463 = vmatpush.bf16.msra.mxu0 %v2452
        %2464 = vmatpush.bf16.msra.mxu0 %v2451
        %2465 = vmatpush.bf16.msra.mxu0 %v2450
        %2466 = vmatpush.bf16.msra.mxu0 %v2449
        %2467 = vmatpush.bf16.msra.mxu0 %v2448
        %2468 = vmatpush.bf16.msra.mxu0 %v2447
        %2469 = vmatpush.bf16.msra.mxu0 %v2446
        %2470 = vmatmul.bf16.gmra.mxu0 %v2396
        %v2471 = vpop.f32.mrf.mxu0
        %v2472 = vadd.f32 0.0, %v2471
        %v2473 = vpop.f32.mrf.mxu0
        %v2474 = vadd.f32 0.0, %v2473
        %2475 = vdwg.mxu0
        %v2476 = vadd.f32 %v2385, %v2472
        %v2477 = vadd.f32 %v2386, %v2474
        %s2478 = scalar_lea.vmem [#allocation2], 144
        %v2479 = vld [vmem:[%s2478] sm:$0xf]
        %v2480 = vld [vmem:[%s555] sm:$0xf]
        %v2481 = vld [vmem:[%s557] sm:$0xf]
        %v2482 = vld [vmem:[%s559] sm:$0xf]
        %v2484 = vrot.slane %v2480, 4
        %v2487 = vrot.slane %v2482, 4
        %v2489 = vsel %vm573, %v2479, %v2484
        %v2490 = vsel %vm573, %v2481, %v2487
        %v2491 = vpack.c.bf16 %v2490, %v2489
        %s2492 = scalar_lea.vmem %s3, 384
        %v2493 = vld [vmem:[%s2492] sm:$0xf]
        %v2494 = vld [vmem:[%s2492 + $0x4] sm:$0xf]
        %v2495 = vld [vmem:[%s2492 + $0x8] sm:$0xf]
        %v2496 = vld [vmem:[%s2492 + $0xc] sm:$0xf]
        %v2497 = vld [vmem:[%s2492 + $0x10] sm:$0xf]
        %v2498 = vld [vmem:[%s2492 + $0x14] sm:$0xf]
        %v2499 = vld [vmem:[%s2492 + $0x18] sm:$0xf]
        %v2500 = vld [vmem:[%s2492 + $0x1c] sm:$0xf]
        %v2501 = vld [vmem:[%s2492 + $0x20] sm:$0xf]
        %v2502 = vld [vmem:[%s2492 + $0x24] sm:$0xf]
        %v2503 = vld [vmem:[%s2492 + $0x28] sm:$0xf]
        %v2504 = vld [vmem:[%s2492 + $0x2c] sm:$0xf]
        %v2505 = vld [vmem:[%s2492 + $0x30] sm:$0xf]
        %v2506 = vld [vmem:[%s2492 + $0x34] sm:$0xf]
        %v2507 = vld [vmem:[%s2492 + $0x38] sm:$0xf]
        %v2508 = vld [vmem:[%s2492 + $0x3c] sm:$0xf]
        %v2525 = vunpack.c.l.b16 %v2493
        %v2526 = vunpack.c.l.b16 %v2494
        %v2527 = vunpack.c.l.b16 %v2495
        %v2528 = vunpack.c.l.b16 %v2496
        %v2529 = vunpack.c.l.b16 %v2497
        %v2530 = vunpack.c.l.b16 %v2498
        %v2531 = vunpack.c.l.b16 %v2499
        %v2532 = vunpack.c.l.b16 %v2500
        %v2533 = vunpack.c.l.b16 %v2501
        %v2534 = vunpack.c.l.b16 %v2502
        %v2535 = vunpack.c.l.b16 %v2503
        %v2536 = vunpack.c.l.b16 %v2504
        %v2537 = vunpack.c.l.b16 %v2505
        %v2538 = vunpack.c.l.b16 %v2506
        %v2539 = vunpack.c.l.b16 %v2507
        %v2540 = vunpack.c.l.b16 %v2508
        %v2541 = vpack.c.b16 %v2526, %v2525
        %v2542 = vpack.c.b16 %v2528, %v2527
        %v2543 = vpack.c.b16 %v2530, %v2529
        %v2544 = vpack.c.b16 %v2532, %v2531
        %v2545 = vpack.c.b16 %v2534, %v2533
        %v2546 = vpack.c.b16 %v2536, %v2535
        %v2547 = vpack.c.b16 %v2538, %v2537
        %v2548 = vpack.c.b16 %v2540, %v2539
        %2557 = vmatpush.bf16.msra.mxu0 %v2548
        %2558 = vmatpush.bf16.msra.mxu0 %v2547
        %2559 = vmatpush.bf16.msra.mxu0 %v2546
        %2560 = vmatpush.bf16.msra.mxu0 %v2545
        %2561 = vmatpush.bf16.msra.mxu0 %v2544
        %2562 = vmatpush.bf16.msra.mxu0 %v2543
        %2563 = vmatpush.bf16.msra.mxu0 %v2542
        %2564 = vmatpush.bf16.msra.mxu0 %v2541
        %2565 = vmatmul.bf16.gmra.mxu0 %v2491
        %v2566 = vpop.f32.mrf.mxu0
        %v2567 = vadd.f32 0.0, %v2566
        %v2568 = vpop.f32.mrf.mxu0
        %v2569 = vadd.f32 0.0, %v2568
        %2570 = vdwg.mxu0
        %v2571 = vadd.f32 %v2476, %v2567
        %v2572 = vadd.f32 %v2477, %v2569
        %v2573 = vld [vmem:[%s2478 + $0x1] sm:$0xf]
        %v2574 = vld [vmem:[%s555 + $0x1] sm:$0xf]
        %v2575 = vld [vmem:[%s557 + $0x1] sm:$0xf]
        %v2576 = vld [vmem:[%s559 + $0x1] sm:$0xf]
        %v2578 = vrot.slane %v2574, 4
        %v2581 = vrot.slane %v2576, 4
        %v2583 = vsel %vm573, %v2573, %v2578
        %v2584 = vsel %vm573, %v2575, %v2581
        %v2585 = vpack.c.bf16 %v2584, %v2583
        %s2586 = scalar_lea.vmem %s3, 512
        %v2587 = vld [vmem:[%s2586] sm:$0xf]
        %v2588 = vld [vmem:[%s2586 + $0x4] sm:$0xf]
        %v2589 = vld [vmem:[%s2586 + $0x8] sm:$0xf]
        %v2590 = vld [vmem:[%s2586 + $0xc] sm:$0xf]
        %v2591 = vld [vmem:[%s2586 + $0x10] sm:$0xf]
        %v2592 = vld [vmem:[%s2586 + $0x14] sm:$0xf]
        %v2593 = vld [vmem:[%s2586 + $0x18] sm:$0xf]
        %v2594 = vld [vmem:[%s2586 + $0x1c] sm:$0xf]
        %v2595 = vld [vmem:[%s2586 + $0x20] sm:$0xf]
        %v2596 = vld [vmem:[%s2586 + $0x24] sm:$0xf]
        %v2597 = vld [vmem:[%s2586 + $0x28] sm:$0xf]
        %v2598 = vld [vmem:[%s2586 + $0x2c] sm:$0xf]
        %v2599 = vld [vmem:[%s2586 + $0x30] sm:$0xf]
        %v2600 = vld [vmem:[%s2586 + $0x34] sm:$0xf]
        %v2601 = vld [vmem:[%s2586 + $0x38] sm:$0xf]
        %v2602 = vld [vmem:[%s2586 + $0x3c] sm:$0xf]
        %v2619 = vunpack.c.l.b16 %v2587
        %v2620 = vunpack.c.l.b16 %v2588
        %v2621 = vunpack.c.l.b16 %v2589
        %v2622 = vunpack.c.l.b16 %v2590
        %v2623 = vunpack.c.l.b16 %v2591
        %v2624 = vunpack.c.l.b16 %v2592
        %v2625 = vunpack.c.l.b16 %v2593
        %v2626 = vunpack.c.l.b16 %v2594
        %v2627 = vunpack.c.l.b16 %v2595
        %v2628 = vunpack.c.l.b16 %v2596
        %v2629 = vunpack.c.l.b16 %v2597
        %v2630 = vunpack.c.l.b16 %v2598
        %v2631 = vunpack.c.l.b16 %v2599
        %v2632 = vunpack.c.l.b16 %v2600
        %v2633 = vunpack.c.l.b16 %v2601
        %v2634 = vunpack.c.l.b16 %v2602
        %v2635 = vpack.c.b16 %v2620, %v2619
        %v2636 = vpack.c.b16 %v2622, %v2621
        %v2637 = vpack.c.b16 %v2624, %v2623
        %v2638 = vpack.c.b16 %v2626, %v2625
        %v2639 = vpack.c.b16 %v2628, %v2627
        %v2640 = vpack.c.b16 %v2630, %v2629
        %v2641 = vpack.c.b16 %v2632, %v2631
        %v2642 = vpack.c.b16 %v2634, %v2633
        %2651 = vmatpush.bf16.msra.mxu0 %v2642
        %2652 = vmatpush.bf16.msra.mxu0 %v2641
        %2653 = vmatpush.bf16.msra.mxu0 %v2640
        %2654 = vmatpush.bf16.msra.mxu0 %v2639
        %2655 = vmatpush.bf16.msra.mxu0 %v2638
        %2656 = vmatpush.bf16.msra.mxu0 %v2637
        %2657 = vmatpush.bf16.msra.mxu0 %v2636
        %2658 = vmatpush.bf16.msra.mxu0 %v2635
        %2659 = vmatmul.bf16.gmra.mxu0 %v2585
        %v2660 = vpop.f32.mrf.mxu0
        %v2661 = vadd.f32 0.0, %v2660
        %v2662 = vpop.f32.mrf.mxu0
        %v2663 = vadd.f32 0.0, %v2662
        %2664 = vdwg.mxu0
        %v2665 = vadd.f32 %v2571, %v2661
        %v2666 = vadd.f32 %v2572, %v2663
        %v2667 = vld [vmem:[%s561] sm:$0xf]
        %v2669 = vrot.slane %v2481, 4
        %v2672 = vrot.slane %v2667, 4
        %v2674 = vsel %vm573, %v2480, %v2669
        %v2675 = vsel %vm573, %v2482, %v2672
        %v2676 = vpack.c.bf16 %v2675, %v2674
        %s2677 = scalar_lea.vmem %s3, 1024
        %v2678 = vld [vmem:[%s2677] sm:$0xf]
        %v2679 = vld [vmem:[%s2677 + $0x4] sm:$0xf]
        %v2680 = vld [vmem:[%s2677 + $0x8] sm:$0xf]
        %v2681 = vld [vmem:[%s2677 + $0xc] sm:$0xf]
        %v2682 = vld [vmem:[%s2677 + $0x10] sm:$0xf]
        %v2683 = vld [vmem:[%s2677 + $0x14] sm:$0xf]
        %v2684 = vld [vmem:[%s2677 + $0x18] sm:$0xf]
        %v2685 = vld [vmem:[%s2677 + $0x1c] sm:$0xf]
        %v2686 = vld [vmem:[%s2677 + $0x20] sm:$0xf]
        %v2687 = vld [vmem:[%s2677 + $0x24] sm:$0xf]
        %v2688 = vld [vmem:[%s2677 + $0x28] sm:$0xf]
        %v2689 = vld [vmem:[%s2677 + $0x2c] sm:$0xf]
        %v2690 = vld [vmem:[%s2677 + $0x30] sm:$0xf]
        %v2691 = vld [vmem:[%s2677 + $0x34] sm:$0xf]
        %v2692 = vld [vmem:[%s2677 + $0x38] sm:$0xf]
        %v2693 = vld [vmem:[%s2677 + $0x3c] sm:$0xf]
        %v2710 = vunpack.c.l.b16 %v2678
        %v2711 = vunpack.c.l.b16 %v2679
        %v2712 = vunpack.c.l.b16 %v2680
        %v2713 = vunpack.c.l.b16 %v2681
        %v2714 = vunpack.c.l.b16 %v2682
        %v2715 = vunpack.c.l.b16 %v2683
        %v2716 = vunpack.c.l.b16 %v2684
        %v2717 = vunpack.c.l.b16 %v2685
        %v2718 = vunpack.c.l.b16 %v2686
        %v2719 = vunpack.c.l.b16 %v2687
        %v2720 = vunpack.c.l.b16 %v2688
        %v2721 = vunpack.c.l.b16 %v2689
        %v2722 = vunpack.c.l.b16 %v2690
        %v2723 = vunpack.c.l.b16 %v2691
        %v2724 = vunpack.c.l.b16 %v2692
        %v2725 = vunpack.c.l.b16 %v2693
        %v2726 = vpack.c.b16 %v2711, %v2710
        %v2727 = vpack.c.b16 %v2713, %v2712
        %v2728 = vpack.c.b16 %v2715, %v2714
        %v2729 = vpack.c.b16 %v2717, %v2716
        %v2730 = vpack.c.b16 %v2719, %v2718
        %v2731 = vpack.c.b16 %v2721, %v2720
        %v2732 = vpack.c.b16 %v2723, %v2722
        %v2733 = vpack.c.b16 %v2725, %v2724
        %2742 = vmatpush.bf16.msra.mxu0 %v2733
        %2743 = vmatpush.bf16.msra.mxu0 %v2732
        %2744 = vmatpush.bf16.msra.mxu0 %v2731
        %2745 = vmatpush.bf16.msra.mxu0 %v2730
        %2746 = vmatpush.bf16.msra.mxu0 %v2729
        %2747 = vmatpush.bf16.msra.mxu0 %v2728
        %2748 = vmatpush.bf16.msra.mxu0 %v2727
        %2749 = vmatpush.bf16.msra.mxu0 %v2726
        %2750 = vmatmul.bf16.gmra.mxu0 %v2676
        %v2751 = vpop.f32.mrf.mxu0
        %v2752 = vadd.f32 0.0, %v2751
        %v2753 = vpop.f32.mrf.mxu0
        %v2754 = vadd.f32 0.0, %v2753
        %2755 = vdwg.mxu0
        %v2756 = vadd.f32 %v2665, %v2752
        %v2757 = vadd.f32 %v2666, %v2754
        %v2758 = vld [vmem:[%s561 + $0x1] sm:$0xf]
        %v2760 = vrot.slane %v2575, 4
        %v2763 = vrot.slane %v2758, 4
        %v2765 = vsel %vm573, %v2574, %v2760
        %v2766 = vsel %vm573, %v2576, %v2763
        %v2767 = vpack.c.bf16 %v2766, %v2765
        %s2768 = scalar_lea.vmem %s3, 1152
        %v2769 = vld [vmem:[%s2768] sm:$0xf]
        %v2770 = vld [vmem:[%s2768 + $0x4] sm:$0xf]
        %v2771 = vld [vmem:[%s2768 + $0x8] sm:$0xf]
        %v2772 = vld [vmem:[%s2768 + $0xc] sm:$0xf]
        %v2773 = vld [vmem:[%s2768 + $0x10] sm:$0xf]
        %v2774 = vld [vmem:[%s2768 + $0x14] sm:$0xf]
        %v2775 = vld [vmem:[%s2768 + $0x18] sm:$0xf]
        %v2776 = vld [vmem:[%s2768 + $0x1c] sm:$0xf]
        %v2777 = vld [vmem:[%s2768 + $0x20] sm:$0xf]
        %v2778 = vld [vmem:[%s2768 + $0x24] sm:$0xf]
        %v2779 = vld [vmem:[%s2768 + $0x28] sm:$0xf]
        %v2780 = vld [vmem:[%s2768 + $0x2c] sm:$0xf]
        %v2781 = vld [vmem:[%s2768 + $0x30] sm:$0xf]
        %v2782 = vld [vmem:[%s2768 + $0x34] sm:$0xf]
        %v2783 = vld [vmem:[%s2768 + $0x38] sm:$0xf]
        %v2784 = vld [vmem:[%s2768 + $0x3c] sm:$0xf]
        %v2801 = vunpack.c.l.b16 %v2769
        %v2802 = vunpack.c.l.b16 %v2770
        %v2803 = vunpack.c.l.b16 %v2771
        %v2804 = vunpack.c.l.b16 %v2772
        %v2805 = vunpack.c.l.b16 %v2773
        %v2806 = vunpack.c.l.b16 %v2774
        %v2807 = vunpack.c.l.b16 %v2775
        %v2808 = vunpack.c.l.b16 %v2776
        %v2809 = vunpack.c.l.b16 %v2777
        %v2810 = vunpack.c.l.b16 %v2778
        %v2811 = vunpack.c.l.b16 %v2779
        %v2812 = vunpack.c.l.b16 %v2780
        %v2813 = vunpack.c.l.b16 %v2781
        %v2814 = vunpack.c.l.b16 %v2782
        %v2815 = vunpack.c.l.b16 %v2783
        %v2816 = vunpack.c.l.b16 %v2784
        %v2817 = vpack.c.b16 %v2802, %v2801
        %v2818 = vpack.c.b16 %v2804, %v2803
        %v2819 = vpack.c.b16 %v2806, %v2805
        %v2820 = vpack.c.b16 %v2808, %v2807
        %v2821 = vpack.c.b16 %v2810, %v2809
        %v2822 = vpack.c.b16 %v2812, %v2811
        %v2823 = vpack.c.b16 %v2814, %v2813
        %v2824 = vpack.c.b16 %v2816, %v2815
        %2833 = vmatpush.bf16.msra.mxu0 %v2824
        %2834 = vmatpush.bf16.msra.mxu0 %v2823
        %2835 = vmatpush.bf16.msra.mxu0 %v2822
        %2836 = vmatpush.bf16.msra.mxu0 %v2821
        %2837 = vmatpush.bf16.msra.mxu0 %v2820
        %2838 = vmatpush.bf16.msra.mxu0 %v2819
        %2839 = vmatpush.bf16.msra.mxu0 %v2818
        %2840 = vmatpush.bf16.msra.mxu0 %v2817
        %2841 = vmatmul.bf16.gmra.mxu0 %v2767
        %v2842 = vpop.f32.mrf.mxu0
        %v2843 = vadd.f32 0.0, %v2842
        %v2844 = vpop.f32.mrf.mxu0
        %v2845 = vadd.f32 0.0, %v2844
        %2846 = vdwg.mxu0
        %v2847 = vadd.f32 %v2756, %v2843
        %v2848 = vadd.f32 %v2757, %v2845
        %v2849 = vld [vmem:[%s4] sm:$0x1]
        %v2851 = vperm.slane %v2849, 0
        %v2853 = vadd.f32 %v2847, %v2851
        %v2854 = vadd.f32 %v2848, %v2851
        %v2855 = vsub.f32 0.0, %v2853
        %v2856 = vsub.f32 0.0, %v2854
        %v2857 = vmul.f32 %v2855, 1.442695
        %v2858 = vpow.pop %v2857
        %v2859 = vmul.f32 %v2856, 1.442695
        %v2860 = vpow.pop %v2859
        %v2861 = vadd.f32 %v2858, 1.0
        %v2862 = vadd.f32 %v2860, 1.0
        %v2863 = vrcp.pop %v2861
        %v2864 = vrcp.pop %v2862
        %s2865 = scalar_lea.vmem [#allocation3], 16
        %2866 = vst [vmem:[%s2865 + $0x2] sm:$0xf] %v2863
        %s2867 = scalar_lea.vmem [#allocation3], 24
        %2868 = vst [vmem:[%s2867 - $0x2] sm:$0xf0] %v2863
        %s2869 = scalar_lea.vmem [#allocation3], 32
        %2870 = vst [vmem:[%s2869 + $0x2] sm:$0xf] %v2864
        %s2871 = scalar_lea.vmem [#allocation3], 40
        %2872 = vst [vmem:[%s2871 - $0x2] sm:$0xf0] %v2864
        %v2873 = vld [vmem:[#allocation3] sm:$0xf]
        %s2874 = scalar_lea.vmem [#allocation3], 8
        %v2875 = vld [vmem:[%s2874] sm:$0xf]
        %v2876 = vld [vmem:[%s2865] sm:$0xf]
        %v2877 = vld [vmem:[%s2867] sm:$0xf]
        %v2879 = vrot.slane %v2875, 4
        %v2882 = vrot.slane %v2877, 4
        %v2884 = vsel %vm573, %v2873, %v2879
        %v2885 = vsel %vm573, %v2876, %v2882
        %v2886 = vpack.c.bf16 %v2885, %v2884
        %v2887 = vld [vmem:[%s5] sm:$0xf]
        %v2888 = vld [vmem:[%s5 + $0x4] sm:$0xf]
        %v2889 = vld [vmem:[%s5 + $0x8] sm:$0xf]
        %v2890 = vld [vmem:[%s5 + $0xc] sm:$0xf]
        %v2891 = vld [vmem:[%s5 + $0x10] sm:$0xf]
        %v2892 = vld [vmem:[%s5 + $0x14] sm:$0xf]
        %v2893 = vld [vmem:[%s5 + $0x18] sm:$0xf]
        %v2894 = vld [vmem:[%s5 + $0x1c] sm:$0xf]
        %v2895 = vld [vmem:[%s5 + $0x20] sm:$0xf]
        %v2896 = vld [vmem:[%s5 + $0x24] sm:$0xf]
        %v2897 = vld [vmem:[%s5 + $0x28] sm:$0xf]
        %v2898 = vld [vmem:[%s5 + $0x2c] sm:$0xf]
        %v2899 = vld [vmem:[%s5 + $0x30] sm:$0xf]
        %v2900 = vld [vmem:[%s5 + $0x34] sm:$0xf]
        %v2901 = vld [vmem:[%s5 + $0x38] sm:$0xf]
        %v2902 = vld [vmem:[%s5 + $0x3c] sm:$0xf]
        %v2903 = vld [vmem:[#allocation3 + $0x1] sm:$0xf]
        %v2904 = vld [vmem:[%s2874 + $0x1] sm:$0xf]
        %v2905 = vld [vmem:[%s2865 + $0x1] sm:$0xf]
        %v2906 = vld [vmem:[%s2867 + $0x1] sm:$0xf]
        %v2908 = vrot.slane %v2904, 4
        %v2911 = vrot.slane %v2906, 4
        %v2913 = vsel %vm573, %v2903, %v2908
        %v2914 = vsel %vm573, %v2905, %v2911
        %v2915 = vpack.c.bf16 %v2914, %v2913
        %s2916 = scalar_lea.vmem %s5, 64
        %v2917 = vld [vmem:[%s2916] sm:$0xf]
        %v2918 = vld [vmem:[%s2916 + $0x4] sm:$0xf]
        %v2919 = vld [vmem:[%s2916 + $0x8] sm:$0xf]
        %v2920 = vld [vmem:[%s2916 + $0xc] sm:$0xf]
        %v2921 = vld [vmem:[%s2916 + $0x10] sm:$0xf]
        %v2922 = vld [vmem:[%s2916 + $0x14] sm:$0xf]
        %v2923 = vld [vmem:[%s2916 + $0x18] sm:$0xf]
        %v2924 = vld [vmem:[%s2916 + $0x1c] sm:$0xf]
        %v2925 = vld [vmem:[%s2916 + $0x20] sm:$0xf]
        %v2926 = vld [vmem:[%s2916 + $0x24] sm:$0xf]
        %v2927 = vld [vmem:[%s2916 + $0x28] sm:$0xf]
        %v2928 = vld [vmem:[%s2916 + $0x2c] sm:$0xf]
        %v2929 = vld [vmem:[%s2916 + $0x30] sm:$0xf]
        %v2930 = vld [vmem:[%s2916 + $0x34] sm:$0xf]
        %v2931 = vld [vmem:[%s2916 + $0x38] sm:$0xf]
        %v2932 = vld [vmem:[%s2916 + $0x3c] sm:$0xf]
        %v2949 = vunpack.c.l.b16 %v2917
        %v2950 = vunpack.c.l.b16 %v2918
        %v2951 = vunpack.c.l.b16 %v2919
        %v2952 = vunpack.c.l.b16 %v2920
        %v2953 = vunpack.c.l.b16 %v2921
        %v2954 = vunpack.c.l.b16 %v2922
        %v2955 = vunpack.c.l.b16 %v2923
        %v2956 = vunpack.c.l.b16 %v2924
        %v2957 = vunpack.c.l.b16 %v2925
        %v2958 = vunpack.c.l.b16 %v2926
        %v2959 = vunpack.c.l.b16 %v2927
        %v2960 = vunpack.c.l.b16 %v2928
        %v2961 = vunpack.c.l.b16 %v2929
        %v2962 = vunpack.c.l.b16 %v2930
        %v2963 = vunpack.c.l.b16 %v2931
        %v2964 = vunpack.c.l.b16 %v2932
        %v2965 = vpack.c.b16 %v2950, %v2949
        %v2966 = vpack.c.b16 %v2952, %v2951
        %v2967 = vpack.c.b16 %v2954, %v2953
        %v2968 = vpack.c.b16 %v2956, %v2955
        %v2969 = vpack.c.b16 %v2958, %v2957
        %v2970 = vpack.c.b16 %v2960, %v2959
        %v2971 = vpack.c.b16 %v2962, %v2961
        %v2972 = vpack.c.b16 %v2964, %v2963
        %2981 = vmatpush.bf16.msra.mxu0 %v2972
        %2982 = vmatpush.bf16.msra.mxu0 %v2971
        %2983 = vmatpush.bf16.msra.mxu0 %v2970
        %2984 = vmatpush.bf16.msra.mxu0 %v2969
        %2985 = vmatpush.bf16.msra.mxu0 %v2968
        %2986 = vmatpush.bf16.msra.mxu0 %v2967
        %2987 = vmatpush.bf16.msra.mxu0 %v2966
        %2988 = vmatpush.bf16.msra.mxu0 %v2965
        %2989 = vmatmul.bf16.gmra.mxu0 %v2915
        %v2990 = vpop.f32.mrf.mxu0
        %v2991 = vadd.f32 0.0, %v2990
        %v2992 = vpop.f32.mrf.mxu0
        %v2993 = vadd.f32 0.0, %v2992
        %2994 = vdwg.mxu0
        %v3011 = vunpack.c.l.b16 %v2887
        %v3012 = vunpack.c.l.b16 %v2888
        %v3013 = vunpack.c.l.b16 %v2889
        %v3014 = vunpack.c.l.b16 %v2890
        %v3015 = vunpack.c.l.b16 %v2891
        %v3016 = vunpack.c.l.b16 %v2892
        %v3017 = vunpack.c.l.b16 %v2893
        %v3018 = vunpack.c.l.b16 %v2894
        %v3019 = vunpack.c.l.b16 %v2895
        %v3020 = vunpack.c.l.b16 %v2896
        %v3021 = vunpack.c.l.b16 %v2897
        %v3022 = vunpack.c.l.b16 %v2898
        %v3023 = vunpack.c.l.b16 %v2899
        %v3024 = vunpack.c.l.b16 %v2900
        %v3025 = vunpack.c.l.b16 %v2901
        %v3026 = vunpack.c.l.b16 %v2902
        %v3027 = vpack.c.b16 %v3012, %v3011
        %v3028 = vpack.c.b16 %v3014, %v3013
        %v3029 = vpack.c.b16 %v3016, %v3015
        %v3030 = vpack.c.b16 %v3018, %v3017
        %v3031 = vpack.c.b16 %v3020, %v3019
        %v3032 = vpack.c.b16 %v3022, %v3021
        %v3033 = vpack.c.b16 %v3024, %v3023
        %v3034 = vpack.c.b16 %v3026, %v3025
        %3043 = vmatpush.bf16.msra.mxu0 %v3034
        %3044 = vmatpush.bf16.msra.mxu0 %v3033
        %3045 = vmatpush.bf16.msra.mxu0 %v3032
        %3046 = vmatpush.bf16.msra.mxu0 %v3031
        %3047 = vmatpush.bf16.msra.mxu0 %v3030
        %3048 = vmatpush.bf16.msra.mxu0 %v3029
        %3049 = vmatpush.bf16.msra.mxu0 %v3028
        %3050 = vmatpush.bf16.msra.mxu0 %v3027
        %3051 = vmatmul.bf16.gmra.mxu0 %v2886
        %v3052 = vpop.f32.mrf.mxu0
        %v3053 = vadd.f32 %v2991, %v3052
        %v3054 = vpop.f32.mrf.mxu0
        %v3055 = vadd.f32 %v2993, %v3054
        %3056 = vdwg.mxu0
        %v3057 = vld [vmem:[#allocation3 + $0x2] sm:$0xf]
        %v3058 = vld [vmem:[%s2874 + $0x2] sm:$0xf]
        %v3059 = vld [vmem:[%s2865 + $0x2] sm:$0xf]
        %v3060 = vld [vmem:[%s2867 + $0x2] sm:$0xf]
        %v3062 = vrot.slane %v3058, 4
        %v3065 = vrot.slane %v3060, 4
        %v3067 = vsel %vm573, %v3057, %v3062
        %v3068 = vsel %vm573, %v3059, %v3065
        %v3069 = vpack.c.bf16 %v3068, %v3067
        %s3070 = scalar_lea.vmem %s5, 128
        %v3071 = vld [vmem:[%s3070] sm:$0xf]
        %v3072 = vld [vmem:[%s3070 + $0x4] sm:$0xf]
        %v3073 = vld [vmem:[%s3070 + $0x8] sm:$0xf]
        %v3074 = vld [vmem:[%s3070 + $0xc] sm:$0xf]
        %v3075 = vld [vmem:[%s3070 + $0x10] sm:$0xf]
        %v3076 = vld [vmem:[%s3070 + $0x14] sm:$0xf]
        %v3077 = vld [vmem:[%s3070 + $0x18] sm:$0xf]
        %v3078 = vld [vmem:[%s3070 + $0x1c] sm:$0xf]
        %v3079 = vld [vmem:[%s3070 + $0x20] sm:$0xf]
        %v3080 = vld [vmem:[%s3070 + $0x24] sm:$0xf]
        %v3081 = vld [vmem:[%s3070 + $0x28] sm:$0xf]
        %v3082 = vld [vmem:[%s3070 + $0x2c] sm:$0xf]
        %v3083 = vld [vmem:[%s3070 + $0x30] sm:$0xf]
        %v3084 = vld [vmem:[%s3070 + $0x34] sm:$0xf]
        %v3085 = vld [vmem:[%s3070 + $0x38] sm:$0xf]
        %v3086 = vld [vmem:[%s3070 + $0x3c] sm:$0xf]
        %v3103 = vunpack.c.l.b16 %v3071
        %v3104 = vunpack.c.l.b16 %v3072
        %v3105 = vunpack.c.l.b16 %v3073
        %v3106 = vunpack.c.l.b16 %v3074
        %v3107 = vunpack.c.l.b16 %v3075
        %v3108 = vunpack.c.l.b16 %v3076
        %v3109 = vunpack.c.l.b16 %v3077
        %v3110 = vunpack.c.l.b16 %v3078
        %v3111 = vunpack.c.l.b16 %v3079
        %v3112 = vunpack.c.l.b16 %v3080
        %v3113 = vunpack.c.l.b16 %v3081
        %v3114 = vunpack.c.l.b16 %v3082
        %v3115 = vunpack.c.l.b16 %v3083
        %v3116 = vunpack.c.l.b16 %v3084
        %v3117 = vunpack.c.l.b16 %v3085
        %v3118 = vunpack.c.l.b16 %v3086
        %v3119 = vpack.c.b16 %v3104, %v3103
        %v3120 = vpack.c.b16 %v3106, %v3105
        %v3121 = vpack.c.b16 %v3108, %v3107
        %v3122 = vpack.c.b16 %v3110, %v3109
        %v3123 = vpack.c.b16 %v3112, %v3111
        %v3124 = vpack.c.b16 %v3114, %v3113
        %v3125 = vpack.c.b16 %v3116, %v3115
        %v3126 = vpack.c.b16 %v3118, %v3117
        %3135 = vmatpush.bf16.msra.mxu0 %v3126
        %3136 = vmatpush.bf16.msra.mxu0 %v3125
        %3137 = vmatpush.bf16.msra.mxu0 %v3124
        %3138 = vmatpush.bf16.msra.mxu0 %v3123
        %3139 = vmatpush.bf16.msra.mxu0 %v3122
        %3140 = vmatpush.bf16.msra.mxu0 %v3121
        %3141 = vmatpush.bf16.msra.mxu0 %v3120
        %3142 = vmatpush.bf16.msra.mxu0 %v3119
        %3143 = vmatmul.bf16.gmra.mxu0 %v3069
        %v3144 = vpop.f32.mrf.mxu0
        %v3145 = vadd.f32 0.0, %v3144
        %v3146 = vpop.f32.mrf.mxu0
        %v3147 = vadd.f32 0.0, %v3146
        %3148 = vdwg.mxu0
        %v3149 = vadd.f32 %v3053, %v3145
        %v3150 = vadd.f32 %v3055, %v3147
        %v3151 = vld [vmem:[#allocation3 + $0x3] sm:$0xf]
        %v3152 = vld [vmem:[%s2874 + $0x3] sm:$0xf]
        %v3153 = vld [vmem:[%s2865 + $0x3] sm:$0xf]
        %v3154 = vld [vmem:[%s2867 + $0x3] sm:$0xf]
        %v3156 = vrot.slane %v3152, 4
        %v3159 = vrot.slane %v3154, 4
        %v3161 = vsel %vm573, %v3151, %v3156
        %v3162 = vsel %vm573, %v3153, %v3159
        %v3163 = vpack.c.bf16 %v3162, %v3161
        %s3164 = scalar_lea.vmem %s5, 192
        %v3165 = vld [vmem:[%s3164] sm:$0xf]
        %v3166 = vld [vmem:[%s3164 + $0x4] sm:$0xf]
        %v3167 = vld [vmem:[%s3164 + $0x8] sm:$0xf]
        %v3168 = vld [vmem:[%s3164 + $0xc] sm:$0xf]
        %v3169 = vld [vmem:[%s3164 + $0x10] sm:$0xf]
        %v3170 = vld [vmem:[%s3164 + $0x14] sm:$0xf]
        %v3171 = vld [vmem:[%s3164 + $0x18] sm:$0xf]
        %v3172 = vld [vmem:[%s3164 + $0x1c] sm:$0xf]
        %v3173 = vld [vmem:[%s3164 + $0x20] sm:$0xf]
        %v3174 = vld [vmem:[%s3164 + $0x24] sm:$0xf]
        %v3175 = vld [vmem:[%s3164 + $0x28] sm:$0xf]
        %v3176 = vld [vmem:[%s3164 + $0x2c] sm:$0xf]
        %v3177 = vld [vmem:[%s3164 + $0x30] sm:$0xf]
        %v3178 = vld [vmem:[%s3164 + $0x34] sm:$0xf]
        %v3179 = vld [vmem:[%s3164 + $0x38] sm:$0xf]
        %v3180 = vld [vmem:[%s3164 + $0x3c] sm:$0xf]
        %v3197 = vunpack.c.l.b16 %v3165
        %v3198 = vunpack.c.l.b16 %v3166
        %v3199 = vunpack.c.l.b16 %v3167
        %v3200 = vunpack.c.l.b16 %v3168
        %v3201 = vunpack.c.l.b16 %v3169
        %v3202 = vunpack.c.l.b16 %v3170
        %v3203 = vunpack.c.l.b16 %v3171
        %v3204 = vunpack.c.l.b16 %v3172
        %v3205 = vunpack.c.l.b16 %v3173
        %v3206 = vunpack.c.l.b16 %v3174
        %v3207 = vunpack.c.l.b16 %v3175
        %v3208 = vunpack.c.l.b16 %v3176
        %v3209 = vunpack.c.l.b16 %v3177
        %v3210 = vunpack.c.l.b16 %v3178
        %v3211 = vunpack.c.l.b16 %v3179
        %v3212 = vunpack.c.l.b16 %v3180
        %v3213 = vpack.c.b16 %v3198, %v3197
        %v3214 = vpack.c.b16 %v3200, %v3199
        %v3215 = vpack.c.b16 %v3202, %v3201
        %v3216 = vpack.c.b16 %v3204, %v3203
        %v3217 = vpack.c.b16 %v3206, %v3205
        %v3218 = vpack.c.b16 %v3208, %v3207
        %v3219 = vpack.c.b16 %v3210, %v3209
        %v3220 = vpack.c.b16 %v3212, %v3211
        %3229 = vmatpush.bf16.msra.mxu0 %v3220
        %3230 = vmatpush.bf16.msra.mxu0 %v3219
        %3231 = vmatpush.bf16.msra.mxu0 %v3218
        %3232 = vmatpush.bf16.msra.mxu0 %v3217
        %3233 = vmatpush.bf16.msra.mxu0 %v3216
        %3234 = vmatpush.bf16.msra.mxu0 %v3215
        %3235 = vmatpush.bf16.msra.mxu0 %v3214
        %3236 = vmatpush.bf16.msra.mxu0 %v3213
        %3237 = vmatmul.bf16.gmra.mxu0 %v3163
        %v3238 = vpop.f32.mrf.mxu0
        %v3239 = vadd.f32 0.0, %v3238
        %v3240 = vpop.f32.mrf.mxu0
        %v3241 = vadd.f32 0.0, %v3240
        %3242 = vdwg.mxu0
        %v3243 = vadd.f32 %v3149, %v3239
        %v3244 = vadd.f32 %v3150, %v3241
        %v3245 = vld [vmem:[#allocation3 + $0x4] sm:$0xf]
        %v3246 = vld [vmem:[%s2874 + $0x4] sm:$0xf]
        %v3247 = vld [vmem:[%s2865 + $0x4] sm:$0xf]
        %v3248 = vld [vmem:[%s2867 + $0x4] sm:$0xf]
        %v3250 = vrot.slane %v3246, 4
        %v3253 = vrot.slane %v3248, 4
        %v3255 = vsel %vm573, %v3245, %v3250
        %v3256 = vsel %vm573, %v3247, %v3253
        %v3257 = vpack.c.bf16 %v3256, %v3255
        %s3258 = scalar_lea.vmem %s5, 256
        %v3259 = vld [vmem:[%s3258] sm:$0xf]
        %v3260 = vld [vmem:[%s3258 + $0x4] sm:$0xf]
        %v3261 = vld [vmem:[%s3258 + $0x8] sm:$0xf]
        %v3262 = vld [vmem:[%s3258 + $0xc] sm:$0xf]
        %v3263 = vld [vmem:[%s3258 + $0x10] sm:$0xf]
        %v3264 = vld [vmem:[%s3258 + $0x14] sm:$0xf]
        %v3265 = vld [vmem:[%s3258 + $0x18] sm:$0xf]
        %v3266 = vld [vmem:[%s3258 + $0x1c] sm:$0xf]
        %v3267 = vld [vmem:[%s3258 + $0x20] sm:$0xf]
        %v3268 = vld [vmem:[%s3258 + $0x24] sm:$0xf]
        %v3269 = vld [vmem:[%s3258 + $0x28] sm:$0xf]
        %v3270 = vld [vmem:[%s3258 + $0x2c] sm:$0xf]
        %v3271 = vld [vmem:[%s3258 + $0x30] sm:$0xf]
        %v3272 = vld [vmem:[%s3258 + $0x34] sm:$0xf]
        %v3273 = vld [vmem:[%s3258 + $0x38] sm:$0xf]
        %v3274 = vld [vmem:[%s3258 + $0x3c] sm:$0xf]
        %v3291 = vunpack.c.l.b16 %v3259
        %v3292 = vunpack.c.l.b16 %v3260
        %v3293 = vunpack.c.l.b16 %v3261
        %v3294 = vunpack.c.l.b16 %v3262
        %v3295 = vunpack.c.l.b16 %v3263
        %v3296 = vunpack.c.l.b16 %v3264
        %v3297 = vunpack.c.l.b16 %v3265
        %v3298 = vunpack.c.l.b16 %v3266
        %v3299 = vunpack.c.l.b16 %v3267
        %v3300 = vunpack.c.l.b16 %v3268
        %v3301 = vunpack.c.l.b16 %v3269
        %v3302 = vunpack.c.l.b16 %v3270
        %v3303 = vunpack.c.l.b16 %v3271
        %v3304 = vunpack.c.l.b16 %v3272
        %v3305 = vunpack.c.l.b16 %v3273
        %v3306 = vunpack.c.l.b16 %v3274
        %v3307 = vpack.c.b16 %v3292, %v3291
        %v3308 = vpack.c.b16 %v3294, %v3293
        %v3309 = vpack.c.b16 %v3296, %v3295
        %v3310 = vpack.c.b16 %v3298, %v3297
        %v3311 = vpack.c.b16 %v3300, %v3299
        %v3312 = vpack.c.b16 %v3302, %v3301
        %v3313 = vpack.c.b16 %v3304, %v3303
        %v3314 = vpack.c.b16 %v3306, %v3305
        %3323 = vmatpush.bf16.msra.mxu0 %v3314
        %3324 = vmatpush.bf16.msra.mxu0 %v3313
        %3325 = vmatpush.bf16.msra.mxu0 %v3312
        %3326 = vmatpush.bf16.msra.mxu0 %v3311
        %3327 = vmatpush.bf16.msra.mxu0 %v3310
        %3328 = vmatpush.bf16.msra.mxu0 %v3309
        %3329 = vmatpush.bf16.msra.mxu0 %v3308
        %3330 = vmatpush.bf16.msra.mxu0 %v3307
        %3331 = vmatmul.bf16.gmra.mxu0 %v3257
        %v3332 = vpop.f32.mrf.mxu0
        %v3333 = vadd.f32 0.0, %v3332
        %v3334 = vpop.f32.mrf.mxu0
        %v3335 = vadd.f32 0.0, %v3334
        %3336 = vdwg.mxu0
        %v3337 = vadd.f32 %v3243, %v3333
        %v3338 = vadd.f32 %v3244, %v3335
        %v3339 = vld [vmem:[%s2869] sm:$0xf]
        %v3341 = vrot.slane %v2876, 4
        %v3344 = vrot.slane %v3339, 4
        %v3346 = vsel %vm573, %v2875, %v3341
        %v3347 = vsel %vm573, %v2877, %v3344
        %v3348 = vpack.c.bf16 %v3347, %v3346
        %s3349 = scalar_lea.vmem %s5, 320
        %v3350 = vld [vmem:[%s3349] sm:$0xf]
        %v3351 = vld [vmem:[%s3349 + $0x4] sm:$0xf]
        %v3352 = vld [vmem:[%s3349 + $0x8] sm:$0xf]
        %v3353 = vld [vmem:[%s3349 + $0xc] sm:$0xf]
        %v3354 = vld [vmem:[%s3349 + $0x10] sm:$0xf]
        %v3355 = vld [vmem:[%s3349 + $0x14] sm:$0xf]
        %v3356 = vld [vmem:[%s3349 + $0x18] sm:$0xf]
        %v3357 = vld [vmem:[%s3349 + $0x1c] sm:$0xf]
        %v3358 = vld [vmem:[%s3349 + $0x20] sm:$0xf]
        %v3359 = vld [vmem:[%s3349 + $0x24] sm:$0xf]
        %v3360 = vld [vmem:[%s3349 + $0x28] sm:$0xf]
        %v3361 = vld [vmem:[%s3349 + $0x2c] sm:$0xf]
        %v3362 = vld [vmem:[%s3349 + $0x30] sm:$0xf]
        %v3363 = vld [vmem:[%s3349 + $0x34] sm:$0xf]
        %v3364 = vld [vmem:[%s3349 + $0x38] sm:$0xf]
        %v3365 = vld [vmem:[%s3349 + $0x3c] sm:$0xf]
        %v3382 = vunpack.c.l.b16 %v3350
        %v3383 = vunpack.c.l.b16 %v3351
        %v3384 = vunpack.c.l.b16 %v3352
        %v3385 = vunpack.c.l.b16 %v3353
        %v3386 = vunpack.c.l.b16 %v3354
        %v3387 = vunpack.c.l.b16 %v3355
        %v3388 = vunpack.c.l.b16 %v3356
        %v3389 = vunpack.c.l.b16 %v3357
        %v3390 = vunpack.c.l.b16 %v3358
        %v3391 = vunpack.c.l.b16 %v3359
        %v3392 = vunpack.c.l.b16 %v3360
        %v3393 = vunpack.c.l.b16 %v3361
        %v3394 = vunpack.c.l.b16 %v3362
        %v3395 = vunpack.c.l.b16 %v3363
        %v3396 = vunpack.c.l.b16 %v3364
        %v3397 = vunpack.c.l.b16 %v3365
        %v3398 = vpack.c.b16 %v3383, %v3382
        %v3399 = vpack.c.b16 %v3385, %v3384
        %v3400 = vpack.c.b16 %v3387, %v3386
        %v3401 = vpack.c.b16 %v3389, %v3388
        %v3402 = vpack.c.b16 %v3391, %v3390
        %v3403 = vpack.c.b16 %v3393, %v3392
        %v3404 = vpack.c.b16 %v3395, %v3394
        %v3405 = vpack.c.b16 %v3397, %v3396
        %3414 = vmatpush.bf16.msra.mxu0 %v3405
        %3415 = vmatpush.bf16.msra.mxu0 %v3404
        %3416 = vmatpush.bf16.msra.mxu0 %v3403
        %3417 = vmatpush.bf16.msra.mxu0 %v3402
        %3418 = vmatpush.bf16.msra.mxu0 %v3401
        %3419 = vmatpush.bf16.msra.mxu0 %v3400
        %3420 = vmatpush.bf16.msra.mxu0 %v3399
        %3421 = vmatpush.bf16.msra.mxu0 %v3398
        %3422 = vmatmul.bf16.gmra.mxu0 %v3348
        %v3423 = vpop.f32.mrf.mxu0
        %v3424 = vadd.f32 0.0, %v3423
        %v3425 = vpop.f32.mrf.mxu0
        %v3426 = vadd.f32 0.0, %v3425
        %3427 = vdwg.mxu0
        %v3428 = vadd.f32 %v3337, %v3424
        %v3429 = vadd.f32 %v3338, %v3426
        %v3430 = vld [vmem:[%s2869 + $0x1] sm:$0xf]
        %v3432 = vrot.slane %v2905, 4
        %v3435 = vrot.slane %v3430, 4
        %v3437 = vsel %vm573, %v2904, %v3432
        %v3438 = vsel %vm573, %v2906, %v3435
        %v3439 = vpack.c.bf16 %v3438, %v3437
        %s3440 = scalar_lea.vmem %s5, 384
        %v3441 = vld [vmem:[%s3440] sm:$0xf]
        %v3442 = vld [vmem:[%s3440 + $0x4] sm:$0xf]
        %v3443 = vld [vmem:[%s3440 + $0x8] sm:$0xf]
        %v3444 = vld [vmem:[%s3440 + $0xc] sm:$0xf]
        %v3445 = vld [vmem:[%s3440 + $0x10] sm:$0xf]
        %v3446 = vld [vmem:[%s3440 + $0x14] sm:$0xf]
        %v3447 = vld [vmem:[%s3440 + $0x18] sm:$0xf]
        %v3448 = vld [vmem:[%s3440 + $0x1c] sm:$0xf]
        %v3449 = vld [vmem:[%s3440 + $0x20] sm:$0xf]
        %v3450 = vld [vmem:[%s3440 + $0x24] sm:$0xf]
        %v3451 = vld [vmem:[%s3440 + $0x28] sm:$0xf]
        %v3452 = vld [vmem:[%s3440 + $0x2c] sm:$0xf]
        %v3453 = vld [vmem:[%s3440 + $0x30] sm:$0xf]
        %v3454 = vld [vmem:[%s3440 + $0x34] sm:$0xf]
        %v3455 = vld [vmem:[%s3440 + $0x38] sm:$0xf]
        %v3456 = vld [vmem:[%s3440 + $0x3c] sm:$0xf]
        %v3473 = vunpack.c.l.b16 %v3441
        %v3474 = vunpack.c.l.b16 %v3442
        %v3475 = vunpack.c.l.b16 %v3443
        %v3476 = vunpack.c.l.b16 %v3444
        %v3477 = vunpack.c.l.b16 %v3445
        %v3478 = vunpack.c.l.b16 %v3446
        %v3479 = vunpack.c.l.b16 %v3447
        %v3480 = vunpack.c.l.b16 %v3448
        %v3481 = vunpack.c.l.b16 %v3449
        %v3482 = vunpack.c.l.b16 %v3450
        %v3483 = vunpack.c.l.b16 %v3451
        %v3484 = vunpack.c.l.b16 %v3452
        %v3485 = vunpack.c.l.b16 %v3453
        %v3486 = vunpack.c.l.b16 %v3454
        %v3487 = vunpack.c.l.b16 %v3455
        %v3488 = vunpack.c.l.b16 %v3456
        %v3489 = vpack.c.b16 %v3474, %v3473
        %v3490 = vpack.c.b16 %v3476, %v3475
        %v3491 = vpack.c.b16 %v3478, %v3477
        %v3492 = vpack.c.b16 %v3480, %v3479
        %v3493 = vpack.c.b16 %v3482, %v3481
        %v3494 = vpack.c.b16 %v3484, %v3483
        %v3495 = vpack.c.b16 %v3486, %v3485
        %v3496 = vpack.c.b16 %v3488, %v3487
        %3505 = vmatpush.bf16.msra.mxu0 %v3496
        %3506 = vmatpush.bf16.msra.mxu0 %v3495
        %3507 = vmatpush.bf16.msra.mxu0 %v3494
        %3508 = vmatpush.bf16.msra.mxu0 %v3493
        %3509 = vmatpush.bf16.msra.mxu0 %v3492
        %3510 = vmatpush.bf16.msra.mxu0 %v3491
        %3511 = vmatpush.bf16.msra.mxu0 %v3490
        %3512 = vmatpush.bf16.msra.mxu0 %v3489
        %3513 = vmatmul.bf16.gmra.mxu0 %v3439
        %v3514 = vpop.f32.mrf.mxu0
        %v3515 = vadd.f32 0.0, %v3514
        %v3516 = vpop.f32.mrf.mxu0
        %v3517 = vadd.f32 0.0, %v3516
        %3518 = vdwg.mxu0
        %v3519 = vadd.f32 %v3428, %v3515
        %v3520 = vadd.f32 %v3429, %v3517
        %v3521 = vld [vmem:[%s2869 + $0x2] sm:$0xf]
        %v3523 = vrot.slane %v3059, 4
        %v3526 = vrot.slane %v3521, 4
        %v3528 = vsel %vm573, %v3058, %v3523
        %v3529 = vsel %vm573, %v3060, %v3526
        %v3530 = vpack.c.bf16 %v3529, %v3528
        %s3531 = scalar_lea.vmem %s5, 448
        %v3532 = vld [vmem:[%s3531] sm:$0xf]
        %v3533 = vld [vmem:[%s3531 + $0x4] sm:$0xf]
        %v3534 = vld [vmem:[%s3531 + $0x8] sm:$0xf]
        %v3535 = vld [vmem:[%s3531 + $0xc] sm:$0xf]
        %v3536 = vld [vmem:[%s3531 + $0x10] sm:$0xf]
        %v3537 = vld [vmem:[%s3531 + $0x14] sm:$0xf]
        %v3538 = vld [vmem:[%s3531 + $0x18] sm:$0xf]
        %v3539 = vld [vmem:[%s3531 + $0x1c] sm:$0xf]
        %v3540 = vld [vmem:[%s3531 + $0x20] sm:$0xf]
        %v3541 = vld [vmem:[%s3531 + $0x24] sm:$0xf]
        %v3542 = vld [vmem:[%s3531 + $0x28] sm:$0xf]
        %v3543 = vld [vmem:[%s3531 + $0x2c] sm:$0xf]
        %v3544 = vld [vmem:[%s3531 + $0x30] sm:$0xf]
        %v3545 = vld [vmem:[%s3531 + $0x34] sm:$0xf]
        %v3546 = vld [vmem:[%s3531 + $0x38] sm:$0xf]
        %v3547 = vld [vmem:[%s3531 + $0x3c] sm:$0xf]
        %v3564 = vunpack.c.l.b16 %v3532
        %v3565 = vunpack.c.l.b16 %v3533
        %v3566 = vunpack.c.l.b16 %v3534
        %v3567 = vunpack.c.l.b16 %v3535
        %v3568 = vunpack.c.l.b16 %v3536
        %v3569 = vunpack.c.l.b16 %v3537
        %v3570 = vunpack.c.l.b16 %v3538
        %v3571 = vunpack.c.l.b16 %v3539
        %v3572 = vunpack.c.l.b16 %v3540
        %v3573 = vunpack.c.l.b16 %v3541
        %v3574 = vunpack.c.l.b16 %v3542
        %v3575 = vunpack.c.l.b16 %v3543
        %v3576 = vunpack.c.l.b16 %v3544
        %v3577 = vunpack.c.l.b16 %v3545
        %v3578 = vunpack.c.l.b16 %v3546
        %v3579 = vunpack.c.l.b16 %v3547
        %v3580 = vpack.c.b16 %v3565, %v3564
        %v3581 = vpack.c.b16 %v3567, %v3566
        %v3582 = vpack.c.b16 %v3569, %v3568
        %v3583 = vpack.c.b16 %v3571, %v3570
        %v3584 = vpack.c.b16 %v3573, %v3572
        %v3585 = vpack.c.b16 %v3575, %v3574
        %v3586 = vpack.c.b16 %v3577, %v3576
        %v3587 = vpack.c.b16 %v3579, %v3578
        %3596 = vmatpush.bf16.msra.mxu0 %v3587
        %3597 = vmatpush.bf16.msra.mxu0 %v3586
        %3598 = vmatpush.bf16.msra.mxu0 %v3585
        %3599 = vmatpush.bf16.msra.mxu0 %v3584
        %3600 = vmatpush.bf16.msra.mxu0 %v3583
        %3601 = vmatpush.bf16.msra.mxu0 %v3582
        %3602 = vmatpush.bf16.msra.mxu0 %v3581
        %3603 = vmatpush.bf16.msra.mxu0 %v3580
        %3604 = vmatmul.bf16.gmra.mxu0 %v3530
        %v3605 = vpop.f32.mrf.mxu0
        %v3606 = vadd.f32 0.0, %v3605
        %v3607 = vpop.f32.mrf.mxu0
        %v3608 = vadd.f32 0.0, %v3607
        %3609 = vdwg.mxu0
        %v3610 = vadd.f32 %v3519, %v3606
        %v3611 = vadd.f32 %v3520, %v3608
        %v3612 = vld [vmem:[%s2869 + $0x3] sm:$0xf]
        %v3614 = vrot.slane %v3153, 4
        %v3617 = vrot.slane %v3612, 4
        %v3619 = vsel %vm573, %v3152, %v3614
        %v3620 = vsel %vm573, %v3154, %v3617
        %v3621 = vpack.c.bf16 %v3620, %v3619
        %s3622 = scalar_lea.vmem %s5, 512
        %v3623 = vld [vmem:[%s3622] sm:$0xf]
        %v3624 = vld [vmem:[%s3622 + $0x4] sm:$0xf]
        %v3625 = vld [vmem:[%s3622 + $0x8] sm:$0xf]
        %v3626 = vld [vmem:[%s3622 + $0xc] sm:$0xf]
        %v3627 = vld [vmem:[%s3622 + $0x10] sm:$0xf]
        %v3628 = vld [vmem:[%s3622 + $0x14] sm:$0xf]
        %v3629 = vld [vmem:[%s3622 + $0x18] sm:$0xf]
        %v3630 = vld [vmem:[%s3622 + $0x1c] sm:$0xf]
        %v3631 = vld [vmem:[%s3622 + $0x20] sm:$0xf]
        %v3632 = vld [vmem:[%s3622 + $0x24] sm:$0xf]
        %v3633 = vld [vmem:[%s3622 + $0x28] sm:$0xf]
        %v3634 = vld [vmem:[%s3622 + $0x2c] sm:$0xf]
        %v3635 = vld [vmem:[%s3622 + $0x30] sm:$0xf]
        %v3636 = vld [vmem:[%s3622 + $0x34] sm:$0xf]
        %v3637 = vld [vmem:[%s3622 + $0x38] sm:$0xf]
        %v3638 = vld [vmem:[%s3622 + $0x3c] sm:$0xf]
        %v3655 = vunpack.c.l.b16 %v3623
        %v3656 = vunpack.c.l.b16 %v3624
        %v3657 = vunpack.c.l.b16 %v3625
        %v3658 = vunpack.c.l.b16 %v3626
        %v3659 = vunpack.c.l.b16 %v3627
        %v3660 = vunpack.c.l.b16 %v3628
        %v3661 = vunpack.c.l.b16 %v3629
        %v3662 = vunpack.c.l.b16 %v3630
        %v3663 = vunpack.c.l.b16 %v3631
        %v3664 = vunpack.c.l.b16 %v3632
        %v3665 = vunpack.c.l.b16 %v3633
        %v3666 = vunpack.c.l.b16 %v3634
        %v3667 = vunpack.c.l.b16 %v3635
        %v3668 = vunpack.c.l.b16 %v3636
        %v3669 = vunpack.c.l.b16 %v3637
        %v3670 = vunpack.c.l.b16 %v3638
        %v3671 = vpack.c.b16 %v3656, %v3655
        %v3672 = vpack.c.b16 %v3658, %v3657
        %v3673 = vpack.c.b16 %v3660, %v3659
        %v3674 = vpack.c.b16 %v3662, %v3661
        %v3675 = vpack.c.b16 %v3664, %v3663
        %v3676 = vpack.c.b16 %v3666, %v3665
        %v3677 = vpack.c.b16 %v3668, %v3667
        %v3678 = vpack.c.b16 %v3670, %v3669
        %3687 = vmatpush.bf16.msra.mxu0 %v3678
        %3688 = vmatpush.bf16.msra.mxu0 %v3677
        %3689 = vmatpush.bf16.msra.mxu0 %v3676
        %3690 = vmatpush.bf16.msra.mxu0 %v3675
        %3691 = vmatpush.bf16.msra.mxu0 %v3674
        %3692 = vmatpush.bf16.msra.mxu0 %v3673
        %3693 = vmatpush.bf16.msra.mxu0 %v3672
        %3694 = vmatpush.bf16.msra.mxu0 %v3671
        %3695 = vmatmul.bf16.gmra.mxu0 %v3621
        %v3696 = vpop.f32.mrf.mxu0
        %v3697 = vadd.f32 0.0, %v3696
        %v3698 = vpop.f32.mrf.mxu0
        %v3699 = vadd.f32 0.0, %v3698
        %3700 = vdwg.mxu0
        %v3701 = vadd.f32 %v3610, %v3697
        %v3702 = vadd.f32 %v3611, %v3699
        %v3703 = vld [vmem:[%s2869 + $0x4] sm:$0xf]
        %v3705 = vrot.slane %v3247, 4
        %v3708 = vrot.slane %v3703, 4
        %v3710 = vsel %vm573, %v3246, %v3705
        %v3711 = vsel %vm573, %v3248, %v3708
        %v3712 = vpack.c.bf16 %v3711, %v3710
        %s3713 = scalar_lea.vmem %s5, 576
        %v3714 = vld [vmem:[%s3713] sm:$0xf]
        %v3715 = vld [vmem:[%s3713 + $0x4] sm:$0xf]
        %v3716 = vld [vmem:[%s3713 + $0x8] sm:$0xf]
        %v3717 = vld [vmem:[%s3713 + $0xc] sm:$0xf]
        %v3718 = vld [vmem:[%s3713 + $0x10] sm:$0xf]
        %v3719 = vld [vmem:[%s3713 + $0x14] sm:$0xf]
        %v3720 = vld [vmem:[%s3713 + $0x18] sm:$0xf]
        %v3721 = vld [vmem:[%s3713 + $0x1c] sm:$0xf]
        %v3722 = vld [vmem:[%s3713 + $0x20] sm:$0xf]
        %v3723 = vld [vmem:[%s3713 + $0x24] sm:$0xf]
        %v3724 = vld [vmem:[%s3713 + $0x28] sm:$0xf]
        %v3725 = vld [vmem:[%s3713 + $0x2c] sm:$0xf]
        %v3726 = vld [vmem:[%s3713 + $0x30] sm:$0xf]
        %v3727 = vld [vmem:[%s3713 + $0x34] sm:$0xf]
        %v3728 = vld [vmem:[%s3713 + $0x38] sm:$0xf]
        %v3729 = vld [vmem:[%s3713 + $0x3c] sm:$0xf]
        %v3746 = vunpack.c.l.b16 %v3714
        %v3747 = vunpack.c.l.b16 %v3715
        %v3748 = vunpack.c.l.b16 %v3716
        %v3749 = vunpack.c.l.b16 %v3717
        %v3750 = vunpack.c.l.b16 %v3718
        %v3751 = vunpack.c.l.b16 %v3719
        %v3752 = vunpack.c.l.b16 %v3720
        %v3753 = vunpack.c.l.b16 %v3721
        %v3754 = vunpack.c.l.b16 %v3722
        %v3755 = vunpack.c.l.b16 %v3723
        %v3756 = vunpack.c.l.b16 %v3724
        %v3757 = vunpack.c.l.b16 %v3725
        %v3758 = vunpack.c.l.b16 %v3726
        %v3759 = vunpack.c.l.b16 %v3727
        %v3760 = vunpack.c.l.b16 %v3728
        %v3761 = vunpack.c.l.b16 %v3729
        %v3762 = vpack.c.b16 %v3747, %v3746
        %v3763 = vpack.c.b16 %v3749, %v3748
        %v3764 = vpack.c.b16 %v3751, %v3750
        %v3765 = vpack.c.b16 %v3753, %v3752
        %v3766 = vpack.c.b16 %v3755, %v3754
        %v3767 = vpack.c.b16 %v3757, %v3756
        %v3768 = vpack.c.b16 %v3759, %v3758
        %v3769 = vpack.c.b16 %v3761, %v3760
        %3778 = vmatpush.bf16.msra.mxu0 %v3769
        %3779 = vmatpush.bf16.msra.mxu0 %v3768
        %3780 = vmatpush.bf16.msra.mxu0 %v3767
        %3781 = vmatpush.bf16.msra.mxu0 %v3766
        %3782 = vmatpush.bf16.msra.mxu0 %v3765
        %3783 = vmatpush.bf16.msra.mxu0 %v3764
        %3784 = vmatpush.bf16.msra.mxu0 %v3763
        %3785 = vmatpush.bf16.msra.mxu0 %v3762
        %3786 = vmatmul.bf16.gmra.mxu0 %v3712
        %v3787 = vpop.f32.mrf.mxu0
        %v3788 = vadd.f32 0.0, %v3787
        %v3789 = vpop.f32.mrf.mxu0
        %v3790 = vadd.f32 0.0, %v3789
        %3791 = vdwg.mxu0
        %v3792 = vadd.f32 %v3701, %v3788
        %v3793 = vadd.f32 %v3702, %v3790
        %v3794 = vld [vmem:[%s2871] sm:$0xf]
        %v3796 = vrot.slane %v3794, 4
        %v3798 = vsel %vm573, %v3339, %v3796
        %v3799 = vpack.c.bf16 %v3798, %v2885
        %s3800 = scalar_lea.vmem %s5, 640
        %v3801 = vld [vmem:[%s3800] sm:$0xf]
        %v3802 = vld [vmem:[%s3800 + $0x4] sm:$0xf]
        %v3803 = vld [vmem:[%s3800 + $0x8] sm:$0xf]
        %v3804 = vld [vmem:[%s3800 + $0xc] sm:$0xf]
        %v3805 = vld [vmem:[%s3800 + $0x10] sm:$0xf]
        %v3806 = vld [vmem:[%s3800 + $0x14] sm:$0xf]
        %v3807 = vld [vmem:[%s3800 + $0x18] sm:$0xf]
        %v3808 = vld [vmem:[%s3800 + $0x1c] sm:$0xf]
        %v3809 = vld [vmem:[%s3800 + $0x20] sm:$0xf]
        %v3810 = vld [vmem:[%s3800 + $0x24] sm:$0xf]
        %v3811 = vld [vmem:[%s3800 + $0x28] sm:$0xf]
        %v3812 = vld [vmem:[%s3800 + $0x2c] sm:$0xf]
        %v3813 = vld [vmem:[%s3800 + $0x30] sm:$0xf]
        %v3814 = vld [vmem:[%s3800 + $0x34] sm:$0xf]
        %v3815 = vld [vmem:[%s3800 + $0x38] sm:$0xf]
        %v3816 = vld [vmem:[%s3800 + $0x3c] sm:$0xf]
        %v3833 = vunpack.c.l.b16 %v3801
        %v3834 = vunpack.c.l.b16 %v3802
        %v3835 = vunpack.c.l.b16 %v3803
        %v3836 = vunpack.c.l.b16 %v3804
        %v3837 = vunpack.c.l.b16 %v3805
        %v3838 = vunpack.c.l.b16 %v3806
        %v3839 = vunpack.c.l.b16 %v3807
        %v3840 = vunpack.c.l.b16 %v3808
        %v3841 = vunpack.c.l.b16 %v3809
        %v3842 = vunpack.c.l.b16 %v3810
        %v3843 = vunpack.c.l.b16 %v3811
        %v3844 = vunpack.c.l.b16 %v3812
        %v3845 = vunpack.c.l.b16 %v3813
        %v3846 = vunpack.c.l.b16 %v3814
        %v3847 = vunpack.c.l.b16 %v3815
        %v3848 = vunpack.c.l.b16 %v3816
        %v3849 = vpack.c.b16 %v3834, %v3833
        %v3850 = vpack.c.b16 %v3836, %v3835
        %v3851 = vpack.c.b16 %v3838, %v3837
        %v3852 = vpack.c.b16 %v3840, %v3839
        %v3853 = vpack.c.b16 %v3842, %v3841
        %v3854 = vpack.c.b16 %v3844, %v3843
        %v3855 = vpack.c.b16 %v3846, %v3845
        %v3856 = vpack.c.b16 %v3848, %v3847
        %3865 = vmatpush.bf16.msra.mxu0 %v3856
        %3866 = vmatpush.bf16.msra.mxu0 %v3855
        %3867 = vmatpush.bf16.msra.mxu0 %v3854
        %3868 = vmatpush.bf16.msra.mxu0 %v3853
        %3869 = vmatpush.bf16.msra.mxu0 %v3852
        %3870 = vmatpush.bf16.msra.mxu0 %v3851
        %3871 = vmatpush.bf16.msra.mxu0 %v3850
        %3872 = vmatpush.bf16.msra.mxu0 %v3849
        %3873 = vmatmul.bf16.gmra.mxu0 %v3799
        %v3874 = vpop.f32.mrf.mxu0
        %v3875 = vadd.f32 0.0, %v3874
        %v3876 = vpop.f32.mrf.mxu0
        %v3877 = vadd.f32 0.0, %v3876
        %3878 = vdwg.mxu0
        %v3879 = vadd.f32 %v3792, %v3875
        %v3880 = vadd.f32 %v3793, %v3877
        %v3881 = vld [vmem:[%s2871 + $0x1] sm:$0xf]
        %v3883 = vrot.slane %v3881, 4
        %v3885 = vsel %vm573, %v3430, %v3883
        %v3886 = vpack.c.bf16 %v3885, %v2914
        %s3887 = scalar_lea.vmem %s5, 704
        %v3888 = vld [vmem:[%s3887] sm:$0xf]
        %v3889 = vld [vmem:[%s3887 + $0x4] sm:$0xf]
        %v3890 = vld [vmem:[%s3887 + $0x8] sm:$0xf]
        %v3891 = vld [vmem:[%s3887 + $0xc] sm:$0xf]
        %v3892 = vld [vmem:[%s3887 + $0x10] sm:$0xf]
        %v3893 = vld [vmem:[%s3887 + $0x14] sm:$0xf]
        %v3894 = vld [vmem:[%s3887 + $0x18] sm:$0xf]
        %v3895 = vld [vmem:[%s3887 + $0x1c] sm:$0xf]
        %v3896 = vld [vmem:[%s3887 + $0x20] sm:$0xf]
        %v3897 = vld [vmem:[%s3887 + $0x24] sm:$0xf]
        %v3898 = vld [vmem:[%s3887 + $0x28] sm:$0xf]
        %v3899 = vld [vmem:[%s3887 + $0x2c] sm:$0xf]
        %v3900 = vld [vmem:[%s3887 + $0x30] sm:$0xf]
        %v3901 = vld [vmem:[%s3887 + $0x34] sm:$0xf]
        %v3902 = vld [vmem:[%s3887 + $0x38] sm:$0xf]
        %v3903 = vld [vmem:[%s3887 + $0x3c] sm:$0xf]
        %v3920 = vunpack.c.l.b16 %v3888
        %v3921 = vunpack.c.l.b16 %v3889
        %v3922 = vunpack.c.l.b16 %v3890
        %v3923 = vunpack.c.l.b16 %v3891
        %v3924 = vunpack.c.l.b16 %v3892
        %v3925 = vunpack.c.l.b16 %v3893
        %v3926 = vunpack.c.l.b16 %v3894
        %v3927 = vunpack.c.l.b16 %v3895
        %v3928 = vunpack.c.l.b16 %v3896
        %v3929 = vunpack.c.l.b16 %v3897
        %v3930 = vunpack.c.l.b16 %v3898
        %v3931 = vunpack.c.l.b16 %v3899
        %v3932 = vunpack.c.l.b16 %v3900
        %v3933 = vunpack.c.l.b16 %v3901
        %v3934 = vunpack.c.l.b16 %v3902
        %v3935 = vunpack.c.l.b16 %v3903
        %v3936 = vpack.c.b16 %v3921, %v3920
        %v3937 = vpack.c.b16 %v3923, %v3922
        %v3938 = vpack.c.b16 %v3925, %v3924
        %v3939 = vpack.c.b16 %v3927, %v3926
        %v3940 = vpack.c.b16 %v3929, %v3928
        %v3941 = vpack.c.b16 %v3931, %v3930
        %v3942 = vpack.c.b16 %v3933, %v3932
        %v3943 = vpack.c.b16 %v3935, %v3934
        %3952 = vmatpush.bf16.msra.mxu0 %v3943
        %3953 = vmatpush.bf16.msra.mxu0 %v3942
        %3954 = vmatpush.bf16.msra.mxu0 %v3941
        %3955 = vmatpush.bf16.msra.mxu0 %v3940
        %3956 = vmatpush.bf16.msra.mxu0 %v3939
        %3957 = vmatpush.bf16.msra.mxu0 %v3938
        %3958 = vmatpush.bf16.msra.mxu0 %v3937
        %3959 = vmatpush.bf16.msra.mxu0 %v3936
        %3960 = vmatmul.bf16.gmra.mxu0 %v3886
        %v3961 = vpop.f32.mrf.mxu0
        %v3962 = vadd.f32 0.0, %v3961
        %v3963 = vpop.f32.mrf.mxu0
        %v3964 = vadd.f32 0.0, %v3963
        %3965 = vdwg.mxu0
        %v3966 = vadd.f32 %v3879, %v3962
        %v3967 = vadd.f32 %v3880, %v3964
        %v3968 = vld [vmem:[%s2871 + $0x2] sm:$0xf]
        %v3970 = vrot.slane %v3968, 4
        %v3972 = vsel %vm573, %v3521, %v3970
        %v3973 = vpack.c.bf16 %v3972, %v3068
        %s3974 = scalar_lea.vmem %s5, 768
        %v3975 = vld [vmem:[%s3974] sm:$0xf]
        %v3976 = vld [vmem:[%s3974 + $0x4] sm:$0xf]
        %v3977 = vld [vmem:[%s3974 + $0x8] sm:$0xf]
        %v3978 = vld [vmem:[%s3974 + $0xc] sm:$0xf]
        %v3979 = vld [vmem:[%s3974 + $0x10] sm:$0xf]
        %v3980 = vld [vmem:[%s3974 + $0x14] sm:$0xf]
        %v3981 = vld [vmem:[%s3974 + $0x18] sm:$0xf]
        %v3982 = vld [vmem:[%s3974 + $0x1c] sm:$0xf]
        %v3983 = vld [vmem:[%s3974 + $0x20] sm:$0xf]
        %v3984 = vld [vmem:[%s3974 + $0x24] sm:$0xf]
        %v3985 = vld [vmem:[%s3974 + $0x28] sm:$0xf]
        %v3986 = vld [vmem:[%s3974 + $0x2c] sm:$0xf]
        %v3987 = vld [vmem:[%s3974 + $0x30] sm:$0xf]
        %v3988 = vld [vmem:[%s3974 + $0x34] sm:$0xf]
        %v3989 = vld [vmem:[%s3974 + $0x38] sm:$0xf]
        %v3990 = vld [vmem:[%s3974 + $0x3c] sm:$0xf]
        %v4007 = vunpack.c.l.b16 %v3975
        %v4008 = vunpack.c.l.b16 %v3976
        %v4009 = vunpack.c.l.b16 %v3977
        %v4010 = vunpack.c.l.b16 %v3978
        %v4011 = vunpack.c.l.b16 %v3979
        %v4012 = vunpack.c.l.b16 %v3980
        %v4013 = vunpack.c.l.b16 %v3981
        %v4014 = vunpack.c.l.b16 %v3982
        %v4015 = vunpack.c.l.b16 %v3983
        %v4016 = vunpack.c.l.b16 %v3984
        %v4017 = vunpack.c.l.b16 %v3985
        %v4018 = vunpack.c.l.b16 %v3986
        %v4019 = vunpack.c.l.b16 %v3987
        %v4020 = vunpack.c.l.b16 %v3988
        %v4021 = vunpack.c.l.b16 %v3989
        %v4022 = vunpack.c.l.b16 %v3990
        %v4023 = vpack.c.b16 %v4008, %v4007
        %v4024 = vpack.c.b16 %v4010, %v4009
        %v4025 = vpack.c.b16 %v4012, %v4011
        %v4026 = vpack.c.b16 %v4014, %v4013
        %v4027 = vpack.c.b16 %v4016, %v4015
        %v4028 = vpack.c.b16 %v4018, %v4017
        %v4029 = vpack.c.b16 %v4020, %v4019
        %v4030 = vpack.c.b16 %v4022, %v4021
        %4039 = vmatpush.bf16.msra.mxu0 %v4030
        %4040 = vmatpush.bf16.msra.mxu0 %v4029
        %4041 = vmatpush.bf16.msra.mxu0 %v4028
        %4042 = vmatpush.bf16.msra.mxu0 %v4027
        %4043 = vmatpush.bf16.msra.mxu0 %v4026
        %4044 = vmatpush.bf16.msra.mxu0 %v4025
        %4045 = vmatpush.bf16.msra.mxu0 %v4024
        %4046 = vmatpush.bf16.msra.mxu0 %v4023
        %4047 = vmatmul.bf16.gmra.mxu0 %v3973
        %v4048 = vpop.f32.mrf.mxu0
        %v4049 = vadd.f32 0.0, %v4048
        %v4050 = vpop.f32.mrf.mxu0
        %v4051 = vadd.f32 0.0, %v4050
        %4052 = vdwg.mxu0
        %v4053 = vadd.f32 %v3966, %v4049
        %v4054 = vadd.f32 %v3967, %v4051
        %v4055 = vld [vmem:[%s2871 + $0x3] sm:$0xf]
        %v4057 = vrot.slane %v4055, 4
        %v4059 = vsel %vm573, %v3612, %v4057
        %v4060 = vpack.c.bf16 %v4059, %v3162
        %s4061 = scalar_lea.vmem %s5, 832
        %v4062 = vld [vmem:[%s4061] sm:$0xf]
        %v4063 = vld [vmem:[%s4061 + $0x4] sm:$0xf]
        %v4064 = vld [vmem:[%s4061 + $0x8] sm:$0xf]
        %v4065 = vld [vmem:[%s4061 + $0xc] sm:$0xf]
        %v4066 = vld [vmem:[%s4061 + $0x10] sm:$0xf]
        %v4067 = vld [vmem:[%s4061 + $0x14] sm:$0xf]
        %v4068 = vld [vmem:[%s4061 + $0x18] sm:$0xf]
        %v4069 = vld [vmem:[%s4061 + $0x1c] sm:$0xf]
        %v4070 = vld [vmem:[%s4061 + $0x20] sm:$0xf]
        %v4071 = vld [vmem:[%s4061 + $0x24] sm:$0xf]
        %v4072 = vld [vmem:[%s4061 + $0x28] sm:$0xf]
        %v4073 = vld [vmem:[%s4061 + $0x2c] sm:$0xf]
        %v4074 = vld [vmem:[%s4061 + $0x30] sm:$0xf]
        %v4075 = vld [vmem:[%s4061 + $0x34] sm:$0xf]
        %v4076 = vld [vmem:[%s4061 + $0x38] sm:$0xf]
        %v4077 = vld [vmem:[%s4061 + $0x3c] sm:$0xf]
        %v4094 = vunpack.c.l.b16 %v4062
        %v4095 = vunpack.c.l.b16 %v4063
        %v4096 = vunpack.c.l.b16 %v4064
        %v4097 = vunpack.c.l.b16 %v4065
        %v4098 = vunpack.c.l.b16 %v4066
        %v4099 = vunpack.c.l.b16 %v4067
        %v4100 = vunpack.c.l.b16 %v4068
        %v4101 = vunpack.c.l.b16 %v4069
        %v4102 = vunpack.c.l.b16 %v4070
        %v4103 = vunpack.c.l.b16 %v4071
        %v4104 = vunpack.c.l.b16 %v4072
        %v4105 = vunpack.c.l.b16 %v4073
        %v4106 = vunpack.c.l.b16 %v4074
        %v4107 = vunpack.c.l.b16 %v4075
        %v4108 = vunpack.c.l.b16 %v4076
        %v4109 = vunpack.c.l.b16 %v4077
        %v4110 = vpack.c.b16 %v4095, %v4094
        %v4111 = vpack.c.b16 %v4097, %v4096
        %v4112 = vpack.c.b16 %v4099, %v4098
        %v4113 = vpack.c.b16 %v4101, %v4100
        %v4114 = vpack.c.b16 %v4103, %v4102
        %v4115 = vpack.c.b16 %v4105, %v4104
        %v4116 = vpack.c.b16 %v4107, %v4106
        %v4117 = vpack.c.b16 %v4109, %v4108
        %4126 = vmatpush.bf16.msra.mxu0 %v4117
        %4127 = vmatpush.bf16.msra.mxu0 %v4116
        %4128 = vmatpush.bf16.msra.mxu0 %v4115
        %4129 = vmatpush.bf16.msra.mxu0 %v4114
        %4130 = vmatpush.bf16.msra.mxu0 %v4113
        %4131 = vmatpush.bf16.msra.mxu0 %v4112
        %4132 = vmatpush.bf16.msra.mxu0 %v4111
        %4133 = vmatpush.bf16.msra.mxu0 %v4110
        %4134 = vmatmul.bf16.gmra.mxu0 %v4060
        %v4135 = vpop.f32.mrf.mxu0
        %v4136 = vadd.f32 0.0, %v4135
        %v4137 = vpop.f32.mrf.mxu0
        %v4138 = vadd.f32 0.0, %v4137
        %4139 = vdwg.mxu0
        %v4140 = vadd.f32 %v4053, %v4136
        %v4141 = vadd.f32 %v4054, %v4138
        %v4142 = vld [vmem:[%s2871 + $0x4] sm:$0xf]
        %v4144 = vrot.slane %v4142, 4
        %v4146 = vsel %vm573, %v3703, %v4144
        %v4147 = vpack.c.bf16 %v4146, %v3256
        %s4148 = scalar_lea.vmem %s5, 896
        %v4149 = vld [vmem:[%s4148] sm:$0xf]
        %v4150 = vld [vmem:[%s4148 + $0x4] sm:$0xf]
        %v4151 = vld [vmem:[%s4148 + $0x8] sm:$0xf]
        %v4152 = vld [vmem:[%s4148 + $0xc] sm:$0xf]
        %v4153 = vld [vmem:[%s4148 + $0x10] sm:$0xf]
        %v4154 = vld [vmem:[%s4148 + $0x14] sm:$0xf]
        %v4155 = vld [vmem:[%s4148 + $0x18] sm:$0xf]
        %v4156 = vld [vmem:[%s4148 + $0x1c] sm:$0xf]
        %v4157 = vld [vmem:[%s4148 + $0x20] sm:$0xf]
        %v4158 = vld [vmem:[%s4148 + $0x24] sm:$0xf]
        %v4159 = vld [vmem:[%s4148 + $0x28] sm:$0xf]
        %v4160 = vld [vmem:[%s4148 + $0x2c] sm:$0xf]
        %v4161 = vld [vmem:[%s4148 + $0x30] sm:$0xf]
        %v4162 = vld [vmem:[%s4148 + $0x34] sm:$0xf]
        %v4163 = vld [vmem:[%s4148 + $0x38] sm:$0xf]
        %v4164 = vld [vmem:[%s4148 + $0x3c] sm:$0xf]
        %v4181 = vunpack.c.l.b16 %v4149
        %v4182 = vunpack.c.l.b16 %v4150
        %v4183 = vunpack.c.l.b16 %v4151
        %v4184 = vunpack.c.l.b16 %v4152
        %v4185 = vunpack.c.l.b16 %v4153
        %v4186 = vunpack.c.l.b16 %v4154
        %v4187 = vunpack.c.l.b16 %v4155
        %v4188 = vunpack.c.l.b16 %v4156
        %v4189 = vunpack.c.l.b16 %v4157
        %v4190 = vunpack.c.l.b16 %v4158
        %v4191 = vunpack.c.l.b16 %v4159
        %v4192 = vunpack.c.l.b16 %v4160
        %v4193 = vunpack.c.l.b16 %v4161
        %v4194 = vunpack.c.l.b16 %v4162
        %v4195 = vunpack.c.l.b16 %v4163
        %v4196 = vunpack.c.l.b16 %v4164
        %v4197 = vpack.c.b16 %v4182, %v4181
        %v4198 = vpack.c.b16 %v4184, %v4183
        %v4199 = vpack.c.b16 %v4186, %v4185
        %v4200 = vpack.c.b16 %v4188, %v4187
        %v4201 = vpack.c.b16 %v4190, %v4189
        %v4202 = vpack.c.b16 %v4192, %v4191
        %v4203 = vpack.c.b16 %v4194, %v4193
        %v4204 = vpack.c.b16 %v4196, %v4195
        %4213 = vmatpush.bf16.msra.mxu0 %v4204
        %4214 = vmatpush.bf16.msra.mxu0 %v4203
        %4215 = vmatpush.bf16.msra.mxu0 %v4202
        %4216 = vmatpush.bf16.msra.mxu0 %v4201
        %4217 = vmatpush.bf16.msra.mxu0 %v4200
        %4218 = vmatpush.bf16.msra.mxu0 %v4199
        %4219 = vmatpush.bf16.msra.mxu0 %v4198
        %4220 = vmatpush.bf16.msra.mxu0 %v4197
        %4221 = vmatmul.bf16.gmra.mxu0 %v4147
        %v4222 = vpop.f32.mrf.mxu0
        %v4223 = vadd.f32 0.0, %v4222
        %v4224 = vpop.f32.mrf.mxu0
        %v4225 = vadd.f32 0.0, %v4224
        %4226 = vdwg.mxu0
        %v4227 = vadd.f32 %v4140, %v4223
        %v4228 = vadd.f32 %v4141, %v4225
        %s4229 = scalar_lea.vmem [#allocation3], 48
        %v4230 = vld [vmem:[%s4229] sm:$0xf]
        %v4232 = vrot.slane %v4230, 4
        %v4234 = vsel %vm573, %v3794, %v4232
        %v4235 = vpack.c.bf16 %v4234, %v3347
        %s4236 = scalar_lea.vmem %s5, 960
        %v4237 = vld [vmem:[%s4236] sm:$0xf]
        %v4238 = vld [vmem:[%s4236 + $0x4] sm:$0xf]
        %v4239 = vld [vmem:[%s4236 + $0x8] sm:$0xf]
        %v4240 = vld [vmem:[%s4236 + $0xc] sm:$0xf]
        %v4241 = vld [vmem:[%s4236 + $0x10] sm:$0xf]
        %v4242 = vld [vmem:[%s4236 + $0x14] sm:$0xf]
        %v4243 = vld [vmem:[%s4236 + $0x18] sm:$0xf]
        %v4244 = vld [vmem:[%s4236 + $0x1c] sm:$0xf]
        %v4245 = vld [vmem:[%s4236 + $0x20] sm:$0xf]
        %v4246 = vld [vmem:[%s4236 + $0x24] sm:$0xf]
        %v4247 = vld [vmem:[%s4236 + $0x28] sm:$0xf]
        %v4248 = vld [vmem:[%s4236 + $0x2c] sm:$0xf]
        %v4249 = vld [vmem:[%s4236 + $0x30] sm:$0xf]
        %v4250 = vld [vmem:[%s4236 + $0x34] sm:$0xf]
        %v4251 = vld [vmem:[%s4236 + $0x38] sm:$0xf]
        %v4252 = vld [vmem:[%s4236 + $0x3c] sm:$0xf]
        %v4269 = vunpack.c.l.b16 %v4237
        %v4270 = vunpack.c.l.b16 %v4238
        %v4271 = vunpack.c.l.b16 %v4239
        %v4272 = vunpack.c.l.b16 %v4240
        %v4273 = vunpack.c.l.b16 %v4241
        %v4274 = vunpack.c.l.b16 %v4242
        %v4275 = vunpack.c.l.b16 %v4243
        %v4276 = vunpack.c.l.b16 %v4244
        %v4277 = vunpack.c.l.b16 %v4245
        %v4278 = vunpack.c.l.b16 %v4246
        %v4279 = vunpack.c.l.b16 %v4247
        %v4280 = vunpack.c.l.b16 %v4248
        %v4281 = vunpack.c.l.b16 %v4249
        %v4282 = vunpack.c.l.b16 %v4250
        %v4283 = vunpack.c.l.b16 %v4251
        %v4284 = vunpack.c.l.b16 %v4252
        %v4285 = vpack.c.b16 %v4270, %v4269
        %v4286 = vpack.c.b16 %v4272, %v4271
        %v4287 = vpack.c.b16 %v4274, %v4273
        %v4288 = vpack.c.b16 %v4276, %v4275
        %v4289 = vpack.c.b16 %v4278, %v4277
        %v4290 = vpack.c.b16 %v4280, %v4279
        %v4291 = vpack.c.b16 %v4282, %v4281
        %v4292 = vpack.c.b16 %v4284, %v4283
        %4301 = vmatpush.bf16.msra.mxu0 %v4292
        %4302 = vmatpush.bf16.msra.mxu0 %v4291
        %4303 = vmatpush.bf16.msra.mxu0 %v4290
        %4304 = vmatpush.bf16.msra.mxu0 %v4289
        %4305 = vmatpush.bf16.msra.mxu0 %v4288
        %4306 = vmatpush.bf16.msra.mxu0 %v4287
        %4307 = vmatpush.bf16.msra.mxu0 %v4286
        %4308 = vmatpush.bf16.msra.mxu0 %v4285
        %4309 = vmatmul.bf16.gmra.mxu0 %v4235
        %v4310 = vpop.f32.mrf.mxu0
        %v4311 = vadd.f32 0.0, %v4310
        %v4312 = vpop.f32.mrf.mxu0
        %v4313 = vadd.f32 0.0, %v4312
        %4314 = vdwg.mxu0
        %v4315 = vadd.f32 %v4227, %v4311
        %v4316 = vadd.f32 %v4228, %v4313
        %v4317 = vld [vmem:[%s4229 + $0x1] sm:$0xf]
        %v4319 = vrot.slane %v4317, 4
        %v4321 = vsel %vm573, %v3881, %v4319
        %v4322 = vpack.c.bf16 %v4321, %v3438
        %s4323 = scalar_lea.vmem %s5, 1024
        %v4324 = vld [vmem:[%s4323] sm:$0xf]
        %v4325 = vld [vmem:[%s4323 + $0x4] sm:$0xf]
        %v4326 = vld [vmem:[%s4323 + $0x8] sm:$0xf]
        %v4327 = vld [vmem:[%s4323 + $0xc] sm:$0xf]
        %v4328 = vld [vmem:[%s4323 + $0x10] sm:$0xf]
        %v4329 = vld [vmem:[%s4323 + $0x14] sm:$0xf]
        %v4330 = vld [vmem:[%s4323 + $0x18] sm:$0xf]
        %v4331 = vld [vmem:[%s4323 + $0x1c] sm:$0xf]
        %v4332 = vld [vmem:[%s4323 + $0x20] sm:$0xf]
        %v4333 = vld [vmem:[%s4323 + $0x24] sm:$0xf]
        %v4334 = vld [vmem:[%s4323 + $0x28] sm:$0xf]
        %v4335 = vld [vmem:[%s4323 + $0x2c] sm:$0xf]
        %v4336 = vld [vmem:[%s4323 + $0x30] sm:$0xf]
        %v4337 = vld [vmem:[%s4323 + $0x34] sm:$0xf]
        %v4338 = vld [vmem:[%s4323 + $0x38] sm:$0xf]
        %v4339 = vld [vmem:[%s4323 + $0x3c] sm:$0xf]
        %v4356 = vunpack.c.l.b16 %v4324
        %v4357 = vunpack.c.l.b16 %v4325
        %v4358 = vunpack.c.l.b16 %v4326
        %v4359 = vunpack.c.l.b16 %v4327
        %v4360 = vunpack.c.l.b16 %v4328
        %v4361 = vunpack.c.l.b16 %v4329
        %v4362 = vunpack.c.l.b16 %v4330
        %v4363 = vunpack.c.l.b16 %v4331
        %v4364 = vunpack.c.l.b16 %v4332
        %v4365 = vunpack.c.l.b16 %v4333
        %v4366 = vunpack.c.l.b16 %v4334
        %v4367 = vunpack.c.l.b16 %v4335
        %v4368 = vunpack.c.l.b16 %v4336
        %v4369 = vunpack.c.l.b16 %v4337
        %v4370 = vunpack.c.l.b16 %v4338
        %v4371 = vunpack.c.l.b16 %v4339
        %v4372 = vpack.c.b16 %v4357, %v4356
        %v4373 = vpack.c.b16 %v4359, %v4358
        %v4374 = vpack.c.b16 %v4361, %v4360
        %v4375 = vpack.c.b16 %v4363, %v4362
        %v4376 = vpack.c.b16 %v4365, %v4364
        %v4377 = vpack.c.b16 %v4367, %v4366
        %v4378 = vpack.c.b16 %v4369, %v4368
        %v4379 = vpack.c.b16 %v4371, %v4370
        %4388 = vmatpush.bf16.msra.mxu0 %v4379
        %4389 = vmatpush.bf16.msra.mxu0 %v4378
        %4390 = vmatpush.bf16.msra.mxu0 %v4377
        %4391 = vmatpush.bf16.msra.mxu0 %v4376
        %4392 = vmatpush.bf16.msra.mxu0 %v4375
        %4393 = vmatpush.bf16.msra.mxu0 %v4374
        %4394 = vmatpush.bf16.msra.mxu0 %v4373
        %4395 = vmatpush.bf16.msra.mxu0 %v4372
        %4396 = vmatmul.bf16.gmra.mxu0 %v4322
        %v4397 = vpop.f32.mrf.mxu0
        %v4398 = vadd.f32 0.0, %v4397
        %v4399 = vpop.f32.mrf.mxu0
        %v4400 = vadd.f32 0.0, %v4399
        %4401 = vdwg.mxu0
        %v4402 = vadd.f32 %v4315, %v4398
        %v4403 = vadd.f32 %v4316, %v4400
        %v4404 = vld [vmem:[%s4229 + $0x2] sm:$0xf]
        %v4406 = vrot.slane %v4404, 4
        %v4408 = vsel %vm573, %v3968, %v4406
        %v4409 = vpack.c.bf16 %v4408, %v3529
        %s4410 = scalar_lea.vmem %s5, 1088
        %v4411 = vld [vmem:[%s4410] sm:$0xf]
        %v4412 = vld [vmem:[%s4410 + $0x4] sm:$0xf]
        %v4413 = vld [vmem:[%s4410 + $0x8] sm:$0xf]
        %v4414 = vld [vmem:[%s4410 + $0xc] sm:$0xf]
        %v4415 = vld [vmem:[%s4410 + $0x10] sm:$0xf]
        %v4416 = vld [vmem:[%s4410 + $0x14] sm:$0xf]
        %v4417 = vld [vmem:[%s4410 + $0x18] sm:$0xf]
        %v4418 = vld [vmem:[%s4410 + $0x1c] sm:$0xf]
        %v4419 = vld [vmem:[%s4410 + $0x20] sm:$0xf]
        %v4420 = vld [vmem:[%s4410 + $0x24] sm:$0xf]
        %v4421 = vld [vmem:[%s4410 + $0x28] sm:$0xf]
        %v4422 = vld [vmem:[%s4410 + $0x2c] sm:$0xf]
        %v4423 = vld [vmem:[%s4410 + $0x30] sm:$0xf]
        %v4424 = vld [vmem:[%s4410 + $0x34] sm:$0xf]
        %v4425 = vld [vmem:[%s4410 + $0x38] sm:$0xf]
        %v4426 = vld [vmem:[%s4410 + $0x3c] sm:$0xf]
        %v4443 = vunpack.c.l.b16 %v4411
        %v4444 = vunpack.c.l.b16 %v4412
        %v4445 = vunpack.c.l.b16 %v4413
        %v4446 = vunpack.c.l.b16 %v4414
        %v4447 = vunpack.c.l.b16 %v4415
        %v4448 = vunpack.c.l.b16 %v4416
        %v4449 = vunpack.c.l.b16 %v4417
        %v4450 = vunpack.c.l.b16 %v4418
        %v4451 = vunpack.c.l.b16 %v4419
        %v4452 = vunpack.c.l.b16 %v4420
        %v4453 = vunpack.c.l.b16 %v4421
        %v4454 = vunpack.c.l.b16 %v4422
        %v4455 = vunpack.c.l.b16 %v4423
        %v4456 = vunpack.c.l.b16 %v4424
        %v4457 = vunpack.c.l.b16 %v4425
        %v4458 = vunpack.c.l.b16 %v4426
        %v4459 = vpack.c.b16 %v4444, %v4443
        %v4460 = vpack.c.b16 %v4446, %v4445
        %v4461 = vpack.c.b16 %v4448, %v4447
        %v4462 = vpack.c.b16 %v4450, %v4449
        %v4463 = vpack.c.b16 %v4452, %v4451
        %v4464 = vpack.c.b16 %v4454, %v4453
        %v4465 = vpack.c.b16 %v4456, %v4455
        %v4466 = vpack.c.b16 %v4458, %v4457
        %4475 = vmatpush.bf16.msra.mxu0 %v4466
        %4476 = vmatpush.bf16.msra.mxu0 %v4465
        %4477 = vmatpush.bf16.msra.mxu0 %v4464
        %4478 = vmatpush.bf16.msra.mxu0 %v4463
        %4479 = vmatpush.bf16.msra.mxu0 %v4462
        %4480 = vmatpush.bf16.msra.mxu0 %v4461
        %4481 = vmatpush.bf16.msra.mxu0 %v4460
        %4482 = vmatpush.bf16.msra.mxu0 %v4459
        %4483 = vmatmul.bf16.gmra.mxu0 %v4409
        %v4484 = vpop.f32.mrf.mxu0
        %v4485 = vadd.f32 0.0, %v4484
        %v4486 = vpop.f32.mrf.mxu0
        %v4487 = vadd.f32 0.0, %v4486
        %4488 = vdwg.mxu0
        %v4489 = vadd.f32 %v4402, %v4485
        %v4490 = vadd.f32 %v4403, %v4487
        %v4491 = vld [vmem:[%s4229 + $0x3] sm:$0xf]
        %v4493 = vrot.slane %v4491, 4
        %v4495 = vsel %vm573, %v4055, %v4493
        %v4496 = vpack.c.bf16 %v4495, %v3620
        %s4497 = scalar_lea.vmem %s5, 1152
        %v4498 = vld [vmem:[%s4497] sm:$0xf]
        %v4499 = vld [vmem:[%s4497 + $0x4] sm:$0xf]
        %v4500 = vld [vmem:[%s4497 + $0x8] sm:$0xf]
        %v4501 = vld [vmem:[%s4497 + $0xc] sm:$0xf]
        %v4502 = vld [vmem:[%s4497 + $0x10] sm:$0xf]
        %v4503 = vld [vmem:[%s4497 + $0x14] sm:$0xf]
        %v4504 = vld [vmem:[%s4497 + $0x18] sm:$0xf]
        %v4505 = vld [vmem:[%s4497 + $0x1c] sm:$0xf]
        %v4506 = vld [vmem:[%s4497 + $0x20] sm:$0xf]
        %v4507 = vld [vmem:[%s4497 + $0x24] sm:$0xf]
        %v4508 = vld [vmem:[%s4497 + $0x28] sm:$0xf]
        %v4509 = vld [vmem:[%s4497 + $0x2c] sm:$0xf]
        %v4510 = vld [vmem:[%s4497 + $0x30] sm:$0xf]
        %v4511 = vld [vmem:[%s4497 + $0x34] sm:$0xf]
        %v4512 = vld [vmem:[%s4497 + $0x38] sm:$0xf]
        %v4513 = vld [vmem:[%s4497 + $0x3c] sm:$0xf]
        %v4530 = vunpack.c.l.b16 %v4498
        %v4531 = vunpack.c.l.b16 %v4499
        %v4532 = vunpack.c.l.b16 %v4500
        %v4533 = vunpack.c.l.b16 %v4501
        %v4534 = vunpack.c.l.b16 %v4502
        %v4535 = vunpack.c.l.b16 %v4503
        %v4536 = vunpack.c.l.b16 %v4504
        %v4537 = vunpack.c.l.b16 %v4505
        %v4538 = vunpack.c.l.b16 %v4506
        %v4539 = vunpack.c.l.b16 %v4507
        %v4540 = vunpack.c.l.b16 %v4508
        %v4541 = vunpack.c.l.b16 %v4509
        %v4542 = vunpack.c.l.b16 %v4510
        %v4543 = vunpack.c.l.b16 %v4511
        %v4544 = vunpack.c.l.b16 %v4512
        %v4545 = vunpack.c.l.b16 %v4513
        %v4546 = vpack.c.b16 %v4531, %v4530
        %v4547 = vpack.c.b16 %v4533, %v4532
        %v4548 = vpack.c.b16 %v4535, %v4534
        %v4549 = vpack.c.b16 %v4537, %v4536
        %v4550 = vpack.c.b16 %v4539, %v4538
        %v4551 = vpack.c.b16 %v4541, %v4540
        %v4552 = vpack.c.b16 %v4543, %v4542
        %v4553 = vpack.c.b16 %v4545, %v4544
        %4562 = vmatpush.bf16.msra.mxu0 %v4553
        %4563 = vmatpush.bf16.msra.mxu0 %v4552
        %4564 = vmatpush.bf16.msra.mxu0 %v4551
        %4565 = vmatpush.bf16.msra.mxu0 %v4550
        %4566 = vmatpush.bf16.msra.mxu0 %v4549
        %4567 = vmatpush.bf16.msra.mxu0 %v4548
        %4568 = vmatpush.bf16.msra.mxu0 %v4547
        %4569 = vmatpush.bf16.msra.mxu0 %v4546
        %4570 = vmatmul.bf16.gmra.mxu0 %v4496
        %v4571 = vpop.f32.mrf.mxu0
        %v4572 = vadd.f32 0.0, %v4571
        %v4573 = vpop.f32.mrf.mxu0
        %v4574 = vadd.f32 0.0, %v4573
        %4575 = vdwg.mxu0
        %v4576 = vadd.f32 %v4489, %v4572
        %v4577 = vadd.f32 %v4490, %v4574
        %v4578 = vld [vmem:[%s4229 + $0x4] sm:$0xf]
        %v4580 = vrot.slane %v4578, 4
        %v4582 = vsel %vm573, %v4142, %v4580
        %v4583 = vpack.c.bf16 %v4582, %v3711
        %s4584 = scalar_lea.vmem %s5, 1216
        %v4585 = vld [vmem:[%s4584] sm:$0xf]
        %v4586 = vld [vmem:[%s4584 + $0x4] sm:$0xf]
        %v4587 = vld [vmem:[%s4584 + $0x8] sm:$0xf]
        %v4588 = vld [vmem:[%s4584 + $0xc] sm:$0xf]
        %v4589 = vld [vmem:[%s4584 + $0x10] sm:$0xf]
        %v4590 = vld [vmem:[%s4584 + $0x14] sm:$0xf]
        %v4591 = vld [vmem:[%s4584 + $0x18] sm:$0xf]
        %v4592 = vld [vmem:[%s4584 + $0x1c] sm:$0xf]
        %v4593 = vld [vmem:[%s4584 + $0x20] sm:$0xf]
        %v4594 = vld [vmem:[%s4584 + $0x24] sm:$0xf]
        %v4595 = vld [vmem:[%s4584 + $0x28] sm:$0xf]
        %v4596 = vld [vmem:[%s4584 + $0x2c] sm:$0xf]
        %v4597 = vld [vmem:[%s4584 + $0x30] sm:$0xf]
        %v4598 = vld [vmem:[%s4584 + $0x34] sm:$0xf]
        %v4599 = vld [vmem:[%s4584 + $0x38] sm:$0xf]
        %v4600 = vld [vmem:[%s4584 + $0x3c] sm:$0xf]
        %v4617 = vunpack.c.l.b16 %v4585
        %v4618 = vunpack.c.l.b16 %v4586
        %v4619 = vunpack.c.l.b16 %v4587
        %v4620 = vunpack.c.l.b16 %v4588
        %v4621 = vunpack.c.l.b16 %v4589
        %v4622 = vunpack.c.l.b16 %v4590
        %v4623 = vunpack.c.l.b16 %v4591
        %v4624 = vunpack.c.l.b16 %v4592
        %v4625 = vunpack.c.l.b16 %v4593
        %v4626 = vunpack.c.l.b16 %v4594
        %v4627 = vunpack.c.l.b16 %v4595
        %v4628 = vunpack.c.l.b16 %v4596
        %v4629 = vunpack.c.l.b16 %v4597
        %v4630 = vunpack.c.l.b16 %v4598
        %v4631 = vunpack.c.l.b16 %v4599
        %v4632 = vunpack.c.l.b16 %v4600
        %v4633 = vpack.c.b16 %v4618, %v4617
        %v4634 = vpack.c.b16 %v4620, %v4619
        %v4635 = vpack.c.b16 %v4622, %v4621
        %v4636 = vpack.c.b16 %v4624, %v4623
        %v4637 = vpack.c.b16 %v4626, %v4625
        %v4638 = vpack.c.b16 %v4628, %v4627
        %v4639 = vpack.c.b16 %v4630, %v4629
        %v4640 = vpack.c.b16 %v4632, %v4631
        %4649 = vmatpush.bf16.msra.mxu0 %v4640
        %4650 = vmatpush.bf16.msra.mxu0 %v4639
        %4651 = vmatpush.bf16.msra.mxu0 %v4638
        %4652 = vmatpush.bf16.msra.mxu0 %v4637
        %4653 = vmatpush.bf16.msra.mxu0 %v4636
        %4654 = vmatpush.bf16.msra.mxu0 %v4635
        %4655 = vmatpush.bf16.msra.mxu0 %v4634
        %4656 = vmatpush.bf16.msra.mxu0 %v4633
        %4657 = vmatmul.bf16.gmra.mxu0 %v4583
        %v4658 = vpop.f32.mrf.mxu0
        %v4659 = vadd.f32 0.0, %v4658
        %v4660 = vpop.f32.mrf.mxu0
        %v4661 = vadd.f32 0.0, %v4660
        %4662 = vdwg.mxu0
        %v4663 = vadd.f32 %v4576, %v4659
        %v4664 = vadd.f32 %v4577, %v4661
        %s4665 = scalar_lea.vmem [#allocation3], 56
        %v4666 = vld [vmem:[%s4665] sm:$0xf]
        %v4668 = vrot.slane %v4666, 4
        %v4670 = vsel %vm573, %v4230, %v4668
        %v4671 = vpack.c.bf16 %v4670, %v3798
        %s4672 = scalar_lea.vmem %s5, 1280
        %v4673 = vld [vmem:[%s4672] sm:$0xf]
        %v4674 = vld [vmem:[%s4672 + $0x4] sm:$0xf]
        %v4675 = vld [vmem:[%s4672 + $0x8] sm:$0xf]
        %v4676 = vld [vmem:[%s4672 + $0xc] sm:$0xf]
        %v4677 = vld [vmem:[%s4672 + $0x10] sm:$0xf]
        %v4678 = vld [vmem:[%s4672 + $0x14] sm:$0xf]
        %v4679 = vld [vmem:[%s4672 + $0x18] sm:$0xf]
        %v4680 = vld [vmem:[%s4672 + $0x1c] sm:$0xf]
        %v4681 = vld [vmem:[%s4672 + $0x20] sm:$0xf]
        %v4682 = vld [vmem:[%s4672 + $0x24] sm:$0xf]
        %v4683 = vld [vmem:[%s4672 + $0x28] sm:$0xf]
        %v4684 = vld [vmem:[%s4672 + $0x2c] sm:$0xf]
        %v4685 = vld [vmem:[%s4672 + $0x30] sm:$0xf]
        %v4686 = vld [vmem:[%s4672 + $0x34] sm:$0xf]
        %v4687 = vld [vmem:[%s4672 + $0x38] sm:$0xf]
        %v4688 = vld [vmem:[%s4672 + $0x3c] sm:$0xf]
        %v4705 = vunpack.c.l.b16 %v4673
        %v4706 = vunpack.c.l.b16 %v4674
        %v4707 = vunpack.c.l.b16 %v4675
        %v4708 = vunpack.c.l.b16 %v4676
        %v4709 = vunpack.c.l.b16 %v4677
        %v4710 = vunpack.c.l.b16 %v4678
        %v4711 = vunpack.c.l.b16 %v4679
        %v4712 = vunpack.c.l.b16 %v4680
        %v4713 = vunpack.c.l.b16 %v4681
        %v4714 = vunpack.c.l.b16 %v4682
        %v4715 = vunpack.c.l.b16 %v4683
        %v4716 = vunpack.c.l.b16 %v4684
        %v4717 = vunpack.c.l.b16 %v4685
        %v4718 = vunpack.c.l.b16 %v4686
        %v4719 = vunpack.c.l.b16 %v4687
        %v4720 = vunpack.c.l.b16 %v4688
        %v4721 = vpack.c.b16 %v4706, %v4705
        %v4722 = vpack.c.b16 %v4708, %v4707
        %v4723 = vpack.c.b16 %v4710, %v4709
        %v4724 = vpack.c.b16 %v4712, %v4711
        %v4725 = vpack.c.b16 %v4714, %v4713
        %v4726 = vpack.c.b16 %v4716, %v4715
        %v4727 = vpack.c.b16 %v4718, %v4717
        %v4728 = vpack.c.b16 %v4720, %v4719
        %4737 = vmatpush.bf16.msra.mxu0 %v4728
        %4738 = vmatpush.bf16.msra.mxu0 %v4727
        %4739 = vmatpush.bf16.msra.mxu0 %v4726
        %4740 = vmatpush.bf16.msra.mxu0 %v4725
        %4741 = vmatpush.bf16.msra.mxu0 %v4724
        %4742 = vmatpush.bf16.msra.mxu0 %v4723
        %4743 = vmatpush.bf16.msra.mxu0 %v4722
        %4744 = vmatpush.bf16.msra.mxu0 %v4721
        %4745 = vmatmul.bf16.gmra.mxu0 %v4671
        %v4746 = vpop.f32.mrf.mxu0
        %v4747 = vadd.f32 0.0, %v4746
        %v4748 = vpop.f32.mrf.mxu0
        %v4749 = vadd.f32 0.0, %v4748
        %4750 = vdwg.mxu0
        %v4751 = vadd.f32 %v4663, %v4747
        %v4752 = vadd.f32 %v4664, %v4749
        %v4753 = vld [vmem:[%s4665 + $0x1] sm:$0xf]
        %v4755 = vrot.slane %v4753, 4
        %v4757 = vsel %vm573, %v4317, %v4755
        %v4758 = vpack.c.bf16 %v4757, %v3885
        %s4759 = scalar_lea.vmem %s5, 1344
        %v4760 = vld [vmem:[%s4759] sm:$0xf]
        %v4761 = vld [vmem:[%s4759 + $0x4] sm:$0xf]
        %v4762 = vld [vmem:[%s4759 + $0x8] sm:$0xf]
        %v4763 = vld [vmem:[%s4759 + $0xc] sm:$0xf]
        %v4764 = vld [vmem:[%s4759 + $0x10] sm:$0xf]
        %v4765 = vld [vmem:[%s4759 + $0x14] sm:$0xf]
        %v4766 = vld [vmem:[%s4759 + $0x18] sm:$0xf]
        %v4767 = vld [vmem:[%s4759 + $0x1c] sm:$0xf]
        %v4768 = vld [vmem:[%s4759 + $0x20] sm:$0xf]
        %v4769 = vld [vmem:[%s4759 + $0x24] sm:$0xf]
        %v4770 = vld [vmem:[%s4759 + $0x28] sm:$0xf]
        %v4771 = vld [vmem:[%s4759 + $0x2c] sm:$0xf]
        %v4772 = vld [vmem:[%s4759 + $0x30] sm:$0xf]
        %v4773 = vld [vmem:[%s4759 + $0x34] sm:$0xf]
        %v4774 = vld [vmem:[%s4759 + $0x38] sm:$0xf]
        %v4775 = vld [vmem:[%s4759 + $0x3c] sm:$0xf]
        %v4792 = vunpack.c.l.b16 %v4760
        %v4793 = vunpack.c.l.b16 %v4761
        %v4794 = vunpack.c.l.b16 %v4762
        %v4795 = vunpack.c.l.b16 %v4763
        %v4796 = vunpack.c.l.b16 %v4764
        %v4797 = vunpack.c.l.b16 %v4765
        %v4798 = vunpack.c.l.b16 %v4766
        %v4799 = vunpack.c.l.b16 %v4767
        %v4800 = vunpack.c.l.b16 %v4768
        %v4801 = vunpack.c.l.b16 %v4769
        %v4802 = vunpack.c.l.b16 %v4770
        %v4803 = vunpack.c.l.b16 %v4771
        %v4804 = vunpack.c.l.b16 %v4772
        %v4805 = vunpack.c.l.b16 %v4773
        %v4806 = vunpack.c.l.b16 %v4774
        %v4807 = vunpack.c.l.b16 %v4775
        %v4808 = vpack.c.b16 %v4793, %v4792
        %v4809 = vpack.c.b16 %v4795, %v4794
        %v4810 = vpack.c.b16 %v4797, %v4796
        %v4811 = vpack.c.b16 %v4799, %v4798
        %v4812 = vpack.c.b16 %v4801, %v4800
        %v4813 = vpack.c.b16 %v4803, %v4802
        %v4814 = vpack.c.b16 %v4805, %v4804
        %v4815 = vpack.c.b16 %v4807, %v4806
        %4824 = vmatpush.bf16.msra.mxu0 %v4815
        %4825 = vmatpush.bf16.msra.mxu0 %v4814
        %4826 = vmatpush.bf16.msra.mxu0 %v4813
        %4827 = vmatpush.bf16.msra.mxu0 %v4812
        %4828 = vmatpush.bf16.msra.mxu0 %v4811
        %4829 = vmatpush.bf16.msra.mxu0 %v4810
        %4830 = vmatpush.bf16.msra.mxu0 %v4809
        %4831 = vmatpush.bf16.msra.mxu0 %v4808
        %4832 = vmatmul.bf16.gmra.mxu0 %v4758
        %v4833 = vpop.f32.mrf.mxu0
        %v4834 = vadd.f32 0.0, %v4833
        %v4835 = vpop.f32.mrf.mxu0
        %v4836 = vadd.f32 0.0, %v4835
        %4837 = vdwg.mxu0
        %v4838 = vadd.f32 %v4751, %v4834
        %v4839 = vadd.f32 %v4752, %v4836
        %v4840 = vld [vmem:[%s4665 + $0x2] sm:$0xf]
        %v4842 = vrot.slane %v4840, 4
        %v4844 = vsel %vm573, %v4404, %v4842
        %v4845 = vpack.c.bf16 %v4844, %v3972
        %s4846 = scalar_lea.vmem %s5, 1408
        %v4847 = vld [vmem:[%s4846] sm:$0xf]
        %v4848 = vld [vmem:[%s4846 + $0x4] sm:$0xf]
        %v4849 = vld [vmem:[%s4846 + $0x8] sm:$0xf]
        %v4850 = vld [vmem:[%s4846 + $0xc] sm:$0xf]
        %v4851 = vld [vmem:[%s4846 + $0x10] sm:$0xf]
        %v4852 = vld [vmem:[%s4846 + $0x14] sm:$0xf]
        %v4853 = vld [vmem:[%s4846 + $0x18] sm:$0xf]
        %v4854 = vld [vmem:[%s4846 + $0x1c] sm:$0xf]
        %v4855 = vld [vmem:[%s4846 + $0x20] sm:$0xf]
        %v4856 = vld [vmem:[%s4846 + $0x24] sm:$0xf]
        %v4857 = vld [vmem:[%s4846 + $0x28] sm:$0xf]
        %v4858 = vld [vmem:[%s4846 + $0x2c] sm:$0xf]
        %v4859 = vld [vmem:[%s4846 + $0x30] sm:$0xf]
        %v4860 = vld [vmem:[%s4846 + $0x34] sm:$0xf]
        %v4861 = vld [vmem:[%s4846 + $0x38] sm:$0xf]
        %v4862 = vld [vmem:[%s4846 + $0x3c] sm:$0xf]
        %v4879 = vunpack.c.l.b16 %v4847
        %v4880 = vunpack.c.l.b16 %v4848
        %v4881 = vunpack.c.l.b16 %v4849
        %v4882 = vunpack.c.l.b16 %v4850
        %v4883 = vunpack.c.l.b16 %v4851
        %v4884 = vunpack.c.l.b16 %v4852
        %v4885 = vunpack.c.l.b16 %v4853
        %v4886 = vunpack.c.l.b16 %v4854
        %v4887 = vunpack.c.l.b16 %v4855
        %v4888 = vunpack.c.l.b16 %v4856
        %v4889 = vunpack.c.l.b16 %v4857
        %v4890 = vunpack.c.l.b16 %v4858
        %v4891 = vunpack.c.l.b16 %v4859
        %v4892 = vunpack.c.l.b16 %v4860
        %v4893 = vunpack.c.l.b16 %v4861
        %v4894 = vunpack.c.l.b16 %v4862
        %v4895 = vpack.c.b16 %v4880, %v4879
        %v4896 = vpack.c.b16 %v4882, %v4881
        %v4897 = vpack.c.b16 %v4884, %v4883
        %v4898 = vpack.c.b16 %v4886, %v4885
        %v4899 = vpack.c.b16 %v4888, %v4887
        %v4900 = vpack.c.b16 %v4890, %v4889
        %v4901 = vpack.c.b16 %v4892, %v4891
        %v4902 = vpack.c.b16 %v4894, %v4893
        %4911 = vmatpush.bf16.msra.mxu0 %v4902
        %4912 = vmatpush.bf16.msra.mxu0 %v4901
        %4913 = vmatpush.bf16.msra.mxu0 %v4900
        %4914 = vmatpush.bf16.msra.mxu0 %v4899
        %4915 = vmatpush.bf16.msra.mxu0 %v4898
        %4916 = vmatpush.bf16.msra.mxu0 %v4897
        %4917 = vmatpush.bf16.msra.mxu0 %v4896
        %4918 = vmatpush.bf16.msra.mxu0 %v4895
        %4919 = vmatmul.bf16.gmra.mxu0 %v4845
        %v4920 = vpop.f32.mrf.mxu0
        %v4921 = vadd.f32 0.0, %v4920
        %v4922 = vpop.f32.mrf.mxu0
        %v4923 = vadd.f32 0.0, %v4922
        %4924 = vdwg.mxu0
        %v4925 = vadd.f32 %v4838, %v4921
        %v4926 = vadd.f32 %v4839, %v4923
        %v4927 = vld [vmem:[%s4665 + $0x3] sm:$0xf]
        %v4929 = vrot.slane %v4927, 4
        %v4931 = vsel %vm573, %v4491, %v4929
        %v4932 = vpack.c.bf16 %v4931, %v4059
        %s4933 = scalar_lea.vmem %s5, 1472
        %v4934 = vld [vmem:[%s4933] sm:$0xf]
        %v4935 = vld [vmem:[%s4933 + $0x4] sm:$0xf]
        %v4936 = vld [vmem:[%s4933 + $0x8] sm:$0xf]
        %v4937 = vld [vmem:[%s4933 + $0xc] sm:$0xf]
        %v4938 = vld [vmem:[%s4933 + $0x10] sm:$0xf]
        %v4939 = vld [vmem:[%s4933 + $0x14] sm:$0xf]
        %v4940 = vld [vmem:[%s4933 + $0x18] sm:$0xf]
        %v4941 = vld [vmem:[%s4933 + $0x1c] sm:$0xf]
        %v4942 = vld [vmem:[%s4933 + $0x20] sm:$0xf]
        %v4943 = vld [vmem:[%s4933 + $0x24] sm:$0xf]
        %v4944 = vld [vmem:[%s4933 + $0x28] sm:$0xf]
        %v4945 = vld [vmem:[%s4933 + $0x2c] sm:$0xf]
        %v4946 = vld [vmem:[%s4933 + $0x30] sm:$0xf]
        %v4947 = vld [vmem:[%s4933 + $0x34] sm:$0xf]
        %v4948 = vld [vmem:[%s4933 + $0x38] sm:$0xf]
        %v4949 = vld [vmem:[%s4933 + $0x3c] sm:$0xf]
        %v4966 = vunpack.c.l.b16 %v4934
        %v4967 = vunpack.c.l.b16 %v4935
        %v4968 = vunpack.c.l.b16 %v4936
        %v4969 = vunpack.c.l.b16 %v4937
        %v4970 = vunpack.c.l.b16 %v4938
        %v4971 = vunpack.c.l.b16 %v4939
        %v4972 = vunpack.c.l.b16 %v4940
        %v4973 = vunpack.c.l.b16 %v4941
        %v4974 = vunpack.c.l.b16 %v4942
        %v4975 = vunpack.c.l.b16 %v4943
        %v4976 = vunpack.c.l.b16 %v4944
        %v4977 = vunpack.c.l.b16 %v4945
        %v4978 = vunpack.c.l.b16 %v4946
        %v4979 = vunpack.c.l.b16 %v4947
        %v4980 = vunpack.c.l.b16 %v4948
        %v4981 = vunpack.c.l.b16 %v4949
        %v4982 = vpack.c.b16 %v4967, %v4966
        %v4983 = vpack.c.b16 %v4969, %v4968
        %v4984 = vpack.c.b16 %v4971, %v4970
        %v4985 = vpack.c.b16 %v4973, %v4972
        %v4986 = vpack.c.b16 %v4975, %v4974
        %v4987 = vpack.c.b16 %v4977, %v4976
        %v4988 = vpack.c.b16 %v4979, %v4978
        %v4989 = vpack.c.b16 %v4981, %v4980
        %4998 = vmatpush.bf16.msra.mxu0 %v4989
        %4999 = vmatpush.bf16.msra.mxu0 %v4988
        %5000 = vmatpush.bf16.msra.mxu0 %v4987
        %5001 = vmatpush.bf16.msra.mxu0 %v4986
        %5002 = vmatpush.bf16.msra.mxu0 %v4985
        %5003 = vmatpush.bf16.msra.mxu0 %v4984
        %5004 = vmatpush.bf16.msra.mxu0 %v4983
        %5005 = vmatpush.bf16.msra.mxu0 %v4982
        %5006 = vmatmul.bf16.gmra.mxu0 %v4932
        %v5007 = vpop.f32.mrf.mxu0
        %v5008 = vadd.f32 0.0, %v5007
        %v5009 = vpop.f32.mrf.mxu0
        %v5010 = vadd.f32 0.0, %v5009
        %5011 = vdwg.mxu0
        %v5012 = vadd.f32 %v4925, %v5008
        %v5013 = vadd.f32 %v4926, %v5010
        %v5014 = vld [vmem:[%s4665 + $0x4] sm:$0xf]
        %v5016 = vrot.slane %v5014, 4
        %v5018 = vsel %vm573, %v4578, %v5016
        %v5019 = vpack.c.bf16 %v5018, %v4146
        %s5020 = scalar_lea.vmem %s5, 1536
        %v5021 = vld [vmem:[%s5020] sm:$0xf]
        %v5022 = vld [vmem:[%s5020 + $0x4] sm:$0xf]
        %v5023 = vld [vmem:[%s5020 + $0x8] sm:$0xf]
        %v5024 = vld [vmem:[%s5020 + $0xc] sm:$0xf]
        %v5025 = vld [vmem:[%s5020 + $0x10] sm:$0xf]
        %v5026 = vld [vmem:[%s5020 + $0x14] sm:$0xf]
        %v5027 = vld [vmem:[%s5020 + $0x18] sm:$0xf]
        %v5028 = vld [vmem:[%s5020 + $0x1c] sm:$0xf]
        %v5029 = vld [vmem:[%s5020 + $0x20] sm:$0xf]
        %v5030 = vld [vmem:[%s5020 + $0x24] sm:$0xf]
        %v5031 = vld [vmem:[%s5020 + $0x28] sm:$0xf]
        %v5032 = vld [vmem:[%s5020 + $0x2c] sm:$0xf]
        %v5033 = vld [vmem:[%s5020 + $0x30] sm:$0xf]
        %v5034 = vld [vmem:[%s5020 + $0x34] sm:$0xf]
        %v5035 = vld [vmem:[%s5020 + $0x38] sm:$0xf]
        %v5036 = vld [vmem:[%s5020 + $0x3c] sm:$0xf]
        %v5053 = vunpack.c.l.b16 %v5021
        %v5054 = vunpack.c.l.b16 %v5022
        %v5055 = vunpack.c.l.b16 %v5023
        %v5056 = vunpack.c.l.b16 %v5024
        %v5057 = vunpack.c.l.b16 %v5025
        %v5058 = vunpack.c.l.b16 %v5026
        %v5059 = vunpack.c.l.b16 %v5027
        %v5060 = vunpack.c.l.b16 %v5028
        %v5061 = vunpack.c.l.b16 %v5029
        %v5062 = vunpack.c.l.b16 %v5030
        %v5063 = vunpack.c.l.b16 %v5031
        %v5064 = vunpack.c.l.b16 %v5032
        %v5065 = vunpack.c.l.b16 %v5033
        %v5066 = vunpack.c.l.b16 %v5034
        %v5067 = vunpack.c.l.b16 %v5035
        %v5068 = vunpack.c.l.b16 %v5036
        %v5069 = vpack.c.b16 %v5054, %v5053
        %v5070 = vpack.c.b16 %v5056, %v5055
        %v5071 = vpack.c.b16 %v5058, %v5057
        %v5072 = vpack.c.b16 %v5060, %v5059
        %v5073 = vpack.c.b16 %v5062, %v5061
        %v5074 = vpack.c.b16 %v5064, %v5063
        %v5075 = vpack.c.b16 %v5066, %v5065
        %v5076 = vpack.c.b16 %v5068, %v5067
        %5085 = vmatpush.bf16.msra.mxu0 %v5076
        %5086 = vmatpush.bf16.msra.mxu0 %v5075
        %5087 = vmatpush.bf16.msra.mxu0 %v5074
        %5088 = vmatpush.bf16.msra.mxu0 %v5073
        %5089 = vmatpush.bf16.msra.mxu0 %v5072
        %5090 = vmatpush.bf16.msra.mxu0 %v5071
        %5091 = vmatpush.bf16.msra.mxu0 %v5070
        %5092 = vmatpush.bf16.msra.mxu0 %v5069
        %5093 = vmatmul.bf16.gmra.mxu0 %v5019
        %v5094 = vpop.f32.mrf.mxu0
        %v5095 = vadd.f32 0.0, %v5094
        %v5096 = vpop.f32.mrf.mxu0
        %v5097 = vadd.f32 0.0, %v5096
        %5098 = vdwg.mxu0
        %v5099 = vadd.f32 %v5012, %v5095
        %v5100 = vadd.f32 %v5013, %v5097
        %v5101 = vld [vmem:[%s6] sm:$0x1]
        %v5103 = vperm.slane %v5101, 0
        %v5105 = vadd.f32 %v5099, %v5103
        %v5106 = vadd.f32 %v5100, %v5103
        %v5107 = vsub.f32 0.0, %v5105
        %v5108 = vsub.f32 0.0, %v5106
        %v5109 = vmul.f32 %v5107, 1.442695
        %v5110 = vpow.pop %v5109
        %v5111 = vmul.f32 %v5108, 1.442695
        %v5112 = vpow.pop %v5111
        %v5113 = vadd.f32 %v5110, 1.0
        %v5114 = vadd.f32 %v5112, 1.0
        %v5115 = vrcp.pop %v5113
        %v5116 = vrcp.pop %v5114
        %v5117 = vpack.c.bf16 %v5115, %v5115
        %v5118 = vpack.c.bf16 %v5116, %v5116
        %v5119 = vld [vmem:[%s7] sm:$0xf]
        %v5120 = vld [vmem:[%s7 + $0x4] sm:$0xf]
        %v5121 = vld [vmem:[%s7 + $0x8] sm:$0xf]
        %v5122 = vld [vmem:[%s7 + $0xc] sm:$0xf]
        %v5123 = vld [vmem:[%s7 + $0x10] sm:$0xf]
        %v5124 = vld [vmem:[%s7 + $0x14] sm:$0xf]
        %v5125 = vld [vmem:[%s7 + $0x18] sm:$0xf]
        %v5126 = vld [vmem:[%s7 + $0x1c] sm:$0xf]
        %v5127 = vld [vmem:[%s7 + $0x20] sm:$0xf]
        %v5128 = vld [vmem:[%s7 + $0x24] sm:$0xf]
        %v5129 = vld [vmem:[%s7 + $0x28] sm:$0xf]
        %v5130 = vld [vmem:[%s7 + $0x2c] sm:$0xf]
        %v5131 = vld [vmem:[%s7 + $0x30] sm:$0xf]
        %v5132 = vld [vmem:[%s7 + $0x34] sm:$0xf]
        %v5133 = vld [vmem:[%s7 + $0x38] sm:$0xf]
        %v5134 = vld [vmem:[%s7 + $0x3c] sm:$0xf]
        %s5135 = scalar_lea.vmem %s7, 64
        %v5136 = vld [vmem:[%s5135] sm:$0xf]
        %v5137 = vld [vmem:[%s5135 + $0x4] sm:$0xf]
        %v5138 = vld [vmem:[%s5135 + $0x8] sm:$0xf]
        %v5139 = vld [vmem:[%s5135 + $0xc] sm:$0xf]
        %v5140 = vld [vmem:[%s5135 + $0x10] sm:$0xf]
        %v5141 = vld [vmem:[%s5135 + $0x14] sm:$0xf]
        %v5142 = vld [vmem:[%s5135 + $0x18] sm:$0xf]
        %v5143 = vld [vmem:[%s5135 + $0x1c] sm:$0xf]
        %v5144 = vld [vmem:[%s5135 + $0x20] sm:$0xf]
        %v5145 = vld [vmem:[%s5135 + $0x24] sm:$0xf]
        %v5146 = vld [vmem:[%s5135 + $0x28] sm:$0xf]
        %v5147 = vld [vmem:[%s5135 + $0x2c] sm:$0xf]
        %v5148 = vld [vmem:[%s5135 + $0x30] sm:$0xf]
        %v5149 = vld [vmem:[%s5135 + $0x34] sm:$0xf]
        %v5150 = vld [vmem:[%s5135 + $0x38] sm:$0xf]
        %v5151 = vld [vmem:[%s5135 + $0x3c] sm:$0xf]
        %v5153 = vunpack.c.l.b16 %v5117
        %v5154 = vpack.c.b16 %v5153, %v5153
        %v5156 = vshrl.u32 %v5154, 16
        %v5175 = vunpack.c.l.b16 %v5136
        %v5176 = vunpack.c.l.b16 %v5137
        %v5177 = vunpack.c.l.b16 %v5138
        %v5178 = vunpack.c.l.b16 %v5139
        %v5179 = vunpack.c.l.b16 %v5140
        %v5180 = vunpack.c.l.b16 %v5141
        %v5181 = vunpack.c.l.b16 %v5142
        %v5182 = vunpack.c.l.b16 %v5143
        %v5183 = vunpack.c.l.b16 %v5144
        %v5184 = vunpack.c.l.b16 %v5145
        %v5185 = vunpack.c.l.b16 %v5146
        %v5186 = vunpack.c.l.b16 %v5147
        %v5187 = vunpack.c.l.b16 %v5148
        %v5188 = vunpack.c.l.b16 %v5149
        %v5189 = vunpack.c.l.b16 %v5150
        %v5190 = vunpack.c.l.b16 %v5151
        %v5191 = vpack.c.b16 %v5176, %v5175
        %v5192 = vpack.c.b16 %v5178, %v5177
        %v5193 = vpack.c.b16 %v5180, %v5179
        %v5194 = vpack.c.b16 %v5182, %v5181
        %v5195 = vpack.c.b16 %v5184, %v5183
        %v5196 = vpack.c.b16 %v5186, %v5185
        %v5197 = vpack.c.b16 %v5188, %v5187
        %v5198 = vpack.c.b16 %v5190, %v5189
        %5207 = vmatpush.bf16.msra.mxu0 %v5198
        %5208 = vmatpush.bf16.msra.mxu0 %v5197
        %5209 = vmatpush.bf16.msra.mxu0 %v5196
        %5210 = vmatpush.bf16.msra.mxu0 %v5195
        %5211 = vmatpush.bf16.msra.mxu0 %v5194
        %5212 = vmatpush.bf16.msra.mxu0 %v5193
        %5213 = vmatpush.bf16.msra.mxu0 %v5192
        %5214 = vmatpush.bf16.msra.mxu0 %v5191
        %5215 = vmatmul.bf16.gmra.mxu0 %v5156
        %v5216 = vpop.f32.mrf.mxu0
        %v5217 = vadd.f32 0.0, %v5216
        %v5218 = vpop.f32.mrf.mxu0
        %5219 = vdwg.mxu0
        %v5236 = vunpack.c.l.b16 %v5119
        %v5237 = vunpack.c.l.b16 %v5120
        %v5238 = vunpack.c.l.b16 %v5121
        %v5239 = vunpack.c.l.b16 %v5122
        %v5240 = vunpack.c.l.b16 %v5123
        %v5241 = vunpack.c.l.b16 %v5124
        %v5242 = vunpack.c.l.b16 %v5125
        %v5243 = vunpack.c.l.b16 %v5126
        %v5244 = vunpack.c.l.b16 %v5127
        %v5245 = vunpack.c.l.b16 %v5128
        %v5246 = vunpack.c.l.b16 %v5129
        %v5247 = vunpack.c.l.b16 %v5130
        %v5248 = vunpack.c.l.b16 %v5131
        %v5249 = vunpack.c.l.b16 %v5132
        %v5250 = vunpack.c.l.b16 %v5133
        %v5251 = vunpack.c.l.b16 %v5134
        %v5252 = vpack.c.b16 %v5237, %v5236
        %v5253 = vpack.c.b16 %v5239, %v5238
        %v5254 = vpack.c.b16 %v5241, %v5240
        %v5255 = vpack.c.b16 %v5243, %v5242
        %v5256 = vpack.c.b16 %v5245, %v5244
        %v5257 = vpack.c.b16 %v5247, %v5246
        %v5258 = vpack.c.b16 %v5249, %v5248
        %v5259 = vpack.c.b16 %v5251, %v5250
        %5268 = vmatpush.bf16.msra.mxu0 %v5259
        %5269 = vmatpush.bf16.msra.mxu0 %v5258
        %5270 = vmatpush.bf16.msra.mxu0 %v5257
        %5271 = vmatpush.bf16.msra.mxu0 %v5256
        %5272 = vmatpush.bf16.msra.mxu0 %v5255
        %5273 = vmatpush.bf16.msra.mxu0 %v5254
        %5274 = vmatpush.bf16.msra.mxu0 %v5253
        %5275 = vmatpush.bf16.msra.mxu0 %v5252
        %5276 = vmatmul.bf16.gmra.mxu0 %v5117
        %v5277 = vpop.f32.mrf.mxu0
        %v5278 = vadd.f32 %v5217, %v5277
        %v5279 = vpop.f32.mrf.mxu0
        %5280 = vdwg.mxu0
        %s5281 = scalar_lea.vmem %s7, 128
        %v5282 = vld [vmem:[%s5281] sm:$0xf]
        %v5283 = vld [vmem:[%s5281 + $0x4] sm:$0xf]
        %v5284 = vld [vmem:[%s5281 + $0x8] sm:$0xf]
        %v5285 = vld [vmem:[%s5281 + $0xc] sm:$0xf]
        %v5286 = vld [vmem:[%s5281 + $0x10] sm:$0xf]
        %v5287 = vld [vmem:[%s5281 + $0x14] sm:$0xf]
        %v5288 = vld [vmem:[%s5281 + $0x18] sm:$0xf]
        %v5289 = vld [vmem:[%s5281 + $0x1c] sm:$0xf]
        %v5290 = vld [vmem:[%s5281 + $0x20] sm:$0xf]
        %v5291 = vld [vmem:[%s5281 + $0x24] sm:$0xf]
        %v5292 = vld [vmem:[%s5281 + $0x28] sm:$0xf]
        %v5293 = vld [vmem:[%s5281 + $0x2c] sm:$0xf]
        %v5294 = vld [vmem:[%s5281 + $0x30] sm:$0xf]
        %v5295 = vld [vmem:[%s5281 + $0x34] sm:$0xf]
        %v5296 = vld [vmem:[%s5281 + $0x38] sm:$0xf]
        %v5297 = vld [vmem:[%s5281 + $0x3c] sm:$0xf]
        %v5298 = vrot.slane %v5154, 1
        %v5316 = vunpack.c.l.b16 %v5282
        %v5317 = vunpack.c.l.b16 %v5283
        %v5318 = vunpack.c.l.b16 %v5284
        %v5319 = vunpack.c.l.b16 %v5285
        %v5320 = vunpack.c.l.b16 %v5286
        %v5321 = vunpack.c.l.b16 %v5287
        %v5322 = vunpack.c.l.b16 %v5288
        %v5323 = vunpack.c.l.b16 %v5289
        %v5324 = vunpack.c.l.b16 %v5290
        %v5325 = vunpack.c.l.b16 %v5291
        %v5326 = vunpack.c.l.b16 %v5292
        %v5327 = vunpack.c.l.b16 %v5293
        %v5328 = vunpack.c.l.b16 %v5294
        %v5329 = vunpack.c.l.b16 %v5295
        %v5330 = vunpack.c.l.b16 %v5296
        %v5331 = vunpack.c.l.b16 %v5297
        %v5332 = vpack.c.b16 %v5317, %v5316
        %v5333 = vpack.c.b16 %v5319, %v5318
        %v5334 = vpack.c.b16 %v5321, %v5320
        %v5335 = vpack.c.b16 %v5323, %v5322
        %v5336 = vpack.c.b16 %v5325, %v5324
        %v5337 = vpack.c.b16 %v5327, %v5326
        %v5338 = vpack.c.b16 %v5329, %v5328
        %v5339 = vpack.c.b16 %v5331, %v5330
        %5348 = vmatpush.bf16.msra.mxu0 %v5339
        %5349 = vmatpush.bf16.msra.mxu0 %v5338
        %5350 = vmatpush.bf16.msra.mxu0 %v5337
        %5351 = vmatpush.bf16.msra.mxu0 %v5336
        %5352 = vmatpush.bf16.msra.mxu0 %v5335
        %5353 = vmatpush.bf16.msra.mxu0 %v5334
        %5354 = vmatpush.bf16.msra.mxu0 %v5333
        %5355 = vmatpush.bf16.msra.mxu0 %v5332
        %5356 = vmatmul.bf16.gmra.mxu0 %v5298
        %v5357 = vpop.f32.mrf.mxu0
        %v5358 = vadd.f32 0.0, %v5357
        %v5359 = vpop.f32.mrf.mxu0
        %5360 = vdwg.mxu0
        %v5361 = vadd.f32 %v5278, %v5358
        %s5362 = scalar_lea.vmem %s7, 192
        %v5363 = vld [vmem:[%s5362] sm:$0xf]
        %v5364 = vld [vmem:[%s5362 + $0x4] sm:$0xf]
        %v5365 = vld [vmem:[%s5362 + $0x8] sm:$0xf]
        %v5366 = vld [vmem:[%s5362 + $0xc] sm:$0xf]
        %v5367 = vld [vmem:[%s5362 + $0x10] sm:$0xf]
        %v5368 = vld [vmem:[%s5362 + $0x14] sm:$0xf]
        %v5369 = vld [vmem:[%s5362 + $0x18] sm:$0xf]
        %v5370 = vld [vmem:[%s5362 + $0x1c] sm:$0xf]
        %v5371 = vld [vmem:[%s5362 + $0x20] sm:$0xf]
        %v5372 = vld [vmem:[%s5362 + $0x24] sm:$0xf]
        %v5373 = vld [vmem:[%s5362 + $0x28] sm:$0xf]
        %v5374 = vld [vmem:[%s5362 + $0x2c] sm:$0xf]
        %v5375 = vld [vmem:[%s5362 + $0x30] sm:$0xf]
        %v5376 = vld [vmem:[%s5362 + $0x34] sm:$0xf]
        %v5377 = vld [vmem:[%s5362 + $0x38] sm:$0xf]
        %v5378 = vld [vmem:[%s5362 + $0x3c] sm:$0xf]
        %v5379 = vrot.slane %v5156, 1
        %v5397 = vunpack.c.l.b16 %v5363
        %v5398 = vunpack.c.l.b16 %v5364
        %v5399 = vunpack.c.l.b16 %v5365
        %v5400 = vunpack.c.l.b16 %v5366
        %v5401 = vunpack.c.l.b16 %v5367
        %v5402 = vunpack.c.l.b16 %v5368
        %v5403 = vunpack.c.l.b16 %v5369
        %v5404 = vunpack.c.l.b16 %v5370
        %v5405 = vunpack.c.l.b16 %v5371
        %v5406 = vunpack.c.l.b16 %v5372
        %v5407 = vunpack.c.l.b16 %v5373
        %v5408 = vunpack.c.l.b16 %v5374
        %v5409 = vunpack.c.l.b16 %v5375
        %v5410 = vunpack.c.l.b16 %v5376
        %v5411 = vunpack.c.l.b16 %v5377
        %v5412 = vunpack.c.l.b16 %v5378
        %v5413 = vpack.c.b16 %v5398, %v5397
        %v5414 = vpack.c.b16 %v5400, %v5399
        %v5415 = vpack.c.b16 %v5402, %v5401
        %v5416 = vpack.c.b16 %v5404, %v5403
        %v5417 = vpack.c.b16 %v5406, %v5405
        %v5418 = vpack.c.b16 %v5408, %v5407
        %v5419 = vpack.c.b16 %v5410, %v5409
        %v5420 = vpack.c.b16 %v5412, %v5411
        %5429 = vmatpush.bf16.msra.mxu0 %v5420
        %5430 = vmatpush.bf16.msra.mxu0 %v5419
        %5431 = vmatpush.bf16.msra.mxu0 %v5418
        %5432 = vmatpush.bf16.msra.mxu0 %v5417
        %5433 = vmatpush.bf16.msra.mxu0 %v5416
        %5434 = vmatpush.bf16.msra.mxu0 %v5415
        %5435 = vmatpush.bf16.msra.mxu0 %v5414
        %5436 = vmatpush.bf16.msra.mxu0 %v5413
        %5437 = vmatmul.bf16.gmra.mxu0 %v5379
        %v5438 = vpop.f32.mrf.mxu0
        %v5439 = vadd.f32 0.0, %v5438
        %v5440 = vpop.f32.mrf.mxu0
        %5441 = vdwg.mxu0
        %v5442 = vadd.f32 %v5361, %v5439
        %s5443 = scalar_lea.vmem %s7, 256
        %v5444 = vld [vmem:[%s5443] sm:$0xf]
        %v5445 = vld [vmem:[%s5443 + $0x4] sm:$0xf]
        %v5446 = vld [vmem:[%s5443 + $0x8] sm:$0xf]
        %v5447 = vld [vmem:[%s5443 + $0xc] sm:$0xf]
        %v5448 = vld [vmem:[%s5443 + $0x10] sm:$0xf]
        %v5449 = vld [vmem:[%s5443 + $0x14] sm:$0xf]
        %v5450 = vld [vmem:[%s5443 + $0x18] sm:$0xf]
        %v5451 = vld [vmem:[%s5443 + $0x1c] sm:$0xf]
        %v5452 = vld [vmem:[%s5443 + $0x20] sm:$0xf]
        %v5453 = vld [vmem:[%s5443 + $0x24] sm:$0xf]
        %v5454 = vld [vmem:[%s5443 + $0x28] sm:$0xf]
        %v5455 = vld [vmem:[%s5443 + $0x2c] sm:$0xf]
        %v5456 = vld [vmem:[%s5443 + $0x30] sm:$0xf]
        %v5457 = vld [vmem:[%s5443 + $0x34] sm:$0xf]
        %v5458 = vld [vmem:[%s5443 + $0x38] sm:$0xf]
        %v5459 = vld [vmem:[%s5443 + $0x3c] sm:$0xf]
        %v5460 = vrot.slane %v5154, 2
        %v5478 = vunpack.c.l.b16 %v5444
        %v5479 = vunpack.c.l.b16 %v5445
        %v5480 = vunpack.c.l.b16 %v5446
        %v5481 = vunpack.c.l.b16 %v5447
        %v5482 = vunpack.c.l.b16 %v5448
        %v5483 = vunpack.c.l.b16 %v5449
        %v5484 = vunpack.c.l.b16 %v5450
        %v5485 = vunpack.c.l.b16 %v5451
        %v5486 = vunpack.c.l.b16 %v5452
        %v5487 = vunpack.c.l.b16 %v5453
        %v5488 = vunpack.c.l.b16 %v5454
        %v5489 = vunpack.c.l.b16 %v5455
        %v5490 = vunpack.c.l.b16 %v5456
        %v5491 = vunpack.c.l.b16 %v5457
        %v5492 = vunpack.c.l.b16 %v5458
        %v5493 = vunpack.c.l.b16 %v5459
        %v5494 = vpack.c.b16 %v5479, %v5478
        %v5495 = vpack.c.b16 %v5481, %v5480
        %v5496 = vpack.c.b16 %v5483, %v5482
        %v5497 = vpack.c.b16 %v5485, %v5484
        %v5498 = vpack.c.b16 %v5487, %v5486
        %v5499 = vpack.c.b16 %v5489, %v5488
        %v5500 = vpack.c.b16 %v5491, %v5490
        %v5501 = vpack.c.b16 %v5493, %v5492
        %5510 = vmatpush.bf16.msra.mxu0 %v5501
        %5511 = vmatpush.bf16.msra.mxu0 %v5500
        %5512 = vmatpush.bf16.msra.mxu0 %v5499
        %5513 = vmatpush.bf16.msra.mxu0 %v5498
        %5514 = vmatpush.bf16.msra.mxu0 %v5497
        %5515 = vmatpush.bf16.msra.mxu0 %v5496
        %5516 = vmatpush.bf16.msra.mxu0 %v5495
        %5517 = vmatpush.bf16.msra.mxu0 %v5494
        %5518 = vmatmul.bf16.gmra.mxu0 %v5460
        %v5519 = vpop.f32.mrf.mxu0
        %v5520 = vadd.f32 0.0, %v5519
        %v5521 = vpop.f32.mrf.mxu0
        %5522 = vdwg.mxu0
        %v5523 = vadd.f32 %v5442, %v5520
        %s5524 = scalar_lea.vmem %s7, 320
        %v5525 = vld [vmem:[%s5524] sm:$0xf]
        %v5526 = vld [vmem:[%s5524 + $0x4] sm:$0xf]
        %v5527 = vld [vmem:[%s5524 + $0x8] sm:$0xf]
        %v5528 = vld [vmem:[%s5524 + $0xc] sm:$0xf]
        %v5529 = vld [vmem:[%s5524 + $0x10] sm:$0xf]
        %v5530 = vld [vmem:[%s5524 + $0x14] sm:$0xf]
        %v5531 = vld [vmem:[%s5524 + $0x18] sm:$0xf]
        %v5532 = vld [vmem:[%s5524 + $0x1c] sm:$0xf]
        %v5533 = vld [vmem:[%s5524 + $0x20] sm:$0xf]
        %v5534 = vld [vmem:[%s5524 + $0x24] sm:$0xf]
        %v5535 = vld [vmem:[%s5524 + $0x28] sm:$0xf]
        %v5536 = vld [vmem:[%s5524 + $0x2c] sm:$0xf]
        %v5537 = vld [vmem:[%s5524 + $0x30] sm:$0xf]
        %v5538 = vld [vmem:[%s5524 + $0x34] sm:$0xf]
        %v5539 = vld [vmem:[%s5524 + $0x38] sm:$0xf]
        %v5540 = vld [vmem:[%s5524 + $0x3c] sm:$0xf]
        %v5541 = vrot.slane %v5156, 2
        %v5559 = vunpack.c.l.b16 %v5525
        %v5560 = vunpack.c.l.b16 %v5526
        %v5561 = vunpack.c.l.b16 %v5527
        %v5562 = vunpack.c.l.b16 %v5528
        %v5563 = vunpack.c.l.b16 %v5529
        %v5564 = vunpack.c.l.b16 %v5530
        %v5565 = vunpack.c.l.b16 %v5531
        %v5566 = vunpack.c.l.b16 %v5532
        %v5567 = vunpack.c.l.b16 %v5533
        %v5568 = vunpack.c.l.b16 %v5534
        %v5569 = vunpack.c.l.b16 %v5535
        %v5570 = vunpack.c.l.b16 %v5536
        %v5571 = vunpack.c.l.b16 %v5537
        %v5572 = vunpack.c.l.b16 %v5538
        %v5573 = vunpack.c.l.b16 %v5539
        %v5574 = vunpack.c.l.b16 %v5540
        %v5575 = vpack.c.b16 %v5560, %v5559
        %v5576 = vpack.c.b16 %v5562, %v5561
        %v5577 = vpack.c.b16 %v5564, %v5563
        %v5578 = vpack.c.b16 %v5566, %v5565
        %v5579 = vpack.c.b16 %v5568, %v5567
        %v5580 = vpack.c.b16 %v5570, %v5569
        %v5581 = vpack.c.b16 %v5572, %v5571
        %v5582 = vpack.c.b16 %v5574, %v5573
        %5591 = vmatpush.bf16.msra.mxu0 %v5582
        %5592 = vmatpush.bf16.msra.mxu0 %v5581
        %5593 = vmatpush.bf16.msra.mxu0 %v5580
        %5594 = vmatpush.bf16.msra.mxu0 %v5579
        %5595 = vmatpush.bf16.msra.mxu0 %v5578
        %5596 = vmatpush.bf16.msra.mxu0 %v5577
        %5597 = vmatpush.bf16.msra.mxu0 %v5576
        %5598 = vmatpush.bf16.msra.mxu0 %v5575
        %5599 = vmatmul.bf16.gmra.mxu0 %v5541
        %v5600 = vpop.f32.mrf.mxu0
        %v5601 = vadd.f32 0.0, %v5600
        %v5602 = vpop.f32.mrf.mxu0
        %5603 = vdwg.mxu0
        %v5604 = vadd.f32 %v5523, %v5601
        %s5605 = scalar_lea.vmem %s7, 384
        %v5606 = vld [vmem:[%s5605] sm:$0xf]
        %v5607 = vld [vmem:[%s5605 + $0x4] sm:$0xf]
        %v5608 = vld [vmem:[%s5605 + $0x8] sm:$0xf]
        %v5609 = vld [vmem:[%s5605 + $0xc] sm:$0xf]
        %v5610 = vld [vmem:[%s5605 + $0x10] sm:$0xf]
        %v5611 = vld [vmem:[%s5605 + $0x14] sm:$0xf]
        %v5612 = vld [vmem:[%s5605 + $0x18] sm:$0xf]
        %v5613 = vld [vmem:[%s5605 + $0x1c] sm:$0xf]
        %v5614 = vld [vmem:[%s5605 + $0x20] sm:$0xf]
        %v5615 = vld [vmem:[%s5605 + $0x24] sm:$0xf]
        %v5616 = vld [vmem:[%s5605 + $0x28] sm:$0xf]
        %v5617 = vld [vmem:[%s5605 + $0x2c] sm:$0xf]
        %v5618 = vld [vmem:[%s5605 + $0x30] sm:$0xf]
        %v5619 = vld [vmem:[%s5605 + $0x34] sm:$0xf]
        %v5620 = vld [vmem:[%s5605 + $0x38] sm:$0xf]
        %v5621 = vld [vmem:[%s5605 + $0x3c] sm:$0xf]
        %v5622 = vrot.slane %v5154, 3
        %v5640 = vunpack.c.l.b16 %v5606
        %v5641 = vunpack.c.l.b16 %v5607
        %v5642 = vunpack.c.l.b16 %v5608
        %v5643 = vunpack.c.l.b16 %v5609
        %v5644 = vunpack.c.l.b16 %v5610
        %v5645 = vunpack.c.l.b16 %v5611
        %v5646 = vunpack.c.l.b16 %v5612
        %v5647 = vunpack.c.l.b16 %v5613
        %v5648 = vunpack.c.l.b16 %v5614
        %v5649 = vunpack.c.l.b16 %v5615
        %v5650 = vunpack.c.l.b16 %v5616
        %v5651 = vunpack.c.l.b16 %v5617
        %v5652 = vunpack.c.l.b16 %v5618
        %v5653 = vunpack.c.l.b16 %v5619
        %v5654 = vunpack.c.l.b16 %v5620
        %v5655 = vunpack.c.l.b16 %v5621
        %v5656 = vpack.c.b16 %v5641, %v5640
        %v5657 = vpack.c.b16 %v5643, %v5642
        %v5658 = vpack.c.b16 %v5645, %v5644
        %v5659 = vpack.c.b16 %v5647, %v5646
        %v5660 = vpack.c.b16 %v5649, %v5648
        %v5661 = vpack.c.b16 %v5651, %v5650
        %v5662 = vpack.c.b16 %v5653, %v5652
        %v5663 = vpack.c.b16 %v5655, %v5654
        %5672 = vmatpush.bf16.msra.mxu0 %v5663
        %5673 = vmatpush.bf16.msra.mxu0 %v5662
        %5674 = vmatpush.bf16.msra.mxu0 %v5661
        %5675 = vmatpush.bf16.msra.mxu0 %v5660
        %5676 = vmatpush.bf16.msra.mxu0 %v5659
        %5677 = vmatpush.bf16.msra.mxu0 %v5658
        %5678 = vmatpush.bf16.msra.mxu0 %v5657
        %5679 = vmatpush.bf16.msra.mxu0 %v5656
        %5680 = vmatmul.bf16.gmra.mxu0 %v5622
        %v5681 = vpop.f32.mrf.mxu0
        %v5682 = vadd.f32 0.0, %v5681
        %v5683 = vpop.f32.mrf.mxu0
        %5684 = vdwg.mxu0
        %v5685 = vadd.f32 %v5604, %v5682
        %s5686 = scalar_lea.vmem %s7, 448
        %v5687 = vld [vmem:[%s5686] sm:$0xf]
        %v5688 = vld [vmem:[%s5686 + $0x4] sm:$0xf]
        %v5689 = vld [vmem:[%s5686 + $0x8] sm:$0xf]
        %v5690 = vld [vmem:[%s5686 + $0xc] sm:$0xf]
        %v5691 = vld [vmem:[%s5686 + $0x10] sm:$0xf]
        %v5692 = vld [vmem:[%s5686 + $0x14] sm:$0xf]
        %v5693 = vld [vmem:[%s5686 + $0x18] sm:$0xf]
        %v5694 = vld [vmem:[%s5686 + $0x1c] sm:$0xf]
        %v5695 = vld [vmem:[%s5686 + $0x20] sm:$0xf]
        %v5696 = vld [vmem:[%s5686 + $0x24] sm:$0xf]
        %v5697 = vld [vmem:[%s5686 + $0x28] sm:$0xf]
        %v5698 = vld [vmem:[%s5686 + $0x2c] sm:$0xf]
        %v5699 = vld [vmem:[%s5686 + $0x30] sm:$0xf]
        %v5700 = vld [vmem:[%s5686 + $0x34] sm:$0xf]
        %v5701 = vld [vmem:[%s5686 + $0x38] sm:$0xf]
        %v5702 = vld [vmem:[%s5686 + $0x3c] sm:$0xf]
        %v5703 = vrot.slane %v5156, 3
        %v5721 = vunpack.c.l.b16 %v5687
        %v5722 = vunpack.c.l.b16 %v5688
        %v5723 = vunpack.c.l.b16 %v5689
        %v5724 = vunpack.c.l.b16 %v5690
        %v5725 = vunpack.c.l.b16 %v5691
        %v5726 = vunpack.c.l.b16 %v5692
        %v5727 = vunpack.c.l.b16 %v5693
        %v5728 = vunpack.c.l.b16 %v5694
        %v5729 = vunpack.c.l.b16 %v5695
        %v5730 = vunpack.c.l.b16 %v5696
        %v5731 = vunpack.c.l.b16 %v5697
        %v5732 = vunpack.c.l.b16 %v5698
        %v5733 = vunpack.c.l.b16 %v5699
        %v5734 = vunpack.c.l.b16 %v5700
        %v5735 = vunpack.c.l.b16 %v5701
        %v5736 = vunpack.c.l.b16 %v5702
        %v5737 = vpack.c.b16 %v5722, %v5721
        %v5738 = vpack.c.b16 %v5724, %v5723
        %v5739 = vpack.c.b16 %v5726, %v5725
        %v5740 = vpack.c.b16 %v5728, %v5727
        %v5741 = vpack.c.b16 %v5730, %v5729
        %v5742 = vpack.c.b16 %v5732, %v5731
        %v5743 = vpack.c.b16 %v5734, %v5733
        %v5744 = vpack.c.b16 %v5736, %v5735
        %5753 = vmatpush.bf16.msra.mxu0 %v5744
        %5754 = vmatpush.bf16.msra.mxu0 %v5743
        %5755 = vmatpush.bf16.msra.mxu0 %v5742
        %5756 = vmatpush.bf16.msra.mxu0 %v5741
        %5757 = vmatpush.bf16.msra.mxu0 %v5740
        %5758 = vmatpush.bf16.msra.mxu0 %v5739
        %5759 = vmatpush.bf16.msra.mxu0 %v5738
        %5760 = vmatpush.bf16.msra.mxu0 %v5737
        %5761 = vmatmul.bf16.gmra.mxu0 %v5703
        %v5762 = vpop.f32.mrf.mxu0
        %v5763 = vadd.f32 0.0, %v5762
        %v5764 = vpop.f32.mrf.mxu0
        %5765 = vdwg.mxu0
        %v5766 = vadd.f32 %v5685, %v5763
        %s5767 = scalar_lea.vmem %s7, 512
        %v5768 = vld [vmem:[%s5767] sm:$0xf]
        %v5769 = vld [vmem:[%s5767 + $0x4] sm:$0xf]
        %v5770 = vld [vmem:[%s5767 + $0x8] sm:$0xf]
        %v5771 = vld [vmem:[%s5767 + $0xc] sm:$0xf]
        %v5772 = vld [vmem:[%s5767 + $0x10] sm:$0xf]
        %v5773 = vld [vmem:[%s5767 + $0x14] sm:$0xf]
        %v5774 = vld [vmem:[%s5767 + $0x18] sm:$0xf]
        %v5775 = vld [vmem:[%s5767 + $0x1c] sm:$0xf]
        %v5776 = vld [vmem:[%s5767 + $0x20] sm:$0xf]
        %v5777 = vld [vmem:[%s5767 + $0x24] sm:$0xf]
        %v5778 = vld [vmem:[%s5767 + $0x28] sm:$0xf]
        %v5779 = vld [vmem:[%s5767 + $0x2c] sm:$0xf]
        %v5780 = vld [vmem:[%s5767 + $0x30] sm:$0xf]
        %v5781 = vld [vmem:[%s5767 + $0x34] sm:$0xf]
        %v5782 = vld [vmem:[%s5767 + $0x38] sm:$0xf]
        %v5783 = vld [vmem:[%s5767 + $0x3c] sm:$0xf]
        %v5800 = vunpack.c.l.b16 %v5768
        %v5801 = vunpack.c.l.b16 %v5769
        %v5802 = vunpack.c.l.b16 %v5770
        %v5803 = vunpack.c.l.b16 %v5771
        %v5804 = vunpack.c.l.b16 %v5772
        %v5805 = vunpack.c.l.b16 %v5773
        %v5806 = vunpack.c.l.b16 %v5774
        %v5807 = vunpack.c.l.b16 %v5775
        %v5808 = vunpack.c.l.b16 %v5776
        %v5809 = vunpack.c.l.b16 %v5777
        %v5810 = vunpack.c.l.b16 %v5778
        %v5811 = vunpack.c.l.b16 %v5779
        %v5812 = vunpack.c.l.b16 %v5780
        %v5813 = vunpack.c.l.b16 %v5781
        %v5814 = vunpack.c.l.b16 %v5782
        %v5815 = vunpack.c.l.b16 %v5783
        %v5816 = vpack.c.b16 %v5801, %v5800
        %v5817 = vpack.c.b16 %v5803, %v5802
        %v5818 = vpack.c.b16 %v5805, %v5804
        %v5819 = vpack.c.b16 %v5807, %v5806
        %v5820 = vpack.c.b16 %v5809, %v5808
        %v5821 = vpack.c.b16 %v5811, %v5810
        %v5822 = vpack.c.b16 %v5813, %v5812
        %v5823 = vpack.c.b16 %v5815, %v5814
        %5832 = vmatpush.bf16.msra.mxu0 %v5823
        %5833 = vmatpush.bf16.msra.mxu0 %v5822
        %5834 = vmatpush.bf16.msra.mxu0 %v5821
        %5835 = vmatpush.bf16.msra.mxu0 %v5820
        %5836 = vmatpush.bf16.msra.mxu0 %v5819
        %5837 = vmatpush.bf16.msra.mxu0 %v5818
        %5838 = vmatpush.bf16.msra.mxu0 %v5817
        %5839 = vmatpush.bf16.msra.mxu0 %v5816
        %5840 = vmatmul.bf16.gmra.mxu0 %v5118
        %v5841 = vpop.f32.mrf.mxu0
        %v5842 = vadd.f32 0.0, %v5841
        %v5843 = vpop.f32.mrf.mxu0
        %5844 = vdwg.mxu0
        %v5845 = vadd.f32 %v5766, %v5842
        %s5846 = scalar_lea.vmem %s7, 576
        %v5847 = vld [vmem:[%s5846] sm:$0xf]
        %v5848 = vld [vmem:[%s5846 + $0x4] sm:$0xf]
        %v5849 = vld [vmem:[%s5846 + $0x8] sm:$0xf]
        %v5850 = vld [vmem:[%s5846 + $0xc] sm:$0xf]
        %v5851 = vld [vmem:[%s5846 + $0x10] sm:$0xf]
        %v5852 = vld [vmem:[%s5846 + $0x14] sm:$0xf]
        %v5853 = vld [vmem:[%s5846 + $0x18] sm:$0xf]
        %v5854 = vld [vmem:[%s5846 + $0x1c] sm:$0xf]
        %v5855 = vld [vmem:[%s5846 + $0x20] sm:$0xf]
        %v5856 = vld [vmem:[%s5846 + $0x24] sm:$0xf]
        %v5857 = vld [vmem:[%s5846 + $0x28] sm:$0xf]
        %v5858 = vld [vmem:[%s5846 + $0x2c] sm:$0xf]
        %v5859 = vld [vmem:[%s5846 + $0x30] sm:$0xf]
        %v5860 = vld [vmem:[%s5846 + $0x34] sm:$0xf]
        %v5861 = vld [vmem:[%s5846 + $0x38] sm:$0xf]
        %v5862 = vld [vmem:[%s5846 + $0x3c] sm:$0xf]
        %v5864 = vunpack.c.l.b16 %v5118
        %v5865 = vpack.c.b16 %v5864, %v5864
        %v5867 = vshrl.u32 %v5865, 16
        %v5886 = vunpack.c.l.b16 %v5847
        %v5887 = vunpack.c.l.b16 %v5848
        %v5888 = vunpack.c.l.b16 %v5849
        %v5889 = vunpack.c.l.b16 %v5850
        %v5890 = vunpack.c.l.b16 %v5851
        %v5891 = vunpack.c.l.b16 %v5852
        %v5892 = vunpack.c.l.b16 %v5853
        %v5893 = vunpack.c.l.b16 %v5854
        %v5894 = vunpack.c.l.b16 %v5855
        %v5895 = vunpack.c.l.b16 %v5856
        %v5896 = vunpack.c.l.b16 %v5857
        %v5897 = vunpack.c.l.b16 %v5858
        %v5898 = vunpack.c.l.b16 %v5859
        %v5899 = vunpack.c.l.b16 %v5860
        %v5900 = vunpack.c.l.b16 %v5861
        %v5901 = vunpack.c.l.b16 %v5862
        %v5902 = vpack.c.b16 %v5887, %v5886
        %v5903 = vpack.c.b16 %v5889, %v5888
        %v5904 = vpack.c.b16 %v5891, %v5890
        %v5905 = vpack.c.b16 %v5893, %v5892
        %v5906 = vpack.c.b16 %v5895, %v5894
        %v5907 = vpack.c.b16 %v5897, %v5896
        %v5908 = vpack.c.b16 %v5899, %v5898
        %v5909 = vpack.c.b16 %v5901, %v5900
        %5918 = vmatpush.bf16.msra.mxu0 %v5909
        %5919 = vmatpush.bf16.msra.mxu0 %v5908
        %5920 = vmatpush.bf16.msra.mxu0 %v5907
        %5921 = vmatpush.bf16.msra.mxu0 %v5906
        %5922 = vmatpush.bf16.msra.mxu0 %v5905
        %5923 = vmatpush.bf16.msra.mxu0 %v5904
        %5924 = vmatpush.bf16.msra.mxu0 %v5903
        %5925 = vmatpush.bf16.msra.mxu0 %v5902
        %5926 = vmatmul.bf16.gmra.mxu0 %v5867
        %v5927 = vpop.f32.mrf.mxu0
        %v5928 = vadd.f32 0.0, %v5927
        %v5929 = vpop.f32.mrf.mxu0
        %5930 = vdwg.mxu0
        %v5931 = vadd.f32 %v5845, %v5928
        %s5932 = scalar_lea.vmem %s7, 640
        %v5933 = vld [vmem:[%s5932] sm:$0xf]
        %v5934 = vld [vmem:[%s5932 + $0x4] sm:$0xf]
        %v5935 = vld [vmem:[%s5932 + $0x8] sm:$0xf]
        %v5936 = vld [vmem:[%s5932 + $0xc] sm:$0xf]
        %v5937 = vld [vmem:[%s5932 + $0x10] sm:$0xf]
        %v5938 = vld [vmem:[%s5932 + $0x14] sm:$0xf]
        %v5939 = vld [vmem:[%s5932 + $0x18] sm:$0xf]
        %v5940 = vld [vmem:[%s5932 + $0x1c] sm:$0xf]
        %v5941 = vld [vmem:[%s5932 + $0x20] sm:$0xf]
        %v5942 = vld [vmem:[%s5932 + $0x24] sm:$0xf]
        %v5943 = vld [vmem:[%s5932 + $0x28] sm:$0xf]
        %v5944 = vld [vmem:[%s5932 + $0x2c] sm:$0xf]
        %v5945 = vld [vmem:[%s5932 + $0x30] sm:$0xf]
        %v5946 = vld [vmem:[%s5932 + $0x34] sm:$0xf]
        %v5947 = vld [vmem:[%s5932 + $0x38] sm:$0xf]
        %v5948 = vld [vmem:[%s5932 + $0x3c] sm:$0xf]
        %v5949 = vrot.slane %v5865, 1
        %v5967 = vunpack.c.l.b16 %v5933
        %v5968 = vunpack.c.l.b16 %v5934
        %v5969 = vunpack.c.l.b16 %v5935
        %v5970 = vunpack.c.l.b16 %v5936
        %v5971 = vunpack.c.l.b16 %v5937
        %v5972 = vunpack.c.l.b16 %v5938
        %v5973 = vunpack.c.l.b16 %v5939
        %v5974 = vunpack.c.l.b16 %v5940
        %v5975 = vunpack.c.l.b16 %v5941
        %v5976 = vunpack.c.l.b16 %v5942
        %v5977 = vunpack.c.l.b16 %v5943
        %v5978 = vunpack.c.l.b16 %v5944
        %v5979 = vunpack.c.l.b16 %v5945
        %v5980 = vunpack.c.l.b16 %v5946
        %v5981 = vunpack.c.l.b16 %v5947
        %v5982 = vunpack.c.l.b16 %v5948
        %v5983 = vpack.c.b16 %v5968, %v5967
        %v5984 = vpack.c.b16 %v5970, %v5969
        %v5985 = vpack.c.b16 %v5972, %v5971
        %v5986 = vpack.c.b16 %v5974, %v5973
        %v5987 = vpack.c.b16 %v5976, %v5975
        %v5988 = vpack.c.b16 %v5978, %v5977
        %v5989 = vpack.c.b16 %v5980, %v5979
        %v5990 = vpack.c.b16 %v5982, %v5981
        %5999 = vmatpush.bf16.msra.mxu0 %v5990
        %6000 = vmatpush.bf16.msra.mxu0 %v5989
        %6001 = vmatpush.bf16.msra.mxu0 %v5988
        %6002 = vmatpush.bf16.msra.mxu0 %v5987
        %6003 = vmatpush.bf16.msra.mxu0 %v5986
        %6004 = vmatpush.bf16.msra.mxu0 %v5985
        %6005 = vmatpush.bf16.msra.mxu0 %v5984
        %6006 = vmatpush.bf16.msra.mxu0 %v5983
        %6007 = vmatmul.bf16.gmra.mxu0 %v5949
        %v6008 = vpop.f32.mrf.mxu0
        %v6009 = vadd.f32 0.0, %v6008
        %v6010 = vpop.f32.mrf.mxu0
        %6011 = vdwg.mxu0
        %v6012 = vadd.f32 %v5931, %v6009
        %s6013 = scalar_lea.vmem %s7, 704
        %v6014 = vld [vmem:[%s6013] sm:$0xf]
        %v6015 = vld [vmem:[%s6013 + $0x4] sm:$0xf]
        %v6016 = vld [vmem:[%s6013 + $0x8] sm:$0xf]
        %v6017 = vld [vmem:[%s6013 + $0xc] sm:$0xf]
        %v6018 = vld [vmem:[%s6013 + $0x10] sm:$0xf]
        %v6019 = vld [vmem:[%s6013 + $0x14] sm:$0xf]
        %v6020 = vld [vmem:[%s6013 + $0x18] sm:$0xf]
        %v6021 = vld [vmem:[%s6013 + $0x1c] sm:$0xf]
        %v6022 = vld [vmem:[%s6013 + $0x20] sm:$0xf]
        %v6023 = vld [vmem:[%s6013 + $0x24] sm:$0xf]
        %v6024 = vld [vmem:[%s6013 + $0x28] sm:$0xf]
        %v6025 = vld [vmem:[%s6013 + $0x2c] sm:$0xf]
        %v6026 = vld [vmem:[%s6013 + $0x30] sm:$0xf]
        %v6027 = vld [vmem:[%s6013 + $0x34] sm:$0xf]
        %v6028 = vld [vmem:[%s6013 + $0x38] sm:$0xf]
        %v6029 = vld [vmem:[%s6013 + $0x3c] sm:$0xf]
        %v6030 = vrot.slane %v5867, 1
        %v6048 = vunpack.c.l.b16 %v6014
        %v6049 = vunpack.c.l.b16 %v6015
        %v6050 = vunpack.c.l.b16 %v6016
        %v6051 = vunpack.c.l.b16 %v6017
        %v6052 = vunpack.c.l.b16 %v6018
        %v6053 = vunpack.c.l.b16 %v6019
        %v6054 = vunpack.c.l.b16 %v6020
        %v6055 = vunpack.c.l.b16 %v6021
        %v6056 = vunpack.c.l.b16 %v6022
        %v6057 = vunpack.c.l.b16 %v6023
        %v6058 = vunpack.c.l.b16 %v6024
        %v6059 = vunpack.c.l.b16 %v6025
        %v6060 = vunpack.c.l.b16 %v6026
        %v6061 = vunpack.c.l.b16 %v6027
        %v6062 = vunpack.c.l.b16 %v6028
        %v6063 = vunpack.c.l.b16 %v6029
        %v6064 = vpack.c.b16 %v6049, %v6048
        %v6065 = vpack.c.b16 %v6051, %v6050
        %v6066 = vpack.c.b16 %v6053, %v6052
        %v6067 = vpack.c.b16 %v6055, %v6054
        %v6068 = vpack.c.b16 %v6057, %v6056
        %v6069 = vpack.c.b16 %v6059, %v6058
        %v6070 = vpack.c.b16 %v6061, %v6060
        %v6071 = vpack.c.b16 %v6063, %v6062
        %6080 = vmatpush.bf16.msra.mxu0 %v6071
        %6081 = vmatpush.bf16.msra.mxu0 %v6070
        %6082 = vmatpush.bf16.msra.mxu0 %v6069
        %6083 = vmatpush.bf16.msra.mxu0 %v6068
        %6084 = vmatpush.bf16.msra.mxu0 %v6067
        %6085 = vmatpush.bf16.msra.mxu0 %v6066
        %6086 = vmatpush.bf16.msra.mxu0 %v6065
        %6087 = vmatpush.bf16.msra.mxu0 %v6064
        %6088 = vmatmul.bf16.gmra.mxu0 %v6030
        %v6089 = vpop.f32.mrf.mxu0
        %v6090 = vadd.f32 0.0, %v6089
        %v6091 = vpop.f32.mrf.mxu0
        %6092 = vdwg.mxu0
        %v6093 = vadd.f32 %v6012, %v6090
        %s6094 = scalar_lea.vmem %s7, 768
        %v6095 = vld [vmem:[%s6094] sm:$0xf]
        %v6096 = vld [vmem:[%s6094 + $0x4] sm:$0xf]
        %v6097 = vld [vmem:[%s6094 + $0x8] sm:$0xf]
        %v6098 = vld [vmem:[%s6094 + $0xc] sm:$0xf]
        %v6099 = vld [vmem:[%s6094 + $0x10] sm:$0xf]
        %v6100 = vld [vmem:[%s6094 + $0x14] sm:$0xf]
        %v6101 = vld [vmem:[%s6094 + $0x18] sm:$0xf]
        %v6102 = vld [vmem:[%s6094 + $0x1c] sm:$0xf]
        %v6103 = vld [vmem:[%s6094 + $0x20] sm:$0xf]
        %v6104 = vld [vmem:[%s6094 + $0x24] sm:$0xf]
        %v6105 = vld [vmem:[%s6094 + $0x28] sm:$0xf]
        %v6106 = vld [vmem:[%s6094 + $0x2c] sm:$0xf]
        %v6107 = vld [vmem:[%s6094 + $0x30] sm:$0xf]
        %v6108 = vld [vmem:[%s6094 + $0x34] sm:$0xf]
        %v6109 = vld [vmem:[%s6094 + $0x38] sm:$0xf]
        %v6110 = vld [vmem:[%s6094 + $0x3c] sm:$0xf]
        %v6111 = vrot.slane %v5865, 2
        %v6129 = vunpack.c.l.b16 %v6095
        %v6130 = vunpack.c.l.b16 %v6096
        %v6131 = vunpack.c.l.b16 %v6097
        %v6132 = vunpack.c.l.b16 %v6098
        %v6133 = vunpack.c.l.b16 %v6099
        %v6134 = vunpack.c.l.b16 %v6100
        %v6135 = vunpack.c.l.b16 %v6101
        %v6136 = vunpack.c.l.b16 %v6102
        %v6137 = vunpack.c.l.b16 %v6103
        %v6138 = vunpack.c.l.b16 %v6104
        %v6139 = vunpack.c.l.b16 %v6105
        %v6140 = vunpack.c.l.b16 %v6106
        %v6141 = vunpack.c.l.b16 %v6107
        %v6142 = vunpack.c.l.b16 %v6108
        %v6143 = vunpack.c.l.b16 %v6109
        %v6144 = vunpack.c.l.b16 %v6110
        %v6145 = vpack.c.b16 %v6130, %v6129
        %v6146 = vpack.c.b16 %v6132, %v6131
        %v6147 = vpack.c.b16 %v6134, %v6133
        %v6148 = vpack.c.b16 %v6136, %v6135
        %v6149 = vpack.c.b16 %v6138, %v6137
        %v6150 = vpack.c.b16 %v6140, %v6139
        %v6151 = vpack.c.b16 %v6142, %v6141
        %v6152 = vpack.c.b16 %v6144, %v6143
        %6161 = vmatpush.bf16.msra.mxu0 %v6152
        %6162 = vmatpush.bf16.msra.mxu0 %v6151
        %6163 = vmatpush.bf16.msra.mxu0 %v6150
        %6164 = vmatpush.bf16.msra.mxu0 %v6149
        %6165 = vmatpush.bf16.msra.mxu0 %v6148
        %6166 = vmatpush.bf16.msra.mxu0 %v6147
        %6167 = vmatpush.bf16.msra.mxu0 %v6146
        %6168 = vmatpush.bf16.msra.mxu0 %v6145
        %6169 = vmatmul.bf16.gmra.mxu0 %v6111
        %v6170 = vpop.f32.mrf.mxu0
        %v6171 = vadd.f32 0.0, %v6170
        %v6172 = vpop.f32.mrf.mxu0
        %6173 = vdwg.mxu0
        %v6174 = vadd.f32 %v6093, %v6171
        %s6175 = scalar_lea.vmem %s7, 832
        %v6176 = vld [vmem:[%s6175] sm:$0xf]
        %v6177 = vld [vmem:[%s6175 + $0x4] sm:$0xf]
        %v6178 = vld [vmem:[%s6175 + $0x8] sm:$0xf]
        %v6179 = vld [vmem:[%s6175 + $0xc] sm:$0xf]
        %v6180 = vld [vmem:[%s6175 + $0x10] sm:$0xf]
        %v6181 = vld [vmem:[%s6175 + $0x14] sm:$0xf]
        %v6182 = vld [vmem:[%s6175 + $0x18] sm:$0xf]
        %v6183 = vld [vmem:[%s6175 + $0x1c] sm:$0xf]
        %v6184 = vld [vmem:[%s6175 + $0x20] sm:$0xf]
        %v6185 = vld [vmem:[%s6175 + $0x24] sm:$0xf]
        %v6186 = vld [vmem:[%s6175 + $0x28] sm:$0xf]
        %v6187 = vld [vmem:[%s6175 + $0x2c] sm:$0xf]
        %v6188 = vld [vmem:[%s6175 + $0x30] sm:$0xf]
        %v6189 = vld [vmem:[%s6175 + $0x34] sm:$0xf]
        %v6190 = vld [vmem:[%s6175 + $0x38] sm:$0xf]
        %v6191 = vld [vmem:[%s6175 + $0x3c] sm:$0xf]
        %v6192 = vrot.slane %v5867, 2
        %v6210 = vunpack.c.l.b16 %v6176
        %v6211 = vunpack.c.l.b16 %v6177
        %v6212 = vunpack.c.l.b16 %v6178
        %v6213 = vunpack.c.l.b16 %v6179
        %v6214 = vunpack.c.l.b16 %v6180
        %v6215 = vunpack.c.l.b16 %v6181
        %v6216 = vunpack.c.l.b16 %v6182
        %v6217 = vunpack.c.l.b16 %v6183
        %v6218 = vunpack.c.l.b16 %v6184
        %v6219 = vunpack.c.l.b16 %v6185
        %v6220 = vunpack.c.l.b16 %v6186
        %v6221 = vunpack.c.l.b16 %v6187
        %v6222 = vunpack.c.l.b16 %v6188
        %v6223 = vunpack.c.l.b16 %v6189
        %v6224 = vunpack.c.l.b16 %v6190
        %v6225 = vunpack.c.l.b16 %v6191
        %v6226 = vpack.c.b16 %v6211, %v6210
        %v6227 = vpack.c.b16 %v6213, %v6212
        %v6228 = vpack.c.b16 %v6215, %v6214
        %v6229 = vpack.c.b16 %v6217, %v6216
        %v6230 = vpack.c.b16 %v6219, %v6218
        %v6231 = vpack.c.b16 %v6221, %v6220
        %v6232 = vpack.c.b16 %v6223, %v6222
        %v6233 = vpack.c.b16 %v6225, %v6224
        %6242 = vmatpush.bf16.msra.mxu0 %v6233
        %6243 = vmatpush.bf16.msra.mxu0 %v6232
        %6244 = vmatpush.bf16.msra.mxu0 %v6231
        %6245 = vmatpush.bf16.msra.mxu0 %v6230
        %6246 = vmatpush.bf16.msra.mxu0 %v6229
        %6247 = vmatpush.bf16.msra.mxu0 %v6228
        %6248 = vmatpush.bf16.msra.mxu0 %v6227
        %6249 = vmatpush.bf16.msra.mxu0 %v6226
        %6250 = vmatmul.bf16.gmra.mxu0 %v6192
        %v6251 = vpop.f32.mrf.mxu0
        %v6252 = vadd.f32 0.0, %v6251
        %v6253 = vpop.f32.mrf.mxu0
        %6254 = vdwg.mxu0
        %v6255 = vadd.f32 %v6174, %v6252
        %s6256 = scalar_lea.vmem %s7, 896
        %v6257 = vld [vmem:[%s6256] sm:$0xf]
        %v6258 = vld [vmem:[%s6256 + $0x4] sm:$0xf]
        %v6259 = vld [vmem:[%s6256 + $0x8] sm:$0xf]
        %v6260 = vld [vmem:[%s6256 + $0xc] sm:$0xf]
        %v6261 = vld [vmem:[%s6256 + $0x10] sm:$0xf]
        %v6262 = vld [vmem:[%s6256 + $0x14] sm:$0xf]
        %v6263 = vld [vmem:[%s6256 + $0x18] sm:$0xf]
        %v6264 = vld [vmem:[%s6256 + $0x1c] sm:$0xf]
        %v6265 = vld [vmem:[%s6256 + $0x20] sm:$0xf]
        %v6266 = vld [vmem:[%s6256 + $0x24] sm:$0xf]
        %v6267 = vld [vmem:[%s6256 + $0x28] sm:$0xf]
        %v6268 = vld [vmem:[%s6256 + $0x2c] sm:$0xf]
        %v6269 = vld [vmem:[%s6256 + $0x30] sm:$0xf]
        %v6270 = vld [vmem:[%s6256 + $0x34] sm:$0xf]
        %v6271 = vld [vmem:[%s6256 + $0x38] sm:$0xf]
        %v6272 = vld [vmem:[%s6256 + $0x3c] sm:$0xf]
        %v6273 = vrot.slane %v5865, 3
        %v6291 = vunpack.c.l.b16 %v6257
        %v6292 = vunpack.c.l.b16 %v6258
        %v6293 = vunpack.c.l.b16 %v6259
        %v6294 = vunpack.c.l.b16 %v6260
        %v6295 = vunpack.c.l.b16 %v6261
        %v6296 = vunpack.c.l.b16 %v6262
        %v6297 = vunpack.c.l.b16 %v6263
        %v6298 = vunpack.c.l.b16 %v6264
        %v6299 = vunpack.c.l.b16 %v6265
        %v6300 = vunpack.c.l.b16 %v6266
        %v6301 = vunpack.c.l.b16 %v6267
        %v6302 = vunpack.c.l.b16 %v6268
        %v6303 = vunpack.c.l.b16 %v6269
        %v6304 = vunpack.c.l.b16 %v6270
        %v6305 = vunpack.c.l.b16 %v6271
        %v6306 = vunpack.c.l.b16 %v6272
        %v6307 = vpack.c.b16 %v6292, %v6291
        %v6308 = vpack.c.b16 %v6294, %v6293
        %v6309 = vpack.c.b16 %v6296, %v6295
        %v6310 = vpack.c.b16 %v6298, %v6297
        %v6311 = vpack.c.b16 %v6300, %v6299
        %v6312 = vpack.c.b16 %v6302, %v6301
        %v6313 = vpack.c.b16 %v6304, %v6303
        %v6314 = vpack.c.b16 %v6306, %v6305
        %6323 = vmatpush.bf16.msra.mxu0 %v6314
        %6324 = vmatpush.bf16.msra.mxu0 %v6313
        %6325 = vmatpush.bf16.msra.mxu0 %v6312
        %6326 = vmatpush.bf16.msra.mxu0 %v6311
        %6327 = vmatpush.bf16.msra.mxu0 %v6310
        %6328 = vmatpush.bf16.msra.mxu0 %v6309
        %6329 = vmatpush.bf16.msra.mxu0 %v6308
        %6330 = vmatpush.bf16.msra.mxu0 %v6307
        %6331 = vmatmul.bf16.gmra.mxu0 %v6273
        %v6332 = vpop.f32.mrf.mxu0
        %v6333 = vadd.f32 0.0, %v6332
        %v6334 = vpop.f32.mrf.mxu0
        %6335 = vdwg.mxu0
        %v6336 = vadd.f32 %v6255, %v6333
        %s6337 = scalar_lea.vmem %s7, 960
        %v6338 = vld [vmem:[%s6337] sm:$0xf]
        %v6339 = vld [vmem:[%s6337 + $0x4] sm:$0xf]
        %v6340 = vld [vmem:[%s6337 + $0x8] sm:$0xf]
        %v6341 = vld [vmem:[%s6337 + $0xc] sm:$0xf]
        %v6342 = vld [vmem:[%s6337 + $0x10] sm:$0xf]
        %v6343 = vld [vmem:[%s6337 + $0x14] sm:$0xf]
        %v6344 = vld [vmem:[%s6337 + $0x18] sm:$0xf]
        %v6345 = vld [vmem:[%s6337 + $0x1c] sm:$0xf]
        %v6346 = vld [vmem:[%s6337 + $0x20] sm:$0xf]
        %v6347 = vld [vmem:[%s6337 + $0x24] sm:$0xf]
        %v6348 = vld [vmem:[%s6337 + $0x28] sm:$0xf]
        %v6349 = vld [vmem:[%s6337 + $0x2c] sm:$0xf]
        %v6350 = vld [vmem:[%s6337 + $0x30] sm:$0xf]
        %v6351 = vld [vmem:[%s6337 + $0x34] sm:$0xf]
        %v6352 = vld [vmem:[%s6337 + $0x38] sm:$0xf]
        %v6353 = vld [vmem:[%s6337 + $0x3c] sm:$0xf]
        %v6354 = vrot.slane %v5867, 3
        %v6372 = vunpack.c.l.b16 %v6338
        %v6373 = vunpack.c.l.b16 %v6339
        %v6374 = vunpack.c.l.b16 %v6340
        %v6375 = vunpack.c.l.b16 %v6341
        %v6376 = vunpack.c.l.b16 %v6342
        %v6377 = vunpack.c.l.b16 %v6343
        %v6378 = vunpack.c.l.b16 %v6344
        %v6379 = vunpack.c.l.b16 %v6345
        %v6380 = vunpack.c.l.b16 %v6346
        %v6381 = vunpack.c.l.b16 %v6347
        %v6382 = vunpack.c.l.b16 %v6348
        %v6383 = vunpack.c.l.b16 %v6349
        %v6384 = vunpack.c.l.b16 %v6350
        %v6385 = vunpack.c.l.b16 %v6351
        %v6386 = vunpack.c.l.b16 %v6352
        %v6387 = vunpack.c.l.b16 %v6353
        %v6388 = vpack.c.b16 %v6373, %v6372
        %v6389 = vpack.c.b16 %v6375, %v6374
        %v6390 = vpack.c.b16 %v6377, %v6376
        %v6391 = vpack.c.b16 %v6379, %v6378
        %v6392 = vpack.c.b16 %v6381, %v6380
        %v6393 = vpack.c.b16 %v6383, %v6382
        %v6394 = vpack.c.b16 %v6385, %v6384
        %v6395 = vpack.c.b16 %v6387, %v6386
        %6404 = vmatpush.bf16.msra.mxu0 %v6395
        %6405 = vmatpush.bf16.msra.mxu0 %v6394
        %6406 = vmatpush.bf16.msra.mxu0 %v6393
        %6407 = vmatpush.bf16.msra.mxu0 %v6392
        %6408 = vmatpush.bf16.msra.mxu0 %v6391
        %6409 = vmatpush.bf16.msra.mxu0 %v6390
        %6410 = vmatpush.bf16.msra.mxu0 %v6389
        %6411 = vmatpush.bf16.msra.mxu0 %v6388
        %6412 = vmatmul.bf16.gmra.mxu0 %v6354
        %v6413 = vpop.f32.mrf.mxu0
        %v6414 = vadd.f32 0.0, %v6413
        %v6415 = vpop.f32.mrf.mxu0
        %6416 = vdwg.mxu0
        %v6417 = vadd.f32 %v6336, %v6414
        %v6418 = vld [vmem:[%s8] sm:$0x1]
        %v6419 = vadd.f32 %v6417, %v6418
        %6420 = vst [vmem:[%s324] sm:$0x1] %v6419
        %s6421 = sand.u32 %s225, 1
        %s6422 = scalar_lea.sflag [#allocation5], %s6421
        %s6423 = sand.u32 %s225, 1
        %s6424 = scalar_lea.vmem [#allocation4], %s6423
        // Predicated region
        $region57: #{lenet_forward.1} parent=55 // pred_check
          %p6425 = pneg %p235
        $region58: #{lenet_forward.1} parent=55 // pred_check_branch
          %6427 = sbr.rel (%p6425) target = $region60
        $region59: #{lenet_forward.1} parent=55 // pred_region
          %6429 = vsyncadd %s6422, 0
          %s6430 = scalar_lea.hbm %s9, %s23
          %s6432 = sshll.u32 %s6424, 4
          %s6433 = int_to_ptr.vmem [resolvable:$true] %s6432
          %s6434 = sshll.u32 %s6430, 4
          %s6435 = int_to_ptr.hbm [resolvable:$true] %s6434
          %6437 = dma.vmem_to_hbm [thread:$0]  %s6433, 16, %s6435, %s6422
        $region60: #{lenet_forward.1} parent=55 // pred_fallthru
          _
      $region56: #{lenet_forward.1} parent=5 // pred_fallthru
        _
      %p6438 = scmp.le.s32.totalorder 2, %s18
      // Predicated region
      $region61: #{lenet_forward.1} parent=5 // pred_check
        %p6439 = pneg %p6438
      $region62: #{lenet_forward.1} parent=5 // pred_check_branch
        %6441 = sbr.rel (%p6439) target = $region64
      $region63: #{lenet_forward.1} parent=5 // pred_region
        %s6442 = ssub.s32 %s18, 2
        // Predicated region
        $region65: #{lenet_forward.1} parent=63 // pred_check
          %p6443 = pneg %p241
        $region66: #{lenet_forward.1} parent=63 // pred_check_branch
          %6445 = sbr.rel (%p6443) target = $region68
        $region67: #{lenet_forward.1} parent=63 // pred_region
          %s6446 = sand.u32 %s226, 1
          %s6447 = scalar_lea.sflag [#allocation5], %s6446
          %s6448 = sand.u32 %s226, 1
          %s6449 = scalar_lea.vmem [#allocation4], %s6448
          %6451 = dma.done %s6447, 16
        $region68: #{lenet_forward.1} parent=63 // pred_fallthru
          _
      $region64: #{lenet_forward.1} parent=5 // pred_fallthru
        _
    $region6: #{lenet_forward.1} parent=1 // loop_footer
      %s22 = sadd.s32 1, %s18
    $region7: #{lenet_forward.1} parent=1 // loop_footer_branch
      %17 = sbr.rel target = $region3
    $region8: #{lenet_forward.1} parent=1 // loop_exit
      _
    %6452 = vsyncpa [#allocation5], 1
    %s6453 = scalar_lea.sflag [#allocation5], 1
    %6454 = vsyncpa %s6453, 1

</llo_original>
